<compile_context>
chip_gen: v5e
topology: v5e:2x2
jax: 0.10.0
libtpu: 0.0.40
codegen_flags: <defaults>
</compile_context>

<pallas_src>
import functools

import jax
import jax.numpy as jnp
from jax.experimental import pallas as pl
from jax.experimental.pallas import tpu as pltpu

EPS = 1e-5          # nn.BatchNorm2d default eps
MAX_TILE = 2048     # pooled positions per grid step (lane tile width = 4*MAX_TILE)


# ---------------------------------------------------------------------------
# Fused kernel: Conv(im2col matmul)+bias -> batch stats -> BN+ReLU+2x2 maxpool
#               [-> Linear + Sigmoid head for the last block]
# ---------------------------------------------------------------------------
def _fused_layer_kernel(*refs, inv_count, tn, nsteps, with_fc, n_batch, hw):
    """Grid: one sequential axis over tiles of tn pooled positions (4*tn patch columns).

    Inputs per step i:
      p_ref  : (K, 4*tn) bf16  im2col patches, lanes = [win0|win1|win2|win3], each
                               window block holding the SAME tn pooled positions.
      wt_ref : (Cout, K) bf16  conv weight, rows=Cout, cols ordered (di, dj, cin).
      b_ref / g_ref / bt_ref : (Cout, 1) f32  conv bias / BN gamma / BN beta.
      [wfc_ref (Cout, hw) f32, bfc_ref (1, 1) f32]   if with_fc
    Output (resident, written at the last step):
      o_ref  : (Cout, Mp) f32  pooled activations            (with_fc=False)
               (N, 1)     f32  sigmoid(Linear(flatten))      (with_fc=True)
    Scratch:
      y_scr  : (nsteps, Cout, 4*tn) f32  pre-BN conv output for the whole layer
      sum_scr / ssq_scr : (Cout, 4*tn) f32  lane-wide partial sum / sum of squares
    """
    if with_fc:
        (p_ref, wt_ref, b_ref, g_ref, bt_ref, wfc_ref, bfc_ref,
         o_ref, y_scr, sum_scr, ssq_scr) = refs
    else:
        (p_ref, wt_ref, b_ref, g_ref, bt_ref,
         o_ref, y_scr, sum_scr, ssq_scr) = refs

    i = pl.program_id(0)

    @pl.when(i == 0)
    def _init():
        sum_scr[...] = jnp.zeros_like(sum_scr)
        ssq_scr[...] = jnp.zeros_like(ssq_scr)

    # Single MXU matmul covering all 4 pool-window blocks; conv bias folded in.
    # Result goes straight to the whole-layer VMEM scratch (no stacking temp).
    y_scr[i] = jnp.dot(wt_ref[...], p_ref[...],
                       preferred_element_type=jnp.float32) + b_ref[...]
    y = y_scr[i]
    # Lane-wide VPU partial accumulators; the cross-lane reductions happen once,
    # in _finalize, instead of per grid step.
    sum_scr[...] = sum_scr[...] + y
    ssq_scr[...] = ssq_scr[...] + y * y

    @pl.when(i == nsteps - 1)
    def _finalize():
        total = jnp.sum(sum_scr[...], axis=1, keepdims=True)    # (Cout, 1)
        totsq = jnp.sum(ssq_scr[...], axis=1, keepdims=True)    # (Cout, 1)
        mean = total * inv_count
        var = totsq * inv_count - mean * mean                   # biased (train-mode) var
        scale = g_ref[...] * jax.lax.rsqrt(var + EPS)
        shift = bt_ref[...] - mean * scale

        def pooled_tile(j):
            """BN + ReLU + 2x2 max-pool for tile j via a running max over the 4 windows."""
            m = None
            for w in range(4):                                   # static unroll
                z = y_scr[j, :, w * tn:(w + 1) * tn] * scale + shift
                z = jnp.maximum(z, 0.0)
                m = z if m is None else jnp.maximum(m, z)
            return m                                             # (Cout, tn)

        if not with_fc:
            for j in range(nsteps):                              # static, lane-dense stores
                o_ref[:, j * tn:(j + 1) * tn] = pooled_tile(j).astype(o_ref.dtype)
        else:
            pooled = pooled_tile(0)                              # (Cout, N*hw); nsteps == 1
            # Linear(flatten) + Sigmoid as a per-sample segmented reduction
            # (each sample owns a contiguous hw-wide lane block; no O(N^2) mask).
            logits = []
            for n in range(n_batch):                             # static unroll over batch
                blk = pooled[:, n * hw:(n + 1) * hw] * wfc_ref[...]          # (Cout, hw)
                s = jnp.sum(jnp.sum(blk, axis=1, keepdims=True), axis=0, keepdims=True)
                logits.append(s)                                 # (1, 1)
            logit = jnp.concatenate(logits, axis=0) + bfc_ref[...]           # (N, 1)
            o_ref[...] = 1.0 / (1.0 + jnp.exp(-logit))


# ---------------------------------------------------------------------------
# Glue: im2col in the pool-window-fused, channel-first, lane-dense layout
# ---------------------------------------------------------------------------
def _build_patches(x_cnhw, tn, k=4, s=2, p=1):
    """x: (Cin, N, H, W) -> patches (K, nsteps*4*tn).

    Column layout per grid tile i (width 4*tn): [win0|win1|win2|win3], win = py*2+px
    indexing the 2x2 max-pool window; each tn-wide block holds the SAME tn pooled
    output positions (n, hp, wp) row-major.  Rows ordered (di, dj, cin) to match the
    conv weight matrix.  Built from strided slices only; cast to bf16 for the MXU.

    # TODO(synk): still materializes the 4x-duplicated im2col tensor in HBM (see header).
    """
    Cin, N, H, W = x_cnhw.shape
    assert H % 4 == 0 and W % 4 == 0, "spatial dims must be divisible by 4"
    Ho = (H + 2 * p - k) // s + 1
    Wo = (W + 2 * p - k) // s + 1
    Hp, Wp = Ho // 2, Wo // 2
    Mp = N * Hp * Wp
    K = k * k * Cin
    assert Mp % tn == 0
    nsteps = Mp // tn

    xp = jnp.pad(x_cnhw.astype(jnp.bfloat16), ((0, 0), (0, 0), (p, p), (p, p)))
    blocks = []
    for py in range(2):
        for px in range(2):
            taps = []
            for di in range(k):
                for dj in range(k):
                    h0 = 2 * py + di
                    w0 = 2 * px + dj
                    sl = xp[:, :, h0:h0 + 4 * (Hp - 1) + 1:4, w0:w0 + 4 * (Wp - 1) + 1:4]
                    taps.append(sl.reshape(Cin, Mp))
            blocks.append(jnp.stack(taps, axis=0).reshape(K, Mp))
    # (K, Mp) per window -> (K, nsteps, 4, tn) -> (K, 4*Mp)
    fused = jnp.stack([b.reshape(K, nsteps, tn) for b in blocks], axis=2)
    return fused.reshape(K, nsteps * 4 * tn), (N, Hp, Wp)


# ---------------------------------------------------------------------------
# One conv block (optionally with the FC + Sigmoid head fused in)
# ---------------------------------------------------------------------------
def conv_block(x_cnhw, w_t, b, gamma, beta, fc_args=None):
    Cout, K = w_t.shape
    Cin, N, H, W = x_cnhw.shape
    Hp, Wp = H // 4, W // 4
    Mp = N * Hp * Wp
    tn = Mp if Mp <= MAX_TILE else MAX_TILE
    assert Mp % tn == 0, f"pooled columns {Mp} must divide by tile {tn}"
    nsteps = Mp // tn
    inv_count = 1.0 / float(4 * Mp)            # conv outputs per channel = N*Ho*Wo

    patches, _ = _build_patches(x_cnhw, tn)

    in_specs = [
        pl.BlockSpec((K, 4 * tn), lambda i: (0, i)),
        pl.BlockSpec((Cout, K), lambda i: (0, 0)),
        pl.BlockSpec((Cout, 1), lambda i: (0, 0)),
        pl.BlockSpec((Cout, 1), lambda i: (0, 0)),
        pl.BlockSpec((Cout, 1), lambda i: (0, 0)),
    ]
    args = [patches, w_t, b, gamma, beta]
    scratch = [
        pltpu.VMEM((nsteps, Cout, 4 * tn), jnp.float32),   # whole-layer pre-BN conv output
        pltpu.VMEM((Cout, 4 * tn), jnp.float32),           # partial sum
        pltpu.VMEM((Cout, 4 * tn), jnp.float32),           # partial sum of squares
    ]

    with_fc = fc_args is not None
    if with_fc:
        wfc, bfc = fc_args                                  # (Cout, hw), (1, 1)
        assert nsteps == 1, "fc head assumes the whole last layer fits in one tile"
        hw = wfc.shape[1]
        assert wfc.shape == (Cout, hw) and Mp == N * hw
        in_specs += [pl.BlockSpec((Cout, hw), lambda i: (0, 0)),
                     pl.BlockSpec((1, 1), lambda i: (0, 0))]
        args += [wfc, bfc]
        out_shape = jax.ShapeDtypeStruct((N, 1), jnp.float32)
        out_spec = pl.BlockSpec((N, 1), lambda i: (0, 0))
    else:
        hw = 0
        # f32 activations: Cout=8 bf16 would force half-masked sublane stores.
        out_shape = jax.ShapeDtypeStruct((Cout, Mp), jnp.float32)
        out_spec = pl.BlockSpec((Cout, Mp), lambda i: (0, 0))

    # Explicit VMEM budget (v7x: 64 MiB physical / 32 MiB default scoped; v5e default 16 MiB).
    y_scr_bytes = nsteps * Cout * 4 * tn * 4
    vmem_bytes = (2 * K * 4 * tn * 2                        # double-buffered patch tiles (bf16)
                  + y_scr_bytes
                  + 2 * Cout * 4 * tn * 4                   # sum / ssq accumulators
                  + (N * 4 if with_fc else Cout * Mp * 4)   # resident output block
                  + Cout * (K * 2 + 3 * 128 * 4))           # weights + per-channel params
    if y_scr_bytes > 24 * 2 ** 20:
        # TODO(synk): two-pass fallback (stats pass + BN/pool pass) when the pre-BN
        # layer output no longer fits comfortably in VMEM (large batch on v7x/v5e).
        raise NotImplementedError("pre-BN conv output too large for single-pass VMEM scheme")
    vmem_limit = int(min(48 * 2 ** 20, max(16 * 2 ** 20, 2 * vmem_bytes)))

    out = pl.pallas_call(
        functools.partial(_fused_layer_kernel, inv_count=inv_count, tn=tn,
                          nsteps=nsteps, with_fc=with_fc, n_batch=N, hw=hw),
        out_shape=out_shape,
        grid=(nsteps,),
        in_specs=in_specs,
        out_specs=out_spec,
        scratch_shapes=scratch,
        compiler_params=pltpu.CompilerParams(
            dimension_semantics=("arbitrary",),   # BN stats = global reduction in-call
            vmem_limit_bytes=vmem_limit),
    )(*args)

    if with_fc:
        return out                                  # (N, 1)
    return out.reshape(Cout, N, Hp, Wp)             # channel-first activation, f32


# ---------------------------------------------------------------------------
# Parameter init (deterministic, synthetic) & forward
# ---------------------------------------------------------------------------
def init_params(key):
    keys = jax.random.split(key, 14)
    params = {}
    cfg = [(3, 8), (8, 16), (16, 32)]
    ki = 0
    for idx, (cin, cout) in enumerate(cfg):
        # PyTorch conv weight (Cout, Cin, kh, kw) -> (Cout, kh*kw*Cin), rows match im2col.
        w_pt = jax.random.normal(keys[ki], (cout, cin, 4, 4), jnp.float32) / jnp.sqrt(cin * 16.0)
        w_t = jnp.transpose(w_pt, (0, 2, 3, 1)).reshape(cout, 16 * cin).astype(jnp.bfloat16)
        b = 0.05 * jax.random.normal(keys[ki + 1], (cout,), jnp.float32)
        gamma = 1.0 + 0.1 * jax.random.normal(keys[ki + 2], (cout,), jnp.float32)
        beta = 0.1 * jax.random.normal(keys[ki + 3], (cout,), jnp.float32)
        params[f"conv{idx + 1}"] = {
            "w": w_t,
            "b": b.reshape(cout, 1),
            "gamma": gamma.reshape(cout, 1),
            "beta": beta.reshape(cout, 1),
        }
        ki += 4
    flattened = 32 * 4 * 4  # = 512, matches _get_flattened_size() for 256x256 input
    wfc = jax.random.normal(keys[ki], (flattened,), jnp.float32) / jnp.sqrt(float(flattened))
    bfc = 0.05 * jax.random.normal(keys[ki + 1], (1,), jnp.float32)
    # fc weight stored as (C3, Hp*Wp) so it matches torch's NCHW flatten order.
    params["fc"] = {"w": wfc.reshape(32, 16), "b": bfc.reshape(1, 1)}
    return params


@jax.jit
def discriminator_forward(x_nchw, params):
    # NCHW -> channel-first (C, N, H, W); activations stay f32, MXU operands are
    # cast to bf16 inside _build_patches.
    x = jnp.transpose(x_nchw, (1, 0, 2, 3))
    for i in range(1, 3):
        p = params[f"conv{i}"]
        x = conv_block(x, p["w"], p["b"], p["gamma"], p["beta"])
    p3 = params["conv3"]
    return conv_block(x, p3["w"], p3["b"], p3["gamma"], p3["beta"],
                      fc_args=(params["fc"]["w"], params["fc"]["b"]))


if __name__ == "__main__":
    key = jax.random.PRNGKey(0)
    pkey, xkey = jax.random.split(key)
    params = init_params(pkey)
    # The module's fc layer is sized for 256x256 inputs (flattened_size = 32*4*4 = 512).
    x = jax.random.normal(xkey, (2, 3, 256, 256), jnp.float32)
    out = jax.block_until_ready(discriminator_forward(x, params))
    assert out.shape == (2, 1)
    assert bool(jnp.all((out >= 0.0) & (out <= 1.0)))
    print("KERNEL_OK")
</pallas_src>

<mosaic_0001>
module attributes {stable_mosaic.version = 11 : i64} {
  func.func @_fused_layer_kernel(%arg0: i32, %arg1: memref<48x8192xbf16, #tpu.memory_space<vmem>>, %arg2: memref<8x48xbf16, #tpu.memory_space<vmem>>, %arg3: memref<8x1xf32, #tpu.memory_space<vmem>>, %arg4: memref<8x1xf32, #tpu.memory_space<vmem>>, %arg5: memref<8x1xf32, #tpu.memory_space<vmem>>, %arg6: memref<8x8192xf32, #tpu.memory_space<vmem>>, %arg7: memref<4x8x8192xf32, #tpu.memory_space<vmem>>, %arg8: memref<8x8192xf32, #tpu.memory_space<vmem>>, %arg9: memref<8x8192xf32, #tpu.memory_space<vmem>>) attributes {dimension_semantics = [#tpu.dimension_semantics<arbitrary>], iteration_bounds = array<i64: 4>, scalar_prefetch = 0 : i64, scratch_operands = 3 : i64, tpu.core_type = #tpu.core_type<tc>, window_params = [{transform_indices = @transform_0, window_bounds = array<i64: 48, 8192>}, {pipeline_mode = #tpu.pipeline_mode<synchronous>, transform_indices = @transform_1, window_bounds = array<i64: 8, 48>}, {pipeline_mode = #tpu.pipeline_mode<synchronous>, transform_indices = @transform_2, window_bounds = array<i64: 8, 1>}, {pipeline_mode = #tpu.pipeline_mode<synchronous>, transform_indices = @transform_3, window_bounds = array<i64: 8, 1>}, {pipeline_mode = #tpu.pipeline_mode<synchronous>, transform_indices = @transform_4, window_bounds = array<i64: 8, 1>}, {pipeline_mode = #tpu.pipeline_mode<synchronous>, transform_indices = @transform_5, window_bounds = array<i64: 8, 8192>}]} {
    %c0_i32 = arith.constant 0 : i32
    %0 = arith.cmpi eq, %arg0, %c0_i32 : i32
    %1 = arith.extui %0 : i1 to i32
    %c0_i32_0 = arith.constant 0 : i32
    %2 = arith.cmpi ne, %1, %c0_i32_0 : i32
    scf.if %2 {
      %cst_19 = arith.constant 0.000000e+00 : f32
      %26 = vector.broadcast %cst_19 : f32 to vector<8x8192xf32>
      %c0_20 = arith.constant 0 : index
      %c0_21 = arith.constant 0 : index
      %27 = vector.load %arg8[%c0_20, %c0_21] : memref<8x8192xf32, #tpu.memory_space<vmem>>, vector<8x8192xf32>
      tpu.vector_store %arg8[%c0_20, %c0_21], %26 {strides = array<i32>} : memref<8x8192xf32, #tpu.memory_space<vmem>>, vector<8x8192xf32>,
      %cst_22 = arith.constant 0.000000e+00 : f32
      %28 = vector.broadcast %cst_22 : f32 to vector<8x8192xf32>
      %c0_23 = arith.constant 0 : index
      %c0_24 = arith.constant 0 : index
      %29 = vector.load %arg9[%c0_23, %c0_24] : memref<8x8192xf32, #tpu.memory_space<vmem>>, vector<8x8192xf32>
      tpu.vector_store %arg9[%c0_23, %c0_24], %28 {strides = array<i32>} : memref<8x8192xf32, #tpu.memory_space<vmem>>, vector<8x8192xf32>,
    } else {
    }
    %c0 = arith.constant 0 : index
    %c0_1 = arith.constant 0 : index
    %3 = vector.load %arg2[%c0, %c0_1] : memref<8x48xbf16, #tpu.memory_space<vmem>>, vector<8x48xbf16>
    %c0_2 = arith.constant 0 : index
    %c0_3 = arith.constant 0 : index
    %4 = vector.load %arg1[%c0_2, %c0_3] : memref<48x8192xbf16, #tpu.memory_space<vmem>>, vector<48x8192xbf16>
    %cst = arith.constant dense<0.000000e+00> : vector<8x8192xf32>
    %5 = tpu.matmul %3, %4, %cst {dimension_numbers = #tpu.dot_dimension_numbers<[1], [0], [0], [1], [0, 0, 1, 1], [], []>} : vector<8x48xbf16>, vector<48x8192xbf16>, vector<8x8192xf32> -> vector<8x8192xf32>
    %c0_4 = arith.constant 0 : index
    %c0_5 = arith.constant 0 : index
    %6 = vector.load %arg3[%c0_4, %c0_5] : memref<8x1xf32, #tpu.memory_space<vmem>>, vector<8x1xf32>
    %7 = vector.broadcast %6 : vector<8x1xf32> to vector<8x8192xf32>
    %8 = arith.addf %5, %7 : vector<8x8192xf32>
    %9 = arith.index_cast %arg0 : i32 to index
    %c0_6 = arith.constant 0 : index
    %c0_7 = arith.constant 0 : index
    %10 = vector.load %arg7[%9, %c0_6, %c0_7] : memref<4x8x8192xf32, #tpu.memory_space<vmem>>, vector<1x8x8192xf32>
    %11 = vector.shape_cast %10 : vector<1x8x8192xf32> to vector<8x8192xf32>
    %12 = vector.shape_cast %8 : vector<8x8192xf32> to vector<1x8x8192xf32>
    tpu.vector_store %arg7[%9, %c0_6, %c0_7], %12 {strides = array<i32>} : memref<4x8x8192xf32, #tpu.memory_space<vmem>>, vector<1x8x8192xf32>,
    %13 = arith.index_cast %arg0 : i32 to index
    %c0_8 = arith.constant 0 : index
    %c0_9 = arith.constant 0 : index
    %14 = vector.load %arg7[%13, %c0_8, %c0_9] : memref<4x8x8192xf32, #tpu.memory_space<vmem>>, vector<1x8x8192xf32>
    %15 = vector.shape_cast %14 : vector<1x8x8192xf32> to vector<8x8192xf32>
    %c0_10 = arith.constant 0 : index
    %c0_11 = arith.constant 0 : index
    %16 = vector.load %arg8[%c0_10, %c0_11] : memref<8x8192xf32, #tpu.memory_space<vmem>>, vector<8x8192xf32>
    %17 = arith.addf %16, %15 : vector<8x8192xf32>
    %c0_12 = arith.constant 0 : index
    %c0_13 = arith.constant 0 : index
    %18 = vector.load %arg8[%c0_12, %c0_13] : memref<8x8192xf32, #tpu.memory_space<vmem>>, vector<8x8192xf32>
    tpu.vector_store %arg8[%c0_12, %c0_13], %17 {strides = array<i32>} : memref<8x8192xf32, #tpu.memory_space<vmem>>, vector<8x8192xf32>,
    %c0_14 = arith.constant 0 : index
    %c0_15 = arith.constant 0 : index
    %19 = vector.load %arg9[%c0_14, %c0_15] : memref<8x8192xf32, #tpu.memory_space<vmem>>, vector<8x8192xf32>
    %20 = arith.mulf %15, %15 : vector<8x8192xf32>
    %21 = arith.addf %19, %20 : vector<8x8192xf32>
    %c0_16 = arith.constant 0 : index
    %c0_17 = arith.constant 0 : index
    %22 = vector.load %arg9[%c0_16, %c0_17] : memref<8x8192xf32, #tpu.memory_space<vmem>>, vector<8x8192xf32>
    tpu.vector_store %arg9[%c0_16, %c0_17], %21 {strides = array<i32>} : memref<8x8192xf32, #tpu.memory_space<vmem>>, vector<8x8192xf32>,
    %c3_i32 = arith.constant 3 : i32
    %23 = arith.cmpi eq, %arg0, %c3_i32 : i32
    %24 = arith.extui %23 : i1 to i32
    %c0_i32_18 = arith.constant 0 : i32
    %25 = arith.cmpi ne, %24, %c0_i32_18 : i32
    scf.if %25 {
      %c0_19 = arith.constant 0 : index
      %c0_20 = arith.constant 0 : index
      %26 = vector.load %arg8[%c0_19, %c0_20] : memref<8x8192xf32, #tpu.memory_space<vmem>>, vector<8x8192xf32>
      %cst_21 = arith.constant dense<0.000000e+00> : vector<8xf32>
      %27 = vector.multi_reduction <add>, %26, %cst_21 [1] : vector<8x8192xf32> to vector<8xf32>
      %28 = vector.shape_cast %27 : vector<8xf32> to vector<8x1xf32>
      %c0_22 = arith.constant 0 : index
      %c0_23 = arith.constant 0 : index
      %29 = vector.load %arg9[%c0_22, %c0_23] : memref<8x8192xf32, #tpu.memory_space<vmem>>, vector<8x8192xf32>
      %cst_24 = arith.constant dense<0.000000e+00> : vector<8xf32>
      %30 = vector.multi_reduction <add>, %29, %cst_24 [1] : vector<8x8192xf32> to vector<8xf32>
      %31 = vector.shape_cast %30 : vector<8xf32> to vector<8x1xf32>
      %cst_25 = arith.constant 3.05175781E-5 : f32
      %32 = vector.broadcast %cst_25 : f32 to vector<8x1xf32>
      %33 = arith.mulf %28, %32 : vector<8x1xf32>
      %cst_26 = arith.constant 3.05175781E-5 : f32
      %34 = vector.broadcast %cst_26 : f32 to vector<8x1xf32>
      %35 = arith.mulf %31, %34 : vector<8x1xf32>
      %36 = arith.mulf %33, %33 : vector<8x1xf32>
      %37 = arith.subf %35, %36 : vector<8x1xf32>
      %c0_27 = arith.constant 0 : index
      %c0_28 = arith.constant 0 : index
      %38 = vector.load %arg4[%c0_27, %c0_28] : memref<8x1xf32, #tpu.memory_space<vmem>>, vector<8x1xf32>
      %cst_29 = arith.constant 9.99999974E-6 : f32
      %39 = vector.broadcast %cst_29 : f32 to vector<8x1xf32>
      %40 = arith.addf %37, %39 : vector<8x1xf32>
      %41 = math.rsqrt %40 : vector<8x1xf32>
      %42 = arith.mulf %38, %41 : vector<8x1xf32>
      %c0_30 = arith.constant 0 : index
      %c0_31 = arith.constant 0 : index
      %43 = vector.load %arg5[%c0_30, %c0_31] : memref<8x1xf32, #tpu.memory_space<vmem>>, vector<8x1xf32>
      %44 = arith.mulf %33, %42 : vector<8x1xf32>
      %45 = arith.subf %43, %44 : vector<8x1xf32>
      %c0_32 = arith.constant 0 : index
      %c0_33 = arith.constant 0 : index
      %c0_34 = arith.constant 0 : index
      %46 = vector.load %arg7[%c0_32, %c0_33, %c0_34] : memref<4x8x8192xf32, #tpu.memory_space<vmem>>, vector<1x8x2048xf32>
      %47 = vector.shape_cast %46 : vector<1x8x2048xf32> to vector<8x2048xf32>
      %48 = vector.broadcast %42 : vector<8x1xf32> to vector<8x2048xf32>
      %49 = arith.mulf %47, %48 : vector<8x2048xf32>
      %50 = vector.broadcast %45 : vector<8x1xf32> to vector<8x2048xf32>
      %51 = arith.addf %49, %50 : vector<8x2048xf32>
      %cst_35 = arith.constant 0.000000e+00 : f32
      %52 = vector.broadcast %cst_35 : f32 to vector<8x2048xf32>
      %53 = arith.maximumf %51, %52 : vector<8x2048xf32>
      %c0_36 = arith.constant 0 : index
      %c0_37 = arith.constant 0 : index
      %c2048 = arith.constant 2048 : index
      %54 = vector.load %arg7[%c0_36, %c0_37, %c2048] : memref<4x8x8192xf32, #tpu.memory_space<vmem>>, vector<1x8x2048xf32>
      %55 = vector.shape_cast %54 : vector<1x8x2048xf32> to vector<8x2048xf32>
      %56 = vector.broadcast %42 : vector<8x1xf32> to vector<8x2048xf32>
      %57 = arith.mulf %55, %56 : vector<8x2048xf32>
      %58 = vector.broadcast %45 : vector<8x1xf32> to vector<8x2048xf32>
      %59 = arith.addf %57, %58 : vector<8x2048xf32>
      %cst_38 = arith.constant 0.000000e+00 : f32
      %60 = vector.broadcast %cst_38 : f32 to vector<8x2048xf32>
      %61 = arith.maximumf %59, %60 : vector<8x2048xf32>
      %62 = arith.maximumf %53, %61 : vector<8x2048xf32>
      %c0_39 = arith.constant 0 : index
      %c0_40 = arith.constant 0 : index
      %c4096 = arith.constant 4096 : index
      %63 = vector.load %arg7[%c0_39, %c0_40, %c4096] : memref<4x8x8192xf32, #tpu.memory_space<vmem>>, vector<1x8x2048xf32>
      %64 = vector.shape_cast %63 : vector<1x8x2048xf32> to vector<8x2048xf32>
      %65 = vector.broadcast %42 : vector<8x1xf32> to vector<8x2048xf32>
      %66 = arith.mulf %64, %65 : vector<8x2048xf32>
      %67 = vector.broadcast %45 : vector<8x1xf32> to vector<8x2048xf32>
      %68 = arith.addf %66, %67 : vector<8x2048xf32>
      %cst_41 = arith.constant 0.000000e+00 : f32
      %69 = vector.broadcast %cst_41 : f32 to vector<8x2048xf32>
      %70 = arith.maximumf %68, %69 : vector<8x2048xf32>
      %71 = arith.maximumf %62, %70 : vector<8x2048xf32>
      %c0_42 = arith.constant 0 : index
      %c0_43 = arith.constant 0 : index
      %c6144 = arith.constant 6144 : index
      %72 = vector.load %arg7[%c0_42, %c0_43, %c6144] : memref<4x8x8192xf32, #tpu.memory_space<vmem>>, vector<1x8x2048xf32>
      %73 = vector.shape_cast %72 : vector<1x8x2048xf32> to vector<8x2048xf32>
      %74 = vector.broadcast %42 : vector<8x1xf32> to vector<8x2048xf32>
      %75 = arith.mulf %73, %74 : vector<8x2048xf32>
      %76 = vector.broadcast %45 : vector<8x1xf32> to vector<8x2048xf32>
      %77 = arith.addf %75, %76 : vector<8x2048xf32>
      %cst_44 = arith.constant 0.000000e+00 : f32
      %78 = vector.broadcast %cst_44 : f32 to vector<8x2048xf32>
      %79 = arith.maximumf %77, %78 : vector<8x2048xf32>
      %80 = arith.maximumf %71, %79 : vector<8x2048xf32>
      %c0_45 = arith.constant 0 : index
      %c0_46 = arith.constant 0 : index
      %81 = vector.load %arg6[%c0_45, %c0_46] : memref<8x8192xf32, #tpu.memory_space<vmem>>, vector<8x2048xf32>
      tpu.vector_store %arg6[%c0_45, %c0_46], %80 {strides = array<i32>} : memref<8x8192xf32, #tpu.memory_space<vmem>>, vector<8x2048xf32>,
      %c1 = arith.constant 1 : index
      %c0_47 = arith.constant 0 : index
      %c0_48 = arith.constant 0 : index
      %82 = vector.load %arg7[%c1, %c0_47, %c0_48] : memref<4x8x8192xf32, #tpu.memory_space<vmem>>, vector<1x8x2048xf32>
      %83 = vector.shape_cast %82 : vector<1x8x2048xf32> to vector<8x2048xf32>
      %84 = vector.broadcast %42 : vector<8x1xf32> to vector<8x2048xf32>
      %85 = arith.mulf %83, %84 : vector<8x2048xf32>
      %86 = vector.broadcast %45 : vector<8x1xf32> to vector<8x2048xf32>
      %87 = arith.addf %85, %86 : vector<8x2048xf32>
      %cst_49 = arith.constant 0.000000e+00 : f32
      %88 = vector.broadcast %cst_49 : f32 to vector<8x2048xf32>
      %89 = arith.maximumf %87, %88 : vector<8x2048xf32>
      %c1_50 = arith.constant 1 : index
      %c0_51 = arith.constant 0 : index
      %c2048_52 = arith.constant 2048 : index
      %90 = vector.load %arg7[%c1_50, %c0_51, %c2048_52] : memref<4x8x8192xf32, #tpu.memory_space<vmem>>, vector<1x8x2048xf32>
      %91 = vector.shape_cast %90 : vector<1x8x2048xf32> to vector<8x2048xf32>
      %92 = vector.broadcast %42 : vector<8x1xf32> to vector<8x2048xf32>
      %93 = arith.mulf %91, %92 : vector<8x2048xf32>
      %94 = vector.broadcast %45 : vector<8x1xf32> to vector<8x2048xf32>
      %95 = arith.addf %93, %94 : vector<8x2048xf32>
      %cst_53 = arith.constant 0.000000e+00 : f32
      %96 = vector.broadcast %cst_53 : f32 to vector<8x2048xf32>
      %97 = arith.maximumf %95, %96 : vector<8x2048xf32>
      %98 = arith.maximumf %89, %97 : vector<8x2048xf32>
      %c1_54 = arith.constant 1 : index
      %c0_55 = arith.constant 0 : index
      %c4096_56 = arith.constant 4096 : index
      %99 = vector.load %arg7[%c1_54, %c0_55, %c4096_56] : memref<4x8x8192xf32, #tpu.memory_space<vmem>>, vector<1x8x2048xf32>
      %100 = vector.shape_cast %99 : vector<1x8x2048xf32> to vector<8x2048xf32>
      %101 = vector.broadcast %42 : vector<8x1xf32> to vector<8x2048xf32>
      %102 = arith.mulf %100, %101 : vector<8x2048xf32>
      %103 = vector.broadcast %45 : vector<8x1xf32> to vector<8x2048xf32>
      %104 = arith.addf %102, %103 : vector<8x2048xf32>
      %cst_57 = arith.constant 0.000000e+00 : f32
      %105 = vector.broadcast %cst_57 : f32 to vector<8x2048xf32>
      %106 = arith.maximumf %104, %105 : vector<8x2048xf32>
      %107 = arith.maximumf %98, %106 : vector<8x2048xf32>
      %c1_58 = arith.constant 1 : index
      %c0_59 = arith.constant 0 : index
      %c6144_60 = arith.constant 6144 : index
      %108 = vector.load %arg7[%c1_58, %c0_59, %c6144_60] : memref<4x8x8192xf32, #tpu.memory_space<vmem>>, vector<1x8x2048xf32>
      %109 = vector.shape_cast %108 : vector<1x8x2048xf32> to vector<8x2048xf32>
      %110 = vector.broadcast %42 : vector<8x1xf32> to vector<8x2048xf32>
      %111 = arith.mulf %109, %110 : vector<8x2048xf32>
      %112 = vector.broadcast %45 : vector<8x1xf32> to vector<8x2048xf32>
      %113 = arith.addf %111, %112 : vector<8x2048xf32>
      %cst_61 = arith.constant 0.000000e+00 : f32
      %114 = vector.broadcast %cst_61 : f32 to vector<8x2048xf32>
      %115 = arith.maximumf %113, %114 : vector<8x2048xf32>
      %116 = arith.maximumf %107, %115 : vector<8x2048xf32>
      %c0_62 = arith.constant 0 : index
      %c2048_63 = arith.constant 2048 : index
      %117 = vector.load %arg6[%c0_62, %c2048_63] : memref<8x8192xf32, #tpu.memory_space<vmem>>, vector<8x2048xf32>
      tpu.vector_store %arg6[%c0_62, %c2048_63], %116 {strides = array<i32>} : memref<8x8192xf32, #tpu.memory_space<vmem>>, vector<8x2048xf32>,
      %c2 = arith.constant 2 : index
      %c0_64 = arith.constant 0 : index
      %c0_65 = arith.constant 0 : index
      %118 = vector.load %arg7[%c2, %c0_64, %c0_65] : memref<4x8x8192xf32, #tpu.memory_space<vmem>>, vector<1x8x2048xf32>
      %119 = vector.shape_cast %118 : vector<1x8x2048xf32> to vector<8x2048xf32>
      %120 = vector.broadcast %42 : vector<8x1xf32> to vector<8x2048xf32>
      %121 = arith.mulf %119, %120 : vector<8x2048xf32>
      %122 = vector.broadcast %45 : vector<8x1xf32> to vector<8x2048xf32>
      %123 = arith.addf %121, %122 : vector<8x2048xf32>
      %cst_66 = arith.constant 0.000000e+00 : f32
      %124 = vector.broadcast %cst_66 : f32 to vector<8x2048xf32>
      %125 = arith.maximumf %123, %124 : vector<8x2048xf32>
      %c2_67 = arith.constant 2 : index
      %c0_68 = arith.constant 0 : index
      %c2048_69 = arith.constant 2048 : index
      %126 = vector.load %arg7[%c2_67, %c0_68, %c2048_69] : memref<4x8x8192xf32, #tpu.memory_space<vmem>>, vector<1x8x2048xf32>
      %127 = vector.shape_cast %126 : vector<1x8x2048xf32> to vector<8x2048xf32>
      %128 = vector.broadcast %42 : vector<8x1xf32> to vector<8x2048xf32>
      %129 = arith.mulf %127, %128 : vector<8x2048xf32>
      %130 = vector.broadcast %45 : vector<8x1xf32> to vector<8x2048xf32>
      %131 = arith.addf %129, %130 : vector<8x2048xf32>
      %cst_70 = arith.constant 0.000000e+00 : f32
      %132 = vector.broadcast %cst_70 : f32 to vector<8x2048xf32>
      %133 = arith.maximumf %131, %132 : vector<8x2048xf32>
      %134 = arith.maximumf %125, %133 : vector<8x2048xf32>
      %c2_71 = arith.constant 2 : index
      %c0_72 = arith.constant 0 : index
      %c4096_73 = arith.constant 4096 : index
      %135 = vector.load %arg7[%c2_71, %c0_72, %c4096_73] : memref<4x8x8192xf32, #tpu.memory_space<vmem>>, vector<1x8x2048xf32>
      %136 = vector.shape_cast %135 : vector<1x8x2048xf32> to vector<8x2048xf32>
      %137 = vector.broadcast %42 : vector<8x1xf32> to vector<8x2048xf32>
      %138 = arith.mulf %136, %137 : vector<8x2048xf32>
      %139 = vector.broadcast %45 : vector<8x1xf32> to vector<8x2048xf32>
      %140 = arith.addf %138, %139 : vector<8x2048xf32>
      %cst_74 = arith.constant 0.000000e+00 : f32
      %141 = vector.broadcast %cst_74 : f32 to vector<8x2048xf32>
      %142 = arith.maximumf %140, %141 : vector<8x2048xf32>
      %143 = arith.maximumf %134, %142 : vector<8x2048xf32>
      %c2_75 = arith.constant 2 : index
      %c0_76 = arith.constant 0 : index
      %c6144_77 = arith.constant 6144 : index
      %144 = vector.load %arg7[%c2_75, %c0_76, %c6144_77] : memref<4x8x8192xf32, #tpu.memory_space<vmem>>, vector<1x8x2048xf32>
      %145 = vector.shape_cast %144 : vector<1x8x2048xf32> to vector<8x2048xf32>
      %146 = vector.broadcast %42 : vector<8x1xf32> to vector<8x2048xf32>
      %147 = arith.mulf %145, %146 : vector<8x2048xf32>
      %148 = vector.broadcast %45 : vector<8x1xf32> to vector<8x2048xf32>
      %149 = arith.addf %147, %148 : vector<8x2048xf32>
      %cst_78 = arith.constant 0.000000e+00 : f32
      %150 = vector.broadcast %cst_78 : f32 to vector<8x2048xf32>
      %151 = arith.maximumf %149, %150 : vector<8x2048xf32>
      %152 = arith.maximumf %143, %151 : vector<8x2048xf32>
      %c0_79 = arith.constant 0 : index
      %c4096_80 = arith.constant 4096 : index
      %153 = vector.load %arg6[%c0_79, %c4096_80] : memref<8x8192xf32, #tpu.memory_space<vmem>>, vector<8x2048xf32>
      tpu.vector_store %arg6[%c0_79, %c4096_80], %152 {strides = array<i32>} : memref<8x8192xf32, #tpu.memory_space<vmem>>, vector<8x2048xf32>,
      %c3 = arith.constant 3 : index
      %c0_81 = arith.constant 0 : index
      %c0_82 = arith.constant 0 : index
      %154 = vector.load %arg7[%c3, %c0_81, %c0_82] : memref<4x8x8192xf32, #tpu.memory_space<vmem>>, vector<1x8x2048xf32>
      %155 = vector.shape_cast %154 : vector<1x8x2048xf32> to vector<8x2048xf32>
      %156 = vector.broadcast %42 : vector<8x1xf32> to vector<8x2048xf32>
      %157 = arith.mulf %155, %156 : vector<8x2048xf32>
      %158 = vector.broadcast %45 : vector<8x1xf32> to vector<8x2048xf32>
      %159 = arith.addf %157, %158 : vector<8x2048xf32>
      %cst_83 = arith.constant 0.000000e+00 : f32
      %160 = vector.broadcast %cst_83 : f32 to vector<8x2048xf32>
      %161 = arith.maximumf %159, %160 : vector<8x2048xf32>
      %c3_84 = arith.constant 3 : index
      %c0_85 = arith.constant 0 : index
      %c2048_86 = arith.constant 2048 : index
      %162 = vector.load %arg7[%c3_84, %c0_85, %c2048_86] : memref<4x8x8192xf32, #tpu.memory_space<vmem>>, vector<1x8x2048xf32>
      %163 = vector.shape_cast %162 : vector<1x8x2048xf32> to vector<8x2048xf32>
      %164 = vector.broadcast %42 : vector<8x1xf32> to vector<8x2048xf32>
      %165 = arith.mulf %163, %164 : vector<8x2048xf32>
      %166 = vector.broadcast %45 : vector<8x1xf32> to vector<8x2048xf32>
      %167 = arith.addf %165, %166 : vector<8x2048xf32>
      %cst_87 = arith.constant 0.000000e+00 : f32
      %168 = vector.broadcast %cst_87 : f32 to vector<8x2048xf32>
      %169 = arith.maximumf %167, %168 : vector<8x2048xf32>
      %170 = arith.maximumf %161, %169 : vector<8x2048xf32>
      %c3_88 = arith.constant 3 : index
      %c0_89 = arith.constant 0 : index
      %c4096_90 = arith.constant 4096 : index
      %171 = vector.load %arg7[%c3_88, %c0_89, %c4096_90] : memref<4x8x8192xf32, #tpu.memory_space<vmem>>, vector<1x8x2048xf32>
      %172 = vector.shape_cast %171 : vector<1x8x2048xf32> to vector<8x2048xf32>
      %173 = vector.broadcast %42 : vector<8x1xf32> to vector<8x2048xf32>
      %174 = arith.mulf %172, %173 : vector<8x2048xf32>
      %175 = vector.broadcast %45 : vector<8x1xf32> to vector<8x2048xf32>
      %176 = arith.addf %174, %175 : vector<8x2048xf32>
      %cst_91 = arith.constant 0.000000e+00 : f32
      %177 = vector.broadcast %cst_91 : f32 to vector<8x2048xf32>
      %178 = arith.maximumf %176, %177 : vector<8x2048xf32>
      %179 = arith.maximumf %170, %178 : vector<8x2048xf32>
      %c3_92 = arith.constant 3 : index
      %c0_93 = arith.constant 0 : index
      %c6144_94 = arith.constant 6144 : index
      %180 = vector.load %arg7[%c3_92, %c0_93, %c6144_94] : memref<4x8x8192xf32, #tpu.memory_space<vmem>>, vector<1x8x2048xf32>
      %181 = vector.shape_cast %180 : vector<1x8x2048xf32> to vector<8x2048xf32>
      %182 = vector.broadcast %42 : vector<8x1xf32> to vector<8x2048xf32>
      %183 = arith.mulf %181, %182 : vector<8x2048xf32>
      %184 = vector.broadcast %45 : vector<8x1xf32> to vector<8x2048xf32>
      %185 = arith.addf %183, %184 : vector<8x2048xf32>
      %cst_95 = arith.constant 0.000000e+00 : f32
      %186 = vector.broadcast %cst_95 : f32 to vector<8x2048xf32>
      %187 = arith.maximumf %185, %186 : vector<8x2048xf32>
      %188 = arith.maximumf %179, %187 : vector<8x2048xf32>
      %c0_96 = arith.constant 0 : index
      %c6144_97 = arith.constant 6144 : index
      %189 = vector.load %arg6[%c0_96, %c6144_97] : memref<8x8192xf32, #tpu.memory_space<vmem>>, vector<8x2048xf32>
      tpu.vector_store %arg6[%c0_96, %c6144_97], %188 {strides = array<i32>} : memref<8x8192xf32, #tpu.memory_space<vmem>>, vector<8x2048xf32>,
    } else {
    }
    return
  }
  func.func @transform_0(%arg0: i32) -> (i32, i32) {
    %c0_i32 = arith.constant 0 : i32
    %c0_i32_0 = arith.constant 0 : i32
    return %c0_i32, %arg0 : i32, i32
  }
  func.func @transform_1(%arg0: i32) -> (i32, i32) {
    %c0_i32 = arith.constant 0 : i32
    %c0_i32_0 = arith.constant 0 : i32
    %c0_i32_1 = arith.constant 0 : i32
    return %c0_i32, %c0_i32_0 : i32, i32
  }
  func.func @transform_2(%arg0: i32) -> (i32, i32) {
    %c0_i32 = arith.constant 0 : i32
    %c0_i32_0 = arith.constant 0 : i32
    %c0_i32_1 = arith.constant 0 : i32
    return %c0_i32, %c0_i32_0 : i32, i32
  }
  func.func @transform_3(%arg0: i32) -> (i32, i32) {
    %c0_i32 = arith.constant 0 : i32
    %c0_i32_0 = arith.constant 0 : i32
    %c0_i32_1 = arith.constant 0 : i32
    return %c0_i32, %c0_i32_0 : i32, i32
  }
  func.func @transform_4(%arg0: i32) -> (i32, i32) {
    %c0_i32 = arith.constant 0 : i32
    %c0_i32_0 = arith.constant 0 : i32
    %c0_i32_1 = arith.constant 0 : i32
    return %c0_i32, %c0_i32_0 : i32, i32
  }
  func.func @transform_5(%arg0: i32) -> (i32, i32) {
    %c0_i32 = arith.constant 0 : i32
    %c0_i32_0 = arith.constant 0 : i32
    %c0_i32_1 = arith.constant 0 : i32
    return %c0_i32, %c0_i32_0 : i32, i32
  }
}

module attributes {stable_mosaic.version = 11 : i64} {
  func.func @_fused_layer_kernel(%arg0: i32, %arg1: memref<128x2048xbf16, #tpu.memory_space<vmem>>, %arg2: memref<16x128xbf16, #tpu.memory_space<vmem>>, %arg3: memref<16x1xf32, #tpu.memory_space<vmem>>, %arg4: memref<16x1xf32, #tpu.memory_space<vmem>>, %arg5: memref<16x1xf32, #tpu.memory_space<vmem>>, %arg6: memref<16x512xf32, #tpu.memory_space<vmem>>, %arg7: memref<1x16x2048xf32, #tpu.memory_space<vmem>>, %arg8: memref<16x2048xf32, #tpu.memory_space<vmem>>, %arg9: memref<16x2048xf32, #tpu.memory_space<vmem>>) attributes {dimension_semantics = [#tpu.dimension_semantics<arbitrary>], iteration_bounds = array<i64: 1>, scalar_prefetch = 0 : i64, scratch_operands = 3 : i64, tpu.core_type = #tpu.core_type<tc>, window_params = [{transform_indices = @transform_0, window_bounds = array<i64: 128, 2048>}, {pipeline_mode = #tpu.pipeline_mode<synchronous>, transform_indices = @transform_1, window_bounds = array<i64: 16, 128>}, {pipeline_mode = #tpu.pipeline_mode<synchronous>, transform_indices = @transform_2, window_bounds = array<i64: 16, 1>}, {pipeline_mode = #tpu.pipeline_mode<synchronous>, transform_indices = @transform_3, window_bounds = array<i64: 16, 1>}, {pipeline_mode = #tpu.pipeline_mode<synchronous>, transform_indices = @transform_4, window_bounds = array<i64: 16, 1>}, {pipeline_mode = #tpu.pipeline_mode<synchronous>, transform_indices = @transform_5, window_bounds = array<i64: 16, 512>}]} {
    %c0_i32 = arith.constant 0 : i32
    %0 = arith.cmpi eq, %arg0, %c0_i32 : i32
    %1 = arith.extui %0 : i1 to i32
    %c0_i32_0 = arith.constant 0 : i32
    %2 = arith.cmpi ne, %1, %c0_i32_0 : i32
    scf.if %2 {
      %cst_20 = arith.constant 0.000000e+00 : f32
      %26 = vector.broadcast %cst_20 : f32 to vector<16x2048xf32>
      %c0_21 = arith.constant 0 : index
      %c0_22 = arith.constant 0 : index
      %27 = vector.load %arg8[%c0_21, %c0_22] : memref<16x2048xf32, #tpu.memory_space<vmem>>, vector<16x2048xf32>
      tpu.vector_store %arg8[%c0_21, %c0_22], %26 {strides = array<i32>} : memref<16x2048xf32, #tpu.memory_space<vmem>>, vector<16x2048xf32>,
      %cst_23 = arith.constant 0.000000e+00 : f32
      %28 = vector.broadcast %cst_23 : f32 to vector<16x2048xf32>
      %c0_24 = arith.constant 0 : index
      %c0_25 = arith.constant 0 : index
      %29 = vector.load %arg9[%c0_24, %c0_25] : memref<16x2048xf32, #tpu.memory_space<vmem>>, vector<16x2048xf32>
      tpu.vector_store %arg9[%c0_24, %c0_25], %28 {strides = array<i32>} : memref<16x2048xf32, #tpu.memory_space<vmem>>, vector<16x2048xf32>,
    } else {
    }
    %c0 = arith.constant 0 : index
    %c0_1 = arith.constant 0 : index
    %3 = vector.load %arg2[%c0, %c0_1] : memref<16x128xbf16, #tpu.memory_space<vmem>>, vector<16x128xbf16>
    %c0_2 = arith.constant 0 : index
    %c0_3 = arith.constant 0 : index
    %4 = vector.load %arg1[%c0_2, %c0_3] : memref<128x2048xbf16, #tpu.memory_space<vmem>>, vector<128x2048xbf16>
    %cst = arith.constant dense<0.000000e+00> : vector<16x2048xf32>
    %5 = tpu.matmul %3, %4, %cst {dimension_numbers = #tpu.dot_dimension_numbers<[1], [0], [0], [1], [0, 0, 1, 1], [], []>} : vector<16x128xbf16>, vector<128x2048xbf16>, vector<16x2048xf32> -> vector<16x2048xf32>
    %c0_4 = arith.constant 0 : index
    %c0_5 = arith.constant 0 : index
    %6 = vector.load %arg3[%c0_4, %c0_5] : memref<16x1xf32, #tpu.memory_space<vmem>>, vector<16x1xf32>
    %7 = vector.broadcast %6 : vector<16x1xf32> to vector<16x2048xf32>
    %8 = arith.addf %5, %7 : vector<16x2048xf32>
    %9 = arith.index_cast %arg0 : i32 to index
    %c0_6 = arith.constant 0 : index
    %c0_7 = arith.constant 0 : index
    %10 = vector.load %arg7[%9, %c0_6, %c0_7] : memref<1x16x2048xf32, #tpu.memory_space<vmem>>, vector<1x16x2048xf32>
    %11 = vector.shape_cast %10 : vector<1x16x2048xf32> to vector<16x2048xf32>
    %12 = vector.shape_cast %8 : vector<16x2048xf32> to vector<1x16x2048xf32>
    tpu.vector_store %arg7[%9, %c0_6, %c0_7], %12 {strides = array<i32>} : memref<1x16x2048xf32, #tpu.memory_space<vmem>>, vector<1x16x2048xf32>,
    %13 = arith.index_cast %arg0 : i32 to index
    %c0_8 = arith.constant 0 : index
    %c0_9 = arith.constant 0 : index
    %14 = vector.load %arg7[%13, %c0_8, %c0_9] : memref<1x16x2048xf32, #tpu.memory_space<vmem>>, vector<1x16x2048xf32>
    %15 = vector.shape_cast %14 : vector<1x16x2048xf32> to vector<16x2048xf32>
    %c0_10 = arith.constant 0 : index
    %c0_11 = arith.constant 0 : index
    %16 = vector.load %arg8[%c0_10, %c0_11] : memref<16x2048xf32, #tpu.memory_space<vmem>>, vector<16x2048xf32>
    %17 = arith.addf %16, %15 : vector<16x2048xf32>
    %c0_12 = arith.constant 0 : index
    %c0_13 = arith.constant 0 : index
    %18 = vector.load %arg8[%c0_12, %c0_13] : memref<16x2048xf32, #tpu.memory_space<vmem>>, vector<16x2048xf32>
    tpu.vector_store %arg8[%c0_12, %c0_13], %17 {strides = array<i32>} : memref<16x2048xf32, #tpu.memory_space<vmem>>, vector<16x2048xf32>,
    %c0_14 = arith.constant 0 : index
    %c0_15 = arith.constant 0 : index
    %19 = vector.load %arg9[%c0_14, %c0_15] : memref<16x2048xf32, #tpu.memory_space<vmem>>, vector<16x2048xf32>
    %20 = arith.mulf %15, %15 : vector<16x2048xf32>
    %21 = arith.addf %19, %20 : vector<16x2048xf32>
    %c0_16 = arith.constant 0 : index
    %c0_17 = arith.constant 0 : index
    %22 = vector.load %arg9[%c0_16, %c0_17] : memref<16x2048xf32, #tpu.memory_space<vmem>>, vector<16x2048xf32>
    tpu.vector_store %arg9[%c0_16, %c0_17], %21 {strides = array<i32>} : memref<16x2048xf32, #tpu.memory_space<vmem>>, vector<16x2048xf32>,
    %c0_i32_18 = arith.constant 0 : i32
    %23 = arith.cmpi eq, %arg0, %c0_i32_18 : i32
    %24 = arith.extui %23 : i1 to i32
    %c0_i32_19 = arith.constant 0 : i32
    %25 = arith.cmpi ne, %24, %c0_i32_19 : i32
    scf.if %25 {
      %c0_20 = arith.constant 0 : index
      %c0_21 = arith.constant 0 : index
      %26 = vector.load %arg8[%c0_20, %c0_21] : memref<16x2048xf32, #tpu.memory_space<vmem>>, vector<16x2048xf32>
      %cst_22 = arith.constant dense<0.000000e+00> : vector<16xf32>
      %27 = vector.multi_reduction <add>, %26, %cst_22 [1] : vector<16x2048xf32> to vector<16xf32>
      %28 = vector.shape_cast %27 : vector<16xf32> to vector<16x1xf32>
      %c0_23 = arith.constant 0 : index
      %c0_24 = arith.constant 0 : index
      %29 = vector.load %arg9[%c0_23, %c0_24] : memref<16x2048xf32, #tpu.memory_space<vmem>>, vector<16x2048xf32>
      %cst_25 = arith.constant dense<0.000000e+00> : vector<16xf32>
      %30 = vector.multi_reduction <add>, %29, %cst_25 [1] : vector<16x2048xf32> to vector<16xf32>
      %31 = vector.shape_cast %30 : vector<16xf32> to vector<16x1xf32>
      %cst_26 = arith.constant 4.8828125E-4 : f32
      %32 = vector.broadcast %cst_26 : f32 to vector<16x1xf32>
      %33 = arith.mulf %28, %32 : vector<16x1xf32>
      %cst_27 = arith.constant 4.8828125E-4 : f32
      %34 = vector.broadcast %cst_27 : f32 to vector<16x1xf32>
      %35 = arith.mulf %31, %34 : vector<16x1xf32>
      %36 = arith.mulf %33, %33 : vector<16x1xf32>
      %37 = arith.subf %35, %36 : vector<16x1xf32>
      %c0_28 = arith.constant 0 : index
      %c0_29 = arith.constant 0 : index
      %38 = vector.load %arg4[%c0_28, %c0_29] : memref<16x1xf32, #tpu.memory_space<vmem>>, vector<16x1xf32>
      %cst_30 = arith.constant 9.99999974E-6 : f32
      %39 = vector.broadcast %cst_30 : f32 to vector<16x1xf32>
      %40 = arith.addf %37, %39 : vector<16x1xf32>
      %41 = math.rsqrt %40 : vector<16x1xf32>
      %42 = arith.mulf %38, %41 : vector<16x1xf32>
      %c0_31 = arith.constant 0 : index
      %c0_32 = arith.constant 0 : index
      %43 = vector.load %arg5[%c0_31, %c0_32] : memref<16x1xf32, #tpu.memory_space<vmem>>, vector<16x1xf32>
      %44 = arith.mulf %33, %42 : vector<16x1xf32>
      %45 = arith.subf %43, %44 : vector<16x1xf32>
      %c0_33 = arith.constant 0 : index
      %c0_34 = arith.constant 0 : index
      %c0_35 = arith.constant 0 : index
      %46 = vector.load %arg7[%c0_33, %c0_34, %c0_35] : memref<1x16x2048xf32, #tpu.memory_space<vmem>>, vector<1x16x512xf32>
      %47 = vector.shape_cast %46 : vector<1x16x512xf32> to vector<16x512xf32>
      %48 = vector.broadcast %42 : vector<16x1xf32> to vector<16x512xf32>
      %49 = arith.mulf %47, %48 : vector<16x512xf32>
      %50 = vector.broadcast %45 : vector<16x1xf32> to vector<16x512xf32>
      %51 = arith.addf %49, %50 : vector<16x512xf32>
      %cst_36 = arith.constant 0.000000e+00 : f32
      %52 = vector.broadcast %cst_36 : f32 to vector<16x512xf32>
      %53 = arith.maximumf %51, %52 : vector<16x512xf32>
      %c0_37 = arith.constant 0 : index
      %c0_38 = arith.constant 0 : index
      %c512 = arith.constant 512 : index
      %54 = vector.load %arg7[%c0_37, %c0_38, %c512] : memref<1x16x2048xf32, #tpu.memory_space<vmem>>, vector<1x16x512xf32>
      %55 = vector.shape_cast %54 : vector<1x16x512xf32> to vector<16x512xf32>
      %56 = vector.broadcast %42 : vector<16x1xf32> to vector<16x512xf32>
      %57 = arith.mulf %55, %56 : vector<16x512xf32>
      %58 = vector.broadcast %45 : vector<16x1xf32> to vector<16x512xf32>
      %59 = arith.addf %57, %58 : vector<16x512xf32>
      %cst_39 = arith.constant 0.000000e+00 : f32
      %60 = vector.broadcast %cst_39 : f32 to vector<16x512xf32>
      %61 = arith.maximumf %59, %60 : vector<16x512xf32>
      %62 = arith.maximumf %53, %61 : vector<16x512xf32>
      %c0_40 = arith.constant 0 : index
      %c0_41 = arith.constant 0 : index
      %c1024 = arith.constant 1024 : index
      %63 = vector.load %arg7[%c0_40, %c0_41, %c1024] : memref<1x16x2048xf32, #tpu.memory_space<vmem>>, vector<1x16x512xf32>
      %64 = vector.shape_cast %63 : vector<1x16x512xf32> to vector<16x512xf32>
      %65 = vector.broadcast %42 : vector<16x1xf32> to vector<16x512xf32>
      %66 = arith.mulf %64, %65 : vector<16x512xf32>
      %67 = vector.broadcast %45 : vector<16x1xf32> to vector<16x512xf32>
      %68 = arith.addf %66, %67 : vector<16x512xf32>
      %cst_42 = arith.constant 0.000000e+00 : f32
      %69 = vector.broadcast %cst_42 : f32 to vector<16x512xf32>
      %70 = arith.maximumf %68, %69 : vector<16x512xf32>
      %71 = arith.maximumf %62, %70 : vector<16x512xf32>
      %c0_43 = arith.constant 0 : index
      %c0_44 = arith.constant 0 : index
      %c1536 = arith.constant 1536 : index
      %72 = vector.load %arg7[%c0_43, %c0_44, %c1536] : memref<1x16x2048xf32, #tpu.memory_space<vmem>>, vector<1x16x512xf32>
      %73 = vector.shape_cast %72 : vector<1x16x512xf32> to vector<16x512xf32>
      %74 = vector.broadcast %42 : vector<16x1xf32> to vector<16x512xf32>
      %75 = arith.mulf %73, %74 : vector<16x512xf32>
      %76 = vector.broadcast %45 : vector<16x1xf32> to vector<16x512xf32>
      %77 = arith.addf %75, %76 : vector<16x512xf32>
      %cst_45 = arith.constant 0.000000e+00 : f32
      %78 = vector.broadcast %cst_45 : f32 to vector<16x512xf32>
      %79 = arith.maximumf %77, %78 : vector<16x512xf32>
      %80 = arith.maximumf %71, %79 : vector<16x512xf32>
      %c0_46 = arith.constant 0 : index
      %c0_47 = arith.constant 0 : index
      %81 = vector.load %arg6[%c0_46, %c0_47] : memref<16x512xf32, #tpu.memory_space<vmem>>, vector<16x512xf32>
      tpu.vector_store %arg6[%c0_46, %c0_47], %80 {strides = array<i32>} : memref<16x512xf32, #tpu.memory_space<vmem>>, vector<16x512xf32>,
    } else {
    }
    return
  }
  func.func @transform_0(%arg0: i32) -> (i32, i32) {
    %c0_i32 = arith.constant 0 : i32
    %c0_i32_0 = arith.constant 0 : i32
    return %c0_i32, %arg0 : i32, i32
  }
  func.func @transform_1(%arg0: i32) -> (i32, i32) {
    %c0_i32 = arith.constant 0 : i32
    %c0_i32_0 = arith.constant 0 : i32
    %c0_i32_1 = arith.constant 0 : i32
    return %c0_i32, %c0_i32_0 : i32, i32
  }
  func.func @transform_2(%arg0: i32) -> (i32, i32) {
    %c0_i32 = arith.constant 0 : i32
    %c0_i32_0 = arith.constant 0 : i32
    %c0_i32_1 = arith.constant 0 : i32
    return %c0_i32, %c0_i32_0 : i32, i32
  }
  func.func @transform_3(%arg0: i32) -> (i32, i32) {
    %c0_i32 = arith.constant 0 : i32
    %c0_i32_0 = arith.constant 0 : i32
    %c0_i32_1 = arith.constant 0 : i32
    return %c0_i32, %c0_i32_0 : i32, i32
  }
  func.func @transform_4(%arg0: i32) -> (i32, i32) {
    %c0_i32 = arith.constant 0 : i32
    %c0_i32_0 = arith.constant 0 : i32
    %c0_i32_1 = arith.constant 0 : i32
    return %c0_i32, %c0_i32_0 : i32, i32
  }
  func.func @transform_5(%arg0: i32) -> (i32, i32) {
    %c0_i32 = arith.constant 0 : i32
    %c0_i32_0 = arith.constant 0 : i32
    %c0_i32_1 = arith.constant 0 : i32
    return %c0_i32, %c0_i32_0 : i32, i32
  }
}

module attributes {stable_mosaic.version = 11 : i64} {
  func.func @_fused_layer_kernel(%arg0: i32, %arg1: memref<256x128xbf16, #tpu.memory_space<vmem>>, %arg2: memref<32x256xbf16, #tpu.memory_space<vmem>>, %arg3: memref<32x1xf32, #tpu.memory_space<vmem>>, %arg4: memref<32x1xf32, #tpu.memory_space<vmem>>, %arg5: memref<32x1xf32, #tpu.memory_space<vmem>>, %arg6: memref<32x16xf32, #tpu.memory_space<vmem>>, %arg7: memref<1x1xf32, #tpu.memory_space<vmem>>, %arg8: memref<2x1xf32, #tpu.memory_space<vmem>>, %arg9: memref<1x32x128xf32, #tpu.memory_space<vmem>>, %arg10: memref<32x128xf32, #tpu.memory_space<vmem>>, %arg11: memref<32x128xf32, #tpu.memory_space<vmem>>) attributes {dimension_semantics = [#tpu.dimension_semantics<arbitrary>], iteration_bounds = array<i64: 1>, scalar_prefetch = 0 : i64, scratch_operands = 3 : i64, tpu.core_type = #tpu.core_type<tc>, window_params = [{transform_indices = @transform_0, window_bounds = array<i64: 256, 128>}, {pipeline_mode = #tpu.pipeline_mode<synchronous>, transform_indices = @transform_1, window_bounds = array<i64: 32, 256>}, {pipeline_mode = #tpu.pipeline_mode<synchronous>, transform_indices = @transform_2, window_bounds = array<i64: 32, 1>}, {pipeline_mode = #tpu.pipeline_mode<synchronous>, transform_indices = @transform_3, window_bounds = array<i64: 32, 1>}, {pipeline_mode = #tpu.pipeline_mode<synchronous>, transform_indices = @transform_4, window_bounds = array<i64: 32, 1>}, {pipeline_mode = #tpu.pipeline_mode<synchronous>, transform_indices = @transform_5, window_bounds = array<i64: 32, 16>}, {pipeline_mode = #tpu.pipeline_mode<synchronous>, transform_indices = @transform_6, window_bounds = array<i64: 1, 1>}, {pipeline_mode = #tpu.pipeline_mode<synchronous>, transform_indices = @transform_7, window_bounds = array<i64: 2, 1>}]} {
    %c0_i32 = arith.constant 0 : i32
    %0 = arith.cmpi eq, %arg0, %c0_i32 : i32
    %1 = arith.extui %0 : i1 to i32
    %c0_i32_0 = arith.constant 0 : i32
    %2 = arith.cmpi ne, %1, %c0_i32_0 : i32
    scf.if %2 {
      %cst_20 = arith.constant 0.000000e+00 : f32
      %26 = vector.broadcast %cst_20 : f32 to vector<32x128xf32>
      %c0_21 = arith.constant 0 : index
      %c0_22 = arith.constant 0 : index
      %27 = vector.load %arg10[%c0_21, %c0_22] : memref<32x128xf32, #tpu.memory_space<vmem>>, vector<32x128xf32>
      tpu.vector_store %arg10[%c0_21, %c0_22], %26 {strides = array<i32>} : memref<32x128xf32, #tpu.memory_space<vmem>>, vector<32x128xf32>,
      %cst_23 = arith.constant 0.000000e+00 : f32
      %28 = vector.broadcast %cst_23 : f32 to vector<32x128xf32>
      %c0_24 = arith.constant 0 : index
      %c0_25 = arith.constant 0 : index
      %29 = vector.load %arg11[%c0_24, %c0_25] : memref<32x128xf32, #tpu.memory_space<vmem>>, vector<32x128xf32>
      tpu.vector_store %arg11[%c0_24, %c0_25], %28 {strides = array<i32>} : memref<32x128xf32, #tpu.memory_space<vmem>>, vector<32x128xf32>,
    } else {
    }
    %c0 = arith.constant 0 : index
    %c0_1 = arith.constant 0 : index
    %3 = vector.load %arg2[%c0, %c0_1] : memref<32x256xbf16, #tpu.memory_space<vmem>>, vector<32x256xbf16>
    %c0_2 = arith.constant 0 : index
    %c0_3 = arith.constant 0 : index
    %4 = vector.load %arg1[%c0_2, %c0_3] : memref<256x128xbf16, #tpu.memory_space<vmem>>, vector<256x128xbf16>
    %cst = arith.constant dense<0.000000e+00> : vector<32x128xf32>
    %5 = tpu.matmul %3, %4, %cst {dimension_numbers = #tpu.dot_dimension_numbers<[1], [0], [0], [1], [0, 0, 1, 1], [], []>} : vector<32x256xbf16>, vector<256x128xbf16>, vector<32x128xf32> -> vector<32x128xf32>
    %c0_4 = arith.constant 0 : index
    %c0_5 = arith.constant 0 : index
    %6 = vector.load %arg3[%c0_4, %c0_5] : memref<32x1xf32, #tpu.memory_space<vmem>>, vector<32x1xf32>
    %7 = vector.broadcast %6 : vector<32x1xf32> to vector<32x128xf32>
    %8 = arith.addf %5, %7 : vector<32x128xf32>
    %9 = arith.index_cast %arg0 : i32 to index
    %c0_6 = arith.constant 0 : index
    %c0_7 = arith.constant 0 : index
    %10 = vector.load %arg9[%9, %c0_6, %c0_7] : memref<1x32x128xf32, #tpu.memory_space<vmem>>, vector<1x32x128xf32>
    %11 = vector.shape_cast %10 : vector<1x32x128xf32> to vector<32x128xf32>
    %12 = vector.shape_cast %8 : vector<32x128xf32> to vector<1x32x128xf32>
    tpu.vector_store %arg9[%9, %c0_6, %c0_7], %12 {strides = array<i32>} : memref<1x32x128xf32, #tpu.memory_space<vmem>>, vector<1x32x128xf32>,
    %13 = arith.index_cast %arg0 : i32 to index
    %c0_8 = arith.constant 0 : index
    %c0_9 = arith.constant 0 : index
    %14 = vector.load %arg9[%13, %c0_8, %c0_9] : memref<1x32x128xf32, #tpu.memory_space<vmem>>, vector<1x32x128xf32>
    %15 = vector.shape_cast %14 : vector<1x32x128xf32> to vector<32x128xf32>
    %c0_10 = arith.constant 0 : index
    %c0_11 = arith.constant 0 : index
    %16 = vector.load %arg10[%c0_10, %c0_11] : memref<32x128xf32, #tpu.memory_space<vmem>>, vector<32x128xf32>
    %17 = arith.addf %16, %15 : vector<32x128xf32>
    %c0_12 = arith.constant 0 : index
    %c0_13 = arith.constant 0 : index
    %18 = vector.load %arg10[%c0_12, %c0_13] : memref<32x128xf32, #tpu.memory_space<vmem>>, vector<32x128xf32>
    tpu.vector_store %arg10[%c0_12, %c0_13], %17 {strides = array<i32>} : memref<32x128xf32, #tpu.memory_space<vmem>>, vector<32x128xf32>,
    %c0_14 = arith.constant 0 : index
    %c0_15 = arith.constant 0 : index
    %19 = vector.load %arg11[%c0_14, %c0_15] : memref<32x128xf32, #tpu.memory_space<vmem>>, vector<32x128xf32>
    %20 = arith.mulf %15, %15 : vector<32x128xf32>
    %21 = arith.addf %19, %20 : vector<32x128xf32>
    %c0_16 = arith.constant 0 : index
    %c0_17 = arith.constant 0 : index
    %22 = vector.load %arg11[%c0_16, %c0_17] : memref<32x128xf32, #tpu.memory_space<vmem>>, vector<32x128xf32>
    tpu.vector_store %arg11[%c0_16, %c0_17], %21 {strides = array<i32>} : memref<32x128xf32, #tpu.memory_space<vmem>>, vector<32x128xf32>,
    %c0_i32_18 = arith.constant 0 : i32
    %23 = arith.cmpi eq, %arg0, %c0_i32_18 : i32
    %24 = arith.extui %23 : i1 to i32
    %c0_i32_19 = arith.constant 0 : i32
    %25 = arith.cmpi ne, %24, %c0_i32_19 : i32
    scf.if %25 {
      %c0_20 = arith.constant 0 : index
      %c0_21 = arith.constant 0 : index
      %26 = vector.load %arg10[%c0_20, %c0_21] : memref<32x128xf32, #tpu.memory_space<vmem>>, vector<32x128xf32>
      %cst_22 = arith.constant dense<0.000000e+00> : vector<32xf32>
      %27 = vector.multi_reduction <add>, %26, %cst_22 [1] : vector<32x128xf32> to vector<32xf32>
      %28 = vector.shape_cast %27 : vector<32xf32> to vector<32x1xf32>
      %c0_23 = arith.constant 0 : index
      %c0_24 = arith.constant 0 : index
      %29 = vector.load %arg11[%c0_23, %c0_24] : memref<32x128xf32, #tpu.memory_space<vmem>>, vector<32x128xf32>
      %cst_25 = arith.constant dense<0.000000e+00> : vector<32xf32>
      %30 = vector.multi_reduction <add>, %29, %cst_25 [1] : vector<32x128xf32> to vector<32xf32>
      %31 = vector.shape_cast %30 : vector<32xf32> to vector<32x1xf32>
      %cst_26 = arith.constant 7.812500e-03 : f32
      %32 = vector.broadcast %cst_26 : f32 to vector<32x1xf32>
      %33 = arith.mulf %28, %32 : vector<32x1xf32>
      %cst_27 = arith.constant 7.812500e-03 : f32
      %34 = vector.broadcast %cst_27 : f32 to vector<32x1xf32>
      %35 = arith.mulf %31, %34 : vector<32x1xf32>
      %36 = arith.mulf %33, %33 : vector<32x1xf32>
      %37 = arith.subf %35, %36 : vector<32x1xf32>
      %c0_28 = arith.constant 0 : index
      %c0_29 = arith.constant 0 : index
      %38 = vector.load %arg4[%c0_28, %c0_29] : memref<32x1xf32, #tpu.memory_space<vmem>>, vector<32x1xf32>
      %cst_30 = arith.constant 9.99999974E-6 : f32
      %39 = vector.broadcast %cst_30 : f32 to vector<32x1xf32>
      %40 = arith.addf %37, %39 : vector<32x1xf32>
      %41 = math.rsqrt %40 : vector<32x1xf32>
      %42 = arith.mulf %38, %41 : vector<32x1xf32>
      %c0_31 = arith.constant 0 : index
      %c0_32 = arith.constant 0 : index
      %43 = vector.load %arg5[%c0_31, %c0_32] : memref<32x1xf32, #tpu.memory_space<vmem>>, vector<32x1xf32>
      %44 = arith.mulf %33, %42 : vector<32x1xf32>
      %45 = arith.subf %43, %44 : vector<32x1xf32>
      %c0_33 = arith.constant 0 : index
      %c0_34 = arith.constant 0 : index
      %c0_35 = arith.constant 0 : index
      %46 = vector.load %arg9[%c0_33, %c0_34, %c0_35] : memref<1x32x128xf32, #tpu.memory_space<vmem>>, vector<1x32x32xf32>
      %47 = vector.shape_cast %46 : vector<1x32x32xf32> to vector<32x32xf32>
      %48 = vector.broadcast %42 : vector<32x1xf32> to vector<32x32xf32>
      %49 = arith.mulf %47, %48 : vector<32x32xf32>
      %50 = vector.broadcast %45 : vector<32x1xf32> to vector<32x32xf32>
      %51 = arith.addf %49, %50 : vector<32x32xf32>
      %cst_36 = arith.constant 0.000000e+00 : f32
      %52 = vector.broadcast %cst_36 : f32 to vector<32x32xf32>
      %53 = arith.maximumf %51, %52 : vector<32x32xf32>
      %c0_37 = arith.constant 0 : index
      %c0_38 = arith.constant 0 : index
      %c32 = arith.constant 32 : index
      %54 = vector.load %arg9[%c0_37, %c0_38, %c32] : memref<1x32x128xf32, #tpu.memory_space<vmem>>, vector<1x32x32xf32>
      %55 = vector.shape_cast %54 : vector<1x32x32xf32> to vector<32x32xf32>
      %56 = vector.broadcast %42 : vector<32x1xf32> to vector<32x32xf32>
      %57 = arith.mulf %55, %56 : vector<32x32xf32>
      %58 = vector.broadcast %45 : vector<32x1xf32> to vector<32x32xf32>
      %59 = arith.addf %57, %58 : vector<32x32xf32>
      %cst_39 = arith.constant 0.000000e+00 : f32
      %60 = vector.broadcast %cst_39 : f32 to vector<32x32xf32>
      %61 = arith.maximumf %59, %60 : vector<32x32xf32>
      %62 = arith.maximumf %53, %61 : vector<32x32xf32>
      %c0_40 = arith.constant 0 : index
      %c0_41 = arith.constant 0 : index
      %c64 = arith.constant 64 : index
      %63 = vector.load %arg9[%c0_40, %c0_41, %c64] : memref<1x32x128xf32, #tpu.memory_space<vmem>>, vector<1x32x32xf32>
      %64 = vector.shape_cast %63 : vector<1x32x32xf32> to vector<32x32xf32>
      %65 = vector.broadcast %42 : vector<32x1xf32> to vector<32x32xf32>
      %66 = arith.mulf %64, %65 : vector<32x32xf32>
      %67 = vector.broadcast %45 : vector<32x1xf32> to vector<32x32xf32>
      %68 = arith.addf %66, %67 : vector<32x32xf32>
      %cst_42 = arith.constant 0.000000e+00 : f32
      %69 = vector.broadcast %cst_42 : f32 to vector<32x32xf32>
      %70 = arith.maximumf %68, %69 : vector<32x32xf32>
      %71 = arith.maximumf %62, %70 : vector<32x32xf32>
      %c0_43 = arith.constant 0 : index
      %c0_44 = arith.constant 0 : index
      %c96 = arith.constant 96 : index
      %72 = vector.load %arg9[%c0_43, %c0_44, %c96] : memref<1x32x128xf32, #tpu.memory_space<vmem>>, vector<1x32x32xf32>
      %73 = vector.shape_cast %72 : vector<1x32x32xf32> to vector<32x32xf32>
      %74 = vector.broadcast %42 : vector<32x1xf32> to vector<32x32xf32>
      %75 = arith.mulf %73, %74 : vector<32x32xf32>
      %76 = vector.broadcast %45 : vector<32x1xf32> to vector<32x32xf32>
      %77 = arith.addf %75, %76 : vector<32x32xf32>
      %cst_45 = arith.constant 0.000000e+00 : f32
      %78 = vector.broadcast %cst_45 : f32 to vector<32x32xf32>
      %79 = arith.maximumf %77, %78 : vector<32x32xf32>
      %80 = arith.maximumf %71, %79 : vector<32x32xf32>
      %81 = vector.extract_strided_slice %80 {offsets = [0, 0], sizes = [32, 16], strides = [1, 1]} : vector<32x32xf32> to vector<32x16xf32>
      %c0_46 = arith.constant 0 : index
      %c0_47 = arith.constant 0 : index
      %82 = vector.load %arg6[%c0_46, %c0_47] : memref<32x16xf32, #tpu.memory_space<vmem>>, vector<32x16xf32>
      %83 = arith.mulf %81, %82 : vector<32x16xf32>
      %cst_48 = arith.constant dense<0.000000e+00> : vector<32xf32>
      %84 = vector.multi_reduction <add>, %83, %cst_48 [1] : vector<32x16xf32> to vector<32xf32>
      %85 = vector.shape_cast %84 : vector<32xf32> to vector<32x1xf32>
      %cst_49 = arith.constant dense<0.000000e+00> : vector<1xf32>
      %86 = vector.multi_reduction <add>, %85, %cst_49 [0] : vector<32x1xf32> to vector<1xf32>
      %87 = vector.shape_cast %86 : vector<1xf32> to vector<1x1xf32>
      %88 = vector.extract_strided_slice %80 {offsets = [0, 16], sizes = [32, 16], strides = [1, 1]} : vector<32x32xf32> to vector<32x16xf32>
      %c0_50 = arith.constant 0 : index
      %c0_51 = arith.constant 0 : index
      %89 = vector.load %arg6[%c0_50, %c0_51] : memref<32x16xf32, #tpu.memory_space<vmem>>, vector<32x16xf32>
      %90 = arith.mulf %88, %89 : vector<32x16xf32>
      %cst_52 = arith.constant dense<0.000000e+00> : vector<32xf32>
      %91 = vector.multi_reduction <add>, %90, %cst_52 [1] : vector<32x16xf32> to vector<32xf32>
      %92 = vector.shape_cast %91 : vector<32xf32> to vector<32x1xf32>
      %cst_53 = arith.constant dense<0.000000e+00> : vector<1xf32>
      %93 = vector.multi_reduction <add>, %92, %cst_53 [0] : vector<32x1xf32> to vector<1xf32>
      %94 = vector.shape_cast %93 : vector<1xf32> to vector<1x1xf32>
      %95 = tpu.concatenate %87, %94 in 0 : vector<1x1xf32>, vector<1x1xf32> -> vector<2x1xf32>
      %c0_54 = arith.constant 0 : index
      %c0_55 = arith.constant 0 : index
      %96 = vector.load %arg7[%c0_54, %c0_55] : memref<1x1xf32, #tpu.memory_space<vmem>>, vector<1x1xf32>
      %97 = vector.broadcast %96 : vector<1x1xf32> to vector<2x1xf32>
      %98 = arith.addf %95, %97 : vector<2x1xf32>
      %cst_56 = arith.constant 0.000000e+00 : f32
      %99 = vector.broadcast %cst_56 : f32 to vector<2x1xf32>
      %100 = arith.subf %99, %98 : vector<2x1xf32>
      %101 = math.exp %100 : vector<2x1xf32>
      %cst_57 = arith.constant 1.000000e+00 : f32
      %102 = vector.broadcast %cst_57 : f32 to vector<2x1xf32>
      %103 = arith.addf %102, %101 : vector<2x1xf32>
      %cst_58 = arith.constant 1.000000e+00 : f32
      %104 = vector.broadcast %cst_58 : f32 to vector<2x1xf32>
      %105 = arith.divf %104, %103 : vector<2x1xf32>
      %c0_59 = arith.constant 0 : index
      %c0_60 = arith.constant 0 : index
      %106 = vector.load %arg8[%c0_59, %c0_60] : memref<2x1xf32, #tpu.memory_space<vmem>>, vector<2x1xf32>
      tpu.vector_store %arg8[%c0_59, %c0_60], %105 {strides = array<i32>} : memref<2x1xf32, #tpu.memory_space<vmem>>, vector<2x1xf32>,
    } else {
    }
    return
  }
  func.func @transform_0(%arg0: i32) -> (i32, i32) {
    %c0_i32 = arith.constant 0 : i32
    %c0_i32_0 = arith.constant 0 : i32
    return %c0_i32, %arg0 : i32, i32
  }
  func.func @transform_1(%arg0: i32) -> (i32, i32) {
    %c0_i32 = arith.constant 0 : i32
    %c0_i32_0 = arith.constant 0 : i32
    %c0_i32_1 = arith.constant 0 : i32
    return %c0_i32, %c0_i32_0 : i32, i32
  }
  func.func @transform_2(%arg0: i32) -> (i32, i32) {
    %c0_i32 = arith.constant 0 : i32
    %c0_i32_0 = arith.constant 0 : i32
    %c0_i32_1 = arith.constant 0 : i32
    return %c0_i32, %c0_i32_0 : i32, i32
  }
  func.func @transform_3(%arg0: i32) -> (i32, i32) {
    %c0_i32 = arith.constant 0 : i32
    %c0_i32_0 = arith.constant 0 : i32
    %c0_i32_1 = arith.constant 0 : i32
    return %c0_i32, %c0_i32_0 : i32, i32
  }
  func.func @transform_4(%arg0: i32) -> (i32, i32) {
    %c0_i32 = arith.constant 0 : i32
    %c0_i32_0 = arith.constant 0 : i32
    %c0_i32_1 = arith.constant 0 : i32
    return %c0_i32, %c0_i32_0 : i32, i32
  }
  func.func @transform_5(%arg0: i32) -> (i32, i32) {
    %c0_i32 = arith.constant 0 : i32
    %c0_i32_0 = arith.constant 0 : i32
    %c0_i32_1 = arith.constant 0 : i32
    return %c0_i32, %c0_i32_0 : i32, i32
  }
  func.func @transform_6(%arg0: i32) -> (i32, i32) {
    %c0_i32 = arith.constant 0 : i32
    %c0_i32_0 = arith.constant 0 : i32
    %c0_i32_1 = arith.constant 0 : i32
    return %c0_i32, %c0_i32_0 : i32, i32
  }
  func.func @transform_7(%arg0: i32) -> (i32, i32) {
    %c0_i32 = arith.constant 0 : i32
    %c0_i32_0 = arith.constant 0 : i32
    %c0_i32_1 = arith.constant 0 : i32
    return %c0_i32, %c0_i32_0 : i32, i32
  }
}

</mosaic_0001>

<llo_original>
// kernel: discriminator_forward.3
$region0: #{discriminator_forward.3}
  #allocation0 [shape = 'u32[]', space=smem, size = 0x4, offset = 0x4, fixed_abs, tag = 'smem constant byte address 0x4 - core index']
  #allocation1 [shape = 'u32[72,128]{1,0:T(1,128)}', space=vmem, size = 0x9000, scoped, tag = 'internal scratch']
  #allocation2 [shape = 'f32[4,8,8192]{2,1,0:T(8,128)}', space=vmem, size = 0x100000, scoped, tag = 'scratch operand']
  #allocation3 [shape = 'f32[8,8192]{1,0:T(8,128)}', space=vmem, size = 0x40000, scoped, tag = 'scratch operand']
  #allocation4 [shape = 'f32[8,8192]{1,0:T(8,128)}', space=vmem, size = 0x40000, scoped, tag = 'scratch operand']
  %s0 = inlined_call_operand.vmem [shape: bf16[48,32768], index: 0, kind: input, shape index: {}]
  %s1 = inlined_call_operand.vmem [shape: bf16[8,48], index: 1, kind: input, shape index: {}]
  %s2 = inlined_call_operand.vmem [shape: f32[8,1], index: 2, kind: input, shape index: {}]
  %s3 = inlined_call_operand.vmem [shape: f32[8,1], index: 3, kind: input, shape index: {}]
  %s4 = inlined_call_operand.vmem [shape: f32[8,1], index: 4, kind: input, shape index: {}]
  %s5 = inlined_call_operand.vmem [shape: f32[8,8192], index: 5, kind: output, shape index: {}]
  %s6 = sld [smem:[#allocation0]]
  $region84: #{discriminator_forward.3} parent=0
    _
  %s8 = ssub.s32 1, %s6
  %s9 = scalar_select 0, %s8, %s6
  $region1: #{discriminator_forward.3} parent=0
    #allocation5 [shape = 'u8[1572864]{0}', space=vmem, size = 0x180000, scoped, tag = 'input window, operand 0']
    loop: start=0, step=1, limit=6
    $region2: #{discriminator_forward.3} parent=1 // loop_pre_header
      _
    $region3: #{discriminator_forward.3} parent=1 // loop_header
      %s11 = sphi 0, %s15
      %p12 = scmp.ge.s32.totalorder %s11, 6
      %s21 = sphi 0, %s23
      %s24 = sphi 0, %s21
      %s25 = sphi 0, %s24
      %s41 = sphi 0, %s25
      %s45 = sphi 0, %s45
      %s47 = sphi 0, %s45
      %s48 = sphi 0, %s47
      %s62 = sphi 0, %s48
      %s66 = sphi 0, %s66
      %s68 = sphi 0, %s66
      %s69 = sphi 0, %s68
      %s83 = sphi 0, %s69
      %s87 = sphi 0, %s87
      %s89 = sphi 0, %s87
      %s90 = sphi 0, %s89
      %s104 = sphi 0, %s90
      %s108 = sphi 0, %s108
      %s110 = sphi 0, %s108
      %s111 = sphi 0, %s110
      %s125 = sphi 0, %s111
      %s129 = sphi 0, %s129
      %s131 = sphi 0, %s129
      %s132 = sphi 0, %s131
      %s146 = sphi 0, %s132
    $region4: #{discriminator_forward.3} parent=1 // loop_header_branch
      %14 = sbr.rel (%p12) target = $region8
    $region5: #{discriminator_forward.3} parent=1 // loop_body
      %s16 = ssub.s32 %s11, 1
      %s17 = ssub.s32 %s11, 2
      %s18 = sadd.s32 %s11, 1
      %s19 = ssub.s32 %s11, %s18
      %p20 = scmp.eq.s32.totalorder %s19, 0
      %s22 = sadd.s32 %s21, 1
      %s23 = scalar_select %p20, %s21, %s22
      %p26 = pneg %p20
      %p27 = scmp.eq.s32.totalorder %s11, 3
      %p28 = por %p26, %p27
      %p29 = scmp.ne.s32.totalorder %s21, %s24
      %p30 = scmp.eq.s32.totalorder %s11, 0
      %p31 = por %p29, %p30
      %p32 = scmp.ne.s32.totalorder %s21, %s24
      %p33 = scmp.eq.s32.totalorder %s16, 3
      %p34 = por %p32, %p33
      %p35 = scmp.ne.s32.totalorder %s24, %s25
      %p36 = scmp.eq.s32.totalorder %s16, 0
      %p37 = por %p35, %p36
      %p38 = scmp.ne.s32.totalorder %s24, %s25
      %p39 = scmp.eq.s32.totalorder %s17, 3
      %p40 = por %p38, %p39
      %p42 = scmp.ne.s32.totalorder %s25, %s41
      %p43 = scmp.eq.s32.totalorder %s17, 0
      %p44 = por %p42, %p43
      %s46 = sadd.s32 %s45, 1
      %p49 = scmp.eq.s32.totalorder %s11, 3
      %p50 = scmp.ne.s32.totalorder %s45, %s47
      %p51 = scmp.eq.s32.totalorder %s11, 0
      %p52 = por %p50, %p51
      %p53 = scmp.ne.s32.totalorder %s45, %s47
      %p54 = scmp.eq.s32.totalorder %s16, 3
      %p55 = por %p53, %p54
      %p56 = scmp.ne.s32.totalorder %s47, %s48
      %p57 = scmp.eq.s32.totalorder %s16, 0
      %p58 = por %p56, %p57
      %p59 = scmp.ne.s32.totalorder %s47, %s48
      %p60 = scmp.eq.s32.totalorder %s17, 3
      %p61 = por %p59, %p60
      %p63 = scmp.ne.s32.totalorder %s48, %s62
      %p64 = scmp.eq.s32.totalorder %s17, 0
      %p65 = por %p63, %p64
      %s67 = sadd.s32 %s66, 1
      %p70 = scmp.eq.s32.totalorder %s11, 3
      %p71 = scmp.ne.s32.totalorder %s66, %s68
      %p72 = scmp.eq.s32.totalorder %s11, 0
      %p73 = por %p71, %p72
      %p74 = scmp.ne.s32.totalorder %s66, %s68
      %p75 = scmp.eq.s32.totalorder %s16, 3
      %p76 = por %p74, %p75
      %p77 = scmp.ne.s32.totalorder %s68, %s69
      %p78 = scmp.eq.s32.totalorder %s16, 0
      %p79 = por %p77, %p78
      %p80 = scmp.ne.s32.totalorder %s68, %s69
      %p81 = scmp.eq.s32.totalorder %s17, 3
      %p82 = por %p80, %p81
      %p84 = scmp.ne.s32.totalorder %s69, %s83
      %p85 = scmp.eq.s32.totalorder %s17, 0
      %p86 = por %p84, %p85
      %s88 = sadd.s32 %s87, 1
      %p91 = scmp.eq.s32.totalorder %s11, 3
      %p92 = scmp.ne.s32.totalorder %s87, %s89
      %p93 = scmp.eq.s32.totalorder %s11, 0
      %p94 = por %p92, %p93
      %p95 = scmp.ne.s32.totalorder %s87, %s89
      %p96 = scmp.eq.s32.totalorder %s16, 3
      %p97 = por %p95, %p96
      %p98 = scmp.ne.s32.totalorder %s89, %s90
      %p99 = scmp.eq.s32.totalorder %s16, 0
      %p100 = por %p98, %p99
      %p101 = scmp.ne.s32.totalorder %s89, %s90
      %p102 = scmp.eq.s32.totalorder %s17, 3
      %p103 = por %p101, %p102
      %p105 = scmp.ne.s32.totalorder %s90, %s104
      %p106 = scmp.eq.s32.totalorder %s17, 0
      %p107 = por %p105, %p106
      %s109 = sadd.s32 %s108, 1
      %p112 = scmp.eq.s32.totalorder %s11, 3
      %p113 = scmp.ne.s32.totalorder %s108, %s110
      %p114 = scmp.eq.s32.totalorder %s11, 0
      %p115 = por %p113, %p114
      %p116 = scmp.ne.s32.totalorder %s108, %s110
      %p117 = scmp.eq.s32.totalorder %s16, 3
      %p118 = por %p116, %p117
      %p119 = scmp.ne.s32.totalorder %s110, %s111
      %p120 = scmp.eq.s32.totalorder %s16, 0
      %p121 = por %p119, %p120
      %p122 = scmp.ne.s32.totalorder %s110, %s111
      %p123 = scmp.eq.s32.totalorder %s17, 3
      %p124 = por %p122, %p123
      %p126 = scmp.ne.s32.totalorder %s111, %s125
      %p127 = scmp.eq.s32.totalorder %s17, 0
      %p128 = por %p126, %p127
      %s130 = sadd.s32 %s129, 1
      %p133 = scmp.eq.s32.totalorder %s11, 3
      %p134 = scmp.ne.s32.totalorder %s129, %s131
      %p135 = scmp.eq.s32.totalorder %s11, 0
      %p136 = por %p134, %p135
      %p137 = scmp.ne.s32.totalorder %s129, %s131
      %p138 = scmp.eq.s32.totalorder %s16, 3
      %p139 = por %p137, %p138
      %p140 = scmp.ne.s32.totalorder %s131, %s132
      %p141 = scmp.eq.s32.totalorder %s16, 0
      %p142 = por %p140, %p141
      %p143 = scmp.ne.s32.totalorder %s131, %s132
      %p144 = scmp.eq.s32.totalorder %s17, 3
      %p145 = por %p143, %p144
      %p147 = scmp.ne.s32.totalorder %s132, %s146
      %p148 = scmp.eq.s32.totalorder %s17, 0
      %p149 = por %p147, %p148
      %p150 = scmp.le.s32.totalorder 1, %s11
      %p151 = scmp.lt.s32.totalorder %s11, 5
      %p152 = pnand %p150, %p151
      %p153 = pneg %p152
      // Predicated region
      $region9: #{discriminator_forward.3} parent=5 // pred_check
        _
      $region10: #{discriminator_forward.3} parent=5 // pred_check_branch
        %155 = sbr.rel (%p152) target = $region12
      $region11: #{discriminator_forward.3} parent=5 // pred_region
        %s156 = ssub.s32 %s11, 1
        // Predicated region
        $region13: #{discriminator_forward.3} parent=11 // pred_check
          %p157 = pneg %p58
        $region14: #{discriminator_forward.3} parent=11 // pred_check_branch
          %159 = sbr.rel (%p157) target = $region16
        $region15: #{discriminator_forward.3} parent=11 // pred_region
          _
        $region16: #{discriminator_forward.3} parent=11 // pred_fallthru
          _
        // Predicated region
        $region17: #{discriminator_forward.3} parent=11 // pred_check
          %p160 = pneg %p79
        $region18: #{discriminator_forward.3} parent=11 // pred_check_branch
          %162 = sbr.rel (%p160) target = $region20
        $region19: #{discriminator_forward.3} parent=11 // pred_region
          _
        $region20: #{discriminator_forward.3} parent=11 // pred_fallthru
          _
        // Predicated region
        $region21: #{discriminator_forward.3} parent=11 // pred_check
          %p163 = pneg %p100
        $region22: #{discriminator_forward.3} parent=11 // pred_check_branch
          %165 = sbr.rel (%p163) target = $region24
        $region23: #{discriminator_forward.3} parent=11 // pred_region
          _
        $region24: #{discriminator_forward.3} parent=11 // pred_fallthru
          _
        // Predicated region
        $region25: #{discriminator_forward.3} parent=11 // pred_check
          %p166 = pneg %p121
        $region26: #{discriminator_forward.3} parent=11 // pred_check_branch
          %168 = sbr.rel (%p166) target = $region28
        $region27: #{discriminator_forward.3} parent=11 // pred_region
          _
        $region28: #{discriminator_forward.3} parent=11 // pred_fallthru
          _
      $region12: #{discriminator_forward.3} parent=5 // pred_fallthru
        _
      %p169 = scmp.lt.s32.totalorder %s11, 4
      // Predicated region
      $region29: #{discriminator_forward.3} parent=5 // pred_check
        %p170 = pneg %p169
      $region30: #{discriminator_forward.3} parent=5 // pred_check_branch
        %172 = sbr.rel (%p170) target = $region32
      $region31: #{discriminator_forward.3} parent=5 // pred_region
        // Predicated region
        $region33: #{discriminator_forward.3} parent=31 // pred_check
          %p173 = pneg %p31
        $region34: #{discriminator_forward.3} parent=31 // pred_check_branch
          %175 = sbr.rel (%p173) target = $region36
        $region35: #{discriminator_forward.3} parent=31 // pred_region
          %s176 = sand.u32 %s21, 1
          %s177 = sand.u32 %s21, 1
          %s178 = smul.addr %s177, 1536
          %s179 = scalar_lea.vmem [#allocation5], %s178
          %s180 = smul.u32 64, %s11
          %s181 = smul.addr %s180, 4
          %s182 = scalar_lea.vmem %s0, %s181
          // Predicated region
          $region37: #{discriminator_forward.3} parent=35 // pred_check
            _
          $region38: #{discriminator_forward.3} parent=35 // pred_check_branch
            %184 = sbr.rel (0) target = $region40
          $region39: #{discriminator_forward.3} parent=35 // pred_region
            // Predicated region
            $region41: #{discriminator_forward.3} parent=39 // pred_check
              _
            $region42: #{discriminator_forward.3} parent=39 // pred_check_branch
              %186 = sbr.rel (0) target = $region44
            $region43: #{discriminator_forward.3} parent=39 // pred_region
              loop: start=0, step=1, limit=1
              $region45: #{discriminator_forward.3} parent=43 // loop_pre_header
                _
              $region46: #{discriminator_forward.3} parent=43 // loop_header
                %s188 = sphi 0, %s192
                %p189 = scmp.ge.s32.totalorder %s188, 1
                %s193 = sphi %s182, %s182
                %s194 = sphi %s179, %s179
              $region47: #{discriminator_forward.3} parent=43 // loop_header_branch
                %191 = sbr.rel (%p189) target = $region51
              $region48: #{discriminator_forward.3} parent=43 // loop_body
                %v195 = vld [vmem:[%s193] sm:$0xff]
                %196 = vst [vmem:[%s194] sm:$0xff] %v195
                %v197 = vld [vmem:[%s193 + $0x8] sm:$0xff]
                %198 = vst [vmem:[%s194 + $0x8] sm:$0xff] %v197
                %v199 = vld [vmem:[%s193 + $0x10] sm:$0xff]
                %200 = vst [vmem:[%s194 + $0x10] sm:$0xff] %v199
                %v201 = vld [vmem:[%s193 + $0x18] sm:$0xff]
                %202 = vst [vmem:[%s194 + $0x18] sm:$0xff] %v201
                %v203 = vld [vmem:[%s193 + $0x20] sm:$0xff]
                %204 = vst [vmem:[%s194 + $0x20] sm:$0xff] %v203
                %v205 = vld [vmem:[%s193 + $0x28] sm:$0xff]
                %206 = vst [vmem:[%s194 + $0x28] sm:$0xff] %v205
                %v207 = vld [vmem:[%s193 + $0x30] sm:$0xff]
                %208 = vst [vmem:[%s194 + $0x30] sm:$0xff] %v207
                %v209 = vld [vmem:[%s193 + $0x38] sm:$0xff]
                %210 = vst [vmem:[%s194 + $0x38] sm:$0xff] %v209
                %v211 = vld [vmem:[%s193 + $0x40] sm:$0xff]
                %212 = vst [vmem:[%s194 + $0x40] sm:$0xff] %v211
                %v213 = vld [vmem:[%s193 + $0x48] sm:$0xff]
                %214 = vst [vmem:[%s194 + $0x48] sm:$0xff] %v213
                %v215 = vld [vmem:[%s193 + $0x50] sm:$0xff]
                %216 = vst [vmem:[%s194 + $0x50] sm:$0xff] %v215
                %v217 = vld [vmem:[%s193 + $0x58] sm:$0xff]
                %218 = vst [vmem:[%s194 + $0x58] sm:$0xff] %v217
                %v219 = vld [vmem:[%s193 + $0x60] sm:$0xff]
                %220 = vst [vmem:[%s194 + $0x60] sm:$0xff] %v219
                %v221 = vld [vmem:[%s193 + $0x68] sm:$0xff]
                %222 = vst [vmem:[%s194 + $0x68] sm:$0xff] %v221
                %v223 = vld [vmem:[%s193 + $0x70] sm:$0xff]
                %224 = vst [vmem:[%s194 + $0x70] sm:$0xff] %v223
                %v225 = vld [vmem:[%s193 + $0x78] sm:$0xff]
                %226 = vst [vmem:[%s194 + $0x78] sm:$0xff] %v225
                %v227 = vld [vmem:[%s193 + $0x80] sm:$0xff]
                %228 = vst [vmem:[%s194 + $0x80] sm:$0xff] %v227
                %v229 = vld [vmem:[%s193 + $0x88] sm:$0xff]
                %230 = vst [vmem:[%s194 + $0x88] sm:$0xff] %v229
                %v231 = vld [vmem:[%s193 + $0x90] sm:$0xff]
                %232 = vst [vmem:[%s194 + $0x90] sm:$0xff] %v231
                %v233 = vld [vmem:[%s193 + $0x98] sm:$0xff]
                %234 = vst [vmem:[%s194 + $0x98] sm:$0xff] %v233
                %v235 = vld [vmem:[%s193 + $0xa0] sm:$0xff]
                %236 = vst [vmem:[%s194 + $0xa0] sm:$0xff] %v235
                %v237 = vld [vmem:[%s193 + $0xa8] sm:$0xff]
                %238 = vst [vmem:[%s194 + $0xa8] sm:$0xff] %v237
                %v239 = vld [vmem:[%s193 + $0xb0] sm:$0xff]
                %240 = vst [vmem:[%s194 + $0xb0] sm:$0xff] %v239
                %v241 = vld [vmem:[%s193 + $0xb8] sm:$0xff]
                %242 = vst [vmem:[%s194 + $0xb8] sm:$0xff] %v241
                %v243 = vld [vmem:[%s193 + $0xc0] sm:$0xff]
                %244 = vst [vmem:[%s194 + $0xc0] sm:$0xff] %v243
                %v245 = vld [vmem:[%s193 + $0xc8] sm:$0xff]
                %246 = vst [vmem:[%s194 + $0xc8] sm:$0xff] %v245
                %v247 = vld [vmem:[%s193 + $0xd0] sm:$0xff]
                %248 = vst [vmem:[%s194 + $0xd0] sm:$0xff] %v247
                %v249 = vld [vmem:[%s193 + $0xd8] sm:$0xff]
                %250 = vst [vmem:[%s194 + $0xd8] sm:$0xff] %v249
                %v251 = vld [vmem:[%s193 + $0xe0] sm:$0xff]
                %252 = vst [vmem:[%s194 + $0xe0] sm:$0xff] %v251
                %v253 = vld [vmem:[%s193 + $0xe8] sm:$0xff]
                %254 = vst [vmem:[%s194 + $0xe8] sm:$0xff] %v253
                %v255 = vld [vmem:[%s193 + $0xf0] sm:$0xff]
                %256 = vst [vmem:[%s194 + $0xf0] sm:$0xff] %v255
                %v257 = vld [vmem:[%s193 + $0xf8] sm:$0xff]
                %258 = vst [vmem:[%s194 + $0xf8] sm:$0xff] %v257
                %v259 = vld [vmem:[%s193 + $0x400] sm:$0xff]
                %260 = vst [vmem:[%s194 + $0x100] sm:$0xff] %v259
                %v261 = vld [vmem:[%s193 + $0x408] sm:$0xff]
                %262 = vst [vmem:[%s194 + $0x108] sm:$0xff] %v261
                %v263 = vld [vmem:[%s193 + $0x410] sm:$0xff]
                %264 = vst [vmem:[%s194 + $0x110] sm:$0xff] %v263
                %v265 = vld [vmem:[%s193 + $0x418] sm:$0xff]
                %266 = vst [vmem:[%s194 + $0x118] sm:$0xff] %v265
                %v267 = vld [vmem:[%s193 + $0x420] sm:$0xff]
                %268 = vst [vmem:[%s194 + $0x120] sm:$0xff] %v267
                %v269 = vld [vmem:[%s193 + $0x428] sm:$0xff]
                %270 = vst [vmem:[%s194 + $0x128] sm:$0xff] %v269
                %v271 = vld [vmem:[%s193 + $0x430] sm:$0xff]
                %272 = vst [vmem:[%s194 + $0x130] sm:$0xff] %v271
                %v273 = vld [vmem:[%s193 + $0x438] sm:$0xff]
                %274 = vst [vmem:[%s194 + $0x138] sm:$0xff] %v273
                %v275 = vld [vmem:[%s193 + $0x440] sm:$0xff]
                %276 = vst [vmem:[%s194 + $0x140] sm:$0xff] %v275
                %v277 = vld [vmem:[%s193 + $0x448] sm:$0xff]
                %278 = vst [vmem:[%s194 + $0x148] sm:$0xff] %v277
                %v279 = vld [vmem:[%s193 + $0x450] sm:$0xff]
                %280 = vst [vmem:[%s194 + $0x150] sm:$0xff] %v279
                %v281 = vld [vmem:[%s193 + $0x458] sm:$0xff]
                %282 = vst [vmem:[%s194 + $0x158] sm:$0xff] %v281
                %v283 = vld [vmem:[%s193 + $0x460] sm:$0xff]
                %284 = vst [vmem:[%s194 + $0x160] sm:$0xff] %v283
                %v285 = vld [vmem:[%s193 + $0x468] sm:$0xff]
                %286 = vst [vmem:[%s194 + $0x168] sm:$0xff] %v285
                %v287 = vld [vmem:[%s193 + $0x470] sm:$0xff]
                %288 = vst [vmem:[%s194 + $0x170] sm:$0xff] %v287
                %v289 = vld [vmem:[%s193 + $0x478] sm:$0xff]
                %290 = vst [vmem:[%s194 + $0x178] sm:$0xff] %v289
                %v291 = vld [vmem:[%s193 + $0x480] sm:$0xff]
                %292 = vst [vmem:[%s194 + $0x180] sm:$0xff] %v291
                %v293 = vld [vmem:[%s193 + $0x488] sm:$0xff]
                %294 = vst [vmem:[%s194 + $0x188] sm:$0xff] %v293
                %v295 = vld [vmem:[%s193 + $0x490] sm:$0xff]
                %296 = vst [vmem:[%s194 + $0x190] sm:$0xff] %v295
                %v297 = vld [vmem:[%s193 + $0x498] sm:$0xff]
                %298 = vst [vmem:[%s194 + $0x198] sm:$0xff] %v297
                %v299 = vld [vmem:[%s193 + $0x4a0] sm:$0xff]
                %300 = vst [vmem:[%s194 + $0x1a0] sm:$0xff] %v299
                %v301 = vld [vmem:[%s193 + $0x4a8] sm:$0xff]
                %302 = vst [vmem:[%s194 + $0x1a8] sm:$0xff] %v301
                %v303 = vld [vmem:[%s193 + $0x4b0] sm:$0xff]
                %304 = vst [vmem:[%s194 + $0x1b0] sm:$0xff] %v303
                %v305 = vld [vmem:[%s193 + $0x4b8] sm:$0xff]
                %306 = vst [vmem:[%s194 + $0x1b8] sm:$0xff] %v305
                %v307 = vld [vmem:[%s193 + $0x4c0] sm:$0xff]
                %308 = vst [vmem:[%s194 + $0x1c0] sm:$0xff] %v307
                %v309 = vld [vmem:[%s193 + $0x4c8] sm:$0xff]
                %310 = vst [vmem:[%s194 + $0x1c8] sm:$0xff] %v309
                %v311 = vld [vmem:[%s193 + $0x4d0] sm:$0xff]
                %312 = vst [vmem:[%s194 + $0x1d0] sm:$0xff] %v311
                %v313 = vld [vmem:[%s193 + $0x4d8] sm:$0xff]
                %314 = vst [vmem:[%s194 + $0x1d8] sm:$0xff] %v313
                %v315 = vld [vmem:[%s193 + $0x4e0] sm:$0xff]
                %316 = vst [vmem:[%s194 + $0x1e0] sm:$0xff] %v315
                %v317 = vld [vmem:[%s193 + $0x4e8] sm:$0xff]
                %318 = vst [vmem:[%s194 + $0x1e8] sm:$0xff] %v317
                %v319 = vld [vmem:[%s193 + $0x4f0] sm:$0xff]
                %320 = vst [vmem:[%s194 + $0x1f0] sm:$0xff] %v319
                %v321 = vld [vmem:[%s193 + $0x4f8] sm:$0xff]
                %322 = vst [vmem:[%s194 + $0x1f8] sm:$0xff] %v321
                %v323 = vld [vmem:[%s193 + $0x800] sm:$0xff]
                %324 = vst [vmem:[%s194 + $0x200] sm:$0xff] %v323
                %v325 = vld [vmem:[%s193 + $0x808] sm:$0xff]
                %326 = vst [vmem:[%s194 + $0x208] sm:$0xff] %v325
                %v327 = vld [vmem:[%s193 + $0x810] sm:$0xff]
                %328 = vst [vmem:[%s194 + $0x210] sm:$0xff] %v327
                %v329 = vld [vmem:[%s193 + $0x818] sm:$0xff]
                %330 = vst [vmem:[%s194 + $0x218] sm:$0xff] %v329
                %v331 = vld [vmem:[%s193 + $0x820] sm:$0xff]
                %332 = vst [vmem:[%s194 + $0x220] sm:$0xff] %v331
                %v333 = vld [vmem:[%s193 + $0x828] sm:$0xff]
                %334 = vst [vmem:[%s194 + $0x228] sm:$0xff] %v333
                %v335 = vld [vmem:[%s193 + $0x830] sm:$0xff]
                %336 = vst [vmem:[%s194 + $0x230] sm:$0xff] %v335
                %v337 = vld [vmem:[%s193 + $0x838] sm:$0xff]
                %338 = vst [vmem:[%s194 + $0x238] sm:$0xff] %v337
                %v339 = vld [vmem:[%s193 + $0x840] sm:$0xff]
                %340 = vst [vmem:[%s194 + $0x240] sm:$0xff] %v339
                %v341 = vld [vmem:[%s193 + $0x848] sm:$0xff]
                %342 = vst [vmem:[%s194 + $0x248] sm:$0xff] %v341
                %v343 = vld [vmem:[%s193 + $0x850] sm:$0xff]
                %344 = vst [vmem:[%s194 + $0x250] sm:$0xff] %v343
                %v345 = vld [vmem:[%s193 + $0x858] sm:$0xff]
                %346 = vst [vmem:[%s194 + $0x258] sm:$0xff] %v345
                %v347 = vld [vmem:[%s193 + $0x860] sm:$0xff]
                %348 = vst [vmem:[%s194 + $0x260] sm:$0xff] %v347
                %v349 = vld [vmem:[%s193 + $0x868] sm:$0xff]
                %350 = vst [vmem:[%s194 + $0x268] sm:$0xff] %v349
                %v351 = vld [vmem:[%s193 + $0x870] sm:$0xff]
                %352 = vst [vmem:[%s194 + $0x270] sm:$0xff] %v351
                %v353 = vld [vmem:[%s193 + $0x878] sm:$0xff]
                %354 = vst [vmem:[%s194 + $0x278] sm:$0xff] %v353
                %v355 = vld [vmem:[%s193 + $0x880] sm:$0xff]
                %356 = vst [vmem:[%s194 + $0x280] sm:$0xff] %v355
                %v357 = vld [vmem:[%s193 + $0x888] sm:$0xff]
                %358 = vst [vmem:[%s194 + $0x288] sm:$0xff] %v357
                %v359 = vld [vmem:[%s193 + $0x890] sm:$0xff]
                %360 = vst [vmem:[%s194 + $0x290] sm:$0xff] %v359
                %v361 = vld [vmem:[%s193 + $0x898] sm:$0xff]
                %362 = vst [vmem:[%s194 + $0x298] sm:$0xff] %v361
                %v363 = vld [vmem:[%s193 + $0x8a0] sm:$0xff]
                %364 = vst [vmem:[%s194 + $0x2a0] sm:$0xff] %v363
                %v365 = vld [vmem:[%s193 + $0x8a8] sm:$0xff]
                %366 = vst [vmem:[%s194 + $0x2a8] sm:$0xff] %v365
                %v367 = vld [vmem:[%s193 + $0x8b0] sm:$0xff]
                %368 = vst [vmem:[%s194 + $0x2b0] sm:$0xff] %v367
                %v369 = vld [vmem:[%s193 + $0x8b8] sm:$0xff]
                %370 = vst [vmem:[%s194 + $0x2b8] sm:$0xff] %v369
                %v371 = vld [vmem:[%s193 + $0x8c0] sm:$0xff]
                %372 = vst [vmem:[%s194 + $0x2c0] sm:$0xff] %v371
                %v373 = vld [vmem:[%s193 + $0x8c8] sm:$0xff]
                %374 = vst [vmem:[%s194 + $0x2c8] sm:$0xff] %v373
                %v375 = vld [vmem:[%s193 + $0x8d0] sm:$0xff]
                %376 = vst [vmem:[%s194 + $0x2d0] sm:$0xff] %v375
                %v377 = vld [vmem:[%s193 + $0x8d8] sm:$0xff]
                %378 = vst [vmem:[%s194 + $0x2d8] sm:$0xff] %v377
                %v379 = vld [vmem:[%s193 + $0x8e0] sm:$0xff]
                %380 = vst [vmem:[%s194 + $0x2e0] sm:$0xff] %v379
                %v381 = vld [vmem:[%s193 + $0x8e8] sm:$0xff]
                %382 = vst [vmem:[%s194 + $0x2e8] sm:$0xff] %v381
                %v383 = vld [vmem:[%s193 + $0x8f0] sm:$0xff]
                %384 = vst [vmem:[%s194 + $0x2f0] sm:$0xff] %v383
                %v385 = vld [vmem:[%s193 + $0x8f8] sm:$0xff]
                %386 = vst [vmem:[%s194 + $0x2f8] sm:$0xff] %v385
                %v387 = vld [vmem:[%s193 + $0xc00] sm:$0xff]
                %388 = vst [vmem:[%s194 + $0x300] sm:$0xff] %v387
                %v389 = vld [vmem:[%s193 + $0xc08] sm:$0xff]
                %390 = vst [vmem:[%s194 + $0x308] sm:$0xff] %v389
                %v391 = vld [vmem:[%s193 + $0xc10] sm:$0xff]
                %392 = vst [vmem:[%s194 + $0x310] sm:$0xff] %v391
                %v393 = vld [vmem:[%s193 + $0xc18] sm:$0xff]
                %394 = vst [vmem:[%s194 + $0x318] sm:$0xff] %v393
                %v395 = vld [vmem:[%s193 + $0xc20] sm:$0xff]
                %396 = vst [vmem:[%s194 + $0x320] sm:$0xff] %v395
                %v397 = vld [vmem:[%s193 + $0xc28] sm:$0xff]
                %398 = vst [vmem:[%s194 + $0x328] sm:$0xff] %v397
                %v399 = vld [vmem:[%s193 + $0xc30] sm:$0xff]
                %400 = vst [vmem:[%s194 + $0x330] sm:$0xff] %v399
                %v401 = vld [vmem:[%s193 + $0xc38] sm:$0xff]
                %402 = vst [vmem:[%s194 + $0x338] sm:$0xff] %v401
                %v403 = vld [vmem:[%s193 + $0xc40] sm:$0xff]
                %404 = vst [vmem:[%s194 + $0x340] sm:$0xff] %v403
                %v405 = vld [vmem:[%s193 + $0xc48] sm:$0xff]
                %406 = vst [vmem:[%s194 + $0x348] sm:$0xff] %v405
                %v407 = vld [vmem:[%s193 + $0xc50] sm:$0xff]
                %408 = vst [vmem:[%s194 + $0x350] sm:$0xff] %v407
                %v409 = vld [vmem:[%s193 + $0xc58] sm:$0xff]
                %410 = vst [vmem:[%s194 + $0x358] sm:$0xff] %v409
                %v411 = vld [vmem:[%s193 + $0xc60] sm:$0xff]
                %412 = vst [vmem:[%s194 + $0x360] sm:$0xff] %v411
                %v413 = vld [vmem:[%s193 + $0xc68] sm:$0xff]
                %414 = vst [vmem:[%s194 + $0x368] sm:$0xff] %v413
                %v415 = vld [vmem:[%s193 + $0xc70] sm:$0xff]
                %416 = vst [vmem:[%s194 + $0x370] sm:$0xff] %v415
                %v417 = vld [vmem:[%s193 + $0xc78] sm:$0xff]
                %418 = vst [vmem:[%s194 + $0x378] sm:$0xff] %v417
                %v419 = vld [vmem:[%s193 + $0xc80] sm:$0xff]
                %420 = vst [vmem:[%s194 + $0x380] sm:$0xff] %v419
                %v421 = vld [vmem:[%s193 + $0xc88] sm:$0xff]
                %422 = vst [vmem:[%s194 + $0x388] sm:$0xff] %v421
                %v423 = vld [vmem:[%s193 + $0xc90] sm:$0xff]
                %424 = vst [vmem:[%s194 + $0x390] sm:$0xff] %v423
                %v425 = vld [vmem:[%s193 + $0xc98] sm:$0xff]
                %426 = vst [vmem:[%s194 + $0x398] sm:$0xff] %v425
                %v427 = vld [vmem:[%s193 + $0xca0] sm:$0xff]
                %428 = vst [vmem:[%s194 + $0x3a0] sm:$0xff] %v427
                %v429 = vld [vmem:[%s193 + $0xca8] sm:$0xff]
                %430 = vst [vmem:[%s194 + $0x3a8] sm:$0xff] %v429
                %v431 = vld [vmem:[%s193 + $0xcb0] sm:$0xff]
                %432 = vst [vmem:[%s194 + $0x3b0] sm:$0xff] %v431
                %v433 = vld [vmem:[%s193 + $0xcb8] sm:$0xff]
                %434 = vst [vmem:[%s194 + $0x3b8] sm:$0xff] %v433
                %v435 = vld [vmem:[%s193 + $0xcc0] sm:$0xff]
                %436 = vst [vmem:[%s194 + $0x3c0] sm:$0xff] %v435
                %v437 = vld [vmem:[%s193 + $0xcc8] sm:$0xff]
                %438 = vst [vmem:[%s194 + $0x3c8] sm:$0xff] %v437
                %v439 = vld [vmem:[%s193 + $0xcd0] sm:$0xff]
                %440 = vst [vmem:[%s194 + $0x3d0] sm:$0xff] %v439
                %v441 = vld [vmem:[%s193 + $0xcd8] sm:$0xff]
                %442 = vst [vmem:[%s194 + $0x3d8] sm:$0xff] %v441
                %v443 = vld [vmem:[%s193 + $0xce0] sm:$0xff]
                %444 = vst [vmem:[%s194 + $0x3e0] sm:$0xff] %v443
                %v445 = vld [vmem:[%s193 + $0xce8] sm:$0xff]
                %446 = vst [vmem:[%s194 + $0x3e8] sm:$0xff] %v445
                %v447 = vld [vmem:[%s193 + $0xcf0] sm:$0xff]
                %448 = vst [vmem:[%s194 + $0x3f0] sm:$0xff] %v447
                %v449 = vld [vmem:[%s193 + $0xcf8] sm:$0xff]
                %450 = vst [vmem:[%s194 + $0x3f8] sm:$0xff] %v449
                %v451 = vld [vmem:[%s193 + $0x1000] sm:$0xff]
                %452 = vst [vmem:[%s194 + $0x400] sm:$0xff] %v451
                %v453 = vld [vmem:[%s193 + $0x1008] sm:$0xff]
                %454 = vst [vmem:[%s194 + $0x408] sm:$0xff] %v453
                %v455 = vld [vmem:[%s193 + $0x1010] sm:$0xff]
                %456 = vst [vmem:[%s194 + $0x410] sm:$0xff] %v455
                %v457 = vld [vmem:[%s193 + $0x1018] sm:$0xff]
                %458 = vst [vmem:[%s194 + $0x418] sm:$0xff] %v457
                %v459 = vld [vmem:[%s193 + $0x1020] sm:$0xff]
                %460 = vst [vmem:[%s194 + $0x420] sm:$0xff] %v459
                %v461 = vld [vmem:[%s193 + $0x1028] sm:$0xff]
                %462 = vst [vmem:[%s194 + $0x428] sm:$0xff] %v461
                %v463 = vld [vmem:[%s193 + $0x1030] sm:$0xff]
                %464 = vst [vmem:[%s194 + $0x430] sm:$0xff] %v463
                %v465 = vld [vmem:[%s193 + $0x1038] sm:$0xff]
                %466 = vst [vmem:[%s194 + $0x438] sm:$0xff] %v465
                %v467 = vld [vmem:[%s193 + $0x1040] sm:$0xff]
                %468 = vst [vmem:[%s194 + $0x440] sm:$0xff] %v467
                %v469 = vld [vmem:[%s193 + $0x1048] sm:$0xff]
                %470 = vst [vmem:[%s194 + $0x448] sm:$0xff] %v469
                %v471 = vld [vmem:[%s193 + $0x1050] sm:$0xff]
                %472 = vst [vmem:[%s194 + $0x450] sm:$0xff] %v471
                %v473 = vld [vmem:[%s193 + $0x1058] sm:$0xff]
                %474 = vst [vmem:[%s194 + $0x458] sm:$0xff] %v473
                %v475 = vld [vmem:[%s193 + $0x1060] sm:$0xff]
                %476 = vst [vmem:[%s194 + $0x460] sm:$0xff] %v475
                %v477 = vld [vmem:[%s193 + $0x1068] sm:$0xff]
                %478 = vst [vmem:[%s194 + $0x468] sm:$0xff] %v477
                %v479 = vld [vmem:[%s193 + $0x1070] sm:$0xff]
                %480 = vst [vmem:[%s194 + $0x470] sm:$0xff] %v479
                %v481 = vld [vmem:[%s193 + $0x1078] sm:$0xff]
                %482 = vst [vmem:[%s194 + $0x478] sm:$0xff] %v481
                %v483 = vld [vmem:[%s193 + $0x1080] sm:$0xff]
                %484 = vst [vmem:[%s194 + $0x480] sm:$0xff] %v483
                %v485 = vld [vmem:[%s193 + $0x1088] sm:$0xff]
                %486 = vst [vmem:[%s194 + $0x488] sm:$0xff] %v485
                %v487 = vld [vmem:[%s193 + $0x1090] sm:$0xff]
                %488 = vst [vmem:[%s194 + $0x490] sm:$0xff] %v487
                %v489 = vld [vmem:[%s193 + $0x1098] sm:$0xff]
                %490 = vst [vmem:[%s194 + $0x498] sm:$0xff] %v489
                %v491 = vld [vmem:[%s193 + $0x10a0] sm:$0xff]
                %492 = vst [vmem:[%s194 + $0x4a0] sm:$0xff] %v491
                %v493 = vld [vmem:[%s193 + $0x10a8] sm:$0xff]
                %494 = vst [vmem:[%s194 + $0x4a8] sm:$0xff] %v493
                %v495 = vld [vmem:[%s193 + $0x10b0] sm:$0xff]
                %496 = vst [vmem:[%s194 + $0x4b0] sm:$0xff] %v495
                %v497 = vld [vmem:[%s193 + $0x10b8] sm:$0xff]
                %498 = vst [vmem:[%s194 + $0x4b8] sm:$0xff] %v497
                %v499 = vld [vmem:[%s193 + $0x10c0] sm:$0xff]
                %500 = vst [vmem:[%s194 + $0x4c0] sm:$0xff] %v499
                %v501 = vld [vmem:[%s193 + $0x10c8] sm:$0xff]
                %502 = vst [vmem:[%s194 + $0x4c8] sm:$0xff] %v501
                %v503 = vld [vmem:[%s193 + $0x10d0] sm:$0xff]
                %504 = vst [vmem:[%s194 + $0x4d0] sm:$0xff] %v503
                %v505 = vld [vmem:[%s193 + $0x10d8] sm:$0xff]
                %506 = vst [vmem:[%s194 + $0x4d8] sm:$0xff] %v505
                %v507 = vld [vmem:[%s193 + $0x10e0] sm:$0xff]
                %508 = vst [vmem:[%s194 + $0x4e0] sm:$0xff] %v507
                %v509 = vld [vmem:[%s193 + $0x10e8] sm:$0xff]
                %510 = vst [vmem:[%s194 + $0x4e8] sm:$0xff] %v509
                %v511 = vld [vmem:[%s193 + $0x10f0] sm:$0xff]
                %512 = vst [vmem:[%s194 + $0x4f0] sm:$0xff] %v511
                %v513 = vld [vmem:[%s193 + $0x10f8] sm:$0xff]
                %514 = vst [vmem:[%s194 + $0x4f8] sm:$0xff] %v513
                %v515 = vld [vmem:[%s193 + $0x1400] sm:$0xff]
                %516 = vst [vmem:[%s194 + $0x500] sm:$0xff] %v515
                %v517 = vld [vmem:[%s193 + $0x1408] sm:$0xff]
                %518 = vst [vmem:[%s194 + $0x508] sm:$0xff] %v517
                %v519 = vld [vmem:[%s193 + $0x1410] sm:$0xff]
                %520 = vst [vmem:[%s194 + $0x510] sm:$0xff] %v519
                %v521 = vld [vmem:[%s193 + $0x1418] sm:$0xff]
                %522 = vst [vmem:[%s194 + $0x518] sm:$0xff] %v521
                %v523 = vld [vmem:[%s193 + $0x1420] sm:$0xff]
                %524 = vst [vmem:[%s194 + $0x520] sm:$0xff] %v523
                %v525 = vld [vmem:[%s193 + $0x1428] sm:$0xff]
                %526 = vst [vmem:[%s194 + $0x528] sm:$0xff] %v525
                %v527 = vld [vmem:[%s193 + $0x1430] sm:$0xff]
                %528 = vst [vmem:[%s194 + $0x530] sm:$0xff] %v527
                %v529 = vld [vmem:[%s193 + $0x1438] sm:$0xff]
                %530 = vst [vmem:[%s194 + $0x538] sm:$0xff] %v529
                %v531 = vld [vmem:[%s193 + $0x1440] sm:$0xff]
                %532 = vst [vmem:[%s194 + $0x540] sm:$0xff] %v531
                %v533 = vld [vmem:[%s193 + $0x1448] sm:$0xff]
                %534 = vst [vmem:[%s194 + $0x548] sm:$0xff] %v533
                %v535 = vld [vmem:[%s193 + $0x1450] sm:$0xff]
                %536 = vst [vmem:[%s194 + $0x550] sm:$0xff] %v535
                %v537 = vld [vmem:[%s193 + $0x1458] sm:$0xff]
                %538 = vst [vmem:[%s194 + $0x558] sm:$0xff] %v537
                %v539 = vld [vmem:[%s193 + $0x1460] sm:$0xff]
                %540 = vst [vmem:[%s194 + $0x560] sm:$0xff] %v539
                %v541 = vld [vmem:[%s193 + $0x1468] sm:$0xff]
                %542 = vst [vmem:[%s194 + $0x568] sm:$0xff] %v541
                %v543 = vld [vmem:[%s193 + $0x1470] sm:$0xff]
                %544 = vst [vmem:[%s194 + $0x570] sm:$0xff] %v543
                %v545 = vld [vmem:[%s193 + $0x1478] sm:$0xff]
                %546 = vst [vmem:[%s194 + $0x578] sm:$0xff] %v545
                %v547 = vld [vmem:[%s193 + $0x1480] sm:$0xff]
                %548 = vst [vmem:[%s194 + $0x580] sm:$0xff] %v547
                %v549 = vld [vmem:[%s193 + $0x1488] sm:$0xff]
                %550 = vst [vmem:[%s194 + $0x588] sm:$0xff] %v549
                %v551 = vld [vmem:[%s193 + $0x1490] sm:$0xff]
                %552 = vst [vmem:[%s194 + $0x590] sm:$0xff] %v551
                %v553 = vld [vmem:[%s193 + $0x1498] sm:$0xff]
                %554 = vst [vmem:[%s194 + $0x598] sm:$0xff] %v553
                %v555 = vld [vmem:[%s193 + $0x14a0] sm:$0xff]
                %556 = vst [vmem:[%s194 + $0x5a0] sm:$0xff] %v555
                %v557 = vld [vmem:[%s193 + $0x14a8] sm:$0xff]
                %558 = vst [vmem:[%s194 + $0x5a8] sm:$0xff] %v557
                %v559 = vld [vmem:[%s193 + $0x14b0] sm:$0xff]
                %560 = vst [vmem:[%s194 + $0x5b0] sm:$0xff] %v559
                %v561 = vld [vmem:[%s193 + $0x14b8] sm:$0xff]
                %562 = vst [vmem:[%s194 + $0x5b8] sm:$0xff] %v561
                %v563 = vld [vmem:[%s193 + $0x14c0] sm:$0xff]
                %564 = vst [vmem:[%s194 + $0x5c0] sm:$0xff] %v563
                %v565 = vld [vmem:[%s193 + $0x14c8] sm:$0xff]
                %566 = vst [vmem:[%s194 + $0x5c8] sm:$0xff] %v565
                %v567 = vld [vmem:[%s193 + $0x14d0] sm:$0xff]
                %568 = vst [vmem:[%s194 + $0x5d0] sm:$0xff] %v567
                %v569 = vld [vmem:[%s193 + $0x14d8] sm:$0xff]
                %570 = vst [vmem:[%s194 + $0x5d8] sm:$0xff] %v569
                %v571 = vld [vmem:[%s193 + $0x14e0] sm:$0xff]
                %572 = vst [vmem:[%s194 + $0x5e0] sm:$0xff] %v571
                %v573 = vld [vmem:[%s193 + $0x14e8] sm:$0xff]
                %574 = vst [vmem:[%s194 + $0x5e8] sm:$0xff] %v573
                %v575 = vld [vmem:[%s193 + $0x14f0] sm:$0xff]
                %576 = vst [vmem:[%s194 + $0x5f0] sm:$0xff] %v575
                %v577 = vld [vmem:[%s193 + $0x14f8] sm:$0xff]
                %578 = vst [vmem:[%s194 + $0x5f8] sm:$0xff] %v577
              $region49: #{discriminator_forward.3} parent=43 // loop_footer
                %s192 = sadd.s32 1, %s188
              $region50: #{discriminator_forward.3} parent=43 // loop_footer_branch
                %187 = sbr.rel target = $region46
              $region51: #{discriminator_forward.3} parent=43 // loop_exit
                _
            $region44: #{discriminator_forward.3} parent=39 // pred_fallthru
              _
            // Predicated region
            $region52: #{discriminator_forward.3} parent=39 // pred_check
              _
            $region53: #{discriminator_forward.3} parent=39 // pred_check_branch
              %580 = sbr.rel target = $region55
            $region54: #{discriminator_forward.3} parent=39 // pred_region
              _
            $region55: #{discriminator_forward.3} parent=39 // pred_fallthru
              _
          $region40: #{discriminator_forward.3} parent=35 // pred_fallthru
            _
          %581 = vnop
        $region36: #{discriminator_forward.3} parent=31 // pred_fallthru
          _
      $region32: #{discriminator_forward.3} parent=5 // pred_fallthru
        _
      %p582 = scmp.le.s32.totalorder 1, %s11
      %p583 = scmp.lt.s32.totalorder %s11, 5
      %p584 = pnand %p582, %p583
      %p585 = pneg %p584
      // Predicated region
      $region56: #{discriminator_forward.3} parent=5 // pred_check
        _
      $region57: #{discriminator_forward.3} parent=5 // pred_check_branch
        %587 = sbr.rel (%p584) target = $region59
      $region58: #{discriminator_forward.3} parent=5 // pred_region
        %s588 = ssub.s32 %s11, 1
        %s589 = sand.u32 %s24, 1
        %s590 = sand.u32 %s24, 1
        %s591 = smul.addr %s590, 1536
        %s592 = scalar_lea.vmem [#allocation5], %s591
        // Predicated region
        $region60: #{discriminator_forward.3} parent=58 // pred_check
          %p593 = pneg %p37
        $region61: #{discriminator_forward.3} parent=58 // pred_check_branch
          %595 = sbr.rel (%p593) target = $region63
        $region62: #{discriminator_forward.3} parent=58 // pred_region
          _
        $region63: #{discriminator_forward.3} parent=58 // pred_fallthru
          _
        %s596 = sand.u32 %s24, 1
        %s597 = sand.u32 %s24, 1
        %s598 = smul.addr %s597, 1536
        %s599 = scalar_lea.vmem [#allocation5], %s598
        %p600 = pneg %p37
        %p601 = pneg %p34
        %p602 = pneg %p58
        %p603 = pneg %p55
        %p604 = pneg %p79
        %p605 = pneg %p76
        %p606 = pneg %p100
        %p607 = pneg %p97
        %p608 = pneg %p121
        %p609 = pneg %p118
        %p610 = pneg %p142
        %p611 = pneg %p139
        %s612 = smul.u32 64, %s16
        %p614 = scmp.eq.s32.totalorder %s16, 0
        // Predicated region
        $region64: #{discriminator_forward.3} parent=58 // pred_check
          %p615 = pneg %p614
        $region65: #{discriminator_forward.3} parent=58 // pred_check_branch
          %617 = sbr.rel (%p615) target = $region67
        $region66: #{discriminator_forward.3} parent=58 // pred_region
          %618 = vst [vmem:[#allocation3] sm:$0xff] 0.0
          %619 = vst [vmem:[#allocation3 + $0x8] sm:$0xff] 0.0
          %620 = vst [vmem:[#allocation3 + $0x10] sm:$0xff] 0.0
          %621 = vst [vmem:[#allocation3 + $0x18] sm:$0xff] 0.0
          %622 = vst [vmem:[#allocation3 + $0x20] sm:$0xff] 0.0
          %623 = vst [vmem:[#allocation3 + $0x28] sm:$0xff] 0.0
          %624 = vst [vmem:[#allocation3 + $0x30] sm:$0xff] 0.0
          %625 = vst [vmem:[#allocation3 + $0x38] sm:$0xff] 0.0
          %626 = vst [vmem:[#allocation3 + $0x40] sm:$0xff] 0.0
          %627 = vst [vmem:[#allocation3 + $0x48] sm:$0xff] 0.0
          %628 = vst [vmem:[#allocation3 + $0x50] sm:$0xff] 0.0
          %629 = vst [vmem:[#allocation3 + $0x58] sm:$0xff] 0.0
          %630 = vst [vmem:[#allocation3 + $0x60] sm:$0xff] 0.0
          %631 = vst [vmem:[#allocation3 + $0x68] sm:$0xff] 0.0
          %632 = vst [vmem:[#allocation3 + $0x70] sm:$0xff] 0.0
          %633 = vst [vmem:[#allocation3 + $0x78] sm:$0xff] 0.0
          %634 = vst [vmem:[#allocation3 + $0x80] sm:$0xff] 0.0
          %635 = vst [vmem:[#allocation3 + $0x88] sm:$0xff] 0.0
          %636 = vst [vmem:[#allocation3 + $0x90] sm:$0xff] 0.0
          %637 = vst [vmem:[#allocation3 + $0x98] sm:$0xff] 0.0
          %638 = vst [vmem:[#allocation3 + $0xa0] sm:$0xff] 0.0
          %639 = vst [vmem:[#allocation3 + $0xa8] sm:$0xff] 0.0
          %640 = vst [vmem:[#allocation3 + $0xb0] sm:$0xff] 0.0
          %641 = vst [vmem:[#allocation3 + $0xb8] sm:$0xff] 0.0
          %642 = vst [vmem:[#allocation3 + $0xc0] sm:$0xff] 0.0
          %643 = vst [vmem:[#allocation3 + $0xc8] sm:$0xff] 0.0
          %644 = vst [vmem:[#allocation3 + $0xd0] sm:$0xff] 0.0
          %645 = vst [vmem:[#allocation3 + $0xd8] sm:$0xff] 0.0
          %646 = vst [vmem:[#allocation3 + $0xe0] sm:$0xff] 0.0
          %647 = vst [vmem:[#allocation3 + $0xe8] sm:$0xff] 0.0
          %648 = vst [vmem:[#allocation3 + $0xf0] sm:$0xff] 0.0
          %649 = vst [vmem:[#allocation3 + $0xf8] sm:$0xff] 0.0
          %650 = vst [vmem:[#allocation3 + $0x100] sm:$0xff] 0.0
          %651 = vst [vmem:[#allocation3 + $0x108] sm:$0xff] 0.0
          %652 = vst [vmem:[#allocation3 + $0x110] sm:$0xff] 0.0
          %653 = vst [vmem:[#allocation3 + $0x118] sm:$0xff] 0.0
          %654 = vst [vmem:[#allocation3 + $0x120] sm:$0xff] 0.0
          %655 = vst [vmem:[#allocation3 + $0x128] sm:$0xff] 0.0
          %656 = vst [vmem:[#allocation3 + $0x130] sm:$0xff] 0.0
          %657 = vst [vmem:[#allocation3 + $0x138] sm:$0xff] 0.0
          %658 = vst [vmem:[#allocation3 + $0x140] sm:$0xff] 0.0
          %659 = vst [vmem:[#allocation3 + $0x148] sm:$0xff] 0.0
          %660 = vst [vmem:[#allocation3 + $0x150] sm:$0xff] 0.0
          %661 = vst [vmem:[#allocation3 + $0x158] sm:$0xff] 0.0
          %662 = vst [vmem:[#allocation3 + $0x160] sm:$0xff] 0.0
          %663 = vst [vmem:[#allocation3 + $0x168] sm:$0xff] 0.0
          %664 = vst [vmem:[#allocation3 + $0x170] sm:$0xff] 0.0
          %665 = vst [vmem:[#allocation3 + $0x178] sm:$0xff] 0.0
          %666 = vst [vmem:[#allocation3 + $0x180] sm:$0xff] 0.0
          %667 = vst [vmem:[#allocation3 + $0x188] sm:$0xff] 0.0
          %668 = vst [vmem:[#allocation3 + $0x190] sm:$0xff] 0.0
          %669 = vst [vmem:[#allocation3 + $0x198] sm:$0xff] 0.0
          %670 = vst [vmem:[#allocation3 + $0x1a0] sm:$0xff] 0.0
          %671 = vst [vmem:[#allocation3 + $0x1a8] sm:$0xff] 0.0
          %672 = vst [vmem:[#allocation3 + $0x1b0] sm:$0xff] 0.0
          %673 = vst [vmem:[#allocation3 + $0x1b8] sm:$0xff] 0.0
          %674 = vst [vmem:[#allocation3 + $0x1c0] sm:$0xff] 0.0
          %675 = vst [vmem:[#allocation3 + $0x1c8] sm:$0xff] 0.0
          %676 = vst [vmem:[#allocation3 + $0x1d0] sm:$0xff] 0.0
          %677 = vst [vmem:[#allocation3 + $0x1d8] sm:$0xff] 0.0
          %678 = vst [vmem:[#allocation3 + $0x1e0] sm:$0xff] 0.0
          %679 = vst [vmem:[#allocation3 + $0x1e8] sm:$0xff] 0.0
          %680 = vst [vmem:[#allocation3 + $0x1f0] sm:$0xff] 0.0
          %681 = vst [vmem:[#allocation3 + $0x1f8] sm:$0xff] 0.0
          %682 = vst [vmem:[#allocation4] sm:$0xff] 0.0
          %683 = vst [vmem:[#allocation4 + $0x8] sm:$0xff] 0.0
          %684 = vst [vmem:[#allocation4 + $0x10] sm:$0xff] 0.0
          %685 = vst [vmem:[#allocation4 + $0x18] sm:$0xff] 0.0
          %686 = vst [vmem:[#allocation4 + $0x20] sm:$0xff] 0.0
          %687 = vst [vmem:[#allocation4 + $0x28] sm:$0xff] 0.0
          %688 = vst [vmem:[#allocation4 + $0x30] sm:$0xff] 0.0
          %689 = vst [vmem:[#allocation4 + $0x38] sm:$0xff] 0.0
          %690 = vst [vmem:[#allocation4 + $0x40] sm:$0xff] 0.0
          %691 = vst [vmem:[#allocation4 + $0x48] sm:$0xff] 0.0
          %692 = vst [vmem:[#allocation4 + $0x50] sm:$0xff] 0.0
          %693 = vst [vmem:[#allocation4 + $0x58] sm:$0xff] 0.0
          %694 = vst [vmem:[#allocation4 + $0x60] sm:$0xff] 0.0
          %695 = vst [vmem:[#allocation4 + $0x68] sm:$0xff] 0.0
          %696 = vst [vmem:[#allocation4 + $0x70] sm:$0xff] 0.0
          %697 = vst [vmem:[#allocation4 + $0x78] sm:$0xff] 0.0
          %698 = vst [vmem:[#allocation4 + $0x80] sm:$0xff] 0.0
          %699 = vst [vmem:[#allocation4 + $0x88] sm:$0xff] 0.0
          %700 = vst [vmem:[#allocation4 + $0x90] sm:$0xff] 0.0
          %701 = vst [vmem:[#allocation4 + $0x98] sm:$0xff] 0.0
          %702 = vst [vmem:[#allocation4 + $0xa0] sm:$0xff] 0.0
          %703 = vst [vmem:[#allocation4 + $0xa8] sm:$0xff] 0.0
          %704 = vst [vmem:[#allocation4 + $0xb0] sm:$0xff] 0.0
          %705 = vst [vmem:[#allocation4 + $0xb8] sm:$0xff] 0.0
          %706 = vst [vmem:[#allocation4 + $0xc0] sm:$0xff] 0.0
          %707 = vst [vmem:[#allocation4 + $0xc8] sm:$0xff] 0.0
          %708 = vst [vmem:[#allocation4 + $0xd0] sm:$0xff] 0.0
          %709 = vst [vmem:[#allocation4 + $0xd8] sm:$0xff] 0.0
          %710 = vst [vmem:[#allocation4 + $0xe0] sm:$0xff] 0.0
          %711 = vst [vmem:[#allocation4 + $0xe8] sm:$0xff] 0.0
          %712 = vst [vmem:[#allocation4 + $0xf0] sm:$0xff] 0.0
          %713 = vst [vmem:[#allocation4 + $0xf8] sm:$0xff] 0.0
          %714 = vst [vmem:[#allocation4 + $0x100] sm:$0xff] 0.0
          %715 = vst [vmem:[#allocation4 + $0x108] sm:$0xff] 0.0
          %716 = vst [vmem:[#allocation4 + $0x110] sm:$0xff] 0.0
          %717 = vst [vmem:[#allocation4 + $0x118] sm:$0xff] 0.0
          %718 = vst [vmem:[#allocation4 + $0x120] sm:$0xff] 0.0
          %719 = vst [vmem:[#allocation4 + $0x128] sm:$0xff] 0.0
          %720 = vst [vmem:[#allocation4 + $0x130] sm:$0xff] 0.0
          %721 = vst [vmem:[#allocation4 + $0x138] sm:$0xff] 0.0
          %722 = vst [vmem:[#allocation4 + $0x140] sm:$0xff] 0.0
          %723 = vst [vmem:[#allocation4 + $0x148] sm:$0xff] 0.0
          %724 = vst [vmem:[#allocation4 + $0x150] sm:$0xff] 0.0
          %725 = vst [vmem:[#allocation4 + $0x158] sm:$0xff] 0.0
          %726 = vst [vmem:[#allocation4 + $0x160] sm:$0xff] 0.0
          %727 = vst [vmem:[#allocation4 + $0x168] sm:$0xff] 0.0
          %728 = vst [vmem:[#allocation4 + $0x170] sm:$0xff] 0.0
          %729 = vst [vmem:[#allocation4 + $0x178] sm:$0xff] 0.0
          %730 = vst [vmem:[#allocation4 + $0x180] sm:$0xff] 0.0
          %731 = vst [vmem:[#allocation4 + $0x188] sm:$0xff] 0.0
          %732 = vst [vmem:[#allocation4 + $0x190] sm:$0xff] 0.0
          %733 = vst [vmem:[#allocation4 + $0x198] sm:$0xff] 0.0
          %734 = vst [vmem:[#allocation4 + $0x1a0] sm:$0xff] 0.0
          %735 = vst [vmem:[#allocation4 + $0x1a8] sm:$0xff] 0.0
          %736 = vst [vmem:[#allocation4 + $0x1b0] sm:$0xff] 0.0
          %737 = vst [vmem:[#allocation4 + $0x1b8] sm:$0xff] 0.0
          %738 = vst [vmem:[#allocation4 + $0x1c0] sm:$0xff] 0.0
          %739 = vst [vmem:[#allocation4 + $0x1c8] sm:$0xff] 0.0
          %740 = vst [vmem:[#allocation4 + $0x1d0] sm:$0xff] 0.0
          %741 = vst [vmem:[#allocation4 + $0x1d8] sm:$0xff] 0.0
          %742 = vst [vmem:[#allocation4 + $0x1e0] sm:$0xff] 0.0
          %743 = vst [vmem:[#allocation4 + $0x1e8] sm:$0xff] 0.0
          %744 = vst [vmem:[#allocation4 + $0x1f0] sm:$0xff] 0.0
          %745 = vst [vmem:[#allocation4 + $0x1f8] sm:$0xff] 0.0
        $region67: #{discriminator_forward.3} parent=58 // pred_fallthru
          _
        %v746 = vld [vmem:[%s1] sm:$0xf]
        %v747 = vld [vmem:[%s592] sm:$0xff]
        %v748 = vld [vmem:[%s592 + $0x8] sm:$0xff]
        %v749 = vld [vmem:[%s592 + $0x10] sm:$0xff]
        %v750 = vld [vmem:[%s592 + $0x18] sm:$0xff]
        %v751 = vld [vmem:[%s592 + $0x20] sm:$0xff]
        %v752 = vld [vmem:[%s592 + $0x28] sm:$0xff]
        %v753 = vld [vmem:[%s592 + $0x30] sm:$0xff]
        %v754 = vld [vmem:[%s592 + $0x38] sm:$0xff]
        %v755 = vld [vmem:[%s592 + $0x40] sm:$0xff]
        %v756 = vld [vmem:[%s592 + $0x48] sm:$0xff]
        %v757 = vld [vmem:[%s592 + $0x50] sm:$0xff]
        %v758 = vld [vmem:[%s592 + $0x58] sm:$0xff]
        %v759 = vld [vmem:[%s592 + $0x60] sm:$0xff]
        %v760 = vld [vmem:[%s592 + $0x68] sm:$0xff]
        %v761 = vld [vmem:[%s592 + $0x70] sm:$0xff]
        %v762 = vld [vmem:[%s592 + $0x78] sm:$0xff]
        %v763 = vld [vmem:[%s592 + $0x80] sm:$0xff]
        %v764 = vld [vmem:[%s592 + $0x88] sm:$0xff]
        %v765 = vld [vmem:[%s592 + $0x90] sm:$0xff]
        %v766 = vld [vmem:[%s592 + $0x98] sm:$0xff]
        %v767 = vld [vmem:[%s592 + $0xa0] sm:$0xff]
        %v768 = vld [vmem:[%s592 + $0xa8] sm:$0xff]
        %v769 = vld [vmem:[%s592 + $0xb0] sm:$0xff]
        %v770 = vld [vmem:[%s592 + $0xb8] sm:$0xff]
        %v771 = vld [vmem:[%s592 + $0xc0] sm:$0xff]
        %v772 = vld [vmem:[%s592 + $0xc8] sm:$0xff]
        %v773 = vld [vmem:[%s592 + $0xd0] sm:$0xff]
        %v774 = vld [vmem:[%s592 + $0xd8] sm:$0xff]
        %v775 = vld [vmem:[%s592 + $0xe0] sm:$0xff]
        %v776 = vld [vmem:[%s592 + $0xe8] sm:$0xff]
        %v777 = vld [vmem:[%s592 + $0xf0] sm:$0xff]
        %v778 = vld [vmem:[%s592 + $0xf8] sm:$0xff]
        %v779 = vld [vmem:[%s592 + $0x100] sm:$0xff]
        %v780 = vld [vmem:[%s592 + $0x108] sm:$0xff]
        %v781 = vld [vmem:[%s592 + $0x110] sm:$0xff]
        %v782 = vld [vmem:[%s592 + $0x118] sm:$0xff]
        %v783 = vld [vmem:[%s592 + $0x120] sm:$0xff]
        %v784 = vld [vmem:[%s592 + $0x128] sm:$0xff]
        %v785 = vld [vmem:[%s592 + $0x130] sm:$0xff]
        %v786 = vld [vmem:[%s592 + $0x138] sm:$0xff]
        %v787 = vld [vmem:[%s592 + $0x140] sm:$0xff]
        %v788 = vld [vmem:[%s592 + $0x148] sm:$0xff]
        %v789 = vld [vmem:[%s592 + $0x150] sm:$0xff]
        %v790 = vld [vmem:[%s592 + $0x158] sm:$0xff]
        %v791 = vld [vmem:[%s592 + $0x160] sm:$0xff]
        %v792 = vld [vmem:[%s592 + $0x168] sm:$0xff]
        %v793 = vld [vmem:[%s592 + $0x170] sm:$0xff]
        %v794 = vld [vmem:[%s592 + $0x178] sm:$0xff]
        %v795 = vld [vmem:[%s592 + $0x180] sm:$0xff]
        %v796 = vld [vmem:[%s592 + $0x188] sm:$0xff]
        %v797 = vld [vmem:[%s592 + $0x190] sm:$0xff]
        %v798 = vld [vmem:[%s592 + $0x198] sm:$0xff]
        %v799 = vld [vmem:[%s592 + $0x1a0] sm:$0xff]
        %v800 = vld [vmem:[%s592 + $0x1a8] sm:$0xff]
        %v801 = vld [vmem:[%s592 + $0x1b0] sm:$0xff]
        %v802 = vld [vmem:[%s592 + $0x1b8] sm:$0xff]
        %v803 = vld [vmem:[%s592 + $0x1c0] sm:$0xff]
        %v804 = vld [vmem:[%s592 + $0x1c8] sm:$0xff]
        %v805 = vld [vmem:[%s592 + $0x1d0] sm:$0xff]
        %v806 = vld [vmem:[%s592 + $0x1d8] sm:$0xff]
        %v807 = vld [vmem:[%s592 + $0x1e0] sm:$0xff]
        %v808 = vld [vmem:[%s592 + $0x1e8] sm:$0xff]
        %v809 = vld [vmem:[%s592 + $0x1f0] sm:$0xff]
        %v810 = vld [vmem:[%s592 + $0x1f8] sm:$0xff]
        %v811 = vld [vmem:[%s592 + $0x200] sm:$0xff]
        %v812 = vld [vmem:[%s592 + $0x208] sm:$0xff]
        %v813 = vld [vmem:[%s592 + $0x210] sm:$0xff]
        %v814 = vld [vmem:[%s592 + $0x218] sm:$0xff]
        %v815 = vld [vmem:[%s592 + $0x220] sm:$0xff]
        %v816 = vld [vmem:[%s592 + $0x228] sm:$0xff]
        %v817 = vld [vmem:[%s592 + $0x230] sm:$0xff]
        %v818 = vld [vmem:[%s592 + $0x238] sm:$0xff]
        %v819 = vld [vmem:[%s592 + $0x240] sm:$0xff]
        %v820 = vld [vmem:[%s592 + $0x248] sm:$0xff]
        %v821 = vld [vmem:[%s592 + $0x250] sm:$0xff]
        %v822 = vld [vmem:[%s592 + $0x258] sm:$0xff]
        %v823 = vld [vmem:[%s592 + $0x260] sm:$0xff]
        %v824 = vld [vmem:[%s592 + $0x268] sm:$0xff]
        %v825 = vld [vmem:[%s592 + $0x270] sm:$0xff]
        %v826 = vld [vmem:[%s592 + $0x278] sm:$0xff]
        %v827 = vld [vmem:[%s592 + $0x280] sm:$0xff]
        %v828 = vld [vmem:[%s592 + $0x288] sm:$0xff]
        %v829 = vld [vmem:[%s592 + $0x290] sm:$0xff]
        %v830 = vld [vmem:[%s592 + $0x298] sm:$0xff]
        %v831 = vld [vmem:[%s592 + $0x2a0] sm:$0xff]
        %v832 = vld [vmem:[%s592 + $0x2a8] sm:$0xff]
        %v833 = vld [vmem:[%s592 + $0x2b0] sm:$0xff]
        %v834 = vld [vmem:[%s592 + $0x2b8] sm:$0xff]
        %v835 = vld [vmem:[%s592 + $0x2c0] sm:$0xff]
        %v836 = vld [vmem:[%s592 + $0x2c8] sm:$0xff]
        %v837 = vld [vmem:[%s592 + $0x2d0] sm:$0xff]
        %v838 = vld [vmem:[%s592 + $0x2d8] sm:$0xff]
        %v839 = vld [vmem:[%s592 + $0x2e0] sm:$0xff]
        %v840 = vld [vmem:[%s592 + $0x2e8] sm:$0xff]
        %v841 = vld [vmem:[%s592 + $0x2f0] sm:$0xff]
        %v842 = vld [vmem:[%s592 + $0x2f8] sm:$0xff]
        %v843 = vld [vmem:[%s592 + $0x300] sm:$0xff]
        %v844 = vld [vmem:[%s592 + $0x308] sm:$0xff]
        %v845 = vld [vmem:[%s592 + $0x310] sm:$0xff]
        %v846 = vld [vmem:[%s592 + $0x318] sm:$0xff]
        %v847 = vld [vmem:[%s592 + $0x320] sm:$0xff]
        %v848 = vld [vmem:[%s592 + $0x328] sm:$0xff]
        %v849 = vld [vmem:[%s592 + $0x330] sm:$0xff]
        %v850 = vld [vmem:[%s592 + $0x338] sm:$0xff]
        %v851 = vld [vmem:[%s592 + $0x340] sm:$0xff]
        %v852 = vld [vmem:[%s592 + $0x348] sm:$0xff]
        %v853 = vld [vmem:[%s592 + $0x350] sm:$0xff]
        %v854 = vld [vmem:[%s592 + $0x358] sm:$0xff]
        %v855 = vld [vmem:[%s592 + $0x360] sm:$0xff]
        %v856 = vld [vmem:[%s592 + $0x368] sm:$0xff]
        %v857 = vld [vmem:[%s592 + $0x370] sm:$0xff]
        %v858 = vld [vmem:[%s592 + $0x378] sm:$0xff]
        %v859 = vld [vmem:[%s592 + $0x380] sm:$0xff]
        %v860 = vld [vmem:[%s592 + $0x388] sm:$0xff]
        %v861 = vld [vmem:[%s592 + $0x390] sm:$0xff]
        %v862 = vld [vmem:[%s592 + $0x398] sm:$0xff]
        %v863 = vld [vmem:[%s592 + $0x3a0] sm:$0xff]
        %v864 = vld [vmem:[%s592 + $0x3a8] sm:$0xff]
        %v865 = vld [vmem:[%s592 + $0x3b0] sm:$0xff]
        %v866 = vld [vmem:[%s592 + $0x3b8] sm:$0xff]
        %v867 = vld [vmem:[%s592 + $0x3c0] sm:$0xff]
        %v868 = vld [vmem:[%s592 + $0x3c8] sm:$0xff]
        %v869 = vld [vmem:[%s592 + $0x3d0] sm:$0xff]
        %v870 = vld [vmem:[%s592 + $0x3d8] sm:$0xff]
        %v871 = vld [vmem:[%s592 + $0x3e0] sm:$0xff]
        %v872 = vld [vmem:[%s592 + $0x3e8] sm:$0xff]
        %v873 = vld [vmem:[%s592 + $0x3f0] sm:$0xff]
        %v874 = vld [vmem:[%s592 + $0x3f8] sm:$0xff]
        %v875 = vld [vmem:[%s592 + $0x400] sm:$0xff]
        %v876 = vld [vmem:[%s592 + $0x408] sm:$0xff]
        %v877 = vld [vmem:[%s592 + $0x410] sm:$0xff]
        %v878 = vld [vmem:[%s592 + $0x418] sm:$0xff]
        %v879 = vld [vmem:[%s592 + $0x420] sm:$0xff]
        %v880 = vld [vmem:[%s592 + $0x428] sm:$0xff]
        %v881 = vld [vmem:[%s592 + $0x430] sm:$0xff]
        %v882 = vld [vmem:[%s592 + $0x438] sm:$0xff]
        %v883 = vld [vmem:[%s592 + $0x440] sm:$0xff]
        %v884 = vld [vmem:[%s592 + $0x448] sm:$0xff]
        %v885 = vld [vmem:[%s592 + $0x450] sm:$0xff]
        %v886 = vld [vmem:[%s592 + $0x458] sm:$0xff]
        %v887 = vld [vmem:[%s592 + $0x460] sm:$0xff]
        %v888 = vld [vmem:[%s592 + $0x468] sm:$0xff]
        %v889 = vld [vmem:[%s592 + $0x470] sm:$0xff]
        %v890 = vld [vmem:[%s592 + $0x478] sm:$0xff]
        %v891 = vld [vmem:[%s592 + $0x480] sm:$0xff]
        %v892 = vld [vmem:[%s592 + $0x488] sm:$0xff]
        %v893 = vld [vmem:[%s592 + $0x490] sm:$0xff]
        %v894 = vld [vmem:[%s592 + $0x498] sm:$0xff]
        %v895 = vld [vmem:[%s592 + $0x4a0] sm:$0xff]
        %v896 = vld [vmem:[%s592 + $0x4a8] sm:$0xff]
        %v897 = vld [vmem:[%s592 + $0x4b0] sm:$0xff]
        %v898 = vld [vmem:[%s592 + $0x4b8] sm:$0xff]
        %v899 = vld [vmem:[%s592 + $0x4c0] sm:$0xff]
        %v900 = vld [vmem:[%s592 + $0x4c8] sm:$0xff]
        %v901 = vld [vmem:[%s592 + $0x4d0] sm:$0xff]
        %v902 = vld [vmem:[%s592 + $0x4d8] sm:$0xff]
        %v903 = vld [vmem:[%s592 + $0x4e0] sm:$0xff]
        %v904 = vld [vmem:[%s592 + $0x4e8] sm:$0xff]
        %v905 = vld [vmem:[%s592 + $0x4f0] sm:$0xff]
        %v906 = vld [vmem:[%s592 + $0x4f8] sm:$0xff]
        %v907 = vld [vmem:[%s592 + $0x500] sm:$0xff]
        %v908 = vld [vmem:[%s592 + $0x508] sm:$0xff]
        %v909 = vld [vmem:[%s592 + $0x510] sm:$0xff]
        %v910 = vld [vmem:[%s592 + $0x518] sm:$0xff]
        %v911 = vld [vmem:[%s592 + $0x520] sm:$0xff]
        %v912 = vld [vmem:[%s592 + $0x528] sm:$0xff]
        %v913 = vld [vmem:[%s592 + $0x530] sm:$0xff]
        %v914 = vld [vmem:[%s592 + $0x538] sm:$0xff]
        %v915 = vld [vmem:[%s592 + $0x540] sm:$0xff]
        %v916 = vld [vmem:[%s592 + $0x548] sm:$0xff]
        %v917 = vld [vmem:[%s592 + $0x550] sm:$0xff]
        %v918 = vld [vmem:[%s592 + $0x558] sm:$0xff]
        %v919 = vld [vmem:[%s592 + $0x560] sm:$0xff]
        %v920 = vld [vmem:[%s592 + $0x568] sm:$0xff]
        %v921 = vld [vmem:[%s592 + $0x570] sm:$0xff]
        %v922 = vld [vmem:[%s592 + $0x578] sm:$0xff]
        %v923 = vld [vmem:[%s592 + $0x580] sm:$0xff]
        %v924 = vld [vmem:[%s592 + $0x588] sm:$0xff]
        %v925 = vld [vmem:[%s592 + $0x590] sm:$0xff]
        %v926 = vld [vmem:[%s592 + $0x598] sm:$0xff]
        %v927 = vld [vmem:[%s592 + $0x5a0] sm:$0xff]
        %v928 = vld [vmem:[%s592 + $0x5a8] sm:$0xff]
        %v929 = vld [vmem:[%s592 + $0x5b0] sm:$0xff]
        %v930 = vld [vmem:[%s592 + $0x5b8] sm:$0xff]
        %v931 = vld [vmem:[%s592 + $0x5c0] sm:$0xff]
        %v932 = vld [vmem:[%s592 + $0x5c8] sm:$0xff]
        %v933 = vld [vmem:[%s592 + $0x5d0] sm:$0xff]
        %v934 = vld [vmem:[%s592 + $0x5d8] sm:$0xff]
        %v935 = vld [vmem:[%s592 + $0x5e0] sm:$0xff]
        %v936 = vld [vmem:[%s592 + $0x5e8] sm:$0xff]
        %v937 = vld [vmem:[%s592 + $0x5f0] sm:$0xff]
        %v938 = vld [vmem:[%s592 + $0x5f8] sm:$0xff]
        %v939 = vld [vmem:[%s2] sm:$0xff]
        %941 = vset.pattern.permute.xlu0 0
        %942 = vperm.xlu0 %941, %v939
        %v943 = vpop.permute.xlu0 %942
        %v1137 = vunpack.c.l.b16 %v747
        %v1138 = vunpack.c.h.b16 %v747
        %v1139 = vunpack.c.l.b16 %v748
        %v1140 = vunpack.c.h.b16 %v748
        %v1141 = vunpack.c.l.b16 %v749
        %v1142 = vunpack.c.h.b16 %v749
        %v1143 = vunpack.c.l.b16 %v750
        %v1144 = vunpack.c.h.b16 %v750
        %v1145 = vunpack.c.l.b16 %v751
        %v1146 = vunpack.c.h.b16 %v751
        %v1147 = vunpack.c.l.b16 %v752
        %v1148 = vunpack.c.h.b16 %v752
        %v1149 = vunpack.c.l.b16 %v753
        %v1150 = vunpack.c.h.b16 %v753
        %v1151 = vunpack.c.l.b16 %v754
        %v1152 = vunpack.c.h.b16 %v754
        %v1153 = vunpack.c.l.b16 %v755
        %v1154 = vunpack.c.h.b16 %v755
        %v1155 = vunpack.c.l.b16 %v756
        %v1156 = vunpack.c.h.b16 %v756
        %v1157 = vunpack.c.l.b16 %v757
        %v1158 = vunpack.c.h.b16 %v757
        %v1159 = vunpack.c.l.b16 %v758
        %v1160 = vunpack.c.h.b16 %v758
        %v1161 = vunpack.c.l.b16 %v759
        %v1162 = vunpack.c.h.b16 %v759
        %v1163 = vunpack.c.l.b16 %v760
        %v1164 = vunpack.c.h.b16 %v760
        %v1165 = vunpack.c.l.b16 %v761
        %v1166 = vunpack.c.h.b16 %v761
        %v1167 = vunpack.c.l.b16 %v762
        %v1168 = vunpack.c.h.b16 %v762
        %v1169 = vunpack.c.l.b16 %v763
        %v1170 = vunpack.c.h.b16 %v763
        %v1171 = vunpack.c.l.b16 %v764
        %v1172 = vunpack.c.h.b16 %v764
        %v1173 = vunpack.c.l.b16 %v765
        %v1174 = vunpack.c.h.b16 %v765
        %v1175 = vunpack.c.l.b16 %v766
        %v1176 = vunpack.c.h.b16 %v766
        %v1177 = vunpack.c.l.b16 %v767
        %v1178 = vunpack.c.h.b16 %v767
        %v1179 = vunpack.c.l.b16 %v768
        %v1180 = vunpack.c.h.b16 %v768
        %v1181 = vunpack.c.l.b16 %v769
        %v1182 = vunpack.c.h.b16 %v769
        %v1183 = vunpack.c.l.b16 %v770
        %v1184 = vunpack.c.h.b16 %v770
        %v1185 = vunpack.c.l.b16 %v771
        %v1186 = vunpack.c.h.b16 %v771
        %v1187 = vunpack.c.l.b16 %v772
        %v1188 = vunpack.c.h.b16 %v772
        %v1189 = vunpack.c.l.b16 %v773
        %v1190 = vunpack.c.h.b16 %v773
        %v1191 = vunpack.c.l.b16 %v774
        %v1192 = vunpack.c.h.b16 %v774
        %v1193 = vunpack.c.l.b16 %v775
        %v1194 = vunpack.c.h.b16 %v775
        %v1195 = vunpack.c.l.b16 %v776
        %v1196 = vunpack.c.h.b16 %v776
        %v1197 = vunpack.c.l.b16 %v777
        %v1198 = vunpack.c.h.b16 %v777
        %v1199 = vunpack.c.l.b16 %v778
        %v1200 = vunpack.c.h.b16 %v778
        %v1201 = vunpack.c.l.b16 %v779
        %v1202 = vunpack.c.h.b16 %v779
        %v1203 = vunpack.c.l.b16 %v780
        %v1204 = vunpack.c.h.b16 %v780
        %v1205 = vunpack.c.l.b16 %v781
        %v1206 = vunpack.c.h.b16 %v781
        %v1207 = vunpack.c.l.b16 %v782
        %v1208 = vunpack.c.h.b16 %v782
        %v1209 = vunpack.c.l.b16 %v783
        %v1210 = vunpack.c.h.b16 %v783
        %v1211 = vunpack.c.l.b16 %v784
        %v1212 = vunpack.c.h.b16 %v784
        %v1213 = vunpack.c.l.b16 %v785
        %v1214 = vunpack.c.h.b16 %v785
        %v1215 = vunpack.c.l.b16 %v786
        %v1216 = vunpack.c.h.b16 %v786
        %v1217 = vunpack.c.l.b16 %v787
        %v1218 = vunpack.c.h.b16 %v787
        %v1219 = vunpack.c.l.b16 %v788
        %v1220 = vunpack.c.h.b16 %v788
        %v1221 = vunpack.c.l.b16 %v789
        %v1222 = vunpack.c.h.b16 %v789
        %v1223 = vunpack.c.l.b16 %v790
        %v1224 = vunpack.c.h.b16 %v790
        %v1225 = vunpack.c.l.b16 %v791
        %v1226 = vunpack.c.h.b16 %v791
        %v1227 = vunpack.c.l.b16 %v792
        %v1228 = vunpack.c.h.b16 %v792
        %v1229 = vunpack.c.l.b16 %v793
        %v1230 = vunpack.c.h.b16 %v793
        %v1231 = vunpack.c.l.b16 %v794
        %v1232 = vunpack.c.h.b16 %v794
        %v1233 = vunpack.c.l.b16 %v795
        %v1234 = vunpack.c.h.b16 %v795
        %v1235 = vunpack.c.l.b16 %v796
        %v1236 = vunpack.c.h.b16 %v796
        %v1237 = vunpack.c.l.b16 %v797
        %v1238 = vunpack.c.h.b16 %v797
        %v1239 = vunpack.c.l.b16 %v798
        %v1240 = vunpack.c.h.b16 %v798
        %v1241 = vunpack.c.l.b16 %v799
        %v1242 = vunpack.c.h.b16 %v799
        %v1243 = vunpack.c.l.b16 %v800
        %v1244 = vunpack.c.h.b16 %v800
        %v1245 = vunpack.c.l.b16 %v801
        %v1246 = vunpack.c.h.b16 %v801
        %v1247 = vunpack.c.l.b16 %v802
        %v1248 = vunpack.c.h.b16 %v802
        %v1249 = vunpack.c.l.b16 %v803
        %v1250 = vunpack.c.h.b16 %v803
        %v1251 = vunpack.c.l.b16 %v804
        %v1252 = vunpack.c.h.b16 %v804
        %v1253 = vunpack.c.l.b16 %v805
        %v1254 = vunpack.c.h.b16 %v805
        %v1255 = vunpack.c.l.b16 %v806
        %v1256 = vunpack.c.h.b16 %v806
        %v1257 = vunpack.c.l.b16 %v807
        %v1258 = vunpack.c.h.b16 %v807
        %v1259 = vunpack.c.l.b16 %v808
        %v1260 = vunpack.c.h.b16 %v808
        %v1261 = vunpack.c.l.b16 %v809
        %v1262 = vunpack.c.h.b16 %v809
        %v1263 = vunpack.c.l.b16 %v810
        %v1264 = vunpack.c.h.b16 %v810
        %v1265 = vunpack.c.l.b16 %v811
        %v1266 = vunpack.c.h.b16 %v811
        %v1267 = vunpack.c.l.b16 %v812
        %v1268 = vunpack.c.h.b16 %v812
        %v1269 = vunpack.c.l.b16 %v813
        %v1270 = vunpack.c.h.b16 %v813
        %v1271 = vunpack.c.l.b16 %v814
        %v1272 = vunpack.c.h.b16 %v814
        %v1273 = vunpack.c.l.b16 %v815
        %v1274 = vunpack.c.h.b16 %v815
        %v1275 = vunpack.c.l.b16 %v816
        %v1276 = vunpack.c.h.b16 %v816
        %v1277 = vunpack.c.l.b16 %v817
        %v1278 = vunpack.c.h.b16 %v817
        %v1279 = vunpack.c.l.b16 %v818
        %v1280 = vunpack.c.h.b16 %v818
        %v1281 = vunpack.c.l.b16 %v819
        %v1282 = vunpack.c.h.b16 %v819
        %v1283 = vunpack.c.l.b16 %v820
        %v1284 = vunpack.c.h.b16 %v820
        %v1285 = vunpack.c.l.b16 %v821
        %v1286 = vunpack.c.h.b16 %v821
        %v1287 = vunpack.c.l.b16 %v822
        %v1288 = vunpack.c.h.b16 %v822
        %v1289 = vunpack.c.l.b16 %v823
        %v1290 = vunpack.c.h.b16 %v823
        %v1291 = vunpack.c.l.b16 %v824
        %v1292 = vunpack.c.h.b16 %v824
        %v1293 = vunpack.c.l.b16 %v825
        %v1294 = vunpack.c.h.b16 %v825
        %v1295 = vunpack.c.l.b16 %v826
        %v1296 = vunpack.c.h.b16 %v826
        %v1297 = vunpack.c.l.b16 %v827
        %v1298 = vunpack.c.h.b16 %v827
        %v1299 = vunpack.c.l.b16 %v828
        %v1300 = vunpack.c.h.b16 %v828
        %v1301 = vunpack.c.l.b16 %v829
        %v1302 = vunpack.c.h.b16 %v829
        %v1303 = vunpack.c.l.b16 %v830
        %v1304 = vunpack.c.h.b16 %v830
        %v1305 = vunpack.c.l.b16 %v831
        %v1306 = vunpack.c.h.b16 %v831
        %v1307 = vunpack.c.l.b16 %v832
        %v1308 = vunpack.c.h.b16 %v832
        %v1309 = vunpack.c.l.b16 %v833
        %v1310 = vunpack.c.h.b16 %v833
        %v1311 = vunpack.c.l.b16 %v834
        %v1312 = vunpack.c.h.b16 %v834
        %v1313 = vunpack.c.l.b16 %v835
        %v1314 = vunpack.c.h.b16 %v835
        %v1315 = vunpack.c.l.b16 %v836
        %v1316 = vunpack.c.h.b16 %v836
        %v1317 = vunpack.c.l.b16 %v837
        %v1318 = vunpack.c.h.b16 %v837
        %v1319 = vunpack.c.l.b16 %v838
        %v1320 = vunpack.c.h.b16 %v838
        %v1321 = vunpack.c.l.b16 %v839
        %v1322 = vunpack.c.h.b16 %v839
        %v1323 = vunpack.c.l.b16 %v840
        %v1324 = vunpack.c.h.b16 %v840
        %v1325 = vunpack.c.l.b16 %v841
        %v1326 = vunpack.c.h.b16 %v841
        %v1327 = vunpack.c.l.b16 %v842
        %v1328 = vunpack.c.h.b16 %v842
        %v1329 = vunpack.c.l.b16 %v843
        %v1330 = vunpack.c.h.b16 %v843
        %v1331 = vunpack.c.l.b16 %v844
        %v1332 = vunpack.c.h.b16 %v844
        %v1333 = vunpack.c.l.b16 %v845
        %v1334 = vunpack.c.h.b16 %v845
        %v1335 = vunpack.c.l.b16 %v846
        %v1336 = vunpack.c.h.b16 %v846
        %v1337 = vunpack.c.l.b16 %v847
        %v1338 = vunpack.c.h.b16 %v847
        %v1339 = vunpack.c.l.b16 %v848
        %v1340 = vunpack.c.h.b16 %v848
        %v1341 = vunpack.c.l.b16 %v849
        %v1342 = vunpack.c.h.b16 %v849
        %v1343 = vunpack.c.l.b16 %v850
        %v1344 = vunpack.c.h.b16 %v850
        %v1345 = vunpack.c.l.b16 %v851
        %v1346 = vunpack.c.h.b16 %v851
        %v1347 = vunpack.c.l.b16 %v852
        %v1348 = vunpack.c.h.b16 %v852
        %v1349 = vunpack.c.l.b16 %v853
        %v1350 = vunpack.c.h.b16 %v853
        %v1351 = vunpack.c.l.b16 %v854
        %v1352 = vunpack.c.h.b16 %v854
        %v1353 = vunpack.c.l.b16 %v855
        %v1354 = vunpack.c.h.b16 %v855
        %v1355 = vunpack.c.l.b16 %v856
        %v1356 = vunpack.c.h.b16 %v856
        %v1357 = vunpack.c.l.b16 %v857
        %v1358 = vunpack.c.h.b16 %v857
        %v1359 = vunpack.c.l.b16 %v858
        %v1360 = vunpack.c.h.b16 %v858
        %v1361 = vunpack.c.l.b16 %v859
        %v1362 = vunpack.c.h.b16 %v859
        %v1363 = vunpack.c.l.b16 %v860
        %v1364 = vunpack.c.h.b16 %v860
        %v1365 = vunpack.c.l.b16 %v861
        %v1366 = vunpack.c.h.b16 %v861
        %v1367 = vunpack.c.l.b16 %v862
        %v1368 = vunpack.c.h.b16 %v862
        %v1369 = vunpack.c.l.b16 %v863
        %v1370 = vunpack.c.h.b16 %v863
        %v1371 = vunpack.c.l.b16 %v864
        %v1372 = vunpack.c.h.b16 %v864
        %v1373 = vunpack.c.l.b16 %v865
        %v1374 = vunpack.c.h.b16 %v865
        %v1375 = vunpack.c.l.b16 %v866
        %v1376 = vunpack.c.h.b16 %v866
        %v1377 = vunpack.c.l.b16 %v867
        %v1378 = vunpack.c.h.b16 %v867
        %v1379 = vunpack.c.l.b16 %v868
        %v1380 = vunpack.c.h.b16 %v868
        %v1381 = vunpack.c.l.b16 %v869
        %v1382 = vunpack.c.h.b16 %v869
        %v1383 = vunpack.c.l.b16 %v870
        %v1384 = vunpack.c.h.b16 %v870
        %v1385 = vunpack.c.l.b16 %v871
        %v1386 = vunpack.c.h.b16 %v871
        %v1387 = vunpack.c.l.b16 %v872
        %v1388 = vunpack.c.h.b16 %v872
        %v1389 = vunpack.c.l.b16 %v873
        %v1390 = vunpack.c.h.b16 %v873
        %v1391 = vunpack.c.l.b16 %v874
        %v1392 = vunpack.c.h.b16 %v874
        %v1393 = vunpack.c.l.b16 %v875
        %v1394 = vunpack.c.h.b16 %v875
        %v1395 = vunpack.c.l.b16 %v876
        %v1396 = vunpack.c.h.b16 %v876
        %v1397 = vunpack.c.l.b16 %v877
        %v1398 = vunpack.c.h.b16 %v877
        %v1399 = vunpack.c.l.b16 %v878
        %v1400 = vunpack.c.h.b16 %v878
        %v1401 = vunpack.c.l.b16 %v879
        %v1402 = vunpack.c.h.b16 %v879
        %v1403 = vunpack.c.l.b16 %v880
        %v1404 = vunpack.c.h.b16 %v880
        %v1405 = vunpack.c.l.b16 %v881
        %v1406 = vunpack.c.h.b16 %v881
        %v1407 = vunpack.c.l.b16 %v882
        %v1408 = vunpack.c.h.b16 %v882
        %v1409 = vunpack.c.l.b16 %v883
        %v1410 = vunpack.c.h.b16 %v883
        %v1411 = vunpack.c.l.b16 %v884
        %v1412 = vunpack.c.h.b16 %v884
        %v1413 = vunpack.c.l.b16 %v885
        %v1414 = vunpack.c.h.b16 %v885
        %v1415 = vunpack.c.l.b16 %v886
        %v1416 = vunpack.c.h.b16 %v886
        %v1417 = vunpack.c.l.b16 %v887
        %v1418 = vunpack.c.h.b16 %v887
        %v1419 = vunpack.c.l.b16 %v888
        %v1420 = vunpack.c.h.b16 %v888
        %v1421 = vunpack.c.l.b16 %v889
        %v1422 = vunpack.c.h.b16 %v889
        %v1423 = vunpack.c.l.b16 %v890
        %v1424 = vunpack.c.h.b16 %v890
        %v1425 = vunpack.c.l.b16 %v891
        %v1426 = vunpack.c.h.b16 %v891
        %v1427 = vunpack.c.l.b16 %v892
        %v1428 = vunpack.c.h.b16 %v892
        %v1429 = vunpack.c.l.b16 %v893
        %v1430 = vunpack.c.h.b16 %v893
        %v1431 = vunpack.c.l.b16 %v894
        %v1432 = vunpack.c.h.b16 %v894
        %v1433 = vunpack.c.l.b16 %v895
        %v1434 = vunpack.c.h.b16 %v895
        %v1435 = vunpack.c.l.b16 %v896
        %v1436 = vunpack.c.h.b16 %v896
        %v1437 = vunpack.c.l.b16 %v897
        %v1438 = vunpack.c.h.b16 %v897
        %v1439 = vunpack.c.l.b16 %v898
        %v1440 = vunpack.c.h.b16 %v898
        %v1441 = vunpack.c.l.b16 %v899
        %v1442 = vunpack.c.h.b16 %v899
        %v1443 = vunpack.c.l.b16 %v900
        %v1444 = vunpack.c.h.b16 %v900
        %v1445 = vunpack.c.l.b16 %v901
        %v1446 = vunpack.c.h.b16 %v901
        %v1447 = vunpack.c.l.b16 %v902
        %v1448 = vunpack.c.h.b16 %v902
        %v1449 = vunpack.c.l.b16 %v903
        %v1450 = vunpack.c.h.b16 %v903
        %v1451 = vunpack.c.l.b16 %v904
        %v1452 = vunpack.c.h.b16 %v904
        %v1453 = vunpack.c.l.b16 %v905
        %v1454 = vunpack.c.h.b16 %v905
        %v1455 = vunpack.c.l.b16 %v906
        %v1456 = vunpack.c.h.b16 %v906
        %v1457 = vunpack.c.l.b16 %v907
        %v1458 = vunpack.c.h.b16 %v907
        %v1459 = vunpack.c.l.b16 %v908
        %v1460 = vunpack.c.h.b16 %v908
        %v1461 = vunpack.c.l.b16 %v909
        %v1462 = vunpack.c.h.b16 %v909
        %v1463 = vunpack.c.l.b16 %v910
        %v1464 = vunpack.c.h.b16 %v910
        %v1465 = vunpack.c.l.b16 %v911
        %v1466 = vunpack.c.h.b16 %v911
        %v1467 = vunpack.c.l.b16 %v912
        %v1468 = vunpack.c.h.b16 %v912
        %v1469 = vunpack.c.l.b16 %v913
        %v1470 = vunpack.c.h.b16 %v913
        %v1471 = vunpack.c.l.b16 %v914
        %v1472 = vunpack.c.h.b16 %v914
        %v1473 = vunpack.c.l.b16 %v915
        %v1474 = vunpack.c.h.b16 %v915
        %v1475 = vunpack.c.l.b16 %v916
        %v1476 = vunpack.c.h.b16 %v916
        %v1477 = vunpack.c.l.b16 %v917
        %v1478 = vunpack.c.h.b16 %v917
        %v1479 = vunpack.c.l.b16 %v918
        %v1480 = vunpack.c.h.b16 %v918
        %v1481 = vunpack.c.l.b16 %v919
        %v1482 = vunpack.c.h.b16 %v919
        %v1483 = vunpack.c.l.b16 %v920
        %v1484 = vunpack.c.h.b16 %v920
        %v1485 = vunpack.c.l.b16 %v921
        %v1486 = vunpack.c.h.b16 %v921
        %v1487 = vunpack.c.l.b16 %v922
        %v1488 = vunpack.c.h.b16 %v922
        %v1489 = vunpack.c.l.b16 %v923
        %v1490 = vunpack.c.h.b16 %v923
        %v1491 = vunpack.c.l.b16 %v924
        %v1492 = vunpack.c.h.b16 %v924
        %v1493 = vunpack.c.l.b16 %v925
        %v1494 = vunpack.c.h.b16 %v925
        %v1495 = vunpack.c.l.b16 %v926
        %v1496 = vunpack.c.h.b16 %v926
        %v1497 = vunpack.c.l.b16 %v927
        %v1498 = vunpack.c.h.b16 %v927
        %v1499 = vunpack.c.l.b16 %v928
        %v1500 = vunpack.c.h.b16 %v928
        %v1501 = vunpack.c.l.b16 %v929
        %v1502 = vunpack.c.h.b16 %v929
        %v1503 = vunpack.c.l.b16 %v930
        %v1504 = vunpack.c.h.b16 %v930
        %v1505 = vunpack.c.l.b16 %v931
        %v1506 = vunpack.c.h.b16 %v931
        %v1507 = vunpack.c.l.b16 %v932
        %v1508 = vunpack.c.h.b16 %v932
        %v1509 = vunpack.c.l.b16 %v933
        %v1510 = vunpack.c.h.b16 %v933
        %v1511 = vunpack.c.l.b16 %v934
        %v1512 = vunpack.c.h.b16 %v934
        %v1513 = vunpack.c.l.b16 %v935
        %v1514 = vunpack.c.h.b16 %v935
        %v1515 = vunpack.c.l.b16 %v936
        %v1516 = vunpack.c.h.b16 %v936
        %v1517 = vunpack.c.l.b16 %v937
        %v1518 = vunpack.c.h.b16 %v937
        %v1519 = vunpack.c.l.b16 %v938
        %v1520 = vunpack.c.h.b16 %v938
        %v1521 = vpack.c.b16 %v1201, %v1137
        %v1522 = vpack.c.b16 %v1202, %v1138
        %v1523 = vpack.c.b16 %v1203, %v1139
        %v1524 = vpack.c.b16 %v1204, %v1140
        %v1525 = vpack.c.b16 %v1205, %v1141
        %v1526 = vpack.c.b16 %v1206, %v1142
        %v1527 = vpack.c.b16 %v1207, %v1143
        %v1528 = vpack.c.b16 %v1208, %v1144
        %v1529 = vpack.c.b16 %v1209, %v1145
        %v1530 = vpack.c.b16 %v1210, %v1146
        %v1531 = vpack.c.b16 %v1211, %v1147
        %v1532 = vpack.c.b16 %v1212, %v1148
        %v1533 = vpack.c.b16 %v1213, %v1149
        %v1534 = vpack.c.b16 %v1214, %v1150
        %v1535 = vpack.c.b16 %v1215, %v1151
        %v1536 = vpack.c.b16 %v1216, %v1152
        %v1537 = vpack.c.b16 %v1217, %v1153
        %v1538 = vpack.c.b16 %v1218, %v1154
        %v1539 = vpack.c.b16 %v1219, %v1155
        %v1540 = vpack.c.b16 %v1220, %v1156
        %v1541 = vpack.c.b16 %v1221, %v1157
        %v1542 = vpack.c.b16 %v1222, %v1158
        %v1543 = vpack.c.b16 %v1223, %v1159
        %v1544 = vpack.c.b16 %v1224, %v1160
        %v1545 = vpack.c.b16 %v1225, %v1161
        %v1546 = vpack.c.b16 %v1226, %v1162
        %v1547 = vpack.c.b16 %v1227, %v1163
        %v1548 = vpack.c.b16 %v1228, %v1164
        %v1549 = vpack.c.b16 %v1229, %v1165
        %v1550 = vpack.c.b16 %v1230, %v1166
        %v1551 = vpack.c.b16 %v1231, %v1167
        %v1552 = vpack.c.b16 %v1232, %v1168
        %v1553 = vpack.c.b16 %v1233, %v1169
        %v1554 = vpack.c.b16 %v1234, %v1170
        %v1555 = vpack.c.b16 %v1235, %v1171
        %v1556 = vpack.c.b16 %v1236, %v1172
        %v1557 = vpack.c.b16 %v1237, %v1173
        %v1558 = vpack.c.b16 %v1238, %v1174
        %v1559 = vpack.c.b16 %v1239, %v1175
        %v1560 = vpack.c.b16 %v1240, %v1176
        %v1561 = vpack.c.b16 %v1241, %v1177
        %v1562 = vpack.c.b16 %v1242, %v1178
        %v1563 = vpack.c.b16 %v1243, %v1179
        %v1564 = vpack.c.b16 %v1244, %v1180
        %v1565 = vpack.c.b16 %v1245, %v1181
        %v1566 = vpack.c.b16 %v1246, %v1182
        %v1567 = vpack.c.b16 %v1247, %v1183
        %v1568 = vpack.c.b16 %v1248, %v1184
        %v1569 = vpack.c.b16 %v1249, %v1185
        %v1570 = vpack.c.b16 %v1250, %v1186
        %v1571 = vpack.c.b16 %v1251, %v1187
        %v1572 = vpack.c.b16 %v1252, %v1188
        %v1573 = vpack.c.b16 %v1253, %v1189
        %v1574 = vpack.c.b16 %v1254, %v1190
        %v1575 = vpack.c.b16 %v1255, %v1191
        %v1576 = vpack.c.b16 %v1256, %v1192
        %v1577 = vpack.c.b16 %v1257, %v1193
        %v1578 = vpack.c.b16 %v1258, %v1194
        %v1579 = vpack.c.b16 %v1259, %v1195
        %v1580 = vpack.c.b16 %v1260, %v1196
        %v1581 = vpack.c.b16 %v1261, %v1197
        %v1582 = vpack.c.b16 %v1262, %v1198
        %v1583 = vpack.c.b16 %v1263, %v1199
        %v1584 = vpack.c.b16 %v1264, %v1200
        %v1585 = vpack.c.b16 %v1329, %v1265
        %v1586 = vpack.c.b16 %v1330, %v1266
        %v1587 = vpack.c.b16 %v1331, %v1267
        %v1588 = vpack.c.b16 %v1332, %v1268
        %v1589 = vpack.c.b16 %v1333, %v1269
        %v1590 = vpack.c.b16 %v1334, %v1270
        %v1591 = vpack.c.b16 %v1335, %v1271
        %v1592 = vpack.c.b16 %v1336, %v1272
        %v1593 = vpack.c.b16 %v1337, %v1273
        %v1594 = vpack.c.b16 %v1338, %v1274
        %v1595 = vpack.c.b16 %v1339, %v1275
        %v1596 = vpack.c.b16 %v1340, %v1276
        %v1597 = vpack.c.b16 %v1341, %v1277
        %v1598 = vpack.c.b16 %v1342, %v1278
        %v1599 = vpack.c.b16 %v1343, %v1279
        %v1600 = vpack.c.b16 %v1344, %v1280
        %v1601 = vpack.c.b16 %v1345, %v1281
        %v1602 = vpack.c.b16 %v1346, %v1282
        %v1603 = vpack.c.b16 %v1347, %v1283
        %v1604 = vpack.c.b16 %v1348, %v1284
        %v1605 = vpack.c.b16 %v1349, %v1285
        %v1606 = vpack.c.b16 %v1350, %v1286
        %v1607 = vpack.c.b16 %v1351, %v1287
        %v1608 = vpack.c.b16 %v1352, %v1288
        %v1609 = vpack.c.b16 %v1353, %v1289
        %v1610 = vpack.c.b16 %v1354, %v1290
        %v1611 = vpack.c.b16 %v1355, %v1291
        %v1612 = vpack.c.b16 %v1356, %v1292
        %v1613 = vpack.c.b16 %v1357, %v1293
        %v1614 = vpack.c.b16 %v1358, %v1294
        %v1615 = vpack.c.b16 %v1359, %v1295
        %v1616 = vpack.c.b16 %v1360, %v1296
        %v1617 = vpack.c.b16 %v1361, %v1297
        %v1618 = vpack.c.b16 %v1362, %v1298
        %v1619 = vpack.c.b16 %v1363, %v1299
        %v1620 = vpack.c.b16 %v1364, %v1300
        %v1621 = vpack.c.b16 %v1365, %v1301
        %v1622 = vpack.c.b16 %v1366, %v1302
        %v1623 = vpack.c.b16 %v1367, %v1303
        %v1624 = vpack.c.b16 %v1368, %v1304
        %v1625 = vpack.c.b16 %v1369, %v1305
        %v1626 = vpack.c.b16 %v1370, %v1306
        %v1627 = vpack.c.b16 %v1371, %v1307
        %v1628 = vpack.c.b16 %v1372, %v1308
        %v1629 = vpack.c.b16 %v1373, %v1309
        %v1630 = vpack.c.b16 %v1374, %v1310
        %v1631 = vpack.c.b16 %v1375, %v1311
        %v1632 = vpack.c.b16 %v1376, %v1312
        %v1633 = vpack.c.b16 %v1377, %v1313
        %v1634 = vpack.c.b16 %v1378, %v1314
        %v1635 = vpack.c.b16 %v1379, %v1315
        %v1636 = vpack.c.b16 %v1380, %v1316
        %v1637 = vpack.c.b16 %v1381, %v1317
        %v1638 = vpack.c.b16 %v1382, %v1318
        %v1639 = vpack.c.b16 %v1383, %v1319
        %v1640 = vpack.c.b16 %v1384, %v1320
        %v1641 = vpack.c.b16 %v1385, %v1321
        %v1642 = vpack.c.b16 %v1386, %v1322
        %v1643 = vpack.c.b16 %v1387, %v1323
        %v1644 = vpack.c.b16 %v1388, %v1324
        %v1645 = vpack.c.b16 %v1389, %v1325
        %v1646 = vpack.c.b16 %v1390, %v1326
        %v1647 = vpack.c.b16 %v1391, %v1327
        %v1648 = vpack.c.b16 %v1392, %v1328
        %v1649 = vpack.c.b16 %v1457, %v1393
        %v1650 = vpack.c.b16 %v1458, %v1394
        %v1651 = vpack.c.b16 %v1459, %v1395
        %v1652 = vpack.c.b16 %v1460, %v1396
        %v1653 = vpack.c.b16 %v1461, %v1397
        %v1654 = vpack.c.b16 %v1462, %v1398
        %v1655 = vpack.c.b16 %v1463, %v1399
        %v1656 = vpack.c.b16 %v1464, %v1400
        %v1657 = vpack.c.b16 %v1465, %v1401
        %v1658 = vpack.c.b16 %v1466, %v1402
        %v1659 = vpack.c.b16 %v1467, %v1403
        %v1660 = vpack.c.b16 %v1468, %v1404
        %v1661 = vpack.c.b16 %v1469, %v1405
        %v1662 = vpack.c.b16 %v1470, %v1406
        %v1663 = vpack.c.b16 %v1471, %v1407
        %v1664 = vpack.c.b16 %v1472, %v1408
        %v1665 = vpack.c.b16 %v1473, %v1409
        %v1666 = vpack.c.b16 %v1474, %v1410
        %v1667 = vpack.c.b16 %v1475, %v1411
        %v1668 = vpack.c.b16 %v1476, %v1412
        %v1669 = vpack.c.b16 %v1477, %v1413
        %v1670 = vpack.c.b16 %v1478, %v1414
        %v1671 = vpack.c.b16 %v1479, %v1415
        %v1672 = vpack.c.b16 %v1480, %v1416
        %v1673 = vpack.c.b16 %v1481, %v1417
        %v1674 = vpack.c.b16 %v1482, %v1418
        %v1675 = vpack.c.b16 %v1483, %v1419
        %v1676 = vpack.c.b16 %v1484, %v1420
        %v1677 = vpack.c.b16 %v1485, %v1421
        %v1678 = vpack.c.b16 %v1486, %v1422
        %v1679 = vpack.c.b16 %v1487, %v1423
        %v1680 = vpack.c.b16 %v1488, %v1424
        %v1681 = vpack.c.b16 %v1489, %v1425
        %v1682 = vpack.c.b16 %v1490, %v1426
        %v1683 = vpack.c.b16 %v1491, %v1427
        %v1684 = vpack.c.b16 %v1492, %v1428
        %v1685 = vpack.c.b16 %v1493, %v1429
        %v1686 = vpack.c.b16 %v1494, %v1430
        %v1687 = vpack.c.b16 %v1495, %v1431
        %v1688 = vpack.c.b16 %v1496, %v1432
        %v1689 = vpack.c.b16 %v1497, %v1433
        %v1690 = vpack.c.b16 %v1498, %v1434
        %v1691 = vpack.c.b16 %v1499, %v1435
        %v1692 = vpack.c.b16 %v1500, %v1436
        %v1693 = vpack.c.b16 %v1501, %v1437
        %v1694 = vpack.c.b16 %v1502, %v1438
        %v1695 = vpack.c.b16 %v1503, %v1439
        %v1696 = vpack.c.b16 %v1504, %v1440
        %v1697 = vpack.c.b16 %v1505, %v1441
        %v1698 = vpack.c.b16 %v1506, %v1442
        %v1699 = vpack.c.b16 %v1507, %v1443
        %v1700 = vpack.c.b16 %v1508, %v1444
        %v1701 = vpack.c.b16 %v1509, %v1445
        %v1702 = vpack.c.b16 %v1510, %v1446
        %v1703 = vpack.c.b16 %v1511, %v1447
        %v1704 = vpack.c.b16 %v1512, %v1448
        %v1705 = vpack.c.b16 %v1513, %v1449
        %v1706 = vpack.c.b16 %v1514, %v1450
        %v1707 = vpack.c.b16 %v1515, %v1451
        %v1708 = vpack.c.b16 %v1516, %v1452
        %v1709 = vpack.c.b16 %v1517, %v1453
        %v1710 = vpack.c.b16 %v1518, %v1454
        %v1711 = vpack.c.b16 %v1519, %v1455
        %v1712 = vpack.c.b16 %v1520, %v1456
        %vm1905 = vcmask 392192
        %v1907 = vsel %vm1905, %v746, 0
        %1909 = vmatpush.bf16.msra.mxu0 0
        %1910 = vmatpush.bf16.msra.mxu0 0
        %1911 = vmatpush.bf16.msra.mxu0 0
        %1912 = vmatpush.bf16.msra.mxu0 0
        %1913 = vmatpush.bf16.msra.mxu0 0
        %1914 = vmatpush.bf16.msra.mxu0 %v1649
        %1915 = vmatpush.bf16.msra.mxu0 %v1585
        %1916 = vmatpush.bf16.msra.mxu0 %v1521
        %1917 = vmatmul.bf16.gmra.mxu0 %v1907
        %v1918 = vpop.f32.mrf.mxu0
        %v1919 = vadd.f32 %v943, %v1918
        %v1920 = vpop.f32.mrf.mxu0
        %1921 = vdwg.mxu0
        %1922 = vmatpush.bf16.msra.mxu0 0
        %1923 = vmatpush.bf16.msra.mxu0 0
        %1924 = vmatpush.bf16.msra.mxu0 0
        %1925 = vmatpush.bf16.msra.mxu0 0
        %1926 = vmatpush.bf16.msra.mxu0 0
        %1927 = vmatpush.bf16.msra.mxu0 %v1650
        %1928 = vmatpush.bf16.msra.mxu0 %v1586
        %1929 = vmatpush.bf16.msra.mxu0 %v1522
        %1930 = vmatmul.bf16.gmra.mxu0 %v1907
        %v1931 = vpop.f32.mrf.mxu0
        %v1932 = vadd.f32 %v943, %v1931
        %v1933 = vpop.f32.mrf.mxu0
        %1934 = vdwg.mxu0
        %1935 = vmatpush.bf16.msra.mxu0 0
        %1936 = vmatpush.bf16.msra.mxu0 0
        %1937 = vmatpush.bf16.msra.mxu0 0
        %1938 = vmatpush.bf16.msra.mxu0 0
        %1939 = vmatpush.bf16.msra.mxu0 0
        %1940 = vmatpush.bf16.msra.mxu0 %v1651
        %1941 = vmatpush.bf16.msra.mxu0 %v1587
        %1942 = vmatpush.bf16.msra.mxu0 %v1523
        %1943 = vmatmul.bf16.gmra.mxu0 %v1907
        %v1944 = vpop.f32.mrf.mxu0
        %v1945 = vadd.f32 %v943, %v1944
        %v1946 = vpop.f32.mrf.mxu0
        %1947 = vdwg.mxu0
        %1948 = vmatpush.bf16.msra.mxu0 0
        %1949 = vmatpush.bf16.msra.mxu0 0
        %1950 = vmatpush.bf16.msra.mxu0 0
        %1951 = vmatpush.bf16.msra.mxu0 0
        %1952 = vmatpush.bf16.msra.mxu0 0
        %1953 = vmatpush.bf16.msra.mxu0 %v1652
        %1954 = vmatpush.bf16.msra.mxu0 %v1588
        %1955 = vmatpush.bf16.msra.mxu0 %v1524
        %1956 = vmatmul.bf16.gmra.mxu0 %v1907
        %v1957 = vpop.f32.mrf.mxu0
        %v1958 = vadd.f32 %v943, %v1957
        %v1959 = vpop.f32.mrf.mxu0
        %1960 = vdwg.mxu0
        %1961 = vmatpush.bf16.msra.mxu0 0
        %1962 = vmatpush.bf16.msra.mxu0 0
        %1963 = vmatpush.bf16.msra.mxu0 0
        %1964 = vmatpush.bf16.msra.mxu0 0
        %1965 = vmatpush.bf16.msra.mxu0 0
        %1966 = vmatpush.bf16.msra.mxu0 %v1653
        %1967 = vmatpush.bf16.msra.mxu0 %v1589
        %1968 = vmatpush.bf16.msra.mxu0 %v1525
        %1969 = vmatmul.bf16.gmra.mxu0 %v1907
        %v1970 = vpop.f32.mrf.mxu0
        %v1971 = vadd.f32 %v943, %v1970
        %v1972 = vpop.f32.mrf.mxu0
        %1973 = vdwg.mxu0
        %1974 = vmatpush.bf16.msra.mxu0 0
        %1975 = vmatpush.bf16.msra.mxu0 0
        %1976 = vmatpush.bf16.msra.mxu0 0
        %1977 = vmatpush.bf16.msra.mxu0 0
        %1978 = vmatpush.bf16.msra.mxu0 0
        %1979 = vmatpush.bf16.msra.mxu0 %v1654
        %1980 = vmatpush.bf16.msra.mxu0 %v1590
        %1981 = vmatpush.bf16.msra.mxu0 %v1526
        %1982 = vmatmul.bf16.gmra.mxu0 %v1907
        %v1983 = vpop.f32.mrf.mxu0
        %v1984 = vadd.f32 %v943, %v1983
        %v1985 = vpop.f32.mrf.mxu0
        %1986 = vdwg.mxu0
        %1987 = vmatpush.bf16.msra.mxu0 0
        %1988 = vmatpush.bf16.msra.mxu0 0
        %1989 = vmatpush.bf16.msra.mxu0 0
        %1990 = vmatpush.bf16.msra.mxu0 0
        %1991 = vmatpush.bf16.msra.mxu0 0
        %1992 = vmatpush.bf16.msra.mxu0 %v1655
        %1993 = vmatpush.bf16.msra.mxu0 %v1591
        %1994 = vmatpush.bf16.msra.mxu0 %v1527
        %1995 = vmatmul.bf16.gmra.mxu0 %v1907
        %v1996 = vpop.f32.mrf.mxu0
        %v1997 = vadd.f32 %v943, %v1996
        %v1998 = vpop.f32.mrf.mxu0
        %1999 = vdwg.mxu0
        %2000 = vmatpush.bf16.msra.mxu0 0
        %2001 = vmatpush.bf16.msra.mxu0 0
        %2002 = vmatpush.bf16.msra.mxu0 0
        %2003 = vmatpush.bf16.msra.mxu0 0
        %2004 = vmatpush.bf16.msra.mxu0 0
        %2005 = vmatpush.bf16.msra.mxu0 %v1656
        %2006 = vmatpush.bf16.msra.mxu0 %v1592
        %2007 = vmatpush.bf16.msra.mxu0 %v1528
        %2008 = vmatmul.bf16.gmra.mxu0 %v1907
        %v2009 = vpop.f32.mrf.mxu0
        %v2010 = vadd.f32 %v943, %v2009
        %v2011 = vpop.f32.mrf.mxu0
        %2012 = vdwg.mxu0
        %2013 = vmatpush.bf16.msra.mxu0 0
        %2014 = vmatpush.bf16.msra.mxu0 0
        %2015 = vmatpush.bf16.msra.mxu0 0
        %2016 = vmatpush.bf16.msra.mxu0 0
        %2017 = vmatpush.bf16.msra.mxu0 0
        %2018 = vmatpush.bf16.msra.mxu0 %v1657
        %2019 = vmatpush.bf16.msra.mxu0 %v1593
        %2020 = vmatpush.bf16.msra.mxu0 %v1529
        %2021 = vmatmul.bf16.gmra.mxu0 %v1907
        %v2022 = vpop.f32.mrf.mxu0
        %v2023 = vadd.f32 %v943, %v2022
        %v2024 = vpop.f32.mrf.mxu0
        %2025 = vdwg.mxu0
        %2026 = vmatpush.bf16.msra.mxu0 0
        %2027 = vmatpush.bf16.msra.mxu0 0
        %2028 = vmatpush.bf16.msra.mxu0 0
        %2029 = vmatpush.bf16.msra.mxu0 0
        %2030 = vmatpush.bf16.msra.mxu0 0
        %2031 = vmatpush.bf16.msra.mxu0 %v1658
        %2032 = vmatpush.bf16.msra.mxu0 %v1594
        %2033 = vmatpush.bf16.msra.mxu0 %v1530
        %2034 = vmatmul.bf16.gmra.mxu0 %v1907
        %v2035 = vpop.f32.mrf.mxu0
        %v2036 = vadd.f32 %v943, %v2035
        %v2037 = vpop.f32.mrf.mxu0
        %2038 = vdwg.mxu0
        %2039 = vmatpush.bf16.msra.mxu0 0
        %2040 = vmatpush.bf16.msra.mxu0 0
        %2041 = vmatpush.bf16.msra.mxu0 0
        %2042 = vmatpush.bf16.msra.mxu0 0
        %2043 = vmatpush.bf16.msra.mxu0 0
        %2044 = vmatpush.bf16.msra.mxu0 %v1659
        %2045 = vmatpush.bf16.msra.mxu0 %v1595
        %2046 = vmatpush.bf16.msra.mxu0 %v1531
        %2047 = vmatmul.bf16.gmra.mxu0 %v1907
        %v2048 = vpop.f32.mrf.mxu0
        %v2049 = vadd.f32 %v943, %v2048
        %v2050 = vpop.f32.mrf.mxu0
        %2051 = vdwg.mxu0
        %2052 = vmatpush.bf16.msra.mxu0 0
        %2053 = vmatpush.bf16.msra.mxu0 0
        %2054 = vmatpush.bf16.msra.mxu0 0
        %2055 = vmatpush.bf16.msra.mxu0 0
        %2056 = vmatpush.bf16.msra.mxu0 0
        %2057 = vmatpush.bf16.msra.mxu0 %v1660
        %2058 = vmatpush.bf16.msra.mxu0 %v1596
        %2059 = vmatpush.bf16.msra.mxu0 %v1532
        %2060 = vmatmul.bf16.gmra.mxu0 %v1907
        %v2061 = vpop.f32.mrf.mxu0
        %v2062 = vadd.f32 %v943, %v2061
        %v2063 = vpop.f32.mrf.mxu0
        %2064 = vdwg.mxu0
        %2065 = vmatpush.bf16.msra.mxu0 0
        %2066 = vmatpush.bf16.msra.mxu0 0
        %2067 = vmatpush.bf16.msra.mxu0 0
        %2068 = vmatpush.bf16.msra.mxu0 0
        %2069 = vmatpush.bf16.msra.mxu0 0
        %2070 = vmatpush.bf16.msra.mxu0 %v1661
        %2071 = vmatpush.bf16.msra.mxu0 %v1597
        %2072 = vmatpush.bf16.msra.mxu0 %v1533
        %2073 = vmatmul.bf16.gmra.mxu0 %v1907
        %v2074 = vpop.f32.mrf.mxu0
        %v2075 = vadd.f32 %v943, %v2074
        %v2076 = vpop.f32.mrf.mxu0
        %2077 = vdwg.mxu0
        %2078 = vmatpush.bf16.msra.mxu0 0
        %2079 = vmatpush.bf16.msra.mxu0 0
        %2080 = vmatpush.bf16.msra.mxu0 0
        %2081 = vmatpush.bf16.msra.mxu0 0
        %2082 = vmatpush.bf16.msra.mxu0 0
        %2083 = vmatpush.bf16.msra.mxu0 %v1662
        %2084 = vmatpush.bf16.msra.mxu0 %v1598
        %2085 = vmatpush.bf16.msra.mxu0 %v1534
        %2086 = vmatmul.bf16.gmra.mxu0 %v1907
        %v2087 = vpop.f32.mrf.mxu0
        %v2088 = vadd.f32 %v943, %v2087
        %v2089 = vpop.f32.mrf.mxu0
        %2090 = vdwg.mxu0
        %2091 = vmatpush.bf16.msra.mxu0 0
        %2092 = vmatpush.bf16.msra.mxu0 0
        %2093 = vmatpush.bf16.msra.mxu0 0
        %2094 = vmatpush.bf16.msra.mxu0 0
        %2095 = vmatpush.bf16.msra.mxu0 0
        %2096 = vmatpush.bf16.msra.mxu0 %v1663
        %2097 = vmatpush.bf16.msra.mxu0 %v1599
        %2098 = vmatpush.bf16.msra.mxu0 %v1535
        %2099 = vmatmul.bf16.gmra.mxu0 %v1907
        %v2100 = vpop.f32.mrf.mxu0
        %v2101 = vadd.f32 %v943, %v2100
        %v2102 = vpop.f32.mrf.mxu0
        %2103 = vdwg.mxu0
        %2104 = vmatpush.bf16.msra.mxu0 0
        %2105 = vmatpush.bf16.msra.mxu0 0
        %2106 = vmatpush.bf16.msra.mxu0 0
        %2107 = vmatpush.bf16.msra.mxu0 0
        %2108 = vmatpush.bf16.msra.mxu0 0
        %2109 = vmatpush.bf16.msra.mxu0 %v1664
        %2110 = vmatpush.bf16.msra.mxu0 %v1600
        %2111 = vmatpush.bf16.msra.mxu0 %v1536
        %2112 = vmatmul.bf16.gmra.mxu0 %v1907
        %v2113 = vpop.f32.mrf.mxu0
        %v2114 = vadd.f32 %v943, %v2113
        %v2115 = vpop.f32.mrf.mxu0
        %2116 = vdwg.mxu0
        %2117 = vmatpush.bf16.msra.mxu0 0
        %2118 = vmatpush.bf16.msra.mxu0 0
        %2119 = vmatpush.bf16.msra.mxu0 0
        %2120 = vmatpush.bf16.msra.mxu0 0
        %2121 = vmatpush.bf16.msra.mxu0 0
        %2122 = vmatpush.bf16.msra.mxu0 %v1665
        %2123 = vmatpush.bf16.msra.mxu0 %v1601
        %2124 = vmatpush.bf16.msra.mxu0 %v1537
        %2125 = vmatmul.bf16.gmra.mxu0 %v1907
        %v2126 = vpop.f32.mrf.mxu0
        %v2127 = vadd.f32 %v943, %v2126
        %v2128 = vpop.f32.mrf.mxu0
        %2129 = vdwg.mxu0
        %2130 = vmatpush.bf16.msra.mxu0 0
        %2131 = vmatpush.bf16.msra.mxu0 0
        %2132 = vmatpush.bf16.msra.mxu0 0
        %2133 = vmatpush.bf16.msra.mxu0 0
        %2134 = vmatpush.bf16.msra.mxu0 0
        %2135 = vmatpush.bf16.msra.mxu0 %v1666
        %2136 = vmatpush.bf16.msra.mxu0 %v1602
        %2137 = vmatpush.bf16.msra.mxu0 %v1538
        %2138 = vmatmul.bf16.gmra.mxu0 %v1907
        %v2139 = vpop.f32.mrf.mxu0
        %v2140 = vadd.f32 %v943, %v2139
        %v2141 = vpop.f32.mrf.mxu0
        %2142 = vdwg.mxu0
        %2143 = vmatpush.bf16.msra.mxu0 0
        %2144 = vmatpush.bf16.msra.mxu0 0
        %2145 = vmatpush.bf16.msra.mxu0 0
        %2146 = vmatpush.bf16.msra.mxu0 0
        %2147 = vmatpush.bf16.msra.mxu0 0
        %2148 = vmatpush.bf16.msra.mxu0 %v1667
        %2149 = vmatpush.bf16.msra.mxu0 %v1603
        %2150 = vmatpush.bf16.msra.mxu0 %v1539
        %2151 = vmatmul.bf16.gmra.mxu0 %v1907
        %v2152 = vpop.f32.mrf.mxu0
        %v2153 = vadd.f32 %v943, %v2152
        %v2154 = vpop.f32.mrf.mxu0
        %2155 = vdwg.mxu0
        %2156 = vmatpush.bf16.msra.mxu0 0
        %2157 = vmatpush.bf16.msra.mxu0 0
        %2158 = vmatpush.bf16.msra.mxu0 0
        %2159 = vmatpush.bf16.msra.mxu0 0
        %2160 = vmatpush.bf16.msra.mxu0 0
        %2161 = vmatpush.bf16.msra.mxu0 %v1668
        %2162 = vmatpush.bf16.msra.mxu0 %v1604
        %2163 = vmatpush.bf16.msra.mxu0 %v1540
        %2164 = vmatmul.bf16.gmra.mxu0 %v1907
        %v2165 = vpop.f32.mrf.mxu0
        %v2166 = vadd.f32 %v943, %v2165
        %v2167 = vpop.f32.mrf.mxu0
        %2168 = vdwg.mxu0
        %2169 = vmatpush.bf16.msra.mxu0 0
        %2170 = vmatpush.bf16.msra.mxu0 0
        %2171 = vmatpush.bf16.msra.mxu0 0
        %2172 = vmatpush.bf16.msra.mxu0 0
        %2173 = vmatpush.bf16.msra.mxu0 0
        %2174 = vmatpush.bf16.msra.mxu0 %v1669
        %2175 = vmatpush.bf16.msra.mxu0 %v1605
        %2176 = vmatpush.bf16.msra.mxu0 %v1541
        %2177 = vmatmul.bf16.gmra.mxu0 %v1907
        %v2178 = vpop.f32.mrf.mxu0
        %v2179 = vadd.f32 %v943, %v2178
        %v2180 = vpop.f32.mrf.mxu0
        %2181 = vdwg.mxu0
        %2182 = vmatpush.bf16.msra.mxu0 0
        %2183 = vmatpush.bf16.msra.mxu0 0
        %2184 = vmatpush.bf16.msra.mxu0 0
        %2185 = vmatpush.bf16.msra.mxu0 0
        %2186 = vmatpush.bf16.msra.mxu0 0
        %2187 = vmatpush.bf16.msra.mxu0 %v1670
        %2188 = vmatpush.bf16.msra.mxu0 %v1606
        %2189 = vmatpush.bf16.msra.mxu0 %v1542
        %2190 = vmatmul.bf16.gmra.mxu0 %v1907
        %v2191 = vpop.f32.mrf.mxu0
        %v2192 = vadd.f32 %v943, %v2191
        %v2193 = vpop.f32.mrf.mxu0
        %2194 = vdwg.mxu0
        %2195 = vmatpush.bf16.msra.mxu0 0
        %2196 = vmatpush.bf16.msra.mxu0 0
        %2197 = vmatpush.bf16.msra.mxu0 0
        %2198 = vmatpush.bf16.msra.mxu0 0
        %2199 = vmatpush.bf16.msra.mxu0 0
        %2200 = vmatpush.bf16.msra.mxu0 %v1671
        %2201 = vmatpush.bf16.msra.mxu0 %v1607
        %2202 = vmatpush.bf16.msra.mxu0 %v1543
        %2203 = vmatmul.bf16.gmra.mxu0 %v1907
        %v2204 = vpop.f32.mrf.mxu0
        %v2205 = vadd.f32 %v943, %v2204
        %v2206 = vpop.f32.mrf.mxu0
        %2207 = vdwg.mxu0
        %2208 = vmatpush.bf16.msra.mxu0 0
        %2209 = vmatpush.bf16.msra.mxu0 0
        %2210 = vmatpush.bf16.msra.mxu0 0
        %2211 = vmatpush.bf16.msra.mxu0 0
        %2212 = vmatpush.bf16.msra.mxu0 0
        %2213 = vmatpush.bf16.msra.mxu0 %v1672
        %2214 = vmatpush.bf16.msra.mxu0 %v1608
        %2215 = vmatpush.bf16.msra.mxu0 %v1544
        %2216 = vmatmul.bf16.gmra.mxu0 %v1907
        %v2217 = vpop.f32.mrf.mxu0
        %v2218 = vadd.f32 %v943, %v2217
        %v2219 = vpop.f32.mrf.mxu0
        %2220 = vdwg.mxu0
        %2221 = vmatpush.bf16.msra.mxu0 0
        %2222 = vmatpush.bf16.msra.mxu0 0
        %2223 = vmatpush.bf16.msra.mxu0 0
        %2224 = vmatpush.bf16.msra.mxu0 0
        %2225 = vmatpush.bf16.msra.mxu0 0
        %2226 = vmatpush.bf16.msra.mxu0 %v1673
        %2227 = vmatpush.bf16.msra.mxu0 %v1609
        %2228 = vmatpush.bf16.msra.mxu0 %v1545
        %2229 = vmatmul.bf16.gmra.mxu0 %v1907
        %v2230 = vpop.f32.mrf.mxu0
        %v2231 = vadd.f32 %v943, %v2230
        %v2232 = vpop.f32.mrf.mxu0
        %2233 = vdwg.mxu0
        %2234 = vmatpush.bf16.msra.mxu0 0
        %2235 = vmatpush.bf16.msra.mxu0 0
        %2236 = vmatpush.bf16.msra.mxu0 0
        %2237 = vmatpush.bf16.msra.mxu0 0
        %2238 = vmatpush.bf16.msra.mxu0 0
        %2239 = vmatpush.bf16.msra.mxu0 %v1674
        %2240 = vmatpush.bf16.msra.mxu0 %v1610
        %2241 = vmatpush.bf16.msra.mxu0 %v1546
        %2242 = vmatmul.bf16.gmra.mxu0 %v1907
        %v2243 = vpop.f32.mrf.mxu0
        %v2244 = vadd.f32 %v943, %v2243
        %v2245 = vpop.f32.mrf.mxu0
        %2246 = vdwg.mxu0
        %2247 = vmatpush.bf16.msra.mxu0 0
        %2248 = vmatpush.bf16.msra.mxu0 0
        %2249 = vmatpush.bf16.msra.mxu0 0
        %2250 = vmatpush.bf16.msra.mxu0 0
        %2251 = vmatpush.bf16.msra.mxu0 0
        %2252 = vmatpush.bf16.msra.mxu0 %v1675
        %2253 = vmatpush.bf16.msra.mxu0 %v1611
        %2254 = vmatpush.bf16.msra.mxu0 %v1547
        %2255 = vmatmul.bf16.gmra.mxu0 %v1907
        %v2256 = vpop.f32.mrf.mxu0
        %v2257 = vadd.f32 %v943, %v2256
        %v2258 = vpop.f32.mrf.mxu0
        %2259 = vdwg.mxu0
        %2260 = vmatpush.bf16.msra.mxu0 0
        %2261 = vmatpush.bf16.msra.mxu0 0
        %2262 = vmatpush.bf16.msra.mxu0 0
        %2263 = vmatpush.bf16.msra.mxu0 0
        %2264 = vmatpush.bf16.msra.mxu0 0
        %2265 = vmatpush.bf16.msra.mxu0 %v1676
        %2266 = vmatpush.bf16.msra.mxu0 %v1612
        %2267 = vmatpush.bf16.msra.mxu0 %v1548
        %2268 = vmatmul.bf16.gmra.mxu0 %v1907
        %v2269 = vpop.f32.mrf.mxu0
        %v2270 = vadd.f32 %v943, %v2269
        %v2271 = vpop.f32.mrf.mxu0
        %2272 = vdwg.mxu0
        %2273 = vmatpush.bf16.msra.mxu0 0
        %2274 = vmatpush.bf16.msra.mxu0 0
        %2275 = vmatpush.bf16.msra.mxu0 0
        %2276 = vmatpush.bf16.msra.mxu0 0
        %2277 = vmatpush.bf16.msra.mxu0 0
        %2278 = vmatpush.bf16.msra.mxu0 %v1677
        %2279 = vmatpush.bf16.msra.mxu0 %v1613
        %2280 = vmatpush.bf16.msra.mxu0 %v1549
        %2281 = vmatmul.bf16.gmra.mxu0 %v1907
        %v2282 = vpop.f32.mrf.mxu0
        %v2283 = vadd.f32 %v943, %v2282
        %v2284 = vpop.f32.mrf.mxu0
        %2285 = vdwg.mxu0
        %2286 = vmatpush.bf16.msra.mxu0 0
        %2287 = vmatpush.bf16.msra.mxu0 0
        %2288 = vmatpush.bf16.msra.mxu0 0
        %2289 = vmatpush.bf16.msra.mxu0 0
        %2290 = vmatpush.bf16.msra.mxu0 0
        %2291 = vmatpush.bf16.msra.mxu0 %v1678
        %2292 = vmatpush.bf16.msra.mxu0 %v1614
        %2293 = vmatpush.bf16.msra.mxu0 %v1550
        %2294 = vmatmul.bf16.gmra.mxu0 %v1907
        %v2295 = vpop.f32.mrf.mxu0
        %v2296 = vadd.f32 %v943, %v2295
        %v2297 = vpop.f32.mrf.mxu0
        %2298 = vdwg.mxu0
        %2299 = vmatpush.bf16.msra.mxu0 0
        %2300 = vmatpush.bf16.msra.mxu0 0
        %2301 = vmatpush.bf16.msra.mxu0 0
        %2302 = vmatpush.bf16.msra.mxu0 0
        %2303 = vmatpush.bf16.msra.mxu0 0
        %2304 = vmatpush.bf16.msra.mxu0 %v1679
        %2305 = vmatpush.bf16.msra.mxu0 %v1615
        %2306 = vmatpush.bf16.msra.mxu0 %v1551
        %2307 = vmatmul.bf16.gmra.mxu0 %v1907
        %v2308 = vpop.f32.mrf.mxu0
        %v2309 = vadd.f32 %v943, %v2308
        %v2310 = vpop.f32.mrf.mxu0
        %2311 = vdwg.mxu0
        %2312 = vmatpush.bf16.msra.mxu0 0
        %2313 = vmatpush.bf16.msra.mxu0 0
        %2314 = vmatpush.bf16.msra.mxu0 0
        %2315 = vmatpush.bf16.msra.mxu0 0
        %2316 = vmatpush.bf16.msra.mxu0 0
        %2317 = vmatpush.bf16.msra.mxu0 %v1680
        %2318 = vmatpush.bf16.msra.mxu0 %v1616
        %2319 = vmatpush.bf16.msra.mxu0 %v1552
        %2320 = vmatmul.bf16.gmra.mxu0 %v1907
        %v2321 = vpop.f32.mrf.mxu0
        %v2322 = vadd.f32 %v943, %v2321
        %v2323 = vpop.f32.mrf.mxu0
        %2324 = vdwg.mxu0
        %2325 = vmatpush.bf16.msra.mxu0 0
        %2326 = vmatpush.bf16.msra.mxu0 0
        %2327 = vmatpush.bf16.msra.mxu0 0
        %2328 = vmatpush.bf16.msra.mxu0 0
        %2329 = vmatpush.bf16.msra.mxu0 0
        %2330 = vmatpush.bf16.msra.mxu0 %v1681
        %2331 = vmatpush.bf16.msra.mxu0 %v1617
        %2332 = vmatpush.bf16.msra.mxu0 %v1553
        %2333 = vmatmul.bf16.gmra.mxu0 %v1907
        %v2334 = vpop.f32.mrf.mxu0
        %v2335 = vadd.f32 %v943, %v2334
        %v2336 = vpop.f32.mrf.mxu0
        %2337 = vdwg.mxu0
        %2338 = vmatpush.bf16.msra.mxu0 0
        %2339 = vmatpush.bf16.msra.mxu0 0
        %2340 = vmatpush.bf16.msra.mxu0 0
        %2341 = vmatpush.bf16.msra.mxu0 0
        %2342 = vmatpush.bf16.msra.mxu0 0
        %2343 = vmatpush.bf16.msra.mxu0 %v1682
        %2344 = vmatpush.bf16.msra.mxu0 %v1618
        %2345 = vmatpush.bf16.msra.mxu0 %v1554
        %2346 = vmatmul.bf16.gmra.mxu0 %v1907
        %v2347 = vpop.f32.mrf.mxu0
        %v2348 = vadd.f32 %v943, %v2347
        %v2349 = vpop.f32.mrf.mxu0
        %2350 = vdwg.mxu0
        %2351 = vmatpush.bf16.msra.mxu0 0
        %2352 = vmatpush.bf16.msra.mxu0 0
        %2353 = vmatpush.bf16.msra.mxu0 0
        %2354 = vmatpush.bf16.msra.mxu0 0
        %2355 = vmatpush.bf16.msra.mxu0 0
        %2356 = vmatpush.bf16.msra.mxu0 %v1683
        %2357 = vmatpush.bf16.msra.mxu0 %v1619
        %2358 = vmatpush.bf16.msra.mxu0 %v1555
        %2359 = vmatmul.bf16.gmra.mxu0 %v1907
        %v2360 = vpop.f32.mrf.mxu0
        %v2361 = vadd.f32 %v943, %v2360
        %v2362 = vpop.f32.mrf.mxu0
        %2363 = vdwg.mxu0
        %2364 = vmatpush.bf16.msra.mxu0 0
        %2365 = vmatpush.bf16.msra.mxu0 0
        %2366 = vmatpush.bf16.msra.mxu0 0
        %2367 = vmatpush.bf16.msra.mxu0 0
        %2368 = vmatpush.bf16.msra.mxu0 0
        %2369 = vmatpush.bf16.msra.mxu0 %v1684
        %2370 = vmatpush.bf16.msra.mxu0 %v1620
        %2371 = vmatpush.bf16.msra.mxu0 %v1556
        %2372 = vmatmul.bf16.gmra.mxu0 %v1907
        %v2373 = vpop.f32.mrf.mxu0
        %v2374 = vadd.f32 %v943, %v2373
        %v2375 = vpop.f32.mrf.mxu0
        %2376 = vdwg.mxu0
        %2377 = vmatpush.bf16.msra.mxu0 0
        %2378 = vmatpush.bf16.msra.mxu0 0
        %2379 = vmatpush.bf16.msra.mxu0 0
        %2380 = vmatpush.bf16.msra.mxu0 0
        %2381 = vmatpush.bf16.msra.mxu0 0
        %2382 = vmatpush.bf16.msra.mxu0 %v1685
        %2383 = vmatpush.bf16.msra.mxu0 %v1621
        %2384 = vmatpush.bf16.msra.mxu0 %v1557
        %2385 = vmatmul.bf16.gmra.mxu0 %v1907
        %v2386 = vpop.f32.mrf.mxu0
        %v2387 = vadd.f32 %v943, %v2386
        %v2388 = vpop.f32.mrf.mxu0
        %2389 = vdwg.mxu0
        %2390 = vmatpush.bf16.msra.mxu0 0
        %2391 = vmatpush.bf16.msra.mxu0 0
        %2392 = vmatpush.bf16.msra.mxu0 0
        %2393 = vmatpush.bf16.msra.mxu0 0
        %2394 = vmatpush.bf16.msra.mxu0 0
        %2395 = vmatpush.bf16.msra.mxu0 %v1686
        %2396 = vmatpush.bf16.msra.mxu0 %v1622
        %2397 = vmatpush.bf16.msra.mxu0 %v1558
        %2398 = vmatmul.bf16.gmra.mxu0 %v1907
        %v2399 = vpop.f32.mrf.mxu0
        %v2400 = vadd.f32 %v943, %v2399
        %v2401 = vpop.f32.mrf.mxu0
        %2402 = vdwg.mxu0
        %2403 = vmatpush.bf16.msra.mxu0 0
        %2404 = vmatpush.bf16.msra.mxu0 0
        %2405 = vmatpush.bf16.msra.mxu0 0
        %2406 = vmatpush.bf16.msra.mxu0 0
        %2407 = vmatpush.bf16.msra.mxu0 0
        %2408 = vmatpush.bf16.msra.mxu0 %v1687
        %2409 = vmatpush.bf16.msra.mxu0 %v1623
        %2410 = vmatpush.bf16.msra.mxu0 %v1559
        %2411 = vmatmul.bf16.gmra.mxu0 %v1907
        %v2412 = vpop.f32.mrf.mxu0
        %v2413 = vadd.f32 %v943, %v2412
        %v2414 = vpop.f32.mrf.mxu0
        %2415 = vdwg.mxu0
        %2416 = vmatpush.bf16.msra.mxu0 0
        %2417 = vmatpush.bf16.msra.mxu0 0
        %2418 = vmatpush.bf16.msra.mxu0 0
        %2419 = vmatpush.bf16.msra.mxu0 0
        %2420 = vmatpush.bf16.msra.mxu0 0
        %2421 = vmatpush.bf16.msra.mxu0 %v1688
        %2422 = vmatpush.bf16.msra.mxu0 %v1624
        %2423 = vmatpush.bf16.msra.mxu0 %v1560
        %2424 = vmatmul.bf16.gmra.mxu0 %v1907
        %v2425 = vpop.f32.mrf.mxu0
        %v2426 = vadd.f32 %v943, %v2425
        %v2427 = vpop.f32.mrf.mxu0
        %2428 = vdwg.mxu0
        %2429 = vmatpush.bf16.msra.mxu0 0
        %2430 = vmatpush.bf16.msra.mxu0 0
        %2431 = vmatpush.bf16.msra.mxu0 0
        %2432 = vmatpush.bf16.msra.mxu0 0
        %2433 = vmatpush.bf16.msra.mxu0 0
        %2434 = vmatpush.bf16.msra.mxu0 %v1689
        %2435 = vmatpush.bf16.msra.mxu0 %v1625
        %2436 = vmatpush.bf16.msra.mxu0 %v1561
        %2437 = vmatmul.bf16.gmra.mxu0 %v1907
        %v2438 = vpop.f32.mrf.mxu0
        %v2439 = vadd.f32 %v943, %v2438
        %v2440 = vpop.f32.mrf.mxu0
        %2441 = vdwg.mxu0
        %2442 = vmatpush.bf16.msra.mxu0 0
        %2443 = vmatpush.bf16.msra.mxu0 0
        %2444 = vmatpush.bf16.msra.mxu0 0
        %2445 = vmatpush.bf16.msra.mxu0 0
        %2446 = vmatpush.bf16.msra.mxu0 0
        %2447 = vmatpush.bf16.msra.mxu0 %v1690
        %2448 = vmatpush.bf16.msra.mxu0 %v1626
        %2449 = vmatpush.bf16.msra.mxu0 %v1562
        %2450 = vmatmul.bf16.gmra.mxu0 %v1907
        %v2451 = vpop.f32.mrf.mxu0
        %v2452 = vadd.f32 %v943, %v2451
        %v2453 = vpop.f32.mrf.mxu0
        %2454 = vdwg.mxu0
        %2455 = vmatpush.bf16.msra.mxu0 0
        %2456 = vmatpush.bf16.msra.mxu0 0
        %2457 = vmatpush.bf16.msra.mxu0 0
        %2458 = vmatpush.bf16.msra.mxu0 0
        %2459 = vmatpush.bf16.msra.mxu0 0
        %2460 = vmatpush.bf16.msra.mxu0 %v1691
        %2461 = vmatpush.bf16.msra.mxu0 %v1627
        %2462 = vmatpush.bf16.msra.mxu0 %v1563
        %2463 = vmatmul.bf16.gmra.mxu0 %v1907
        %v2464 = vpop.f32.mrf.mxu0
        %v2465 = vadd.f32 %v943, %v2464
        %v2466 = vpop.f32.mrf.mxu0
        %2467 = vdwg.mxu0
        %2468 = vmatpush.bf16.msra.mxu0 0
        %2469 = vmatpush.bf16.msra.mxu0 0
        %2470 = vmatpush.bf16.msra.mxu0 0
        %2471 = vmatpush.bf16.msra.mxu0 0
        %2472 = vmatpush.bf16.msra.mxu0 0
        %2473 = vmatpush.bf16.msra.mxu0 %v1692
        %2474 = vmatpush.bf16.msra.mxu0 %v1628
        %2475 = vmatpush.bf16.msra.mxu0 %v1564
        %2476 = vmatmul.bf16.gmra.mxu0 %v1907
        %v2477 = vpop.f32.mrf.mxu0
        %v2478 = vadd.f32 %v943, %v2477
        %v2479 = vpop.f32.mrf.mxu0
        %2480 = vdwg.mxu0
        %2481 = vmatpush.bf16.msra.mxu0 0
        %2482 = vmatpush.bf16.msra.mxu0 0
        %2483 = vmatpush.bf16.msra.mxu0 0
        %2484 = vmatpush.bf16.msra.mxu0 0
        %2485 = vmatpush.bf16.msra.mxu0 0
        %2486 = vmatpush.bf16.msra.mxu0 %v1693
        %2487 = vmatpush.bf16.msra.mxu0 %v1629
        %2488 = vmatpush.bf16.msra.mxu0 %v1565
        %2489 = vmatmul.bf16.gmra.mxu0 %v1907
        %v2490 = vpop.f32.mrf.mxu0
        %v2491 = vadd.f32 %v943, %v2490
        %v2492 = vpop.f32.mrf.mxu0
        %2493 = vdwg.mxu0
        %2494 = vmatpush.bf16.msra.mxu0 0
        %2495 = vmatpush.bf16.msra.mxu0 0
        %2496 = vmatpush.bf16.msra.mxu0 0
        %2497 = vmatpush.bf16.msra.mxu0 0
        %2498 = vmatpush.bf16.msra.mxu0 0
        %2499 = vmatpush.bf16.msra.mxu0 %v1694
        %2500 = vmatpush.bf16.msra.mxu0 %v1630
        %2501 = vmatpush.bf16.msra.mxu0 %v1566
        %2502 = vmatmul.bf16.gmra.mxu0 %v1907
        %v2503 = vpop.f32.mrf.mxu0
        %v2504 = vadd.f32 %v943, %v2503
        %v2505 = vpop.f32.mrf.mxu0
        %2506 = vdwg.mxu0
        %2507 = vmatpush.bf16.msra.mxu0 0
        %2508 = vmatpush.bf16.msra.mxu0 0
        %2509 = vmatpush.bf16.msra.mxu0 0
        %2510 = vmatpush.bf16.msra.mxu0 0
        %2511 = vmatpush.bf16.msra.mxu0 0
        %2512 = vmatpush.bf16.msra.mxu0 %v1695
        %2513 = vmatpush.bf16.msra.mxu0 %v1631
        %2514 = vmatpush.bf16.msra.mxu0 %v1567
        %2515 = vmatmul.bf16.gmra.mxu0 %v1907
        %v2516 = vpop.f32.mrf.mxu0
        %v2517 = vadd.f32 %v943, %v2516
        %v2518 = vpop.f32.mrf.mxu0
        %2519 = vdwg.mxu0
        %2520 = vmatpush.bf16.msra.mxu0 0
        %2521 = vmatpush.bf16.msra.mxu0 0
        %2522 = vmatpush.bf16.msra.mxu0 0
        %2523 = vmatpush.bf16.msra.mxu0 0
        %2524 = vmatpush.bf16.msra.mxu0 0
        %2525 = vmatpush.bf16.msra.mxu0 %v1696
        %2526 = vmatpush.bf16.msra.mxu0 %v1632
        %2527 = vmatpush.bf16.msra.mxu0 %v1568
        %2528 = vmatmul.bf16.gmra.mxu0 %v1907
        %v2529 = vpop.f32.mrf.mxu0
        %v2530 = vadd.f32 %v943, %v2529
        %v2531 = vpop.f32.mrf.mxu0
        %2532 = vdwg.mxu0
        %2533 = vmatpush.bf16.msra.mxu0 0
        %2534 = vmatpush.bf16.msra.mxu0 0
        %2535 = vmatpush.bf16.msra.mxu0 0
        %2536 = vmatpush.bf16.msra.mxu0 0
        %2537 = vmatpush.bf16.msra.mxu0 0
        %2538 = vmatpush.bf16.msra.mxu0 %v1697
        %2539 = vmatpush.bf16.msra.mxu0 %v1633
        %2540 = vmatpush.bf16.msra.mxu0 %v1569
        %2541 = vmatmul.bf16.gmra.mxu0 %v1907
        %v2542 = vpop.f32.mrf.mxu0
        %v2543 = vadd.f32 %v943, %v2542
        %v2544 = vpop.f32.mrf.mxu0
        %2545 = vdwg.mxu0
        %2546 = vmatpush.bf16.msra.mxu0 0
        %2547 = vmatpush.bf16.msra.mxu0 0
        %2548 = vmatpush.bf16.msra.mxu0 0
        %2549 = vmatpush.bf16.msra.mxu0 0
        %2550 = vmatpush.bf16.msra.mxu0 0
        %2551 = vmatpush.bf16.msra.mxu0 %v1698
        %2552 = vmatpush.bf16.msra.mxu0 %v1634
        %2553 = vmatpush.bf16.msra.mxu0 %v1570
        %2554 = vmatmul.bf16.gmra.mxu0 %v1907
        %v2555 = vpop.f32.mrf.mxu0
        %v2556 = vadd.f32 %v943, %v2555
        %v2557 = vpop.f32.mrf.mxu0
        %2558 = vdwg.mxu0
        %2559 = vmatpush.bf16.msra.mxu0 0
        %2560 = vmatpush.bf16.msra.mxu0 0
        %2561 = vmatpush.bf16.msra.mxu0 0
        %2562 = vmatpush.bf16.msra.mxu0 0
        %2563 = vmatpush.bf16.msra.mxu0 0
        %2564 = vmatpush.bf16.msra.mxu0 %v1699
        %2565 = vmatpush.bf16.msra.mxu0 %v1635
        %2566 = vmatpush.bf16.msra.mxu0 %v1571
        %2567 = vmatmul.bf16.gmra.mxu0 %v1907
        %v2568 = vpop.f32.mrf.mxu0
        %v2569 = vadd.f32 %v943, %v2568
        %v2570 = vpop.f32.mrf.mxu0
        %2571 = vdwg.mxu0
        %2572 = vmatpush.bf16.msra.mxu0 0
        %2573 = vmatpush.bf16.msra.mxu0 0
        %2574 = vmatpush.bf16.msra.mxu0 0
        %2575 = vmatpush.bf16.msra.mxu0 0
        %2576 = vmatpush.bf16.msra.mxu0 0
        %2577 = vmatpush.bf16.msra.mxu0 %v1700
        %2578 = vmatpush.bf16.msra.mxu0 %v1636
        %2579 = vmatpush.bf16.msra.mxu0 %v1572
        %2580 = vmatmul.bf16.gmra.mxu0 %v1907
        %v2581 = vpop.f32.mrf.mxu0
        %v2582 = vadd.f32 %v943, %v2581
        %v2583 = vpop.f32.mrf.mxu0
        %2584 = vdwg.mxu0
        %2585 = vmatpush.bf16.msra.mxu0 0
        %2586 = vmatpush.bf16.msra.mxu0 0
        %2587 = vmatpush.bf16.msra.mxu0 0
        %2588 = vmatpush.bf16.msra.mxu0 0
        %2589 = vmatpush.bf16.msra.mxu0 0
        %2590 = vmatpush.bf16.msra.mxu0 %v1701
        %2591 = vmatpush.bf16.msra.mxu0 %v1637
        %2592 = vmatpush.bf16.msra.mxu0 %v1573
        %2593 = vmatmul.bf16.gmra.mxu0 %v1907
        %v2594 = vpop.f32.mrf.mxu0
        %v2595 = vadd.f32 %v943, %v2594
        %v2596 = vpop.f32.mrf.mxu0
        %2597 = vdwg.mxu0
        %2598 = vmatpush.bf16.msra.mxu0 0
        %2599 = vmatpush.bf16.msra.mxu0 0
        %2600 = vmatpush.bf16.msra.mxu0 0
        %2601 = vmatpush.bf16.msra.mxu0 0
        %2602 = vmatpush.bf16.msra.mxu0 0
        %2603 = vmatpush.bf16.msra.mxu0 %v1702
        %2604 = vmatpush.bf16.msra.mxu0 %v1638
        %2605 = vmatpush.bf16.msra.mxu0 %v1574
        %2606 = vmatmul.bf16.gmra.mxu0 %v1907
        %v2607 = vpop.f32.mrf.mxu0
        %v2608 = vadd.f32 %v943, %v2607
        %v2609 = vpop.f32.mrf.mxu0
        %2610 = vdwg.mxu0
        %2611 = vmatpush.bf16.msra.mxu0 0
        %2612 = vmatpush.bf16.msra.mxu0 0
        %2613 = vmatpush.bf16.msra.mxu0 0
        %2614 = vmatpush.bf16.msra.mxu0 0
        %2615 = vmatpush.bf16.msra.mxu0 0
        %2616 = vmatpush.bf16.msra.mxu0 %v1703
        %2617 = vmatpush.bf16.msra.mxu0 %v1639
        %2618 = vmatpush.bf16.msra.mxu0 %v1575
        %2619 = vmatmul.bf16.gmra.mxu0 %v1907
        %v2620 = vpop.f32.mrf.mxu0
        %v2621 = vadd.f32 %v943, %v2620
        %v2622 = vpop.f32.mrf.mxu0
        %2623 = vdwg.mxu0
        %2624 = vmatpush.bf16.msra.mxu0 0
        %2625 = vmatpush.bf16.msra.mxu0 0
        %2626 = vmatpush.bf16.msra.mxu0 0
        %2627 = vmatpush.bf16.msra.mxu0 0
        %2628 = vmatpush.bf16.msra.mxu0 0
        %2629 = vmatpush.bf16.msra.mxu0 %v1704
        %2630 = vmatpush.bf16.msra.mxu0 %v1640
        %2631 = vmatpush.bf16.msra.mxu0 %v1576
        %2632 = vmatmul.bf16.gmra.mxu0 %v1907
        %v2633 = vpop.f32.mrf.mxu0
        %v2634 = vadd.f32 %v943, %v2633
        %v2635 = vpop.f32.mrf.mxu0
        %2636 = vdwg.mxu0
        %2637 = vmatpush.bf16.msra.mxu0 0
        %2638 = vmatpush.bf16.msra.mxu0 0
        %2639 = vmatpush.bf16.msra.mxu0 0
        %2640 = vmatpush.bf16.msra.mxu0 0
        %2641 = vmatpush.bf16.msra.mxu0 0
        %2642 = vmatpush.bf16.msra.mxu0 %v1705
        %2643 = vmatpush.bf16.msra.mxu0 %v1641
        %2644 = vmatpush.bf16.msra.mxu0 %v1577
        %2645 = vmatmul.bf16.gmra.mxu0 %v1907
        %v2646 = vpop.f32.mrf.mxu0
        %v2647 = vadd.f32 %v943, %v2646
        %v2648 = vpop.f32.mrf.mxu0
        %2649 = vdwg.mxu0
        %2650 = vmatpush.bf16.msra.mxu0 0
        %2651 = vmatpush.bf16.msra.mxu0 0
        %2652 = vmatpush.bf16.msra.mxu0 0
        %2653 = vmatpush.bf16.msra.mxu0 0
        %2654 = vmatpush.bf16.msra.mxu0 0
        %2655 = vmatpush.bf16.msra.mxu0 %v1706
        %2656 = vmatpush.bf16.msra.mxu0 %v1642
        %2657 = vmatpush.bf16.msra.mxu0 %v1578
        %2658 = vmatmul.bf16.gmra.mxu0 %v1907
        %v2659 = vpop.f32.mrf.mxu0
        %v2660 = vadd.f32 %v943, %v2659
        %v2661 = vpop.f32.mrf.mxu0
        %2662 = vdwg.mxu0
        %2663 = vmatpush.bf16.msra.mxu0 0
        %2664 = vmatpush.bf16.msra.mxu0 0
        %2665 = vmatpush.bf16.msra.mxu0 0
        %2666 = vmatpush.bf16.msra.mxu0 0
        %2667 = vmatpush.bf16.msra.mxu0 0
        %2668 = vmatpush.bf16.msra.mxu0 %v1707
        %2669 = vmatpush.bf16.msra.mxu0 %v1643
        %2670 = vmatpush.bf16.msra.mxu0 %v1579
        %2671 = vmatmul.bf16.gmra.mxu0 %v1907
        %v2672 = vpop.f32.mrf.mxu0
        %v2673 = vadd.f32 %v943, %v2672
        %v2674 = vpop.f32.mrf.mxu0
        %2675 = vdwg.mxu0
        %2676 = vmatpush.bf16.msra.mxu0 0
        %2677 = vmatpush.bf16.msra.mxu0 0
        %2678 = vmatpush.bf16.msra.mxu0 0
        %2679 = vmatpush.bf16.msra.mxu0 0
        %2680 = vmatpush.bf16.msra.mxu0 0
        %2681 = vmatpush.bf16.msra.mxu0 %v1708
        %2682 = vmatpush.bf16.msra.mxu0 %v1644
        %2683 = vmatpush.bf16.msra.mxu0 %v1580
        %2684 = vmatmul.bf16.gmra.mxu0 %v1907
        %v2685 = vpop.f32.mrf.mxu0
        %v2686 = vadd.f32 %v943, %v2685
        %v2687 = vpop.f32.mrf.mxu0
        %2688 = vdwg.mxu0
        %2689 = vmatpush.bf16.msra.mxu0 0
        %2690 = vmatpush.bf16.msra.mxu0 0
        %2691 = vmatpush.bf16.msra.mxu0 0
        %2692 = vmatpush.bf16.msra.mxu0 0
        %2693 = vmatpush.bf16.msra.mxu0 0
        %2694 = vmatpush.bf16.msra.mxu0 %v1709
        %2695 = vmatpush.bf16.msra.mxu0 %v1645
        %2696 = vmatpush.bf16.msra.mxu0 %v1581
        %2697 = vmatmul.bf16.gmra.mxu0 %v1907
        %v2698 = vpop.f32.mrf.mxu0
        %v2699 = vadd.f32 %v943, %v2698
        %v2700 = vpop.f32.mrf.mxu0
        %2701 = vdwg.mxu0
        %2702 = vmatpush.bf16.msra.mxu0 0
        %2703 = vmatpush.bf16.msra.mxu0 0
        %2704 = vmatpush.bf16.msra.mxu0 0
        %2705 = vmatpush.bf16.msra.mxu0 0
        %2706 = vmatpush.bf16.msra.mxu0 0
        %2707 = vmatpush.bf16.msra.mxu0 %v1710
        %2708 = vmatpush.bf16.msra.mxu0 %v1646
        %2709 = vmatpush.bf16.msra.mxu0 %v1582
        %2710 = vmatmul.bf16.gmra.mxu0 %v1907
        %v2711 = vpop.f32.mrf.mxu0
        %v2712 = vadd.f32 %v943, %v2711
        %v2713 = vpop.f32.mrf.mxu0
        %2714 = vdwg.mxu0
        %2715 = vmatpush.bf16.msra.mxu0 0
        %2716 = vmatpush.bf16.msra.mxu0 0
        %2717 = vmatpush.bf16.msra.mxu0 0
        %2718 = vmatpush.bf16.msra.mxu0 0
        %2719 = vmatpush.bf16.msra.mxu0 0
        %2720 = vmatpush.bf16.msra.mxu0 %v1711
        %2721 = vmatpush.bf16.msra.mxu0 %v1647
        %2722 = vmatpush.bf16.msra.mxu0 %v1583
        %2723 = vmatmul.bf16.gmra.mxu0 %v1907
        %v2724 = vpop.f32.mrf.mxu0
        %v2725 = vadd.f32 %v943, %v2724
        %v2726 = vpop.f32.mrf.mxu0
        %2727 = vdwg.mxu0
        %2728 = vmatpush.bf16.msra.mxu0 0
        %2729 = vmatpush.bf16.msra.mxu0 0
        %2730 = vmatpush.bf16.msra.mxu0 0
        %2731 = vmatpush.bf16.msra.mxu0 0
        %2732 = vmatpush.bf16.msra.mxu0 0
        %2733 = vmatpush.bf16.msra.mxu0 %v1712
        %2734 = vmatpush.bf16.msra.mxu0 %v1648
        %2735 = vmatpush.bf16.msra.mxu0 %v1584
        %2736 = vmatmul.bf16.gmra.mxu0 %v1907
        %v2737 = vpop.f32.mrf.mxu0
        %v2738 = vadd.f32 %v943, %v2737
        %v2739 = vpop.f32.mrf.mxu0
        %2740 = vdwg.mxu0
        %s2741 = smul.u32 %s16, 64
        %s2742 = smul.addr %s2741, 8
        %s2743 = scalar_lea.vmem [#allocation2], %s2742
        %2744 = vst [vmem:[%s2743] sm:$0xff] %v1919
        %2745 = vst [vmem:[%s2743 + $0x8] sm:$0xff] %v1932
        %2746 = vst [vmem:[%s2743 + $0x10] sm:$0xff] %v1945
        %2747 = vst [vmem:[%s2743 + $0x18] sm:$0xff] %v1958
        %2748 = vst [vmem:[%s2743 + $0x20] sm:$0xff] %v1971
        %2749 = vst [vmem:[%s2743 + $0x28] sm:$0xff] %v1984
        %2750 = vst [vmem:[%s2743 + $0x30] sm:$0xff] %v1997
        %2751 = vst [vmem:[%s2743 + $0x38] sm:$0xff] %v2010
        %2752 = vst [vmem:[%s2743 + $0x40] sm:$0xff] %v2023
        %2753 = vst [vmem:[%s2743 + $0x48] sm:$0xff] %v2036
        %2754 = vst [vmem:[%s2743 + $0x50] sm:$0xff] %v2049
        %2755 = vst [vmem:[%s2743 + $0x58] sm:$0xff] %v2062
        %2756 = vst [vmem:[%s2743 + $0x60] sm:$0xff] %v2075
        %2757 = vst [vmem:[%s2743 + $0x68] sm:$0xff] %v2088
        %2758 = vst [vmem:[%s2743 + $0x70] sm:$0xff] %v2101
        %2759 = vst [vmem:[%s2743 + $0x78] sm:$0xff] %v2114
        %2760 = vst [vmem:[%s2743 + $0x80] sm:$0xff] %v2127
        %2761 = vst [vmem:[%s2743 + $0x88] sm:$0xff] %v2140
        %2762 = vst [vmem:[%s2743 + $0x90] sm:$0xff] %v2153
        %2763 = vst [vmem:[%s2743 + $0x98] sm:$0xff] %v2166
        %2764 = vst [vmem:[%s2743 + $0xa0] sm:$0xff] %v2179
        %2765 = vst [vmem:[%s2743 + $0xa8] sm:$0xff] %v2192
        %2766 = vst [vmem:[%s2743 + $0xb0] sm:$0xff] %v2205
        %2767 = vst [vmem:[%s2743 + $0xb8] sm:$0xff] %v2218
        %2768 = vst [vmem:[%s2743 + $0xc0] sm:$0xff] %v2231
        %2769 = vst [vmem:[%s2743 + $0xc8] sm:$0xff] %v2244
        %2770 = vst [vmem:[%s2743 + $0xd0] sm:$0xff] %v2257
        %2771 = vst [vmem:[%s2743 + $0xd8] sm:$0xff] %v2270
        %2772 = vst [vmem:[%s2743 + $0xe0] sm:$0xff] %v2283
        %2773 = vst [vmem:[%s2743 + $0xe8] sm:$0xff] %v2296
        %2774 = vst [vmem:[%s2743 + $0xf0] sm:$0xff] %v2309
        %2775 = vst [vmem:[%s2743 + $0xf8] sm:$0xff] %v2322
        %2776 = vst [vmem:[%s2743 + $0x100] sm:$0xff] %v2335
        %2777 = vst [vmem:[%s2743 + $0x108] sm:$0xff] %v2348
        %2778 = vst [vmem:[%s2743 + $0x110] sm:$0xff] %v2361
        %2779 = vst [vmem:[%s2743 + $0x118] sm:$0xff] %v2374
        %2780 = vst [vmem:[%s2743 + $0x120] sm:$0xff] %v2387
        %2781 = vst [vmem:[%s2743 + $0x128] sm:$0xff] %v2400
        %2782 = vst [vmem:[%s2743 + $0x130] sm:$0xff] %v2413
        %2783 = vst [vmem:[%s2743 + $0x138] sm:$0xff] %v2426
        %2784 = vst [vmem:[%s2743 + $0x140] sm:$0xff] %v2439
        %2785 = vst [vmem:[%s2743 + $0x148] sm:$0xff] %v2452
        %2786 = vst [vmem:[%s2743 + $0x150] sm:$0xff] %v2465
        %2787 = vst [vmem:[%s2743 + $0x158] sm:$0xff] %v2478
        %2788 = vst [vmem:[%s2743 + $0x160] sm:$0xff] %v2491
        %2789 = vst [vmem:[%s2743 + $0x168] sm:$0xff] %v2504
        %2790 = vst [vmem:[%s2743 + $0x170] sm:$0xff] %v2517
        %2791 = vst [vmem:[%s2743 + $0x178] sm:$0xff] %v2530
        %2792 = vst [vmem:[%s2743 + $0x180] sm:$0xff] %v2543
        %2793 = vst [vmem:[%s2743 + $0x188] sm:$0xff] %v2556
        %2794 = vst [vmem:[%s2743 + $0x190] sm:$0xff] %v2569
        %2795 = vst [vmem:[%s2743 + $0x198] sm:$0xff] %v2582
        %2796 = vst [vmem:[%s2743 + $0x1a0] sm:$0xff] %v2595
        %2797 = vst [vmem:[%s2743 + $0x1a8] sm:$0xff] %v2608
        %2798 = vst [vmem:[%s2743 + $0x1b0] sm:$0xff] %v2621
        %2799 = vst [vmem:[%s2743 + $0x1b8] sm:$0xff] %v2634
        %2800 = vst [vmem:[%s2743 + $0x1c0] sm:$0xff] %v2647
        %2801 = vst [vmem:[%s2743 + $0x1c8] sm:$0xff] %v2660
        %2802 = vst [vmem:[%s2743 + $0x1d0] sm:$0xff] %v2673
        %2803 = vst [vmem:[%s2743 + $0x1d8] sm:$0xff] %v2686
        %2804 = vst [vmem:[%s2743 + $0x1e0] sm:$0xff] %v2699
        %2805 = vst [vmem:[%s2743 + $0x1e8] sm:$0xff] %v2712
        %2806 = vst [vmem:[%s2743 + $0x1f0] sm:$0xff] %v2725
        %2807 = vst [vmem:[%s2743 + $0x1f8] sm:$0xff] %v2738
        %v2808 = vld [vmem:[%s2743] sm:$0xff]
        %v2809 = vld [vmem:[%s2743 + $0x8] sm:$0xff]
        %v2810 = vld [vmem:[%s2743 + $0x10] sm:$0xff]
        %v2811 = vld [vmem:[%s2743 + $0x18] sm:$0xff]
        %v2812 = vld [vmem:[%s2743 + $0x20] sm:$0xff]
        %v2813 = vld [vmem:[%s2743 + $0x28] sm:$0xff]
        %v2814 = vld [vmem:[%s2743 + $0x30] sm:$0xff]
        %v2815 = vld [vmem:[%s2743 + $0x38] sm:$0xff]
        %v2816 = vld [vmem:[%s2743 + $0x40] sm:$0xff]
        %v2817 = vld [vmem:[%s2743 + $0x48] sm:$0xff]
        %v2818 = vld [vmem:[%s2743 + $0x50] sm:$0xff]
        %v2819 = vld [vmem:[%s2743 + $0x58] sm:$0xff]
        %v2820 = vld [vmem:[%s2743 + $0x60] sm:$0xff]
        %v2821 = vld [vmem:[%s2743 + $0x68] sm:$0xff]
        %v2822 = vld [vmem:[%s2743 + $0x70] sm:$0xff]
        %v2823 = vld [vmem:[%s2743 + $0x78] sm:$0xff]
        %v2824 = vld [vmem:[%s2743 + $0x80] sm:$0xff]
        %v2825 = vld [vmem:[%s2743 + $0x88] sm:$0xff]
        %v2826 = vld [vmem:[%s2743 + $0x90] sm:$0xff]
        %v2827 = vld [vmem:[%s2743 + $0x98] sm:$0xff]
        %v2828 = vld [vmem:[%s2743 + $0xa0] sm:$0xff]
        %v2829 = vld [vmem:[%s2743 + $0xa8] sm:$0xff]
        %v2830 = vld [vmem:[%s2743 + $0xb0] sm:$0xff]
        %v2831 = vld [vmem:[%s2743 + $0xb8] sm:$0xff]
        %v2832 = vld [vmem:[%s2743 + $0xc0] sm:$0xff]
        %v2833 = vld [vmem:[%s2743 + $0xc8] sm:$0xff]
        %v2834 = vld [vmem:[%s2743 + $0xd0] sm:$0xff]
        %v2835 = vld [vmem:[%s2743 + $0xd8] sm:$0xff]
        %v2836 = vld [vmem:[%s2743 + $0xe0] sm:$0xff]
        %v2837 = vld [vmem:[%s2743 + $0xe8] sm:$0xff]
        %v2838 = vld [vmem:[%s2743 + $0xf0] sm:$0xff]
        %v2839 = vld [vmem:[%s2743 + $0xf8] sm:$0xff]
        %v2840 = vld [vmem:[%s2743 + $0x100] sm:$0xff]
        %v2841 = vld [vmem:[%s2743 + $0x108] sm:$0xff]
        %v2842 = vld [vmem:[%s2743 + $0x110] sm:$0xff]
        %v2843 = vld [vmem:[%s2743 + $0x118] sm:$0xff]
        %v2844 = vld [vmem:[%s2743 + $0x120] sm:$0xff]
        %v2845 = vld [vmem:[%s2743 + $0x128] sm:$0xff]
        %v2846 = vld [vmem:[%s2743 + $0x130] sm:$0xff]
        %v2847 = vld [vmem:[%s2743 + $0x138] sm:$0xff]
        %v2848 = vld [vmem:[%s2743 + $0x140] sm:$0xff]
        %v2849 = vld [vmem:[%s2743 + $0x148] sm:$0xff]
        %v2850 = vld [vmem:[%s2743 + $0x150] sm:$0xff]
        %v2851 = vld [vmem:[%s2743 + $0x158] sm:$0xff]
        %v2852 = vld [vmem:[%s2743 + $0x160] sm:$0xff]
        %v2853 = vld [vmem:[%s2743 + $0x168] sm:$0xff]
        %v2854 = vld [vmem:[%s2743 + $0x170] sm:$0xff]
        %v2855 = vld [vmem:[%s2743 + $0x178] sm:$0xff]
        %v2856 = vld [vmem:[%s2743 + $0x180] sm:$0xff]
        %v2857 = vld [vmem:[%s2743 + $0x188] sm:$0xff]
        %v2858 = vld [vmem:[%s2743 + $0x190] sm:$0xff]
        %v2859 = vld [vmem:[%s2743 + $0x198] sm:$0xff]
        %v2860 = vld [vmem:[%s2743 + $0x1a0] sm:$0xff]
        %v2861 = vld [vmem:[%s2743 + $0x1a8] sm:$0xff]
        %v2862 = vld [vmem:[%s2743 + $0x1b0] sm:$0xff]
        %v2863 = vld [vmem:[%s2743 + $0x1b8] sm:$0xff]
        %v2864 = vld [vmem:[%s2743 + $0x1c0] sm:$0xff]
        %v2865 = vld [vmem:[%s2743 + $0x1c8] sm:$0xff]
        %v2866 = vld [vmem:[%s2743 + $0x1d0] sm:$0xff]
        %v2867 = vld [vmem:[%s2743 + $0x1d8] sm:$0xff]
        %v2868 = vld [vmem:[%s2743 + $0x1e0] sm:$0xff]
        %v2869 = vld [vmem:[%s2743 + $0x1e8] sm:$0xff]
        %v2870 = vld [vmem:[%s2743 + $0x1f0] sm:$0xff]
        %v2871 = vld [vmem:[%s2743 + $0x1f8] sm:$0xff]
        %v2872 = vld [vmem:[#allocation3] sm:$0xff]
        %v2873 = vld [vmem:[#allocation3 + $0x8] sm:$0xff]
        %v2874 = vld [vmem:[#allocation3 + $0x10] sm:$0xff]
        %v2875 = vld [vmem:[#allocation3 + $0x18] sm:$0xff]
        %v2876 = vld [vmem:[#allocation3 + $0x20] sm:$0xff]
        %v2877 = vld [vmem:[#allocation3 + $0x28] sm:$0xff]
        %v2878 = vld [vmem:[#allocation3 + $0x30] sm:$0xff]
        %v2879 = vld [vmem:[#allocation3 + $0x38] sm:$0xff]
        %v2880 = vld [vmem:[#allocation3 + $0x40] sm:$0xff]
        %v2881 = vld [vmem:[#allocation3 + $0x48] sm:$0xff]
        %v2882 = vld [vmem:[#allocation3 + $0x50] sm:$0xff]
        %v2883 = vld [vmem:[#allocation3 + $0x58] sm:$0xff]
        %v2884 = vld [vmem:[#allocation3 + $0x60] sm:$0xff]
        %v2885 = vld [vmem:[#allocation3 + $0x68] sm:$0xff]
        %v2886 = vld [vmem:[#allocation3 + $0x70] sm:$0xff]
        %v2887 = vld [vmem:[#allocation3 + $0x78] sm:$0xff]
        %v2888 = vld [vmem:[#allocation3 + $0x80] sm:$0xff]
        %v2889 = vld [vmem:[#allocation3 + $0x88] sm:$0xff]
        %v2890 = vld [vmem:[#allocation3 + $0x90] sm:$0xff]
        %v2891 = vld [vmem:[#allocation3 + $0x98] sm:$0xff]
        %v2892 = vld [vmem:[#allocation3 + $0xa0] sm:$0xff]
        %v2893 = vld [vmem:[#allocation3 + $0xa8] sm:$0xff]
        %v2894 = vld [vmem:[#allocation3 + $0xb0] sm:$0xff]
        %v2895 = vld [vmem:[#allocation3 + $0xb8] sm:$0xff]
        %v2896 = vld [vmem:[#allocation3 + $0xc0] sm:$0xff]
        %v2897 = vld [vmem:[#allocation3 + $0xc8] sm:$0xff]
        %v2898 = vld [vmem:[#allocation3 + $0xd0] sm:$0xff]
        %v2899 = vld [vmem:[#allocation3 + $0xd8] sm:$0xff]
        %v2900 = vld [vmem:[#allocation3 + $0xe0] sm:$0xff]
        %v2901 = vld [vmem:[#allocation3 + $0xe8] sm:$0xff]
        %v2902 = vld [vmem:[#allocation3 + $0xf0] sm:$0xff]
        %v2903 = vld [vmem:[#allocation3 + $0xf8] sm:$0xff]
        %v2904 = vld [vmem:[#allocation3 + $0x100] sm:$0xff]
        %v2905 = vld [vmem:[#allocation3 + $0x108] sm:$0xff]
        %v2906 = vld [vmem:[#allocation3 + $0x110] sm:$0xff]
        %v2907 = vld [vmem:[#allocation3 + $0x118] sm:$0xff]
        %v2908 = vld [vmem:[#allocation3 + $0x120] sm:$0xff]
        %v2909 = vld [vmem:[#allocation3 + $0x128] sm:$0xff]
        %v2910 = vld [vmem:[#allocation3 + $0x130] sm:$0xff]
        %v2911 = vld [vmem:[#allocation3 + $0x138] sm:$0xff]
        %v2912 = vld [vmem:[#allocation3 + $0x140] sm:$0xff]
        %v2913 = vld [vmem:[#allocation3 + $0x148] sm:$0xff]
        %v2914 = vld [vmem:[#allocation3 + $0x150] sm:$0xff]
        %v2915 = vld [vmem:[#allocation3 + $0x158] sm:$0xff]
        %v2916 = vld [vmem:[#allocation3 + $0x160] sm:$0xff]
        %v2917 = vld [vmem:[#allocation3 + $0x168] sm:$0xff]
        %v2918 = vld [vmem:[#allocation3 + $0x170] sm:$0xff]
        %v2919 = vld [vmem:[#allocation3 + $0x178] sm:$0xff]
        %v2920 = vld [vmem:[#allocation3 + $0x180] sm:$0xff]
        %v2921 = vld [vmem:[#allocation3 + $0x188] sm:$0xff]
        %v2922 = vld [vmem:[#allocation3 + $0x190] sm:$0xff]
        %v2923 = vld [vmem:[#allocation3 + $0x198] sm:$0xff]
        %v2924 = vld [vmem:[#allocation3 + $0x1a0] sm:$0xff]
        %v2925 = vld [vmem:[#allocation3 + $0x1a8] sm:$0xff]
        %v2926 = vld [vmem:[#allocation3 + $0x1b0] sm:$0xff]
        %v2927 = vld [vmem:[#allocation3 + $0x1b8] sm:$0xff]
        %v2928 = vld [vmem:[#allocation3 + $0x1c0] sm:$0xff]
        %v2929 = vld [vmem:[#allocation3 + $0x1c8] sm:$0xff]
        %v2930 = vld [vmem:[#allocation3 + $0x1d0] sm:$0xff]
        %v2931 = vld [vmem:[#allocation3 + $0x1d8] sm:$0xff]
        %v2932 = vld [vmem:[#allocation3 + $0x1e0] sm:$0xff]
        %v2933 = vld [vmem:[#allocation3 + $0x1e8] sm:$0xff]
        %v2934 = vld [vmem:[#allocation3 + $0x1f0] sm:$0xff]
        %v2935 = vld [vmem:[#allocation3 + $0x1f8] sm:$0xff]
        %v2936 = vadd.f32 %v2872, %v2808
        %v2937 = vadd.f32 %v2873, %v2809
        %v2938 = vadd.f32 %v2874, %v2810
        %v2939 = vadd.f32 %v2875, %v2811
        %v2940 = vadd.f32 %v2876, %v2812
        %v2941 = vadd.f32 %v2877, %v2813
        %v2942 = vadd.f32 %v2878, %v2814
        %v2943 = vadd.f32 %v2879, %v2815
        %v2944 = vadd.f32 %v2880, %v2816
        %v2945 = vadd.f32 %v2881, %v2817
        %v2946 = vadd.f32 %v2882, %v2818
        %v2947 = vadd.f32 %v2883, %v2819
        %v2948 = vadd.f32 %v2884, %v2820
        %v2949 = vadd.f32 %v2885, %v2821
        %v2950 = vadd.f32 %v2886, %v2822
        %v2951 = vadd.f32 %v2887, %v2823
        %v2952 = vadd.f32 %v2888, %v2824
        %v2953 = vadd.f32 %v2889, %v2825
        %v2954 = vadd.f32 %v2890, %v2826
        %v2955 = vadd.f32 %v2891, %v2827
        %v2956 = vadd.f32 %v2892, %v2828
        %v2957 = vadd.f32 %v2893, %v2829
        %v2958 = vadd.f32 %v2894, %v2830
        %v2959 = vadd.f32 %v2895, %v2831
        %v2960 = vadd.f32 %v2896, %v2832
        %v2961 = vadd.f32 %v2897, %v2833
        %v2962 = vadd.f32 %v2898, %v2834
        %v2963 = vadd.f32 %v2899, %v2835
        %v2964 = vadd.f32 %v2900, %v2836
        %v2965 = vadd.f32 %v2901, %v2837
        %v2966 = vadd.f32 %v2902, %v2838
        %v2967 = vadd.f32 %v2903, %v2839
        %v2968 = vadd.f32 %v2904, %v2840
        %v2969 = vadd.f32 %v2905, %v2841
        %v2970 = vadd.f32 %v2906, %v2842
        %v2971 = vadd.f32 %v2907, %v2843
        %v2972 = vadd.f32 %v2908, %v2844
        %v2973 = vadd.f32 %v2909, %v2845
        %v2974 = vadd.f32 %v2910, %v2846
        %v2975 = vadd.f32 %v2911, %v2847
        %v2976 = vadd.f32 %v2912, %v2848
        %v2977 = vadd.f32 %v2913, %v2849
        %v2978 = vadd.f32 %v2914, %v2850
        %v2979 = vadd.f32 %v2915, %v2851
        %v2980 = vadd.f32 %v2916, %v2852
        %v2981 = vadd.f32 %v2917, %v2853
        %v2982 = vadd.f32 %v2918, %v2854
        %v2983 = vadd.f32 %v2919, %v2855
        %v2984 = vadd.f32 %v2920, %v2856
        %v2985 = vadd.f32 %v2921, %v2857
        %v2986 = vadd.f32 %v2922, %v2858
        %v2987 = vadd.f32 %v2923, %v2859
        %v2988 = vadd.f32 %v2924, %v2860
        %v2989 = vadd.f32 %v2925, %v2861
        %v2990 = vadd.f32 %v2926, %v2862
        %v2991 = vadd.f32 %v2927, %v2863
        %v2992 = vadd.f32 %v2928, %v2864
        %v2993 = vadd.f32 %v2929, %v2865
        %v2994 = vadd.f32 %v2930, %v2866
        %v2995 = vadd.f32 %v2931, %v2867
        %v2996 = vadd.f32 %v2932, %v2868
        %v2997 = vadd.f32 %v2933, %v2869
        %v2998 = vadd.f32 %v2934, %v2870
        %v2999 = vadd.f32 %v2935, %v2871
        %3000 = vst [vmem:[#allocation3] sm:$0xff] %v2936
        %3001 = vst [vmem:[#allocation3 + $0x8] sm:$0xff] %v2937
        %3002 = vst [vmem:[#allocation3 + $0x10] sm:$0xff] %v2938
        %3003 = vst [vmem:[#allocation3 + $0x18] sm:$0xff] %v2939
        %3004 = vst [vmem:[#allocation3 + $0x20] sm:$0xff] %v2940
        %3005 = vst [vmem:[#allocation3 + $0x28] sm:$0xff] %v2941
        %3006 = vst [vmem:[#allocation3 + $0x30] sm:$0xff] %v2942
        %3007 = vst [vmem:[#allocation3 + $0x38] sm:$0xff] %v2943
        %3008 = vst [vmem:[#allocation3 + $0x40] sm:$0xff] %v2944
        %3009 = vst [vmem:[#allocation3 + $0x48] sm:$0xff] %v2945
        %3010 = vst [vmem:[#allocation3 + $0x50] sm:$0xff] %v2946
        %3011 = vst [vmem:[#allocation3 + $0x58] sm:$0xff] %v2947
        %3012 = vst [vmem:[#allocation3 + $0x60] sm:$0xff] %v2948
        %3013 = vst [vmem:[#allocation3 + $0x68] sm:$0xff] %v2949
        %3014 = vst [vmem:[#allocation3 + $0x70] sm:$0xff] %v2950
        %3015 = vst [vmem:[#allocation3 + $0x78] sm:$0xff] %v2951
        %3016 = vst [vmem:[#allocation3 + $0x80] sm:$0xff] %v2952
        %3017 = vst [vmem:[#allocation3 + $0x88] sm:$0xff] %v2953
        %3018 = vst [vmem:[#allocation3 + $0x90] sm:$0xff] %v2954
        %3019 = vst [vmem:[#allocation3 + $0x98] sm:$0xff] %v2955
        %3020 = vst [vmem:[#allocation3 + $0xa0] sm:$0xff] %v2956
        %3021 = vst [vmem:[#allocation3 + $0xa8] sm:$0xff] %v2957
        %3022 = vst [vmem:[#allocation3 + $0xb0] sm:$0xff] %v2958
        %3023 = vst [vmem:[#allocation3 + $0xb8] sm:$0xff] %v2959
        %3024 = vst [vmem:[#allocation3 + $0xc0] sm:$0xff] %v2960
        %3025 = vst [vmem:[#allocation3 + $0xc8] sm:$0xff] %v2961
        %3026 = vst [vmem:[#allocation3 + $0xd0] sm:$0xff] %v2962
        %3027 = vst [vmem:[#allocation3 + $0xd8] sm:$0xff] %v2963
        %3028 = vst [vmem:[#allocation3 + $0xe0] sm:$0xff] %v2964
        %3029 = vst [vmem:[#allocation3 + $0xe8] sm:$0xff] %v2965
        %3030 = vst [vmem:[#allocation3 + $0xf0] sm:$0xff] %v2966
        %3031 = vst [vmem:[#allocation3 + $0xf8] sm:$0xff] %v2967
        %3032 = vst [vmem:[#allocation3 + $0x100] sm:$0xff] %v2968
        %3033 = vst [vmem:[#allocation3 + $0x108] sm:$0xff] %v2969
        %3034 = vst [vmem:[#allocation3 + $0x110] sm:$0xff] %v2970
        %3035 = vst [vmem:[#allocation3 + $0x118] sm:$0xff] %v2971
        %3036 = vst [vmem:[#allocation3 + $0x120] sm:$0xff] %v2972
        %3037 = vst [vmem:[#allocation3 + $0x128] sm:$0xff] %v2973
        %3038 = vst [vmem:[#allocation3 + $0x130] sm:$0xff] %v2974
        %3039 = vst [vmem:[#allocation3 + $0x138] sm:$0xff] %v2975
        %3040 = vst [vmem:[#allocation3 + $0x140] sm:$0xff] %v2976
        %3041 = vst [vmem:[#allocation3 + $0x148] sm:$0xff] %v2977
        %3042 = vst [vmem:[#allocation3 + $0x150] sm:$0xff] %v2978
        %3043 = vst [vmem:[#allocation3 + $0x158] sm:$0xff] %v2979
        %3044 = vst [vmem:[#allocation3 + $0x160] sm:$0xff] %v2980
        %3045 = vst [vmem:[#allocation3 + $0x168] sm:$0xff] %v2981
        %3046 = vst [vmem:[#allocation3 + $0x170] sm:$0xff] %v2982
        %3047 = vst [vmem:[#allocation3 + $0x178] sm:$0xff] %v2983
        %3048 = vst [vmem:[#allocation3 + $0x180] sm:$0xff] %v2984
        %3049 = vst [vmem:[#allocation3 + $0x188] sm:$0xff] %v2985
        %3050 = vst [vmem:[#allocation3 + $0x190] sm:$0xff] %v2986
        %3051 = vst [vmem:[#allocation3 + $0x198] sm:$0xff] %v2987
        %3052 = vst [vmem:[#allocation3 + $0x1a0] sm:$0xff] %v2988
        %3053 = vst [vmem:[#allocation3 + $0x1a8] sm:$0xff] %v2989
        %3054 = vst [vmem:[#allocation3 + $0x1b0] sm:$0xff] %v2990
        %3055 = vst [vmem:[#allocation3 + $0x1b8] sm:$0xff] %v2991
        %3056 = vst [vmem:[#allocation3 + $0x1c0] sm:$0xff] %v2992
        %3057 = vst [vmem:[#allocation3 + $0x1c8] sm:$0xff] %v2993
        %3058 = vst [vmem:[#allocation3 + $0x1d0] sm:$0xff] %v2994
        %3059 = vst [vmem:[#allocation3 + $0x1d8] sm:$0xff] %v2995
        %3060 = vst [vmem:[#allocation3 + $0x1e0] sm:$0xff] %v2996
        %3061 = vst [vmem:[#allocation3 + $0x1e8] sm:$0xff] %v2997
        %3062 = vst [vmem:[#allocation3 + $0x1f0] sm:$0xff] %v2998
        %3063 = vst [vmem:[#allocation3 + $0x1f8] sm:$0xff] %v2999
        %v3064 = vld [vmem:[#allocation4] sm:$0xff]
        %v3065 = vld [vmem:[#allocation4 + $0x8] sm:$0xff]
        %v3066 = vld [vmem:[#allocation4 + $0x10] sm:$0xff]
        %v3067 = vld [vmem:[#allocation4 + $0x18] sm:$0xff]
        %v3068 = vld [vmem:[#allocation4 + $0x20] sm:$0xff]
        %v3069 = vld [vmem:[#allocation4 + $0x28] sm:$0xff]
        %v3070 = vld [vmem:[#allocation4 + $0x30] sm:$0xff]
        %v3071 = vld [vmem:[#allocation4 + $0x38] sm:$0xff]
        %v3072 = vld [vmem:[#allocation4 + $0x40] sm:$0xff]
        %v3073 = vld [vmem:[#allocation4 + $0x48] sm:$0xff]
        %v3074 = vld [vmem:[#allocation4 + $0x50] sm:$0xff]
        %v3075 = vld [vmem:[#allocation4 + $0x58] sm:$0xff]
        %v3076 = vld [vmem:[#allocation4 + $0x60] sm:$0xff]
        %v3077 = vld [vmem:[#allocation4 + $0x68] sm:$0xff]
        %v3078 = vld [vmem:[#allocation4 + $0x70] sm:$0xff]
        %v3079 = vld [vmem:[#allocation4 + $0x78] sm:$0xff]
        %v3080 = vld [vmem:[#allocation4 + $0x80] sm:$0xff]
        %v3081 = vld [vmem:[#allocation4 + $0x88] sm:$0xff]
        %v3082 = vld [vmem:[#allocation4 + $0x90] sm:$0xff]
        %v3083 = vld [vmem:[#allocation4 + $0x98] sm:$0xff]
        %v3084 = vld [vmem:[#allocation4 + $0xa0] sm:$0xff]
        %v3085 = vld [vmem:[#allocation4 + $0xa8] sm:$0xff]
        %v3086 = vld [vmem:[#allocation4 + $0xb0] sm:$0xff]
        %v3087 = vld [vmem:[#allocation4 + $0xb8] sm:$0xff]
        %v3088 = vld [vmem:[#allocation4 + $0xc0] sm:$0xff]
        %v3089 = vld [vmem:[#allocation4 + $0xc8] sm:$0xff]
        %v3090 = vld [vmem:[#allocation4 + $0xd0] sm:$0xff]
        %v3091 = vld [vmem:[#allocation4 + $0xd8] sm:$0xff]
        %v3092 = vld [vmem:[#allocation4 + $0xe0] sm:$0xff]
        %v3093 = vld [vmem:[#allocation4 + $0xe8] sm:$0xff]
        %v3094 = vld [vmem:[#allocation4 + $0xf0] sm:$0xff]
        %v3095 = vld [vmem:[#allocation4 + $0xf8] sm:$0xff]
        %v3096 = vld [vmem:[#allocation4 + $0x100] sm:$0xff]
        %v3097 = vld [vmem:[#allocation4 + $0x108] sm:$0xff]
        %v3098 = vld [vmem:[#allocation4 + $0x110] sm:$0xff]
        %v3099 = vld [vmem:[#allocation4 + $0x118] sm:$0xff]
        %v3100 = vld [vmem:[#allocation4 + $0x120] sm:$0xff]
        %v3101 = vld [vmem:[#allocation4 + $0x128] sm:$0xff]
        %v3102 = vld [vmem:[#allocation4 + $0x130] sm:$0xff]
        %v3103 = vld [vmem:[#allocation4 + $0x138] sm:$0xff]
        %v3104 = vld [vmem:[#allocation4 + $0x140] sm:$0xff]
        %v3105 = vld [vmem:[#allocation4 + $0x148] sm:$0xff]
        %v3106 = vld [vmem:[#allocation4 + $0x150] sm:$0xff]
        %v3107 = vld [vmem:[#allocation4 + $0x158] sm:$0xff]
        %v3108 = vld [vmem:[#allocation4 + $0x160] sm:$0xff]
        %v3109 = vld [vmem:[#allocation4 + $0x168] sm:$0xff]
        %v3110 = vld [vmem:[#allocation4 + $0x170] sm:$0xff]
        %v3111 = vld [vmem:[#allocation4 + $0x178] sm:$0xff]
        %v3112 = vld [vmem:[#allocation4 + $0x180] sm:$0xff]
        %v3113 = vld [vmem:[#allocation4 + $0x188] sm:$0xff]
        %v3114 = vld [vmem:[#allocation4 + $0x190] sm:$0xff]
        %v3115 = vld [vmem:[#allocation4 + $0x198] sm:$0xff]
        %v3116 = vld [vmem:[#allocation4 + $0x1a0] sm:$0xff]
        %v3117 = vld [vmem:[#allocation4 + $0x1a8] sm:$0xff]
        %v3118 = vld [vmem:[#allocation4 + $0x1b0] sm:$0xff]
        %v3119 = vld [vmem:[#allocation4 + $0x1b8] sm:$0xff]
        %v3120 = vld [vmem:[#allocation4 + $0x1c0] sm:$0xff]
        %v3121 = vld [vmem:[#allocation4 + $0x1c8] sm:$0xff]
        %v3122 = vld [vmem:[#allocation4 + $0x1d0] sm:$0xff]
        %v3123 = vld [vmem:[#allocation4 + $0x1d8] sm:$0xff]
        %v3124 = vld [vmem:[#allocation4 + $0x1e0] sm:$0xff]
        %v3125 = vld [vmem:[#allocation4 + $0x1e8] sm:$0xff]
        %v3126 = vld [vmem:[#allocation4 + $0x1f0] sm:$0xff]
        %v3127 = vld [vmem:[#allocation4 + $0x1f8] sm:$0xff]
        %v3128 = vmul.f32 %v2808, %v2808
        %v3129 = vmul.f32 %v2809, %v2809
        %v3130 = vmul.f32 %v2810, %v2810
        %v3131 = vmul.f32 %v2811, %v2811
        %v3132 = vmul.f32 %v2812, %v2812
        %v3133 = vmul.f32 %v2813, %v2813
        %v3134 = vmul.f32 %v2814, %v2814
        %v3135 = vmul.f32 %v2815, %v2815
        %v3136 = vmul.f32 %v2816, %v2816
        %v3137 = vmul.f32 %v2817, %v2817
        %v3138 = vmul.f32 %v2818, %v2818
        %v3139 = vmul.f32 %v2819, %v2819
        %v3140 = vmul.f32 %v2820, %v2820
        %v3141 = vmul.f32 %v2821, %v2821
        %v3142 = vmul.f32 %v2822, %v2822
        %v3143 = vmul.f32 %v2823, %v2823
        %v3144 = vmul.f32 %v2824, %v2824
        %v3145 = vmul.f32 %v2825, %v2825
        %v3146 = vmul.f32 %v2826, %v2826
        %v3147 = vmul.f32 %v2827, %v2827
        %v3148 = vmul.f32 %v2828, %v2828
        %v3149 = vmul.f32 %v2829, %v2829
        %v3150 = vmul.f32 %v2830, %v2830
        %v3151 = vmul.f32 %v2831, %v2831
        %v3152 = vmul.f32 %v2832, %v2832
        %v3153 = vmul.f32 %v2833, %v2833
        %v3154 = vmul.f32 %v2834, %v2834
        %v3155 = vmul.f32 %v2835, %v2835
        %v3156 = vmul.f32 %v2836, %v2836
        %v3157 = vmul.f32 %v2837, %v2837
        %v3158 = vmul.f32 %v2838, %v2838
        %v3159 = vmul.f32 %v2839, %v2839
        %v3160 = vmul.f32 %v2840, %v2840
        %v3161 = vmul.f32 %v2841, %v2841
        %v3162 = vmul.f32 %v2842, %v2842
        %v3163 = vmul.f32 %v2843, %v2843
        %v3164 = vmul.f32 %v2844, %v2844
        %v3165 = vmul.f32 %v2845, %v2845
        %v3166 = vmul.f32 %v2846, %v2846
        %v3167 = vmul.f32 %v2847, %v2847
        %v3168 = vmul.f32 %v2848, %v2848
        %v3169 = vmul.f32 %v2849, %v2849
        %v3170 = vmul.f32 %v2850, %v2850
        %v3171 = vmul.f32 %v2851, %v2851
        %v3172 = vmul.f32 %v2852, %v2852
        %v3173 = vmul.f32 %v2853, %v2853
        %v3174 = vmul.f32 %v2854, %v2854
        %v3175 = vmul.f32 %v2855, %v2855
        %v3176 = vmul.f32 %v2856, %v2856
        %v3177 = vmul.f32 %v2857, %v2857
        %v3178 = vmul.f32 %v2858, %v2858
        %v3179 = vmul.f32 %v2859, %v2859
        %v3180 = vmul.f32 %v2860, %v2860
        %v3181 = vmul.f32 %v2861, %v2861
        %v3182 = vmul.f32 %v2862, %v2862
        %v3183 = vmul.f32 %v2863, %v2863
        %v3184 = vmul.f32 %v2864, %v2864
        %v3185 = vmul.f32 %v2865, %v2865
        %v3186 = vmul.f32 %v2866, %v2866
        %v3187 = vmul.f32 %v2867, %v2867
        %v3188 = vmul.f32 %v2868, %v2868
        %v3189 = vmul.f32 %v2869, %v2869
        %v3190 = vmul.f32 %v2870, %v2870
        %v3191 = vmul.f32 %v2871, %v2871
        %v3192 = vadd.f32 %v3064, %v3128
        %v3193 = vadd.f32 %v3065, %v3129
        %v3194 = vadd.f32 %v3066, %v3130
        %v3195 = vadd.f32 %v3067, %v3131
        %v3196 = vadd.f32 %v3068, %v3132
        %v3197 = vadd.f32 %v3069, %v3133
        %v3198 = vadd.f32 %v3070, %v3134
        %v3199 = vadd.f32 %v3071, %v3135
        %v3200 = vadd.f32 %v3072, %v3136
        %v3201 = vadd.f32 %v3073, %v3137
        %v3202 = vadd.f32 %v3074, %v3138
        %v3203 = vadd.f32 %v3075, %v3139
        %v3204 = vadd.f32 %v3076, %v3140
        %v3205 = vadd.f32 %v3077, %v3141
        %v3206 = vadd.f32 %v3078, %v3142
        %v3207 = vadd.f32 %v3079, %v3143
        %v3208 = vadd.f32 %v3080, %v3144
        %v3209 = vadd.f32 %v3081, %v3145
        %v3210 = vadd.f32 %v3082, %v3146
        %v3211 = vadd.f32 %v3083, %v3147
        %v3212 = vadd.f32 %v3084, %v3148
        %v3213 = vadd.f32 %v3085, %v3149
        %v3214 = vadd.f32 %v3086, %v3150
        %v3215 = vadd.f32 %v3087, %v3151
        %v3216 = vadd.f32 %v3088, %v3152
        %v3217 = vadd.f32 %v3089, %v3153
        %v3218 = vadd.f32 %v3090, %v3154
        %v3219 = vadd.f32 %v3091, %v3155
        %v3220 = vadd.f32 %v3092, %v3156
        %v3221 = vadd.f32 %v3093, %v3157
        %v3222 = vadd.f32 %v3094, %v3158
        %v3223 = vadd.f32 %v3095, %v3159
        %v3224 = vadd.f32 %v3096, %v3160
        %v3225 = vadd.f32 %v3097, %v3161
        %v3226 = vadd.f32 %v3098, %v3162
        %v3227 = vadd.f32 %v3099, %v3163
        %v3228 = vadd.f32 %v3100, %v3164
        %v3229 = vadd.f32 %v3101, %v3165
        %v3230 = vadd.f32 %v3102, %v3166
        %v3231 = vadd.f32 %v3103, %v3167
        %v3232 = vadd.f32 %v3104, %v3168
        %v3233 = vadd.f32 %v3105, %v3169
        %v3234 = vadd.f32 %v3106, %v3170
        %v3235 = vadd.f32 %v3107, %v3171
        %v3236 = vadd.f32 %v3108, %v3172
        %v3237 = vadd.f32 %v3109, %v3173
        %v3238 = vadd.f32 %v3110, %v3174
        %v3239 = vadd.f32 %v3111, %v3175
        %v3240 = vadd.f32 %v3112, %v3176
        %v3241 = vadd.f32 %v3113, %v3177
        %v3242 = vadd.f32 %v3114, %v3178
        %v3243 = vadd.f32 %v3115, %v3179
        %v3244 = vadd.f32 %v3116, %v3180
        %v3245 = vadd.f32 %v3117, %v3181
        %v3246 = vadd.f32 %v3118, %v3182
        %v3247 = vadd.f32 %v3119, %v3183
        %v3248 = vadd.f32 %v3120, %v3184
        %v3249 = vadd.f32 %v3121, %v3185
        %v3250 = vadd.f32 %v3122, %v3186
        %v3251 = vadd.f32 %v3123, %v3187
        %v3252 = vadd.f32 %v3124, %v3188
        %v3253 = vadd.f32 %v3125, %v3189
        %v3254 = vadd.f32 %v3126, %v3190
        %v3255 = vadd.f32 %v3127, %v3191
        %3256 = vst [vmem:[#allocation4] sm:$0xff] %v3192
        %3257 = vst [vmem:[#allocation4 + $0x8] sm:$0xff] %v3193
        %3258 = vst [vmem:[#allocation4 + $0x10] sm:$0xff] %v3194
        %3259 = vst [vmem:[#allocation4 + $0x18] sm:$0xff] %v3195
        %3260 = vst [vmem:[#allocation4 + $0x20] sm:$0xff] %v3196
        %3261 = vst [vmem:[#allocation4 + $0x28] sm:$0xff] %v3197
        %3262 = vst [vmem:[#allocation4 + $0x30] sm:$0xff] %v3198
        %3263 = vst [vmem:[#allocation4 + $0x38] sm:$0xff] %v3199
        %3264 = vst [vmem:[#allocation4 + $0x40] sm:$0xff] %v3200
        %3265 = vst [vmem:[#allocation4 + $0x48] sm:$0xff] %v3201
        %3266 = vst [vmem:[#allocation4 + $0x50] sm:$0xff] %v3202
        %3267 = vst [vmem:[#allocation4 + $0x58] sm:$0xff] %v3203
        %3268 = vst [vmem:[#allocation4 + $0x60] sm:$0xff] %v3204
        %3269 = vst [vmem:[#allocation4 + $0x68] sm:$0xff] %v3205
        %3270 = vst [vmem:[#allocation4 + $0x70] sm:$0xff] %v3206
        %3271 = vst [vmem:[#allocation4 + $0x78] sm:$0xff] %v3207
        %3272 = vst [vmem:[#allocation4 + $0x80] sm:$0xff] %v3208
        %3273 = vst [vmem:[#allocation4 + $0x88] sm:$0xff] %v3209
        %3274 = vst [vmem:[#allocation4 + $0x90] sm:$0xff] %v3210
        %3275 = vst [vmem:[#allocation4 + $0x98] sm:$0xff] %v3211
        %3276 = vst [vmem:[#allocation4 + $0xa0] sm:$0xff] %v3212
        %3277 = vst [vmem:[#allocation4 + $0xa8] sm:$0xff] %v3213
        %3278 = vst [vmem:[#allocation4 + $0xb0] sm:$0xff] %v3214
        %3279 = vst [vmem:[#allocation4 + $0xb8] sm:$0xff] %v3215
        %3280 = vst [vmem:[#allocation4 + $0xc0] sm:$0xff] %v3216
        %3281 = vst [vmem:[#allocation4 + $0xc8] sm:$0xff] %v3217
        %3282 = vst [vmem:[#allocation4 + $0xd0] sm:$0xff] %v3218
        %3283 = vst [vmem:[#allocation4 + $0xd8] sm:$0xff] %v3219
        %3284 = vst [vmem:[#allocation4 + $0xe0] sm:$0xff] %v3220
        %3285 = vst [vmem:[#allocation4 + $0xe8] sm:$0xff] %v3221
        %3286 = vst [vmem:[#allocation4 + $0xf0] sm:$0xff] %v3222
        %3287 = vst [vmem:[#allocation4 + $0xf8] sm:$0xff] %v3223
        %3288 = vst [vmem:[#allocation4 + $0x100] sm:$0xff] %v3224
        %3289 = vst [vmem:[#allocation4 + $0x108] sm:$0xff] %v3225
        %3290 = vst [vmem:[#allocation4 + $0x110] sm:$0xff] %v3226
        %3291 = vst [vmem:[#allocation4 + $0x118] sm:$0xff] %v3227
        %3292 = vst [vmem:[#allocation4 + $0x120] sm:$0xff] %v3228
        %3293 = vst [vmem:[#allocation4 + $0x128] sm:$0xff] %v3229
        %3294 = vst [vmem:[#allocation4 + $0x130] sm:$0xff] %v3230
        %3295 = vst [vmem:[#allocation4 + $0x138] sm:$0xff] %v3231
        %3296 = vst [vmem:[#allocation4 + $0x140] sm:$0xff] %v3232
        %3297 = vst [vmem:[#allocation4 + $0x148] sm:$0xff] %v3233
        %3298 = vst [vmem:[#allocation4 + $0x150] sm:$0xff] %v3234
        %3299 = vst [vmem:[#allocation4 + $0x158] sm:$0xff] %v3235
        %3300 = vst [vmem:[#allocation4 + $0x160] sm:$0xff] %v3236
        %3301 = vst [vmem:[#allocation4 + $0x168] sm:$0xff] %v3237
        %3302 = vst [vmem:[#allocation4 + $0x170] sm:$0xff] %v3238
        %3303 = vst [vmem:[#allocation4 + $0x178] sm:$0xff] %v3239
        %3304 = vst [vmem:[#allocation4 + $0x180] sm:$0xff] %v3240
        %3305 = vst [vmem:[#allocation4 + $0x188] sm:$0xff] %v3241
        %3306 = vst [vmem:[#allocation4 + $0x190] sm:$0xff] %v3242
        %3307 = vst [vmem:[#allocation4 + $0x198] sm:$0xff] %v3243
        %3308 = vst [vmem:[#allocation4 + $0x1a0] sm:$0xff] %v3244
        %3309 = vst [vmem:[#allocation4 + $0x1a8] sm:$0xff] %v3245
        %3310 = vst [vmem:[#allocation4 + $0x1b0] sm:$0xff] %v3246
        %3311 = vst [vmem:[#allocation4 + $0x1b8] sm:$0xff] %v3247
        %3312 = vst [vmem:[#allocation4 + $0x1c0] sm:$0xff] %v3248
        %3313 = vst [vmem:[#allocation4 + $0x1c8] sm:$0xff] %v3249
        %3314 = vst [vmem:[#allocation4 + $0x1d0] sm:$0xff] %v3250
        %3315 = vst [vmem:[#allocation4 + $0x1d8] sm:$0xff] %v3251
        %3316 = vst [vmem:[#allocation4 + $0x1e0] sm:$0xff] %v3252
        %3317 = vst [vmem:[#allocation4 + $0x1e8] sm:$0xff] %v3253
        %3318 = vst [vmem:[#allocation4 + $0x1f0] sm:$0xff] %v3254
        %3319 = vst [vmem:[#allocation4 + $0x1f8] sm:$0xff] %v3255
        %p3320 = scmp.eq.s32.totalorder %s16, 3
        // Predicated region
        $region68: #{discriminator_forward.3} parent=58 // pred_check
          %p3321 = pneg %p3320
        $region69: #{discriminator_forward.3} parent=58 // pred_check_branch
          %3323 = sbr.rel (%p3321) target = $region71
        $region70: #{discriminator_forward.3} parent=58 // pred_region
          %v3324 = vld [vmem:[#allocation3] sm:$0xff]
          %v3325 = vld [vmem:[#allocation3 + $0x8] sm:$0xff]
          %v3326 = vld [vmem:[#allocation3 + $0x10] sm:$0xff]
          %v3327 = vld [vmem:[#allocation3 + $0x18] sm:$0xff]
          %v3328 = vld [vmem:[#allocation3 + $0x20] sm:$0xff]
          %v3329 = vld [vmem:[#allocation3 + $0x28] sm:$0xff]
          %v3330 = vld [vmem:[#allocation3 + $0x30] sm:$0xff]
          %v3331 = vld [vmem:[#allocation3 + $0x38] sm:$0xff]
          %v3332 = vld [vmem:[#allocation3 + $0x40] sm:$0xff]
          %v3333 = vld [vmem:[#allocation3 + $0x48] sm:$0xff]
          %v3334 = vld [vmem:[#allocation3 + $0x50] sm:$0xff]
          %v3335 = vld [vmem:[#allocation3 + $0x58] sm:$0xff]
          %v3336 = vld [vmem:[#allocation3 + $0x60] sm:$0xff]
          %v3337 = vld [vmem:[#allocation3 + $0x68] sm:$0xff]
          %v3338 = vld [vmem:[#allocation3 + $0x70] sm:$0xff]
          %v3339 = vld [vmem:[#allocation3 + $0x78] sm:$0xff]
          %v3340 = vld [vmem:[#allocation3 + $0x80] sm:$0xff]
          %v3341 = vld [vmem:[#allocation3 + $0x88] sm:$0xff]
          %v3342 = vld [vmem:[#allocation3 + $0x90] sm:$0xff]
          %v3343 = vld [vmem:[#allocation3 + $0x98] sm:$0xff]
          %v3344 = vld [vmem:[#allocation3 + $0xa0] sm:$0xff]
          %v3345 = vld [vmem:[#allocation3 + $0xa8] sm:$0xff]
          %v3346 = vld [vmem:[#allocation3 + $0xb0] sm:$0xff]
          %v3347 = vld [vmem:[#allocation3 + $0xb8] sm:$0xff]
          %v3348 = vld [vmem:[#allocation3 + $0xc0] sm:$0xff]
          %v3349 = vld [vmem:[#allocation3 + $0xc8] sm:$0xff]
          %v3350 = vld [vmem:[#allocation3 + $0xd0] sm:$0xff]
          %v3351 = vld [vmem:[#allocation3 + $0xd8] sm:$0xff]
          %v3352 = vld [vmem:[#allocation3 + $0xe0] sm:$0xff]
          %v3353 = vld [vmem:[#allocation3 + $0xe8] sm:$0xff]
          %v3354 = vld [vmem:[#allocation3 + $0xf0] sm:$0xff]
          %v3355 = vld [vmem:[#allocation3 + $0xf8] sm:$0xff]
          %v3356 = vld [vmem:[#allocation3 + $0x100] sm:$0xff]
          %v3357 = vld [vmem:[#allocation3 + $0x108] sm:$0xff]
          %v3358 = vld [vmem:[#allocation3 + $0x110] sm:$0xff]
          %v3359 = vld [vmem:[#allocation3 + $0x118] sm:$0xff]
          %v3360 = vld [vmem:[#allocation3 + $0x120] sm:$0xff]
          %v3361 = vld [vmem:[#allocation3 + $0x128] sm:$0xff]
          %v3362 = vld [vmem:[#allocation3 + $0x130] sm:$0xff]
          %v3363 = vld [vmem:[#allocation3 + $0x138] sm:$0xff]
          %v3364 = vld [vmem:[#allocation3 + $0x140] sm:$0xff]
          %v3365 = vld [vmem:[#allocation3 + $0x148] sm:$0xff]
          %v3366 = vld [vmem:[#allocation3 + $0x150] sm:$0xff]
          %v3367 = vld [vmem:[#allocation3 + $0x158] sm:$0xff]
          %v3368 = vld [vmem:[#allocation3 + $0x160] sm:$0xff]
          %v3369 = vld [vmem:[#allocation3 + $0x168] sm:$0xff]
          %v3370 = vld [vmem:[#allocation3 + $0x170] sm:$0xff]
          %v3371 = vld [vmem:[#allocation3 + $0x178] sm:$0xff]
          %v3372 = vld [vmem:[#allocation3 + $0x180] sm:$0xff]
          %v3373 = vld [vmem:[#allocation3 + $0x188] sm:$0xff]
          %v3374 = vld [vmem:[#allocation3 + $0x190] sm:$0xff]
          %v3375 = vld [vmem:[#allocation3 + $0x198] sm:$0xff]
          %v3376 = vld [vmem:[#allocation3 + $0x1a0] sm:$0xff]
          %v3377 = vld [vmem:[#allocation3 + $0x1a8] sm:$0xff]
          %v3378 = vld [vmem:[#allocation3 + $0x1b0] sm:$0xff]
          %v3379 = vld [vmem:[#allocation3 + $0x1b8] sm:$0xff]
          %v3380 = vld [vmem:[#allocation3 + $0x1c0] sm:$0xff]
          %v3381 = vld [vmem:[#allocation3 + $0x1c8] sm:$0xff]
          %v3382 = vld [vmem:[#allocation3 + $0x1d0] sm:$0xff]
          %v3383 = vld [vmem:[#allocation3 + $0x1d8] sm:$0xff]
          %v3384 = vld [vmem:[#allocation3 + $0x1e0] sm:$0xff]
          %v3385 = vld [vmem:[#allocation3 + $0x1e8] sm:$0xff]
          %v3386 = vld [vmem:[#allocation3 + $0x1f0] sm:$0xff]
          %v3387 = vld [vmem:[#allocation3 + $0x1f8] sm:$0xff]
          %v3388 = vadd.f32 %v3324, %v3325
          %v3389 = vadd.f32 %v3388, %v3326
          %v3390 = vadd.f32 %v3389, %v3327
          %v3391 = vadd.f32 %v3390, %v3328
          %v3392 = vadd.f32 %v3391, %v3329
          %v3393 = vadd.f32 %v3392, %v3330
          %v3394 = vadd.f32 %v3393, %v3331
          %v3395 = vadd.f32 %v3394, %v3332
          %v3396 = vadd.f32 %v3395, %v3333
          %v3397 = vadd.f32 %v3396, %v3334
          %v3398 = vadd.f32 %v3397, %v3335
          %v3399 = vadd.f32 %v3398, %v3336
          %v3400 = vadd.f32 %v3399, %v3337
          %v3401 = vadd.f32 %v3400, %v3338
          %v3402 = vadd.f32 %v3401, %v3339
          %v3403 = vadd.f32 %v3402, %v3340
          %v3404 = vadd.f32 %v3403, %v3341
          %v3405 = vadd.f32 %v3404, %v3342
          %v3406 = vadd.f32 %v3405, %v3343
          %v3407 = vadd.f32 %v3406, %v3344
          %v3408 = vadd.f32 %v3407, %v3345
          %v3409 = vadd.f32 %v3408, %v3346
          %v3410 = vadd.f32 %v3409, %v3347
          %v3411 = vadd.f32 %v3410, %v3348
          %v3412 = vadd.f32 %v3411, %v3349
          %v3413 = vadd.f32 %v3412, %v3350
          %v3414 = vadd.f32 %v3413, %v3351
          %v3415 = vadd.f32 %v3414, %v3352
          %v3416 = vadd.f32 %v3415, %v3353
          %v3417 = vadd.f32 %v3416, %v3354
          %v3418 = vadd.f32 %v3417, %v3355
          %v3419 = vadd.f32 %v3418, %v3356
          %v3420 = vadd.f32 %v3419, %v3357
          %v3421 = vadd.f32 %v3420, %v3358
          %v3422 = vadd.f32 %v3421, %v3359
          %v3423 = vadd.f32 %v3422, %v3360
          %v3424 = vadd.f32 %v3423, %v3361
          %v3425 = vadd.f32 %v3424, %v3362
          %v3426 = vadd.f32 %v3425, %v3363
          %v3427 = vadd.f32 %v3426, %v3364
          %v3428 = vadd.f32 %v3427, %v3365
          %v3429 = vadd.f32 %v3428, %v3366
          %v3430 = vadd.f32 %v3429, %v3367
          %v3431 = vadd.f32 %v3430, %v3368
          %v3432 = vadd.f32 %v3431, %v3369
          %v3433 = vadd.f32 %v3432, %v3370
          %v3434 = vadd.f32 %v3433, %v3371
          %v3435 = vadd.f32 %v3434, %v3372
          %v3436 = vadd.f32 %v3435, %v3373
          %v3437 = vadd.f32 %v3436, %v3374
          %v3438 = vadd.f32 %v3437, %v3375
          %v3439 = vadd.f32 %v3438, %v3376
          %v3440 = vadd.f32 %v3439, %v3377
          %v3441 = vadd.f32 %v3440, %v3378
          %v3442 = vadd.f32 %v3441, %v3379
          %v3443 = vadd.f32 %v3442, %v3380
          %v3444 = vadd.f32 %v3443, %v3381
          %v3445 = vadd.f32 %v3444, %v3382
          %v3446 = vadd.f32 %v3445, %v3383
          %v3447 = vadd.f32 %v3446, %v3384
          %v3448 = vadd.f32 %v3447, %v3385
          %v3449 = vadd.f32 %v3448, %v3386
          %v3450 = vadd.f32 %v3449, %v3387
          %3451 = vadd.xlane.f32.xlu0 %v3450
          %v3452 = vpop.xlane.xlu0 %3451
          %v3453 = vld [vmem:[#allocation4] sm:$0xff]
          %v3454 = vld [vmem:[#allocation4 + $0x8] sm:$0xff]
          %v3455 = vld [vmem:[#allocation4 + $0x10] sm:$0xff]
          %v3456 = vld [vmem:[#allocation4 + $0x18] sm:$0xff]
          %v3457 = vld [vmem:[#allocation4 + $0x20] sm:$0xff]
          %v3458 = vld [vmem:[#allocation4 + $0x28] sm:$0xff]
          %v3459 = vld [vmem:[#allocation4 + $0x30] sm:$0xff]
          %v3460 = vld [vmem:[#allocation4 + $0x38] sm:$0xff]
          %v3461 = vld [vmem:[#allocation4 + $0x40] sm:$0xff]
          %v3462 = vld [vmem:[#allocation4 + $0x48] sm:$0xff]
          %v3463 = vld [vmem:[#allocation4 + $0x50] sm:$0xff]
          %v3464 = vld [vmem:[#allocation4 + $0x58] sm:$0xff]
          %v3465 = vld [vmem:[#allocation4 + $0x60] sm:$0xff]
          %v3466 = vld [vmem:[#allocation4 + $0x68] sm:$0xff]
          %v3467 = vld [vmem:[#allocation4 + $0x70] sm:$0xff]
          %v3468 = vld [vmem:[#allocation4 + $0x78] sm:$0xff]
          %v3469 = vld [vmem:[#allocation4 + $0x80] sm:$0xff]
          %v3470 = vld [vmem:[#allocation4 + $0x88] sm:$0xff]
          %v3471 = vld [vmem:[#allocation4 + $0x90] sm:$0xff]
          %v3472 = vld [vmem:[#allocation4 + $0x98] sm:$0xff]
          %v3473 = vld [vmem:[#allocation4 + $0xa0] sm:$0xff]
          %v3474 = vld [vmem:[#allocation4 + $0xa8] sm:$0xff]
          %v3475 = vld [vmem:[#allocation4 + $0xb0] sm:$0xff]
          %v3476 = vld [vmem:[#allocation4 + $0xb8] sm:$0xff]
          %v3477 = vld [vmem:[#allocation4 + $0xc0] sm:$0xff]
          %v3478 = vld [vmem:[#allocation4 + $0xc8] sm:$0xff]
          %v3479 = vld [vmem:[#allocation4 + $0xd0] sm:$0xff]
          %v3480 = vld [vmem:[#allocation4 + $0xd8] sm:$0xff]
          %v3481 = vld [vmem:[#allocation4 + $0xe0] sm:$0xff]
          %v3482 = vld [vmem:[#allocation4 + $0xe8] sm:$0xff]
          %v3483 = vld [vmem:[#allocation4 + $0xf0] sm:$0xff]
          %v3484 = vld [vmem:[#allocation4 + $0xf8] sm:$0xff]
          %v3485 = vld [vmem:[#allocation4 + $0x100] sm:$0xff]
          %v3486 = vld [vmem:[#allocation4 + $0x108] sm:$0xff]
          %v3487 = vld [vmem:[#allocation4 + $0x110] sm:$0xff]
          %v3488 = vld [vmem:[#allocation4 + $0x118] sm:$0xff]
          %v3489 = vld [vmem:[#allocation4 + $0x120] sm:$0xff]
          %v3490 = vld [vmem:[#allocation4 + $0x128] sm:$0xff]
          %v3491 = vld [vmem:[#allocation4 + $0x130] sm:$0xff]
          %v3492 = vld [vmem:[#allocation4 + $0x138] sm:$0xff]
          %v3493 = vld [vmem:[#allocation4 + $0x140] sm:$0xff]
          %v3494 = vld [vmem:[#allocation4 + $0x148] sm:$0xff]
          %v3495 = vld [vmem:[#allocation4 + $0x150] sm:$0xff]
          %v3496 = vld [vmem:[#allocation4 + $0x158] sm:$0xff]
          %v3497 = vld [vmem:[#allocation4 + $0x160] sm:$0xff]
          %v3498 = vld [vmem:[#allocation4 + $0x168] sm:$0xff]
          %v3499 = vld [vmem:[#allocation4 + $0x170] sm:$0xff]
          %v3500 = vld [vmem:[#allocation4 + $0x178] sm:$0xff]
          %v3501 = vld [vmem:[#allocation4 + $0x180] sm:$0xff]
          %v3502 = vld [vmem:[#allocation4 + $0x188] sm:$0xff]
          %v3503 = vld [vmem:[#allocation4 + $0x190] sm:$0xff]
          %v3504 = vld [vmem:[#allocation4 + $0x198] sm:$0xff]
          %v3505 = vld [vmem:[#allocation4 + $0x1a0] sm:$0xff]
          %v3506 = vld [vmem:[#allocation4 + $0x1a8] sm:$0xff]
          %v3507 = vld [vmem:[#allocation4 + $0x1b0] sm:$0xff]
          %v3508 = vld [vmem:[#allocation4 + $0x1b8] sm:$0xff]
          %v3509 = vld [vmem:[#allocation4 + $0x1c0] sm:$0xff]
          %v3510 = vld [vmem:[#allocation4 + $0x1c8] sm:$0xff]
          %v3511 = vld [vmem:[#allocation4 + $0x1d0] sm:$0xff]
          %v3512 = vld [vmem:[#allocation4 + $0x1d8] sm:$0xff]
          %v3513 = vld [vmem:[#allocation4 + $0x1e0] sm:$0xff]
          %v3514 = vld [vmem:[#allocation4 + $0x1e8] sm:$0xff]
          %v3515 = vld [vmem:[#allocation4 + $0x1f0] sm:$0xff]
          %v3516 = vld [vmem:[#allocation4 + $0x1f8] sm:$0xff]
          %v3517 = vadd.f32 %v3453, %v3454
          %v3518 = vadd.f32 %v3517, %v3455
          %v3519 = vadd.f32 %v3518, %v3456
          %v3520 = vadd.f32 %v3519, %v3457
          %v3521 = vadd.f32 %v3520, %v3458
          %v3522 = vadd.f32 %v3521, %v3459
          %v3523 = vadd.f32 %v3522, %v3460
          %v3524 = vadd.f32 %v3523, %v3461
          %v3525 = vadd.f32 %v3524, %v3462
          %v3526 = vadd.f32 %v3525, %v3463
          %v3527 = vadd.f32 %v3526, %v3464
          %v3528 = vadd.f32 %v3527, %v3465
          %v3529 = vadd.f32 %v3528, %v3466
          %v3530 = vadd.f32 %v3529, %v3467
          %v3531 = vadd.f32 %v3530, %v3468
          %v3532 = vadd.f32 %v3531, %v3469
          %v3533 = vadd.f32 %v3532, %v3470
          %v3534 = vadd.f32 %v3533, %v3471
          %v3535 = vadd.f32 %v3534, %v3472
          %v3536 = vadd.f32 %v3535, %v3473
          %v3537 = vadd.f32 %v3536, %v3474
          %v3538 = vadd.f32 %v3537, %v3475
          %v3539 = vadd.f32 %v3538, %v3476
          %v3540 = vadd.f32 %v3539, %v3477
          %v3541 = vadd.f32 %v3540, %v3478
          %v3542 = vadd.f32 %v3541, %v3479
          %v3543 = vadd.f32 %v3542, %v3480
          %v3544 = vadd.f32 %v3543, %v3481
          %v3545 = vadd.f32 %v3544, %v3482
          %v3546 = vadd.f32 %v3545, %v3483
          %v3547 = vadd.f32 %v3546, %v3484
          %v3548 = vadd.f32 %v3547, %v3485
          %v3549 = vadd.f32 %v3548, %v3486
          %v3550 = vadd.f32 %v3549, %v3487
          %v3551 = vadd.f32 %v3550, %v3488
          %v3552 = vadd.f32 %v3551, %v3489
          %v3553 = vadd.f32 %v3552, %v3490
          %v3554 = vadd.f32 %v3553, %v3491
          %v3555 = vadd.f32 %v3554, %v3492
          %v3556 = vadd.f32 %v3555, %v3493
          %v3557 = vadd.f32 %v3556, %v3494
          %v3558 = vadd.f32 %v3557, %v3495
          %v3559 = vadd.f32 %v3558, %v3496
          %v3560 = vadd.f32 %v3559, %v3497
          %v3561 = vadd.f32 %v3560, %v3498
          %v3562 = vadd.f32 %v3561, %v3499
          %v3563 = vadd.f32 %v3562, %v3500
          %v3564 = vadd.f32 %v3563, %v3501
          %v3565 = vadd.f32 %v3564, %v3502
          %v3566 = vadd.f32 %v3565, %v3503
          %v3567 = vadd.f32 %v3566, %v3504
          %v3568 = vadd.f32 %v3567, %v3505
          %v3569 = vadd.f32 %v3568, %v3506
          %v3570 = vadd.f32 %v3569, %v3507
          %v3571 = vadd.f32 %v3570, %v3508
          %v3572 = vadd.f32 %v3571, %v3509
          %v3573 = vadd.f32 %v3572, %v3510
          %v3574 = vadd.f32 %v3573, %v3511
          %v3575 = vadd.f32 %v3574, %v3512
          %v3576 = vadd.f32 %v3575, %v3513
          %v3577 = vadd.f32 %v3576, %v3514
          %v3578 = vadd.f32 %v3577, %v3515
          %v3579 = vadd.f32 %v3578, %v3516
          %3580 = vadd.xlane.f32.xlu0 %v3579
          %v3581 = vpop.xlane.xlu0 %3580
          %v3582 = vmul.f32 %v3452, 3.0517578e-05
          %v3583 = vmul.f32 %v3581, 3.0517578e-05
          %v3584 = vmul.f32 %v3582, %v3582
          %v3585 = vsub.f32 %v3583, %v3584
          %v3586 = vld [vmem:[%s3] sm:$0xff]
          %v3587 = vadd.f32 %v3585, 1e-05
          %v3588 = vrsqrt.pop %v3587
          %v3589 = vmul.f32 %v3588, %v3587
          %v3590 = vmul.f32 %v3589, %v3588
          %v3591 = vmul.f32 0.5, %v3590
          %v3592 = vsub.f32 1.5, %v3591
          %v3593 = vmul.f32 %v3588, %v3592
          %vm3594 = vweird.f32 %v3587
          %vm3595 = vweird.f32 %v3588
          %vm3596 = vmor %vm3594, %vm3595
          %v3597 = vsel %vm3596, %v3588, %v3593
          %v3598 = vmul.f32 %v3586, %v3597
          %v3599 = vld [vmem:[%s4] sm:$0xff]
          %v3600 = vmul.f32 %v3582, %v3598
          %v3601 = vsub.f32 %v3599, %v3600
          %v3602 = vld [vmem:[#allocation2] sm:$0xff]
          %v3603 = vld [vmem:[#allocation2 + $0x8] sm:$0xff]
          %v3604 = vld [vmem:[#allocation2 + $0x10] sm:$0xff]
          %v3605 = vld [vmem:[#allocation2 + $0x18] sm:$0xff]
          %v3606 = vld [vmem:[#allocation2 + $0x20] sm:$0xff]
          %v3607 = vld [vmem:[#allocation2 + $0x28] sm:$0xff]
          %v3608 = vld [vmem:[#allocation2 + $0x30] sm:$0xff]
          %v3609 = vld [vmem:[#allocation2 + $0x38] sm:$0xff]
          %v3610 = vld [vmem:[#allocation2 + $0x40] sm:$0xff]
          %v3611 = vld [vmem:[#allocation2 + $0x48] sm:$0xff]
          %v3612 = vld [vmem:[#allocation2 + $0x50] sm:$0xff]
          %v3613 = vld [vmem:[#allocation2 + $0x58] sm:$0xff]
          %v3614 = vld [vmem:[#allocation2 + $0x60] sm:$0xff]
          %v3615 = vld [vmem:[#allocation2 + $0x68] sm:$0xff]
          %v3616 = vld [vmem:[#allocation2 + $0x70] sm:$0xff]
          %v3617 = vld [vmem:[#allocation2 + $0x78] sm:$0xff]
          %3619 = vset.pattern.permute.xlu0 0
          %3620 = vperm.xlu0 %3619, %v3598
          %v3621 = vpop.permute.xlu0 %3620
          %v3623 = vmul.f32 %v3602, %v3621
          %v3624 = vmul.f32 %v3603, %v3621
          %v3625 = vmul.f32 %v3604, %v3621
          %v3626 = vmul.f32 %v3605, %v3621
          %v3627 = vmul.f32 %v3606, %v3621
          %v3628 = vmul.f32 %v3607, %v3621
          %v3629 = vmul.f32 %v3608, %v3621
          %v3630 = vmul.f32 %v3609, %v3621
          %v3631 = vmul.f32 %v3610, %v3621
          %v3632 = vmul.f32 %v3611, %v3621
          %v3633 = vmul.f32 %v3612, %v3621
          %v3634 = vmul.f32 %v3613, %v3621
          %v3635 = vmul.f32 %v3614, %v3621
          %v3636 = vmul.f32 %v3615, %v3621
          %v3637 = vmul.f32 %v3616, %v3621
          %v3638 = vmul.f32 %v3617, %v3621
          %3640 = vset.pattern.permute.xlu0 0
          %3641 = vperm.xlu0 %3640, %v3601
          %v3642 = vpop.permute.xlu0 %3641
          %v3644 = vadd.f32 %v3623, %v3642
          %v3645 = vadd.f32 %v3624, %v3642
          %v3646 = vadd.f32 %v3625, %v3642
          %v3647 = vadd.f32 %v3626, %v3642
          %v3648 = vadd.f32 %v3627, %v3642
          %v3649 = vadd.f32 %v3628, %v3642
          %v3650 = vadd.f32 %v3629, %v3642
          %v3651 = vadd.f32 %v3630, %v3642
          %v3652 = vadd.f32 %v3631, %v3642
          %v3653 = vadd.f32 %v3632, %v3642
          %v3654 = vadd.f32 %v3633, %v3642
          %v3655 = vadd.f32 %v3634, %v3642
          %v3656 = vadd.f32 %v3635, %v3642
          %v3657 = vadd.f32 %v3636, %v3642
          %v3658 = vadd.f32 %v3637, %v3642
          %v3659 = vadd.f32 %v3638, %v3642
          %v3660 = vmax.f32 %v3644, 0.0
          %v3661 = vmax.f32 %v3645, 0.0
          %v3662 = vmax.f32 %v3646, 0.0
          %v3663 = vmax.f32 %v3647, 0.0
          %v3664 = vmax.f32 %v3648, 0.0
          %v3665 = vmax.f32 %v3649, 0.0
          %v3666 = vmax.f32 %v3650, 0.0
          %v3667 = vmax.f32 %v3651, 0.0
          %v3668 = vmax.f32 %v3652, 0.0
          %v3669 = vmax.f32 %v3653, 0.0
          %v3670 = vmax.f32 %v3654, 0.0
          %v3671 = vmax.f32 %v3655, 0.0
          %v3672 = vmax.f32 %v3656, 0.0
          %v3673 = vmax.f32 %v3657, 0.0
          %v3674 = vmax.f32 %v3658, 0.0
          %v3675 = vmax.f32 %v3659, 0.0
          %v3676 = vld [vmem:[#allocation2 + $0x80] sm:$0xff]
          %v3677 = vld [vmem:[#allocation2 + $0x88] sm:$0xff]
          %v3678 = vld [vmem:[#allocation2 + $0x90] sm:$0xff]
          %v3679 = vld [vmem:[#allocation2 + $0x98] sm:$0xff]
          %v3680 = vld [vmem:[#allocation2 + $0xa0] sm:$0xff]
          %v3681 = vld [vmem:[#allocation2 + $0xa8] sm:$0xff]
          %v3682 = vld [vmem:[#allocation2 + $0xb0] sm:$0xff]
          %v3683 = vld [vmem:[#allocation2 + $0xb8] sm:$0xff]
          %v3684 = vld [vmem:[#allocation2 + $0xc0] sm:$0xff]
          %v3685 = vld [vmem:[#allocation2 + $0xc8] sm:$0xff]
          %v3686 = vld [vmem:[#allocation2 + $0xd0] sm:$0xff]
          %v3687 = vld [vmem:[#allocation2 + $0xd8] sm:$0xff]
          %v3688 = vld [vmem:[#allocation2 + $0xe0] sm:$0xff]
          %v3689 = vld [vmem:[#allocation2 + $0xe8] sm:$0xff]
          %v3690 = vld [vmem:[#allocation2 + $0xf0] sm:$0xff]
          %v3691 = vld [vmem:[#allocation2 + $0xf8] sm:$0xff]
          %v3692 = vmul.f32 %v3676, %v3621
          %v3693 = vmul.f32 %v3677, %v3621
          %v3694 = vmul.f32 %v3678, %v3621
          %v3695 = vmul.f32 %v3679, %v3621
          %v3696 = vmul.f32 %v3680, %v3621
          %v3697 = vmul.f32 %v3681, %v3621
          %v3698 = vmul.f32 %v3682, %v3621
          %v3699 = vmul.f32 %v3683, %v3621
          %v3700 = vmul.f32 %v3684, %v3621
          %v3701 = vmul.f32 %v3685, %v3621
          %v3702 = vmul.f32 %v3686, %v3621
          %v3703 = vmul.f32 %v3687, %v3621
          %v3704 = vmul.f32 %v3688, %v3621
          %v3705 = vmul.f32 %v3689, %v3621
          %v3706 = vmul.f32 %v3690, %v3621
          %v3707 = vmul.f32 %v3691, %v3621
          %v3708 = vadd.f32 %v3692, %v3642
          %v3709 = vadd.f32 %v3693, %v3642
          %v3710 = vadd.f32 %v3694, %v3642
          %v3711 = vadd.f32 %v3695, %v3642
          %v3712 = vadd.f32 %v3696, %v3642
          %v3713 = vadd.f32 %v3697, %v3642
          %v3714 = vadd.f32 %v3698, %v3642
          %v3715 = vadd.f32 %v3699, %v3642
          %v3716 = vadd.f32 %v3700, %v3642
          %v3717 = vadd.f32 %v3701, %v3642
          %v3718 = vadd.f32 %v3702, %v3642
          %v3719 = vadd.f32 %v3703, %v3642
          %v3720 = vadd.f32 %v3704, %v3642
          %v3721 = vadd.f32 %v3705, %v3642
          %v3722 = vadd.f32 %v3706, %v3642
          %v3723 = vadd.f32 %v3707, %v3642
          %v3724 = vmax.f32 %v3708, 0.0
          %v3725 = vmax.f32 %v3709, 0.0
          %v3726 = vmax.f32 %v3710, 0.0
          %v3727 = vmax.f32 %v3711, 0.0
          %v3728 = vmax.f32 %v3712, 0.0
          %v3729 = vmax.f32 %v3713, 0.0
          %v3730 = vmax.f32 %v3714, 0.0
          %v3731 = vmax.f32 %v3715, 0.0
          %v3732 = vmax.f32 %v3716, 0.0
          %v3733 = vmax.f32 %v3717, 0.0
          %v3734 = vmax.f32 %v3718, 0.0
          %v3735 = vmax.f32 %v3719, 0.0
          %v3736 = vmax.f32 %v3720, 0.0
          %v3737 = vmax.f32 %v3721, 0.0
          %v3738 = vmax.f32 %v3722, 0.0
          %v3739 = vmax.f32 %v3723, 0.0
          %v3740 = vmax.f32 %v3660, %v3724
          %v3741 = vmax.f32 %v3661, %v3725
          %v3742 = vmax.f32 %v3662, %v3726
          %v3743 = vmax.f32 %v3663, %v3727
          %v3744 = vmax.f32 %v3664, %v3728
          %v3745 = vmax.f32 %v3665, %v3729
          %v3746 = vmax.f32 %v3666, %v3730
          %v3747 = vmax.f32 %v3667, %v3731
          %v3748 = vmax.f32 %v3668, %v3732
          %v3749 = vmax.f32 %v3669, %v3733
          %v3750 = vmax.f32 %v3670, %v3734
          %v3751 = vmax.f32 %v3671, %v3735
          %v3752 = vmax.f32 %v3672, %v3736
          %v3753 = vmax.f32 %v3673, %v3737
          %v3754 = vmax.f32 %v3674, %v3738
          %v3755 = vmax.f32 %v3675, %v3739
          %v3756 = vld [vmem:[#allocation2 + $0x100] sm:$0xff]
          %v3757 = vld [vmem:[#allocation2 + $0x108] sm:$0xff]
          %v3758 = vld [vmem:[#allocation2 + $0x110] sm:$0xff]
          %v3759 = vld [vmem:[#allocation2 + $0x118] sm:$0xff]
          %v3760 = vld [vmem:[#allocation2 + $0x120] sm:$0xff]
          %v3761 = vld [vmem:[#allocation2 + $0x128] sm:$0xff]
          %v3762 = vld [vmem:[#allocation2 + $0x130] sm:$0xff]
          %v3763 = vld [vmem:[#allocation2 + $0x138] sm:$0xff]
          %v3764 = vld [vmem:[#allocation2 + $0x140] sm:$0xff]
          %v3765 = vld [vmem:[#allocation2 + $0x148] sm:$0xff]
          %v3766 = vld [vmem:[#allocation2 + $0x150] sm:$0xff]
          %v3767 = vld [vmem:[#allocation2 + $0x158] sm:$0xff]
          %v3768 = vld [vmem:[#allocation2 + $0x160] sm:$0xff]
          %v3769 = vld [vmem:[#allocation2 + $0x168] sm:$0xff]
          %v3770 = vld [vmem:[#allocation2 + $0x170] sm:$0xff]
          %v3771 = vld [vmem:[#allocation2 + $0x178] sm:$0xff]
          %v3772 = vmul.f32 %v3756, %v3621
          %v3773 = vmul.f32 %v3757, %v3621
          %v3774 = vmul.f32 %v3758, %v3621
          %v3775 = vmul.f32 %v3759, %v3621
          %v3776 = vmul.f32 %v3760, %v3621
          %v3777 = vmul.f32 %v3761, %v3621
          %v3778 = vmul.f32 %v3762, %v3621
          %v3779 = vmul.f32 %v3763, %v3621
          %v3780 = vmul.f32 %v3764, %v3621
          %v3781 = vmul.f32 %v3765, %v3621
          %v3782 = vmul.f32 %v3766, %v3621
          %v3783 = vmul.f32 %v3767, %v3621
          %v3784 = vmul.f32 %v3768, %v3621
          %v3785 = vmul.f32 %v3769, %v3621
          %v3786 = vmul.f32 %v3770, %v3621
          %v3787 = vmul.f32 %v3771, %v3621
          %v3788 = vadd.f32 %v3772, %v3642
          %v3789 = vadd.f32 %v3773, %v3642
          %v3790 = vadd.f32 %v3774, %v3642
          %v3791 = vadd.f32 %v3775, %v3642
          %v3792 = vadd.f32 %v3776, %v3642
          %v3793 = vadd.f32 %v3777, %v3642
          %v3794 = vadd.f32 %v3778, %v3642
          %v3795 = vadd.f32 %v3779, %v3642
          %v3796 = vadd.f32 %v3780, %v3642
          %v3797 = vadd.f32 %v3781, %v3642
          %v3798 = vadd.f32 %v3782, %v3642
          %v3799 = vadd.f32 %v3783, %v3642
          %v3800 = vadd.f32 %v3784, %v3642
          %v3801 = vadd.f32 %v3785, %v3642
          %v3802 = vadd.f32 %v3786, %v3642
          %v3803 = vadd.f32 %v3787, %v3642
          %v3804 = vmax.f32 %v3788, 0.0
          %v3805 = vmax.f32 %v3789, 0.0
          %v3806 = vmax.f32 %v3790, 0.0
          %v3807 = vmax.f32 %v3791, 0.0
          %v3808 = vmax.f32 %v3792, 0.0
          %v3809 = vmax.f32 %v3793, 0.0
          %v3810 = vmax.f32 %v3794, 0.0
          %v3811 = vmax.f32 %v3795, 0.0
          %v3812 = vmax.f32 %v3796, 0.0
          %v3813 = vmax.f32 %v3797, 0.0
          %v3814 = vmax.f32 %v3798, 0.0
          %v3815 = vmax.f32 %v3799, 0.0
          %v3816 = vmax.f32 %v3800, 0.0
          %v3817 = vmax.f32 %v3801, 0.0
          %v3818 = vmax.f32 %v3802, 0.0
          %v3819 = vmax.f32 %v3803, 0.0
          %v3820 = vmax.f32 %v3740, %v3804
          %v3821 = vmax.f32 %v3741, %v3805
          %v3822 = vmax.f32 %v3742, %v3806
          %v3823 = vmax.f32 %v3743, %v3807
          %v3824 = vmax.f32 %v3744, %v3808
          %v3825 = vmax.f32 %v3745, %v3809
          %v3826 = vmax.f32 %v3746, %v3810
          %v3827 = vmax.f32 %v3747, %v3811
          %v3828 = vmax.f32 %v3748, %v3812
          %v3829 = vmax.f32 %v3749, %v3813
          %v3830 = vmax.f32 %v3750, %v3814
          %v3831 = vmax.f32 %v3751, %v3815
          %v3832 = vmax.f32 %v3752, %v3816
          %v3833 = vmax.f32 %v3753, %v3817
          %v3834 = vmax.f32 %v3754, %v3818
          %v3835 = vmax.f32 %v3755, %v3819
          %v3836 = vld [vmem:[#allocation2 + $0x180] sm:$0xff]
          %v3837 = vld [vmem:[#allocation2 + $0x188] sm:$0xff]
          %v3838 = vld [vmem:[#allocation2 + $0x190] sm:$0xff]
          %v3839 = vld [vmem:[#allocation2 + $0x198] sm:$0xff]
          %v3840 = vld [vmem:[#allocation2 + $0x1a0] sm:$0xff]
          %v3841 = vld [vmem:[#allocation2 + $0x1a8] sm:$0xff]
          %v3842 = vld [vmem:[#allocation2 + $0x1b0] sm:$0xff]
          %v3843 = vld [vmem:[#allocation2 + $0x1b8] sm:$0xff]
          %v3844 = vld [vmem:[#allocation2 + $0x1c0] sm:$0xff]
          %v3845 = vld [vmem:[#allocation2 + $0x1c8] sm:$0xff]
          %v3846 = vld [vmem:[#allocation2 + $0x1d0] sm:$0xff]
          %v3847 = vld [vmem:[#allocation2 + $0x1d8] sm:$0xff]
          %v3848 = vld [vmem:[#allocation2 + $0x1e0] sm:$0xff]
          %v3849 = vld [vmem:[#allocation2 + $0x1e8] sm:$0xff]
          %v3850 = vld [vmem:[#allocation2 + $0x1f0] sm:$0xff]
          %v3851 = vld [vmem:[#allocation2 + $0x1f8] sm:$0xff]
          %v3852 = vmul.f32 %v3836, %v3621
          %v3853 = vmul.f32 %v3837, %v3621
          %v3854 = vmul.f32 %v3838, %v3621
          %v3855 = vmul.f32 %v3839, %v3621
          %v3856 = vmul.f32 %v3840, %v3621
          %v3857 = vmul.f32 %v3841, %v3621
          %v3858 = vmul.f32 %v3842, %v3621
          %v3859 = vmul.f32 %v3843, %v3621
          %v3860 = vmul.f32 %v3844, %v3621
          %v3861 = vmul.f32 %v3845, %v3621
          %v3862 = vmul.f32 %v3846, %v3621
          %v3863 = vmul.f32 %v3847, %v3621
          %v3864 = vmul.f32 %v3848, %v3621
          %v3865 = vmul.f32 %v3849, %v3621
          %v3866 = vmul.f32 %v3850, %v3621
          %v3867 = vmul.f32 %v3851, %v3621
          %v3868 = vadd.f32 %v3852, %v3642
          %v3869 = vadd.f32 %v3853, %v3642
          %v3870 = vadd.f32 %v3854, %v3642
          %v3871 = vadd.f32 %v3855, %v3642
          %v3872 = vadd.f32 %v3856, %v3642
          %v3873 = vadd.f32 %v3857, %v3642
          %v3874 = vadd.f32 %v3858, %v3642
          %v3875 = vadd.f32 %v3859, %v3642
          %v3876 = vadd.f32 %v3860, %v3642
          %v3877 = vadd.f32 %v3861, %v3642
          %v3878 = vadd.f32 %v3862, %v3642
          %v3879 = vadd.f32 %v3863, %v3642
          %v3880 = vadd.f32 %v3864, %v3642
          %v3881 = vadd.f32 %v3865, %v3642
          %v3882 = vadd.f32 %v3866, %v3642
          %v3883 = vadd.f32 %v3867, %v3642
          %v3884 = vmax.f32 %v3868, 0.0
          %v3885 = vmax.f32 %v3869, 0.0
          %v3886 = vmax.f32 %v3870, 0.0
          %v3887 = vmax.f32 %v3871, 0.0
          %v3888 = vmax.f32 %v3872, 0.0
          %v3889 = vmax.f32 %v3873, 0.0
          %v3890 = vmax.f32 %v3874, 0.0
          %v3891 = vmax.f32 %v3875, 0.0
          %v3892 = vmax.f32 %v3876, 0.0
          %v3893 = vmax.f32 %v3877, 0.0
          %v3894 = vmax.f32 %v3878, 0.0
          %v3895 = vmax.f32 %v3879, 0.0
          %v3896 = vmax.f32 %v3880, 0.0
          %v3897 = vmax.f32 %v3881, 0.0
          %v3898 = vmax.f32 %v3882, 0.0
          %v3899 = vmax.f32 %v3883, 0.0
          %v3900 = vmax.f32 %v3820, %v3884
          %v3901 = vmax.f32 %v3821, %v3885
          %v3902 = vmax.f32 %v3822, %v3886
          %v3903 = vmax.f32 %v3823, %v3887
          %v3904 = vmax.f32 %v3824, %v3888
          %v3905 = vmax.f32 %v3825, %v3889
          %v3906 = vmax.f32 %v3826, %v3890
          %v3907 = vmax.f32 %v3827, %v3891
          %v3908 = vmax.f32 %v3828, %v3892
          %v3909 = vmax.f32 %v3829, %v3893
          %v3910 = vmax.f32 %v3830, %v3894
          %v3911 = vmax.f32 %v3831, %v3895
          %v3912 = vmax.f32 %v3832, %v3896
          %v3913 = vmax.f32 %v3833, %v3897
          %v3914 = vmax.f32 %v3834, %v3898
          %v3915 = vmax.f32 %v3835, %v3899
          %3916 = vst [vmem:[%s5] sm:$0xff] %v3900
          %3917 = vst [vmem:[%s5 + $0x8] sm:$0xff] %v3901
          %3918 = vst [vmem:[%s5 + $0x10] sm:$0xff] %v3902
          %3919 = vst [vmem:[%s5 + $0x18] sm:$0xff] %v3903
          %3920 = vst [vmem:[%s5 + $0x20] sm:$0xff] %v3904
          %3921 = vst [vmem:[%s5 + $0x28] sm:$0xff] %v3905
          %3922 = vst [vmem:[%s5 + $0x30] sm:$0xff] %v3906
          %3923 = vst [vmem:[%s5 + $0x38] sm:$0xff] %v3907
          %3924 = vst [vmem:[%s5 + $0x40] sm:$0xff] %v3908
          %3925 = vst [vmem:[%s5 + $0x48] sm:$0xff] %v3909
          %3926 = vst [vmem:[%s5 + $0x50] sm:$0xff] %v3910
          %3927 = vst [vmem:[%s5 + $0x58] sm:$0xff] %v3911
          %3928 = vst [vmem:[%s5 + $0x60] sm:$0xff] %v3912
          %3929 = vst [vmem:[%s5 + $0x68] sm:$0xff] %v3913
          %3930 = vst [vmem:[%s5 + $0x70] sm:$0xff] %v3914
          %3931 = vst [vmem:[%s5 + $0x78] sm:$0xff] %v3915
          %s3932 = scalar_lea.vmem [#allocation2], 512
          %v3933 = vld [vmem:[%s3932] sm:$0xff]
          %v3934 = vld [vmem:[%s3932 + $0x8] sm:$0xff]
          %v3935 = vld [vmem:[%s3932 + $0x10] sm:$0xff]
          %v3936 = vld [vmem:[%s3932 + $0x18] sm:$0xff]
          %v3937 = vld [vmem:[%s3932 + $0x20] sm:$0xff]
          %v3938 = vld [vmem:[%s3932 + $0x28] sm:$0xff]
          %v3939 = vld [vmem:[%s3932 + $0x30] sm:$0xff]
          %v3940 = vld [vmem:[%s3932 + $0x38] sm:$0xff]
          %v3941 = vld [vmem:[%s3932 + $0x40] sm:$0xff]
          %v3942 = vld [vmem:[%s3932 + $0x48] sm:$0xff]
          %v3943 = vld [vmem:[%s3932 + $0x50] sm:$0xff]
          %v3944 = vld [vmem:[%s3932 + $0x58] sm:$0xff]
          %v3945 = vld [vmem:[%s3932 + $0x60] sm:$0xff]
          %v3946 = vld [vmem:[%s3932 + $0x68] sm:$0xff]
          %v3947 = vld [vmem:[%s3932 + $0x70] sm:$0xff]
          %v3948 = vld [vmem:[%s3932 + $0x78] sm:$0xff]
          %v3949 = vmul.f32 %v3933, %v3621
          %v3950 = vmul.f32 %v3934, %v3621
          %v3951 = vmul.f32 %v3935, %v3621
          %v3952 = vmul.f32 %v3936, %v3621
          %v3953 = vmul.f32 %v3937, %v3621
          %v3954 = vmul.f32 %v3938, %v3621
          %v3955 = vmul.f32 %v3939, %v3621
          %v3956 = vmul.f32 %v3940, %v3621
          %v3957 = vmul.f32 %v3941, %v3621
          %v3958 = vmul.f32 %v3942, %v3621
          %v3959 = vmul.f32 %v3943, %v3621
          %v3960 = vmul.f32 %v3944, %v3621
          %v3961 = vmul.f32 %v3945, %v3621
          %v3962 = vmul.f32 %v3946, %v3621
          %v3963 = vmul.f32 %v3947, %v3621
          %v3964 = vmul.f32 %v3948, %v3621
          %v3965 = vadd.f32 %v3949, %v3642
          %v3966 = vadd.f32 %v3950, %v3642
          %v3967 = vadd.f32 %v3951, %v3642
          %v3968 = vadd.f32 %v3952, %v3642
          %v3969 = vadd.f32 %v3953, %v3642
          %v3970 = vadd.f32 %v3954, %v3642
          %v3971 = vadd.f32 %v3955, %v3642
          %v3972 = vadd.f32 %v3956, %v3642
          %v3973 = vadd.f32 %v3957, %v3642
          %v3974 = vadd.f32 %v3958, %v3642
          %v3975 = vadd.f32 %v3959, %v3642
          %v3976 = vadd.f32 %v3960, %v3642
          %v3977 = vadd.f32 %v3961, %v3642
          %v3978 = vadd.f32 %v3962, %v3642
          %v3979 = vadd.f32 %v3963, %v3642
          %v3980 = vadd.f32 %v3964, %v3642
          %v3981 = vmax.f32 %v3965, 0.0
          %v3982 = vmax.f32 %v3966, 0.0
          %v3983 = vmax.f32 %v3967, 0.0
          %v3984 = vmax.f32 %v3968, 0.0
          %v3985 = vmax.f32 %v3969, 0.0
          %v3986 = vmax.f32 %v3970, 0.0
          %v3987 = vmax.f32 %v3971, 0.0
          %v3988 = vmax.f32 %v3972, 0.0
          %v3989 = vmax.f32 %v3973, 0.0
          %v3990 = vmax.f32 %v3974, 0.0
          %v3991 = vmax.f32 %v3975, 0.0
          %v3992 = vmax.f32 %v3976, 0.0
          %v3993 = vmax.f32 %v3977, 0.0
          %v3994 = vmax.f32 %v3978, 0.0
          %v3995 = vmax.f32 %v3979, 0.0
          %v3996 = vmax.f32 %v3980, 0.0
          %v3997 = vld [vmem:[%s3932 + $0x80] sm:$0xff]
          %v3998 = vld [vmem:[%s3932 + $0x88] sm:$0xff]
          %v3999 = vld [vmem:[%s3932 + $0x90] sm:$0xff]
          %v4000 = vld [vmem:[%s3932 + $0x98] sm:$0xff]
          %v4001 = vld [vmem:[%s3932 + $0xa0] sm:$0xff]
          %v4002 = vld [vmem:[%s3932 + $0xa8] sm:$0xff]
          %v4003 = vld [vmem:[%s3932 + $0xb0] sm:$0xff]
          %v4004 = vld [vmem:[%s3932 + $0xb8] sm:$0xff]
          %v4005 = vld [vmem:[%s3932 + $0xc0] sm:$0xff]
          %v4006 = vld [vmem:[%s3932 + $0xc8] sm:$0xff]
          %v4007 = vld [vmem:[%s3932 + $0xd0] sm:$0xff]
          %v4008 = vld [vmem:[%s3932 + $0xd8] sm:$0xff]
          %v4009 = vld [vmem:[%s3932 + $0xe0] sm:$0xff]
          %v4010 = vld [vmem:[%s3932 + $0xe8] sm:$0xff]
          %v4011 = vld [vmem:[%s3932 + $0xf0] sm:$0xff]
          %v4012 = vld [vmem:[%s3932 + $0xf8] sm:$0xff]
          %v4013 = vmul.f32 %v3997, %v3621
          %v4014 = vmul.f32 %v3998, %v3621
          %v4015 = vmul.f32 %v3999, %v3621
          %v4016 = vmul.f32 %v4000, %v3621
          %v4017 = vmul.f32 %v4001, %v3621
          %v4018 = vmul.f32 %v4002, %v3621
          %v4019 = vmul.f32 %v4003, %v3621
          %v4020 = vmul.f32 %v4004, %v3621
          %v4021 = vmul.f32 %v4005, %v3621
          %v4022 = vmul.f32 %v4006, %v3621
          %v4023 = vmul.f32 %v4007, %v3621
          %v4024 = vmul.f32 %v4008, %v3621
          %v4025 = vmul.f32 %v4009, %v3621
          %v4026 = vmul.f32 %v4010, %v3621
          %v4027 = vmul.f32 %v4011, %v3621
          %v4028 = vmul.f32 %v4012, %v3621
          %v4029 = vadd.f32 %v4013, %v3642
          %v4030 = vadd.f32 %v4014, %v3642
          %v4031 = vadd.f32 %v4015, %v3642
          %v4032 = vadd.f32 %v4016, %v3642
          %v4033 = vadd.f32 %v4017, %v3642
          %v4034 = vadd.f32 %v4018, %v3642
          %v4035 = vadd.f32 %v4019, %v3642
          %v4036 = vadd.f32 %v4020, %v3642
          %v4037 = vadd.f32 %v4021, %v3642
          %v4038 = vadd.f32 %v4022, %v3642
          %v4039 = vadd.f32 %v4023, %v3642
          %v4040 = vadd.f32 %v4024, %v3642
          %v4041 = vadd.f32 %v4025, %v3642
          %v4042 = vadd.f32 %v4026, %v3642
          %v4043 = vadd.f32 %v4027, %v3642
          %v4044 = vadd.f32 %v4028, %v3642
          %v4045 = vmax.f32 %v4029, 0.0
          %v4046 = vmax.f32 %v4030, 0.0
          %v4047 = vmax.f32 %v4031, 0.0
          %v4048 = vmax.f32 %v4032, 0.0
          %v4049 = vmax.f32 %v4033, 0.0
          %v4050 = vmax.f32 %v4034, 0.0
          %v4051 = vmax.f32 %v4035, 0.0
          %v4052 = vmax.f32 %v4036, 0.0
          %v4053 = vmax.f32 %v4037, 0.0
          %v4054 = vmax.f32 %v4038, 0.0
          %v4055 = vmax.f32 %v4039, 0.0
          %v4056 = vmax.f32 %v4040, 0.0
          %v4057 = vmax.f32 %v4041, 0.0
          %v4058 = vmax.f32 %v4042, 0.0
          %v4059 = vmax.f32 %v4043, 0.0
          %v4060 = vmax.f32 %v4044, 0.0
          %v4061 = vmax.f32 %v3981, %v4045
          %v4062 = vmax.f32 %v3982, %v4046
          %v4063 = vmax.f32 %v3983, %v4047
          %v4064 = vmax.f32 %v3984, %v4048
          %v4065 = vmax.f32 %v3985, %v4049
          %v4066 = vmax.f32 %v3986, %v4050
          %v4067 = vmax.f32 %v3987, %v4051
          %v4068 = vmax.f32 %v3988, %v4052
          %v4069 = vmax.f32 %v3989, %v4053
          %v4070 = vmax.f32 %v3990, %v4054
          %v4071 = vmax.f32 %v3991, %v4055
          %v4072 = vmax.f32 %v3992, %v4056
          %v4073 = vmax.f32 %v3993, %v4057
          %v4074 = vmax.f32 %v3994, %v4058
          %v4075 = vmax.f32 %v3995, %v4059
          %v4076 = vmax.f32 %v3996, %v4060
          %v4077 = vld [vmem:[%s3932 + $0x100] sm:$0xff]
          %v4078 = vld [vmem:[%s3932 + $0x108] sm:$0xff]
          %v4079 = vld [vmem:[%s3932 + $0x110] sm:$0xff]
          %v4080 = vld [vmem:[%s3932 + $0x118] sm:$0xff]
          %v4081 = vld [vmem:[%s3932 + $0x120] sm:$0xff]
          %v4082 = vld [vmem:[%s3932 + $0x128] sm:$0xff]
          %v4083 = vld [vmem:[%s3932 + $0x130] sm:$0xff]
          %v4084 = vld [vmem:[%s3932 + $0x138] sm:$0xff]
          %v4085 = vld [vmem:[%s3932 + $0x140] sm:$0xff]
          %v4086 = vld [vmem:[%s3932 + $0x148] sm:$0xff]
          %v4087 = vld [vmem:[%s3932 + $0x150] sm:$0xff]
          %v4088 = vld [vmem:[%s3932 + $0x158] sm:$0xff]
          %v4089 = vld [vmem:[%s3932 + $0x160] sm:$0xff]
          %v4090 = vld [vmem:[%s3932 + $0x168] sm:$0xff]
          %v4091 = vld [vmem:[%s3932 + $0x170] sm:$0xff]
          %v4092 = vld [vmem:[%s3932 + $0x178] sm:$0xff]
          %v4093 = vmul.f32 %v4077, %v3621
          %v4094 = vmul.f32 %v4078, %v3621
          %v4095 = vmul.f32 %v4079, %v3621
          %v4096 = vmul.f32 %v4080, %v3621
          %v4097 = vmul.f32 %v4081, %v3621
          %v4098 = vmul.f32 %v4082, %v3621
          %v4099 = vmul.f32 %v4083, %v3621
          %v4100 = vmul.f32 %v4084, %v3621
          %v4101 = vmul.f32 %v4085, %v3621
          %v4102 = vmul.f32 %v4086, %v3621
          %v4103 = vmul.f32 %v4087, %v3621
          %v4104 = vmul.f32 %v4088, %v3621
          %v4105 = vmul.f32 %v4089, %v3621
          %v4106 = vmul.f32 %v4090, %v3621
          %v4107 = vmul.f32 %v4091, %v3621
          %v4108 = vmul.f32 %v4092, %v3621
          %v4109 = vadd.f32 %v4093, %v3642
          %v4110 = vadd.f32 %v4094, %v3642
          %v4111 = vadd.f32 %v4095, %v3642
          %v4112 = vadd.f32 %v4096, %v3642
          %v4113 = vadd.f32 %v4097, %v3642
          %v4114 = vadd.f32 %v4098, %v3642
          %v4115 = vadd.f32 %v4099, %v3642
          %v4116 = vadd.f32 %v4100, %v3642
          %v4117 = vadd.f32 %v4101, %v3642
          %v4118 = vadd.f32 %v4102, %v3642
          %v4119 = vadd.f32 %v4103, %v3642
          %v4120 = vadd.f32 %v4104, %v3642
          %v4121 = vadd.f32 %v4105, %v3642
          %v4122 = vadd.f32 %v4106, %v3642
          %v4123 = vadd.f32 %v4107, %v3642
          %v4124 = vadd.f32 %v4108, %v3642
          %v4125 = vmax.f32 %v4109, 0.0
          %v4126 = vmax.f32 %v4110, 0.0
          %v4127 = vmax.f32 %v4111, 0.0
          %v4128 = vmax.f32 %v4112, 0.0
          %v4129 = vmax.f32 %v4113, 0.0
          %v4130 = vmax.f32 %v4114, 0.0
          %v4131 = vmax.f32 %v4115, 0.0
          %v4132 = vmax.f32 %v4116, 0.0
          %v4133 = vmax.f32 %v4117, 0.0
          %v4134 = vmax.f32 %v4118, 0.0
          %v4135 = vmax.f32 %v4119, 0.0
          %v4136 = vmax.f32 %v4120, 0.0
          %v4137 = vmax.f32 %v4121, 0.0
          %v4138 = vmax.f32 %v4122, 0.0
          %v4139 = vmax.f32 %v4123, 0.0
          %v4140 = vmax.f32 %v4124, 0.0
          %v4141 = vmax.f32 %v4061, %v4125
          %v4142 = vmax.f32 %v4062, %v4126
          %v4143 = vmax.f32 %v4063, %v4127
          %v4144 = vmax.f32 %v4064, %v4128
          %v4145 = vmax.f32 %v4065, %v4129
          %v4146 = vmax.f32 %v4066, %v4130
          %v4147 = vmax.f32 %v4067, %v4131
          %v4148 = vmax.f32 %v4068, %v4132
          %v4149 = vmax.f32 %v4069, %v4133
          %v4150 = vmax.f32 %v4070, %v4134
          %v4151 = vmax.f32 %v4071, %v4135
          %v4152 = vmax.f32 %v4072, %v4136
          %v4153 = vmax.f32 %v4073, %v4137
          %v4154 = vmax.f32 %v4074, %v4138
          %v4155 = vmax.f32 %v4075, %v4139
          %v4156 = vmax.f32 %v4076, %v4140
          %v4157 = vld [vmem:[%s3932 + $0x180] sm:$0xff]
          %v4158 = vld [vmem:[%s3932 + $0x188] sm:$0xff]
          %v4159 = vld [vmem:[%s3932 + $0x190] sm:$0xff]
          %v4160 = vld [vmem:[%s3932 + $0x198] sm:$0xff]
          %v4161 = vld [vmem:[%s3932 + $0x1a0] sm:$0xff]
          %v4162 = vld [vmem:[%s3932 + $0x1a8] sm:$0xff]
          %v4163 = vld [vmem:[%s3932 + $0x1b0] sm:$0xff]
          %v4164 = vld [vmem:[%s3932 + $0x1b8] sm:$0xff]
          %v4165 = vld [vmem:[%s3932 + $0x1c0] sm:$0xff]
          %v4166 = vld [vmem:[%s3932 + $0x1c8] sm:$0xff]
          %v4167 = vld [vmem:[%s3932 + $0x1d0] sm:$0xff]
          %v4168 = vld [vmem:[%s3932 + $0x1d8] sm:$0xff]
          %v4169 = vld [vmem:[%s3932 + $0x1e0] sm:$0xff]
          %v4170 = vld [vmem:[%s3932 + $0x1e8] sm:$0xff]
          %v4171 = vld [vmem:[%s3932 + $0x1f0] sm:$0xff]
          %v4172 = vld [vmem:[%s3932 + $0x1f8] sm:$0xff]
          %v4173 = vmul.f32 %v4157, %v3621
          %v4174 = vmul.f32 %v4158, %v3621
          %v4175 = vmul.f32 %v4159, %v3621
          %v4176 = vmul.f32 %v4160, %v3621
          %v4177 = vmul.f32 %v4161, %v3621
          %v4178 = vmul.f32 %v4162, %v3621
          %v4179 = vmul.f32 %v4163, %v3621
          %v4180 = vmul.f32 %v4164, %v3621
          %v4181 = vmul.f32 %v4165, %v3621
          %v4182 = vmul.f32 %v4166, %v3621
          %v4183 = vmul.f32 %v4167, %v3621
          %v4184 = vmul.f32 %v4168, %v3621
          %v4185 = vmul.f32 %v4169, %v3621
          %v4186 = vmul.f32 %v4170, %v3621
          %v4187 = vmul.f32 %v4171, %v3621
          %v4188 = vmul.f32 %v4172, %v3621
          %v4189 = vadd.f32 %v4173, %v3642
          %v4190 = vadd.f32 %v4174, %v3642
          %v4191 = vadd.f32 %v4175, %v3642
          %v4192 = vadd.f32 %v4176, %v3642
          %v4193 = vadd.f32 %v4177, %v3642
          %v4194 = vadd.f32 %v4178, %v3642
          %v4195 = vadd.f32 %v4179, %v3642
          %v4196 = vadd.f32 %v4180, %v3642
          %v4197 = vadd.f32 %v4181, %v3642
          %v4198 = vadd.f32 %v4182, %v3642
          %v4199 = vadd.f32 %v4183, %v3642
          %v4200 = vadd.f32 %v4184, %v3642
          %v4201 = vadd.f32 %v4185, %v3642
          %v4202 = vadd.f32 %v4186, %v3642
          %v4203 = vadd.f32 %v4187, %v3642
          %v4204 = vadd.f32 %v4188, %v3642
          %v4205 = vmax.f32 %v4189, 0.0
          %v4206 = vmax.f32 %v4190, 0.0
          %v4207 = vmax.f32 %v4191, 0.0
          %v4208 = vmax.f32 %v4192, 0.0
          %v4209 = vmax.f32 %v4193, 0.0
          %v4210 = vmax.f32 %v4194, 0.0
          %v4211 = vmax.f32 %v4195, 0.0
          %v4212 = vmax.f32 %v4196, 0.0
          %v4213 = vmax.f32 %v4197, 0.0
          %v4214 = vmax.f32 %v4198, 0.0
          %v4215 = vmax.f32 %v4199, 0.0
          %v4216 = vmax.f32 %v4200, 0.0
          %v4217 = vmax.f32 %v4201, 0.0
          %v4218 = vmax.f32 %v4202, 0.0
          %v4219 = vmax.f32 %v4203, 0.0
          %v4220 = vmax.f32 %v4204, 0.0
          %v4221 = vmax.f32 %v4141, %v4205
          %v4222 = vmax.f32 %v4142, %v4206
          %v4223 = vmax.f32 %v4143, %v4207
          %v4224 = vmax.f32 %v4144, %v4208
          %v4225 = vmax.f32 %v4145, %v4209
          %v4226 = vmax.f32 %v4146, %v4210
          %v4227 = vmax.f32 %v4147, %v4211
          %v4228 = vmax.f32 %v4148, %v4212
          %v4229 = vmax.f32 %v4149, %v4213
          %v4230 = vmax.f32 %v4150, %v4214
          %v4231 = vmax.f32 %v4151, %v4215
          %v4232 = vmax.f32 %v4152, %v4216
          %v4233 = vmax.f32 %v4153, %v4217
          %v4234 = vmax.f32 %v4154, %v4218
          %v4235 = vmax.f32 %v4155, %v4219
          %v4236 = vmax.f32 %v4156, %v4220
          %4237 = vst [vmem:[%s5 + $0x80] sm:$0xff] %v4221
          %4238 = vst [vmem:[%s5 + $0x88] sm:$0xff] %v4222
          %4239 = vst [vmem:[%s5 + $0x90] sm:$0xff] %v4223
          %4240 = vst [vmem:[%s5 + $0x98] sm:$0xff] %v4224
          %4241 = vst [vmem:[%s5 + $0xa0] sm:$0xff] %v4225
          %4242 = vst [vmem:[%s5 + $0xa8] sm:$0xff] %v4226
          %4243 = vst [vmem:[%s5 + $0xb0] sm:$0xff] %v4227
          %4244 = vst [vmem:[%s5 + $0xb8] sm:$0xff] %v4228
          %4245 = vst [vmem:[%s5 + $0xc0] sm:$0xff] %v4229
          %4246 = vst [vmem:[%s5 + $0xc8] sm:$0xff] %v4230
          %4247 = vst [vmem:[%s5 + $0xd0] sm:$0xff] %v4231
          %4248 = vst [vmem:[%s5 + $0xd8] sm:$0xff] %v4232
          %4249 = vst [vmem:[%s5 + $0xe0] sm:$0xff] %v4233
          %4250 = vst [vmem:[%s5 + $0xe8] sm:$0xff] %v4234
          %4251 = vst [vmem:[%s5 + $0xf0] sm:$0xff] %v4235
          %4252 = vst [vmem:[%s5 + $0xf8] sm:$0xff] %v4236
          %s4253 = scalar_lea.vmem [#allocation2], 1024
          %v4254 = vld [vmem:[%s4253] sm:$0xff]
          %v4255 = vld [vmem:[%s4253 + $0x8] sm:$0xff]
          %v4256 = vld [vmem:[%s4253 + $0x10] sm:$0xff]
          %v4257 = vld [vmem:[%s4253 + $0x18] sm:$0xff]
          %v4258 = vld [vmem:[%s4253 + $0x20] sm:$0xff]
          %v4259 = vld [vmem:[%s4253 + $0x28] sm:$0xff]
          %v4260 = vld [vmem:[%s4253 + $0x30] sm:$0xff]
          %v4261 = vld [vmem:[%s4253 + $0x38] sm:$0xff]
          %v4262 = vld [vmem:[%s4253 + $0x40] sm:$0xff]
          %v4263 = vld [vmem:[%s4253 + $0x48] sm:$0xff]
          %v4264 = vld [vmem:[%s4253 + $0x50] sm:$0xff]
          %v4265 = vld [vmem:[%s4253 + $0x58] sm:$0xff]
          %v4266 = vld [vmem:[%s4253 + $0x60] sm:$0xff]
          %v4267 = vld [vmem:[%s4253 + $0x68] sm:$0xff]
          %v4268 = vld [vmem:[%s4253 + $0x70] sm:$0xff]
          %v4269 = vld [vmem:[%s4253 + $0x78] sm:$0xff]
          %v4270 = vmul.f32 %v4254, %v3621
          %v4271 = vmul.f32 %v4255, %v3621
          %v4272 = vmul.f32 %v4256, %v3621
          %v4273 = vmul.f32 %v4257, %v3621
          %v4274 = vmul.f32 %v4258, %v3621
          %v4275 = vmul.f32 %v4259, %v3621
          %v4276 = vmul.f32 %v4260, %v3621
          %v4277 = vmul.f32 %v4261, %v3621
          %v4278 = vmul.f32 %v4262, %v3621
          %v4279 = vmul.f32 %v4263, %v3621
          %v4280 = vmul.f32 %v4264, %v3621
          %v4281 = vmul.f32 %v4265, %v3621
          %v4282 = vmul.f32 %v4266, %v3621
          %v4283 = vmul.f32 %v4267, %v3621
          %v4284 = vmul.f32 %v4268, %v3621
          %v4285 = vmul.f32 %v4269, %v3621
          %v4286 = vadd.f32 %v4270, %v3642
          %v4287 = vadd.f32 %v4271, %v3642
          %v4288 = vadd.f32 %v4272, %v3642
          %v4289 = vadd.f32 %v4273, %v3642
          %v4290 = vadd.f32 %v4274, %v3642
          %v4291 = vadd.f32 %v4275, %v3642
          %v4292 = vadd.f32 %v4276, %v3642
          %v4293 = vadd.f32 %v4277, %v3642
          %v4294 = vadd.f32 %v4278, %v3642
          %v4295 = vadd.f32 %v4279, %v3642
          %v4296 = vadd.f32 %v4280, %v3642
          %v4297 = vadd.f32 %v4281, %v3642
          %v4298 = vadd.f32 %v4282, %v3642
          %v4299 = vadd.f32 %v4283, %v3642
          %v4300 = vadd.f32 %v4284, %v3642
          %v4301 = vadd.f32 %v4285, %v3642
          %v4302 = vmax.f32 %v4286, 0.0
          %v4303 = vmax.f32 %v4287, 0.0
          %v4304 = vmax.f32 %v4288, 0.0
          %v4305 = vmax.f32 %v4289, 0.0
          %v4306 = vmax.f32 %v4290, 0.0
          %v4307 = vmax.f32 %v4291, 0.0
          %v4308 = vmax.f32 %v4292, 0.0
          %v4309 = vmax.f32 %v4293, 0.0
          %v4310 = vmax.f32 %v4294, 0.0
          %v4311 = vmax.f32 %v4295, 0.0
          %v4312 = vmax.f32 %v4296, 0.0
          %v4313 = vmax.f32 %v4297, 0.0
          %v4314 = vmax.f32 %v4298, 0.0
          %v4315 = vmax.f32 %v4299, 0.0
          %v4316 = vmax.f32 %v4300, 0.0
          %v4317 = vmax.f32 %v4301, 0.0
          %v4318 = vld [vmem:[%s4253 + $0x80] sm:$0xff]
          %v4319 = vld [vmem:[%s4253 + $0x88] sm:$0xff]
          %v4320 = vld [vmem:[%s4253 + $0x90] sm:$0xff]
          %v4321 = vld [vmem:[%s4253 + $0x98] sm:$0xff]
          %v4322 = vld [vmem:[%s4253 + $0xa0] sm:$0xff]
          %v4323 = vld [vmem:[%s4253 + $0xa8] sm:$0xff]
          %v4324 = vld [vmem:[%s4253 + $0xb0] sm:$0xff]
          %v4325 = vld [vmem:[%s4253 + $0xb8] sm:$0xff]
          %v4326 = vld [vmem:[%s4253 + $0xc0] sm:$0xff]
          %v4327 = vld [vmem:[%s4253 + $0xc8] sm:$0xff]
          %v4328 = vld [vmem:[%s4253 + $0xd0] sm:$0xff]
          %v4329 = vld [vmem:[%s4253 + $0xd8] sm:$0xff]
          %v4330 = vld [vmem:[%s4253 + $0xe0] sm:$0xff]
          %v4331 = vld [vmem:[%s4253 + $0xe8] sm:$0xff]
          %v4332 = vld [vmem:[%s4253 + $0xf0] sm:$0xff]
          %v4333 = vld [vmem:[%s4253 + $0xf8] sm:$0xff]
          %v4334 = vmul.f32 %v4318, %v3621
          %v4335 = vmul.f32 %v4319, %v3621
          %v4336 = vmul.f32 %v4320, %v3621
          %v4337 = vmul.f32 %v4321, %v3621
          %v4338 = vmul.f32 %v4322, %v3621
          %v4339 = vmul.f32 %v4323, %v3621
          %v4340 = vmul.f32 %v4324, %v3621
          %v4341 = vmul.f32 %v4325, %v3621
          %v4342 = vmul.f32 %v4326, %v3621
          %v4343 = vmul.f32 %v4327, %v3621
          %v4344 = vmul.f32 %v4328, %v3621
          %v4345 = vmul.f32 %v4329, %v3621
          %v4346 = vmul.f32 %v4330, %v3621
          %v4347 = vmul.f32 %v4331, %v3621
          %v4348 = vmul.f32 %v4332, %v3621
          %v4349 = vmul.f32 %v4333, %v3621
          %v4350 = vadd.f32 %v4334, %v3642
          %v4351 = vadd.f32 %v4335, %v3642
          %v4352 = vadd.f32 %v4336, %v3642
          %v4353 = vadd.f32 %v4337, %v3642
          %v4354 = vadd.f32 %v4338, %v3642
          %v4355 = vadd.f32 %v4339, %v3642
          %v4356 = vadd.f32 %v4340, %v3642
          %v4357 = vadd.f32 %v4341, %v3642
          %v4358 = vadd.f32 %v4342, %v3642
          %v4359 = vadd.f32 %v4343, %v3642
          %v4360 = vadd.f32 %v4344, %v3642
          %v4361 = vadd.f32 %v4345, %v3642
          %v4362 = vadd.f32 %v4346, %v3642
          %v4363 = vadd.f32 %v4347, %v3642
          %v4364 = vadd.f32 %v4348, %v3642
          %v4365 = vadd.f32 %v4349, %v3642
          %v4366 = vmax.f32 %v4350, 0.0
          %v4367 = vmax.f32 %v4351, 0.0
          %v4368 = vmax.f32 %v4352, 0.0
          %v4369 = vmax.f32 %v4353, 0.0
          %v4370 = vmax.f32 %v4354, 0.0
          %v4371 = vmax.f32 %v4355, 0.0
          %v4372 = vmax.f32 %v4356, 0.0
          %v4373 = vmax.f32 %v4357, 0.0
          %v4374 = vmax.f32 %v4358, 0.0
          %v4375 = vmax.f32 %v4359, 0.0
          %v4376 = vmax.f32 %v4360, 0.0
          %v4377 = vmax.f32 %v4361, 0.0
          %v4378 = vmax.f32 %v4362, 0.0
          %v4379 = vmax.f32 %v4363, 0.0
          %v4380 = vmax.f32 %v4364, 0.0
          %v4381 = vmax.f32 %v4365, 0.0
          %v4382 = vmax.f32 %v4302, %v4366
          %v4383 = vmax.f32 %v4303, %v4367
          %v4384 = vmax.f32 %v4304, %v4368
          %v4385 = vmax.f32 %v4305, %v4369
          %v4386 = vmax.f32 %v4306, %v4370
          %v4387 = vmax.f32 %v4307, %v4371
          %v4388 = vmax.f32 %v4308, %v4372
          %v4389 = vmax.f32 %v4309, %v4373
          %v4390 = vmax.f32 %v4310, %v4374
          %v4391 = vmax.f32 %v4311, %v4375
          %v4392 = vmax.f32 %v4312, %v4376
          %v4393 = vmax.f32 %v4313, %v4377
          %v4394 = vmax.f32 %v4314, %v4378
          %v4395 = vmax.f32 %v4315, %v4379
          %v4396 = vmax.f32 %v4316, %v4380
          %v4397 = vmax.f32 %v4317, %v4381
          %v4398 = vld [vmem:[%s4253 + $0x100] sm:$0xff]
          %v4399 = vld [vmem:[%s4253 + $0x108] sm:$0xff]
          %v4400 = vld [vmem:[%s4253 + $0x110] sm:$0xff]
          %v4401 = vld [vmem:[%s4253 + $0x118] sm:$0xff]
          %v4402 = vld [vmem:[%s4253 + $0x120] sm:$0xff]
          %v4403 = vld [vmem:[%s4253 + $0x128] sm:$0xff]
          %v4404 = vld [vmem:[%s4253 + $0x130] sm:$0xff]
          %v4405 = vld [vmem:[%s4253 + $0x138] sm:$0xff]
          %v4406 = vld [vmem:[%s4253 + $0x140] sm:$0xff]
          %v4407 = vld [vmem:[%s4253 + $0x148] sm:$0xff]
          %v4408 = vld [vmem:[%s4253 + $0x150] sm:$0xff]
          %v4409 = vld [vmem:[%s4253 + $0x158] sm:$0xff]
          %v4410 = vld [vmem:[%s4253 + $0x160] sm:$0xff]
          %v4411 = vld [vmem:[%s4253 + $0x168] sm:$0xff]
          %v4412 = vld [vmem:[%s4253 + $0x170] sm:$0xff]
          %v4413 = vld [vmem:[%s4253 + $0x178] sm:$0xff]
          %v4414 = vmul.f32 %v4398, %v3621
          %v4415 = vmul.f32 %v4399, %v3621
          %v4416 = vmul.f32 %v4400, %v3621
          %v4417 = vmul.f32 %v4401, %v3621
          %v4418 = vmul.f32 %v4402, %v3621
          %v4419 = vmul.f32 %v4403, %v3621
          %v4420 = vmul.f32 %v4404, %v3621
          %v4421 = vmul.f32 %v4405, %v3621
          %v4422 = vmul.f32 %v4406, %v3621
          %v4423 = vmul.f32 %v4407, %v3621
          %v4424 = vmul.f32 %v4408, %v3621
          %v4425 = vmul.f32 %v4409, %v3621
          %v4426 = vmul.f32 %v4410, %v3621
          %v4427 = vmul.f32 %v4411, %v3621
          %v4428 = vmul.f32 %v4412, %v3621
          %v4429 = vmul.f32 %v4413, %v3621
          %v4430 = vadd.f32 %v4414, %v3642
          %v4431 = vadd.f32 %v4415, %v3642
          %v4432 = vadd.f32 %v4416, %v3642
          %v4433 = vadd.f32 %v4417, %v3642
          %v4434 = vadd.f32 %v4418, %v3642
          %v4435 = vadd.f32 %v4419, %v3642
          %v4436 = vadd.f32 %v4420, %v3642
          %v4437 = vadd.f32 %v4421, %v3642
          %v4438 = vadd.f32 %v4422, %v3642
          %v4439 = vadd.f32 %v4423, %v3642
          %v4440 = vadd.f32 %v4424, %v3642
          %v4441 = vadd.f32 %v4425, %v3642
          %v4442 = vadd.f32 %v4426, %v3642
          %v4443 = vadd.f32 %v4427, %v3642
          %v4444 = vadd.f32 %v4428, %v3642
          %v4445 = vadd.f32 %v4429, %v3642
          %v4446 = vmax.f32 %v4430, 0.0
          %v4447 = vmax.f32 %v4431, 0.0
          %v4448 = vmax.f32 %v4432, 0.0
          %v4449 = vmax.f32 %v4433, 0.0
          %v4450 = vmax.f32 %v4434, 0.0
          %v4451 = vmax.f32 %v4435, 0.0
          %v4452 = vmax.f32 %v4436, 0.0
          %v4453 = vmax.f32 %v4437, 0.0
          %v4454 = vmax.f32 %v4438, 0.0
          %v4455 = vmax.f32 %v4439, 0.0
          %v4456 = vmax.f32 %v4440, 0.0
          %v4457 = vmax.f32 %v4441, 0.0
          %v4458 = vmax.f32 %v4442, 0.0
          %v4459 = vmax.f32 %v4443, 0.0
          %v4460 = vmax.f32 %v4444, 0.0
          %v4461 = vmax.f32 %v4445, 0.0
          %v4462 = vmax.f32 %v4382, %v4446
          %v4463 = vmax.f32 %v4383, %v4447
          %v4464 = vmax.f32 %v4384, %v4448
          %v4465 = vmax.f32 %v4385, %v4449
          %v4466 = vmax.f32 %v4386, %v4450
          %v4467 = vmax.f32 %v4387, %v4451
          %v4468 = vmax.f32 %v4388, %v4452
          %v4469 = vmax.f32 %v4389, %v4453
          %v4470 = vmax.f32 %v4390, %v4454
          %v4471 = vmax.f32 %v4391, %v4455
          %v4472 = vmax.f32 %v4392, %v4456
          %v4473 = vmax.f32 %v4393, %v4457
          %v4474 = vmax.f32 %v4394, %v4458
          %v4475 = vmax.f32 %v4395, %v4459
          %v4476 = vmax.f32 %v4396, %v4460
          %v4477 = vmax.f32 %v4397, %v4461
          %v4478 = vld [vmem:[%s4253 + $0x180] sm:$0xff]
          %v4479 = vld [vmem:[%s4253 + $0x188] sm:$0xff]
          %v4480 = vld [vmem:[%s4253 + $0x190] sm:$0xff]
          %v4481 = vld [vmem:[%s4253 + $0x198] sm:$0xff]
          %v4482 = vld [vmem:[%s4253 + $0x1a0] sm:$0xff]
          %v4483 = vld [vmem:[%s4253 + $0x1a8] sm:$0xff]
          %v4484 = vld [vmem:[%s4253 + $0x1b0] sm:$0xff]
          %v4485 = vld [vmem:[%s4253 + $0x1b8] sm:$0xff]
          %v4486 = vld [vmem:[%s4253 + $0x1c0] sm:$0xff]
          %v4487 = vld [vmem:[%s4253 + $0x1c8] sm:$0xff]
          %v4488 = vld [vmem:[%s4253 + $0x1d0] sm:$0xff]
          %v4489 = vld [vmem:[%s4253 + $0x1d8] sm:$0xff]
          %v4490 = vld [vmem:[%s4253 + $0x1e0] sm:$0xff]
          %v4491 = vld [vmem:[%s4253 + $0x1e8] sm:$0xff]
          %v4492 = vld [vmem:[%s4253 + $0x1f0] sm:$0xff]
          %v4493 = vld [vmem:[%s4253 + $0x1f8] sm:$0xff]
          %v4494 = vmul.f32 %v4478, %v3621
          %v4495 = vmul.f32 %v4479, %v3621
          %v4496 = vmul.f32 %v4480, %v3621
          %v4497 = vmul.f32 %v4481, %v3621
          %v4498 = vmul.f32 %v4482, %v3621
          %v4499 = vmul.f32 %v4483, %v3621
          %v4500 = vmul.f32 %v4484, %v3621
          %v4501 = vmul.f32 %v4485, %v3621
          %v4502 = vmul.f32 %v4486, %v3621
          %v4503 = vmul.f32 %v4487, %v3621
          %v4504 = vmul.f32 %v4488, %v3621
          %v4505 = vmul.f32 %v4489, %v3621
          %v4506 = vmul.f32 %v4490, %v3621
          %v4507 = vmul.f32 %v4491, %v3621
          %v4508 = vmul.f32 %v4492, %v3621
          %v4509 = vmul.f32 %v4493, %v3621
          %v4510 = vadd.f32 %v4494, %v3642
          %v4511 = vadd.f32 %v4495, %v3642
          %v4512 = vadd.f32 %v4496, %v3642
          %v4513 = vadd.f32 %v4497, %v3642
          %v4514 = vadd.f32 %v4498, %v3642
          %v4515 = vadd.f32 %v4499, %v3642
          %v4516 = vadd.f32 %v4500, %v3642
          %v4517 = vadd.f32 %v4501, %v3642
          %v4518 = vadd.f32 %v4502, %v3642
          %v4519 = vadd.f32 %v4503, %v3642
          %v4520 = vadd.f32 %v4504, %v3642
          %v4521 = vadd.f32 %v4505, %v3642
          %v4522 = vadd.f32 %v4506, %v3642
          %v4523 = vadd.f32 %v4507, %v3642
          %v4524 = vadd.f32 %v4508, %v3642
          %v4525 = vadd.f32 %v4509, %v3642
          %v4526 = vmax.f32 %v4510, 0.0
          %v4527 = vmax.f32 %v4511, 0.0
          %v4528 = vmax.f32 %v4512, 0.0
          %v4529 = vmax.f32 %v4513, 0.0
          %v4530 = vmax.f32 %v4514, 0.0
          %v4531 = vmax.f32 %v4515, 0.0
          %v4532 = vmax.f32 %v4516, 0.0
          %v4533 = vmax.f32 %v4517, 0.0
          %v4534 = vmax.f32 %v4518, 0.0
          %v4535 = vmax.f32 %v4519, 0.0
          %v4536 = vmax.f32 %v4520, 0.0
          %v4537 = vmax.f32 %v4521, 0.0
          %v4538 = vmax.f32 %v4522, 0.0
          %v4539 = vmax.f32 %v4523, 0.0
          %v4540 = vmax.f32 %v4524, 0.0
          %v4541 = vmax.f32 %v4525, 0.0
          %v4542 = vmax.f32 %v4462, %v4526
          %v4543 = vmax.f32 %v4463, %v4527
          %v4544 = vmax.f32 %v4464, %v4528
          %v4545 = vmax.f32 %v4465, %v4529
          %v4546 = vmax.f32 %v4466, %v4530
          %v4547 = vmax.f32 %v4467, %v4531
          %v4548 = vmax.f32 %v4468, %v4532
          %v4549 = vmax.f32 %v4469, %v4533
          %v4550 = vmax.f32 %v4470, %v4534
          %v4551 = vmax.f32 %v4471, %v4535
          %v4552 = vmax.f32 %v4472, %v4536
          %v4553 = vmax.f32 %v4473, %v4537
          %v4554 = vmax.f32 %v4474, %v4538
          %v4555 = vmax.f32 %v4475, %v4539
          %v4556 = vmax.f32 %v4476, %v4540
          %v4557 = vmax.f32 %v4477, %v4541
          %4558 = vst [vmem:[%s5 + $0x100] sm:$0xff] %v4542
          %4559 = vst [vmem:[%s5 + $0x108] sm:$0xff] %v4543
          %4560 = vst [vmem:[%s5 + $0x110] sm:$0xff] %v4544
          %4561 = vst [vmem:[%s5 + $0x118] sm:$0xff] %v4545
          %4562 = vst [vmem:[%s5 + $0x120] sm:$0xff] %v4546
          %4563 = vst [vmem:[%s5 + $0x128] sm:$0xff] %v4547
          %4564 = vst [vmem:[%s5 + $0x130] sm:$0xff] %v4548
          %4565 = vst [vmem:[%s5 + $0x138] sm:$0xff] %v4549
          %4566 = vst [vmem:[%s5 + $0x140] sm:$0xff] %v4550
          %4567 = vst [vmem:[%s5 + $0x148] sm:$0xff] %v4551
          %4568 = vst [vmem:[%s5 + $0x150] sm:$0xff] %v4552
          %4569 = vst [vmem:[%s5 + $0x158] sm:$0xff] %v4553
          %4570 = vst [vmem:[%s5 + $0x160] sm:$0xff] %v4554
          %4571 = vst [vmem:[%s5 + $0x168] sm:$0xff] %v4555
          %4572 = vst [vmem:[%s5 + $0x170] sm:$0xff] %v4556
          %4573 = vst [vmem:[%s5 + $0x178] sm:$0xff] %v4557
          %s4574 = scalar_lea.vmem [#allocation2], 1536
          %v4575 = vld [vmem:[%s4574] sm:$0xff]
          %v4576 = vld [vmem:[%s4574 + $0x8] sm:$0xff]
          %v4577 = vld [vmem:[%s4574 + $0x10] sm:$0xff]
          %v4578 = vld [vmem:[%s4574 + $0x18] sm:$0xff]
          %v4579 = vld [vmem:[%s4574 + $0x20] sm:$0xff]
          %v4580 = vld [vmem:[%s4574 + $0x28] sm:$0xff]
          %v4581 = vld [vmem:[%s4574 + $0x30] sm:$0xff]
          %v4582 = vld [vmem:[%s4574 + $0x38] sm:$0xff]
          %v4583 = vld [vmem:[%s4574 + $0x40] sm:$0xff]
          %v4584 = vld [vmem:[%s4574 + $0x48] sm:$0xff]
          %v4585 = vld [vmem:[%s4574 + $0x50] sm:$0xff]
          %v4586 = vld [vmem:[%s4574 + $0x58] sm:$0xff]
          %v4587 = vld [vmem:[%s4574 + $0x60] sm:$0xff]
          %v4588 = vld [vmem:[%s4574 + $0x68] sm:$0xff]
          %v4589 = vld [vmem:[%s4574 + $0x70] sm:$0xff]
          %v4590 = vld [vmem:[%s4574 + $0x78] sm:$0xff]
          %v4591 = vmul.f32 %v4575, %v3621
          %v4592 = vmul.f32 %v4576, %v3621
          %v4593 = vmul.f32 %v4577, %v3621
          %v4594 = vmul.f32 %v4578, %v3621
          %v4595 = vmul.f32 %v4579, %v3621
          %v4596 = vmul.f32 %v4580, %v3621
          %v4597 = vmul.f32 %v4581, %v3621
          %v4598 = vmul.f32 %v4582, %v3621
          %v4599 = vmul.f32 %v4583, %v3621
          %v4600 = vmul.f32 %v4584, %v3621
          %v4601 = vmul.f32 %v4585, %v3621
          %v4602 = vmul.f32 %v4586, %v3621
          %v4603 = vmul.f32 %v4587, %v3621
          %v4604 = vmul.f32 %v4588, %v3621
          %v4605 = vmul.f32 %v4589, %v3621
          %v4606 = vmul.f32 %v4590, %v3621
          %v4607 = vadd.f32 %v4591, %v3642
          %v4608 = vadd.f32 %v4592, %v3642
          %v4609 = vadd.f32 %v4593, %v3642
          %v4610 = vadd.f32 %v4594, %v3642
          %v4611 = vadd.f32 %v4595, %v3642
          %v4612 = vadd.f32 %v4596, %v3642
          %v4613 = vadd.f32 %v4597, %v3642
          %v4614 = vadd.f32 %v4598, %v3642
          %v4615 = vadd.f32 %v4599, %v3642
          %v4616 = vadd.f32 %v4600, %v3642
          %v4617 = vadd.f32 %v4601, %v3642
          %v4618 = vadd.f32 %v4602, %v3642
          %v4619 = vadd.f32 %v4603, %v3642
          %v4620 = vadd.f32 %v4604, %v3642
          %v4621 = vadd.f32 %v4605, %v3642
          %v4622 = vadd.f32 %v4606, %v3642
          %v4623 = vmax.f32 %v4607, 0.0
          %v4624 = vmax.f32 %v4608, 0.0
          %v4625 = vmax.f32 %v4609, 0.0
          %v4626 = vmax.f32 %v4610, 0.0
          %v4627 = vmax.f32 %v4611, 0.0
          %v4628 = vmax.f32 %v4612, 0.0
          %v4629 = vmax.f32 %v4613, 0.0
          %v4630 = vmax.f32 %v4614, 0.0
          %v4631 = vmax.f32 %v4615, 0.0
          %v4632 = vmax.f32 %v4616, 0.0
          %v4633 = vmax.f32 %v4617, 0.0
          %v4634 = vmax.f32 %v4618, 0.0
          %v4635 = vmax.f32 %v4619, 0.0
          %v4636 = vmax.f32 %v4620, 0.0
          %v4637 = vmax.f32 %v4621, 0.0
          %v4638 = vmax.f32 %v4622, 0.0
          %v4639 = vld [vmem:[%s4574 + $0x80] sm:$0xff]
          %v4640 = vld [vmem:[%s4574 + $0x88] sm:$0xff]
          %v4641 = vld [vmem:[%s4574 + $0x90] sm:$0xff]
          %v4642 = vld [vmem:[%s4574 + $0x98] sm:$0xff]
          %v4643 = vld [vmem:[%s4574 + $0xa0] sm:$0xff]
          %v4644 = vld [vmem:[%s4574 + $0xa8] sm:$0xff]
          %v4645 = vld [vmem:[%s4574 + $0xb0] sm:$0xff]
          %v4646 = vld [vmem:[%s4574 + $0xb8] sm:$0xff]
          %v4647 = vld [vmem:[%s4574 + $0xc0] sm:$0xff]
          %v4648 = vld [vmem:[%s4574 + $0xc8] sm:$0xff]
          %v4649 = vld [vmem:[%s4574 + $0xd0] sm:$0xff]
          %v4650 = vld [vmem:[%s4574 + $0xd8] sm:$0xff]
          %v4651 = vld [vmem:[%s4574 + $0xe0] sm:$0xff]
          %v4652 = vld [vmem:[%s4574 + $0xe8] sm:$0xff]
          %v4653 = vld [vmem:[%s4574 + $0xf0] sm:$0xff]
          %v4654 = vld [vmem:[%s4574 + $0xf8] sm:$0xff]
          %v4655 = vmul.f32 %v4639, %v3621
          %v4656 = vmul.f32 %v4640, %v3621
          %v4657 = vmul.f32 %v4641, %v3621
          %v4658 = vmul.f32 %v4642, %v3621
          %v4659 = vmul.f32 %v4643, %v3621
          %v4660 = vmul.f32 %v4644, %v3621
          %v4661 = vmul.f32 %v4645, %v3621
          %v4662 = vmul.f32 %v4646, %v3621
          %v4663 = vmul.f32 %v4647, %v3621
          %v4664 = vmul.f32 %v4648, %v3621
          %v4665 = vmul.f32 %v4649, %v3621
          %v4666 = vmul.f32 %v4650, %v3621
          %v4667 = vmul.f32 %v4651, %v3621
          %v4668 = vmul.f32 %v4652, %v3621
          %v4669 = vmul.f32 %v4653, %v3621
          %v4670 = vmul.f32 %v4654, %v3621
          %v4671 = vadd.f32 %v4655, %v3642
          %v4672 = vadd.f32 %v4656, %v3642
          %v4673 = vadd.f32 %v4657, %v3642
          %v4674 = vadd.f32 %v4658, %v3642
          %v4675 = vadd.f32 %v4659, %v3642
          %v4676 = vadd.f32 %v4660, %v3642
          %v4677 = vadd.f32 %v4661, %v3642
          %v4678 = vadd.f32 %v4662, %v3642
          %v4679 = vadd.f32 %v4663, %v3642
          %v4680 = vadd.f32 %v4664, %v3642
          %v4681 = vadd.f32 %v4665, %v3642
          %v4682 = vadd.f32 %v4666, %v3642
          %v4683 = vadd.f32 %v4667, %v3642
          %v4684 = vadd.f32 %v4668, %v3642
          %v4685 = vadd.f32 %v4669, %v3642
          %v4686 = vadd.f32 %v4670, %v3642
          %v4687 = vmax.f32 %v4671, 0.0
          %v4688 = vmax.f32 %v4672, 0.0
          %v4689 = vmax.f32 %v4673, 0.0
          %v4690 = vmax.f32 %v4674, 0.0
          %v4691 = vmax.f32 %v4675, 0.0
          %v4692 = vmax.f32 %v4676, 0.0
          %v4693 = vmax.f32 %v4677, 0.0
          %v4694 = vmax.f32 %v4678, 0.0
          %v4695 = vmax.f32 %v4679, 0.0
          %v4696 = vmax.f32 %v4680, 0.0
          %v4697 = vmax.f32 %v4681, 0.0
          %v4698 = vmax.f32 %v4682, 0.0
          %v4699 = vmax.f32 %v4683, 0.0
          %v4700 = vmax.f32 %v4684, 0.0
          %v4701 = vmax.f32 %v4685, 0.0
          %v4702 = vmax.f32 %v4686, 0.0
          %v4703 = vmax.f32 %v4623, %v4687
          %v4704 = vmax.f32 %v4624, %v4688
          %v4705 = vmax.f32 %v4625, %v4689
          %v4706 = vmax.f32 %v4626, %v4690
          %v4707 = vmax.f32 %v4627, %v4691
          %v4708 = vmax.f32 %v4628, %v4692
          %v4709 = vmax.f32 %v4629, %v4693
          %v4710 = vmax.f32 %v4630, %v4694
          %v4711 = vmax.f32 %v4631, %v4695
          %v4712 = vmax.f32 %v4632, %v4696
          %v4713 = vmax.f32 %v4633, %v4697
          %v4714 = vmax.f32 %v4634, %v4698
          %v4715 = vmax.f32 %v4635, %v4699
          %v4716 = vmax.f32 %v4636, %v4700
          %v4717 = vmax.f32 %v4637, %v4701
          %v4718 = vmax.f32 %v4638, %v4702
          %v4719 = vld [vmem:[%s4574 + $0x100] sm:$0xff]
          %v4720 = vld [vmem:[%s4574 + $0x108] sm:$0xff]
          %v4721 = vld [vmem:[%s4574 + $0x110] sm:$0xff]
          %v4722 = vld [vmem:[%s4574 + $0x118] sm:$0xff]
          %v4723 = vld [vmem:[%s4574 + $0x120] sm:$0xff]
          %v4724 = vld [vmem:[%s4574 + $0x128] sm:$0xff]
          %v4725 = vld [vmem:[%s4574 + $0x130] sm:$0xff]
          %v4726 = vld [vmem:[%s4574 + $0x138] sm:$0xff]
          %v4727 = vld [vmem:[%s4574 + $0x140] sm:$0xff]
          %v4728 = vld [vmem:[%s4574 + $0x148] sm:$0xff]
          %v4729 = vld [vmem:[%s4574 + $0x150] sm:$0xff]
          %v4730 = vld [vmem:[%s4574 + $0x158] sm:$0xff]
          %v4731 = vld [vmem:[%s4574 + $0x160] sm:$0xff]
          %v4732 = vld [vmem:[%s4574 + $0x168] sm:$0xff]
          %v4733 = vld [vmem:[%s4574 + $0x170] sm:$0xff]
          %v4734 = vld [vmem:[%s4574 + $0x178] sm:$0xff]
          %v4735 = vmul.f32 %v4719, %v3621
          %v4736 = vmul.f32 %v4720, %v3621
          %v4737 = vmul.f32 %v4721, %v3621
          %v4738 = vmul.f32 %v4722, %v3621
          %v4739 = vmul.f32 %v4723, %v3621
          %v4740 = vmul.f32 %v4724, %v3621
          %v4741 = vmul.f32 %v4725, %v3621
          %v4742 = vmul.f32 %v4726, %v3621
          %v4743 = vmul.f32 %v4727, %v3621
          %v4744 = vmul.f32 %v4728, %v3621
          %v4745 = vmul.f32 %v4729, %v3621
          %v4746 = vmul.f32 %v4730, %v3621
          %v4747 = vmul.f32 %v4731, %v3621
          %v4748 = vmul.f32 %v4732, %v3621
          %v4749 = vmul.f32 %v4733, %v3621
          %v4750 = vmul.f32 %v4734, %v3621
          %v4751 = vadd.f32 %v4735, %v3642
          %v4752 = vadd.f32 %v4736, %v3642
          %v4753 = vadd.f32 %v4737, %v3642
          %v4754 = vadd.f32 %v4738, %v3642
          %v4755 = vadd.f32 %v4739, %v3642
          %v4756 = vadd.f32 %v4740, %v3642
          %v4757 = vadd.f32 %v4741, %v3642
          %v4758 = vadd.f32 %v4742, %v3642
          %v4759 = vadd.f32 %v4743, %v3642
          %v4760 = vadd.f32 %v4744, %v3642
          %v4761 = vadd.f32 %v4745, %v3642
          %v4762 = vadd.f32 %v4746, %v3642
          %v4763 = vadd.f32 %v4747, %v3642
          %v4764 = vadd.f32 %v4748, %v3642
          %v4765 = vadd.f32 %v4749, %v3642
          %v4766 = vadd.f32 %v4750, %v3642
          %v4767 = vmax.f32 %v4751, 0.0
          %v4768 = vmax.f32 %v4752, 0.0
          %v4769 = vmax.f32 %v4753, 0.0
          %v4770 = vmax.f32 %v4754, 0.0
          %v4771 = vmax.f32 %v4755, 0.0
          %v4772 = vmax.f32 %v4756, 0.0
          %v4773 = vmax.f32 %v4757, 0.0
          %v4774 = vmax.f32 %v4758, 0.0
          %v4775 = vmax.f32 %v4759, 0.0
          %v4776 = vmax.f32 %v4760, 0.0
          %v4777 = vmax.f32 %v4761, 0.0
          %v4778 = vmax.f32 %v4762, 0.0
          %v4779 = vmax.f32 %v4763, 0.0
          %v4780 = vmax.f32 %v4764, 0.0
          %v4781 = vmax.f32 %v4765, 0.0
          %v4782 = vmax.f32 %v4766, 0.0
          %v4783 = vmax.f32 %v4703, %v4767
          %v4784 = vmax.f32 %v4704, %v4768
          %v4785 = vmax.f32 %v4705, %v4769
          %v4786 = vmax.f32 %v4706, %v4770
          %v4787 = vmax.f32 %v4707, %v4771
          %v4788 = vmax.f32 %v4708, %v4772
          %v4789 = vmax.f32 %v4709, %v4773
          %v4790 = vmax.f32 %v4710, %v4774
          %v4791 = vmax.f32 %v4711, %v4775
          %v4792 = vmax.f32 %v4712, %v4776
          %v4793 = vmax.f32 %v4713, %v4777
          %v4794 = vmax.f32 %v4714, %v4778
          %v4795 = vmax.f32 %v4715, %v4779
          %v4796 = vmax.f32 %v4716, %v4780
          %v4797 = vmax.f32 %v4717, %v4781
          %v4798 = vmax.f32 %v4718, %v4782
          %v4799 = vld [vmem:[%s4574 + $0x180] sm:$0xff]
          %v4800 = vld [vmem:[%s4574 + $0x188] sm:$0xff]
          %v4801 = vld [vmem:[%s4574 + $0x190] sm:$0xff]
          %v4802 = vld [vmem:[%s4574 + $0x198] sm:$0xff]
          %v4803 = vld [vmem:[%s4574 + $0x1a0] sm:$0xff]
          %v4804 = vld [vmem:[%s4574 + $0x1a8] sm:$0xff]
          %v4805 = vld [vmem:[%s4574 + $0x1b0] sm:$0xff]
          %v4806 = vld [vmem:[%s4574 + $0x1b8] sm:$0xff]
          %v4807 = vld [vmem:[%s4574 + $0x1c0] sm:$0xff]
          %v4808 = vld [vmem:[%s4574 + $0x1c8] sm:$0xff]
          %v4809 = vld [vmem:[%s4574 + $0x1d0] sm:$0xff]
          %v4810 = vld [vmem:[%s4574 + $0x1d8] sm:$0xff]
          %v4811 = vld [vmem:[%s4574 + $0x1e0] sm:$0xff]
          %v4812 = vld [vmem:[%s4574 + $0x1e8] sm:$0xff]
          %v4813 = vld [vmem:[%s4574 + $0x1f0] sm:$0xff]
          %v4814 = vld [vmem:[%s4574 + $0x1f8] sm:$0xff]
          %v4815 = vmul.f32 %v4799, %v3621
          %v4816 = vmul.f32 %v4800, %v3621
          %v4817 = vmul.f32 %v4801, %v3621
          %v4818 = vmul.f32 %v4802, %v3621
          %v4819 = vmul.f32 %v4803, %v3621
          %v4820 = vmul.f32 %v4804, %v3621
          %v4821 = vmul.f32 %v4805, %v3621
          %v4822 = vmul.f32 %v4806, %v3621
          %v4823 = vmul.f32 %v4807, %v3621
          %v4824 = vmul.f32 %v4808, %v3621
          %v4825 = vmul.f32 %v4809, %v3621
          %v4826 = vmul.f32 %v4810, %v3621
          %v4827 = vmul.f32 %v4811, %v3621
          %v4828 = vmul.f32 %v4812, %v3621
          %v4829 = vmul.f32 %v4813, %v3621
          %v4830 = vmul.f32 %v4814, %v3621
          %v4831 = vadd.f32 %v4815, %v3642
          %v4832 = vadd.f32 %v4816, %v3642
          %v4833 = vadd.f32 %v4817, %v3642
          %v4834 = vadd.f32 %v4818, %v3642
          %v4835 = vadd.f32 %v4819, %v3642
          %v4836 = vadd.f32 %v4820, %v3642
          %v4837 = vadd.f32 %v4821, %v3642
          %v4838 = vadd.f32 %v4822, %v3642
          %v4839 = vadd.f32 %v4823, %v3642
          %v4840 = vadd.f32 %v4824, %v3642
          %v4841 = vadd.f32 %v4825, %v3642
          %v4842 = vadd.f32 %v4826, %v3642
          %v4843 = vadd.f32 %v4827, %v3642
          %v4844 = vadd.f32 %v4828, %v3642
          %v4845 = vadd.f32 %v4829, %v3642
          %v4846 = vadd.f32 %v4830, %v3642
          %v4847 = vmax.f32 %v4831, 0.0
          %v4848 = vmax.f32 %v4832, 0.0
          %v4849 = vmax.f32 %v4833, 0.0
          %v4850 = vmax.f32 %v4834, 0.0
          %v4851 = vmax.f32 %v4835, 0.0
          %v4852 = vmax.f32 %v4836, 0.0
          %v4853 = vmax.f32 %v4837, 0.0
          %v4854 = vmax.f32 %v4838, 0.0
          %v4855 = vmax.f32 %v4839, 0.0
          %v4856 = vmax.f32 %v4840, 0.0
          %v4857 = vmax.f32 %v4841, 0.0
          %v4858 = vmax.f32 %v4842, 0.0
          %v4859 = vmax.f32 %v4843, 0.0
          %v4860 = vmax.f32 %v4844, 0.0
          %v4861 = vmax.f32 %v4845, 0.0
          %v4862 = vmax.f32 %v4846, 0.0
          %v4863 = vmax.f32 %v4783, %v4847
          %v4864 = vmax.f32 %v4784, %v4848
          %v4865 = vmax.f32 %v4785, %v4849
          %v4866 = vmax.f32 %v4786, %v4850
          %v4867 = vmax.f32 %v4787, %v4851
          %v4868 = vmax.f32 %v4788, %v4852
          %v4869 = vmax.f32 %v4789, %v4853
          %v4870 = vmax.f32 %v4790, %v4854
          %v4871 = vmax.f32 %v4791, %v4855
          %v4872 = vmax.f32 %v4792, %v4856
          %v4873 = vmax.f32 %v4793, %v4857
          %v4874 = vmax.f32 %v4794, %v4858
          %v4875 = vmax.f32 %v4795, %v4859
          %v4876 = vmax.f32 %v4796, %v4860
          %v4877 = vmax.f32 %v4797, %v4861
          %v4878 = vmax.f32 %v4798, %v4862
          %4879 = vst [vmem:[%s5 + $0x180] sm:$0xff] %v4863
          %4880 = vst [vmem:[%s5 + $0x188] sm:$0xff] %v4864
          %4881 = vst [vmem:[%s5 + $0x190] sm:$0xff] %v4865
          %4882 = vst [vmem:[%s5 + $0x198] sm:$0xff] %v4866
          %4883 = vst [vmem:[%s5 + $0x1a0] sm:$0xff] %v4867
          %4884 = vst [vmem:[%s5 + $0x1a8] sm:$0xff] %v4868
          %4885 = vst [vmem:[%s5 + $0x1b0] sm:$0xff] %v4869
          %4886 = vst [vmem:[%s5 + $0x1b8] sm:$0xff] %v4870
          %4887 = vst [vmem:[%s5 + $0x1c0] sm:$0xff] %v4871
          %4888 = vst [vmem:[%s5 + $0x1c8] sm:$0xff] %v4872
          %4889 = vst [vmem:[%s5 + $0x1d0] sm:$0xff] %v4873
          %4890 = vst [vmem:[%s5 + $0x1d8] sm:$0xff] %v4874
          %4891 = vst [vmem:[%s5 + $0x1e0] sm:$0xff] %v4875
          %4892 = vst [vmem:[%s5 + $0x1e8] sm:$0xff] %v4876
          %4893 = vst [vmem:[%s5 + $0x1f0] sm:$0xff] %v4877
          %4894 = vst [vmem:[%s5 + $0x1f8] sm:$0xff] %v4878
        $region71: #{discriminator_forward.3} parent=58 // pred_fallthru
          _
        // Predicated region
        $region72: #{discriminator_forward.3} parent=58 // pred_check
          %p4895 = pneg %p139
        $region73: #{discriminator_forward.3} parent=58 // pred_check_branch
          %4897 = sbr.rel (%p4895) target = $region75
        $region74: #{discriminator_forward.3} parent=58 // pred_region
          _
        $region75: #{discriminator_forward.3} parent=58 // pred_fallthru
          _
        // Predicated region
        $region76: #{discriminator_forward.3} parent=58 // pred_check
          %p4898 = pneg %p139
        $region77: #{discriminator_forward.3} parent=58 // pred_check_branch
          %4900 = sbr.rel (%p4898) target = $region79
        $region78: #{discriminator_forward.3} parent=58 // pred_region
          _
        $region79: #{discriminator_forward.3} parent=58 // pred_fallthru
          _
      $region59: #{discriminator_forward.3} parent=5 // pred_fallthru
        _
      %p4901 = scmp.le.s32.totalorder 2, %s11
      // Predicated region
      $region80: #{discriminator_forward.3} parent=5 // pred_check
        %p4902 = pneg %p4901
      $region81: #{discriminator_forward.3} parent=5 // pred_check_branch
        %4904 = sbr.rel (%p4902) target = $region83
      $region82: #{discriminator_forward.3} parent=5 // pred_region
        %s4905 = ssub.s32 %s11, 2
      $region83: #{discriminator_forward.3} parent=5 // pred_fallthru
        _
    $region6: #{discriminator_forward.3} parent=1 // loop_footer
      %s15 = sadd.s32 1, %s11
    $region7: #{discriminator_forward.3} parent=1 // loop_footer_branch
      %10 = sbr.rel target = $region3
    $region8: #{discriminator_forward.3} parent=1 // loop_exit
      _

// kernel: discriminator_forward.4
$region0: #{discriminator_forward.4}
  #allocation0 [shape = 'u32[]', space=smem, size = 0x4, offset = 0x4, fixed_abs, tag = 'smem constant byte address 0x4 - core index']
  #allocation1 [shape = 'u32[72,128]{1,0:T(1,128)}', space=vmem, size = 0x9000, scoped, tag = 'internal scratch']
  #allocation2 [shape = 'f32[1,16,2048]{2,1,0:T(8,128)}', space=vmem, size = 0x20000, scoped, tag = 'scratch operand']
  #allocation3 [shape = 'f32[16,2048]{1,0:T(8,128)}', space=vmem, size = 0x20000, scoped, tag = 'scratch operand']
  #allocation4 [shape = 'f32[16,2048]{1,0:T(8,128)}', space=vmem, size = 0x20000, scoped, tag = 'scratch operand']
  %s0 = inlined_call_operand.vmem [shape: bf16[128,2048], index: 0, kind: input, shape index: {}]
  %s1 = inlined_call_operand.vmem [shape: bf16[16,128], index: 1, kind: input, shape index: {}]
  %s2 = inlined_call_operand.vmem [shape: f32[16,1], index: 2, kind: input, shape index: {}]
  %s3 = inlined_call_operand.vmem [shape: f32[16,1], index: 3, kind: input, shape index: {}]
  %s4 = inlined_call_operand.vmem [shape: f32[16,1], index: 4, kind: input, shape index: {}]
  %s5 = inlined_call_operand.vmem [shape: f32[16,512], index: 5, kind: output, shape index: {}]
  %s6 = sld [smem:[#allocation0]]
  $region38: #{discriminator_forward.4} parent=0
    _
  %s8 = ssub.s32 1, %s6
  %s9 = scalar_select 0, %s8, %s6
  // Predicated region
  $region2: #{discriminator_forward.4} parent=0 // pred_check
    _
  $region3: #{discriminator_forward.4} parent=0 // pred_check_branch
    %11 = sbr.rel (0) target = $region5
  $region4: #{discriminator_forward.4} parent=0 // pred_region
    _
  $region5: #{discriminator_forward.4} parent=0 // pred_fallthru
    _
  // Predicated region
  $region6: #{discriminator_forward.4} parent=0 // pred_check
    _
  $region7: #{discriminator_forward.4} parent=0 // pred_check_branch
    %13 = sbr.rel (0) target = $region9
  $region8: #{discriminator_forward.4} parent=0 // pred_region
    _
  $region9: #{discriminator_forward.4} parent=0 // pred_fallthru
    _
  // Predicated region
  $region10: #{discriminator_forward.4} parent=0 // pred_check
    _
  $region11: #{discriminator_forward.4} parent=0 // pred_check_branch
    %15 = sbr.rel (0) target = $region13
  $region12: #{discriminator_forward.4} parent=0 // pred_region
    _
  $region13: #{discriminator_forward.4} parent=0 // pred_fallthru
    _
  // Predicated region
  $region14: #{discriminator_forward.4} parent=0 // pred_check
    _
  $region15: #{discriminator_forward.4} parent=0 // pred_check_branch
    %17 = sbr.rel (0) target = $region17
  $region16: #{discriminator_forward.4} parent=0 // pred_region
    _
  $region17: #{discriminator_forward.4} parent=0 // pred_fallthru
    _
  // Predicated region
  $region18: #{discriminator_forward.4} parent=0 // pred_check
    _
  $region19: #{discriminator_forward.4} parent=0 // pred_check_branch
    %19 = sbr.rel (0) target = $region21
  $region20: #{discriminator_forward.4} parent=0 // pred_region
    _
  $region21: #{discriminator_forward.4} parent=0 // pred_fallthru
    _
  %p20 = scmp.eq.s32.totalorder 0, 0
  // Predicated region
  $region22: #{discriminator_forward.4} parent=0 // pred_check
    %p21 = pneg %p20
  $region23: #{discriminator_forward.4} parent=0 // pred_check_branch
    %23 = sbr.rel (%p21) target = $region25
  $region24: #{discriminator_forward.4} parent=0 // pred_region
    %24 = vst [vmem:[#allocation3] sm:$0xff] 0.0
    %25 = vst [vmem:[#allocation3 + $0x8] sm:$0xff] 0.0
    %26 = vst [vmem:[#allocation3 + $0x10] sm:$0xff] 0.0
    %27 = vst [vmem:[#allocation3 + $0x18] sm:$0xff] 0.0
    %28 = vst [vmem:[#allocation3 + $0x20] sm:$0xff] 0.0
    %29 = vst [vmem:[#allocation3 + $0x28] sm:$0xff] 0.0
    %30 = vst [vmem:[#allocation3 + $0x30] sm:$0xff] 0.0
    %31 = vst [vmem:[#allocation3 + $0x38] sm:$0xff] 0.0
    %32 = vst [vmem:[#allocation3 + $0x40] sm:$0xff] 0.0
    %33 = vst [vmem:[#allocation3 + $0x48] sm:$0xff] 0.0
    %34 = vst [vmem:[#allocation3 + $0x50] sm:$0xff] 0.0
    %35 = vst [vmem:[#allocation3 + $0x58] sm:$0xff] 0.0
    %36 = vst [vmem:[#allocation3 + $0x60] sm:$0xff] 0.0
    %37 = vst [vmem:[#allocation3 + $0x68] sm:$0xff] 0.0
    %38 = vst [vmem:[#allocation3 + $0x70] sm:$0xff] 0.0
    %39 = vst [vmem:[#allocation3 + $0x78] sm:$0xff] 0.0
    %40 = vst [vmem:[#allocation3 + $0x80] sm:$0xff] 0.0
    %41 = vst [vmem:[#allocation3 + $0x88] sm:$0xff] 0.0
    %42 = vst [vmem:[#allocation3 + $0x90] sm:$0xff] 0.0
    %43 = vst [vmem:[#allocation3 + $0x98] sm:$0xff] 0.0
    %44 = vst [vmem:[#allocation3 + $0xa0] sm:$0xff] 0.0
    %45 = vst [vmem:[#allocation3 + $0xa8] sm:$0xff] 0.0
    %46 = vst [vmem:[#allocation3 + $0xb0] sm:$0xff] 0.0
    %47 = vst [vmem:[#allocation3 + $0xb8] sm:$0xff] 0.0
    %48 = vst [vmem:[#allocation3 + $0xc0] sm:$0xff] 0.0
    %49 = vst [vmem:[#allocation3 + $0xc8] sm:$0xff] 0.0
    %50 = vst [vmem:[#allocation3 + $0xd0] sm:$0xff] 0.0
    %51 = vst [vmem:[#allocation3 + $0xd8] sm:$0xff] 0.0
    %52 = vst [vmem:[#allocation3 + $0xe0] sm:$0xff] 0.0
    %53 = vst [vmem:[#allocation3 + $0xe8] sm:$0xff] 0.0
    %54 = vst [vmem:[#allocation3 + $0xf0] sm:$0xff] 0.0
    %55 = vst [vmem:[#allocation3 + $0xf8] sm:$0xff] 0.0
    %56 = vst [vmem:[#allocation4] sm:$0xff] 0.0
    %57 = vst [vmem:[#allocation4 + $0x8] sm:$0xff] 0.0
    %58 = vst [vmem:[#allocation4 + $0x10] sm:$0xff] 0.0
    %59 = vst [vmem:[#allocation4 + $0x18] sm:$0xff] 0.0
    %60 = vst [vmem:[#allocation4 + $0x20] sm:$0xff] 0.0
    %61 = vst [vmem:[#allocation4 + $0x28] sm:$0xff] 0.0
    %62 = vst [vmem:[#allocation4 + $0x30] sm:$0xff] 0.0
    %63 = vst [vmem:[#allocation4 + $0x38] sm:$0xff] 0.0
    %64 = vst [vmem:[#allocation4 + $0x40] sm:$0xff] 0.0
    %65 = vst [vmem:[#allocation4 + $0x48] sm:$0xff] 0.0
    %66 = vst [vmem:[#allocation4 + $0x50] sm:$0xff] 0.0
    %67 = vst [vmem:[#allocation4 + $0x58] sm:$0xff] 0.0
    %68 = vst [vmem:[#allocation4 + $0x60] sm:$0xff] 0.0
    %69 = vst [vmem:[#allocation4 + $0x68] sm:$0xff] 0.0
    %70 = vst [vmem:[#allocation4 + $0x70] sm:$0xff] 0.0
    %71 = vst [vmem:[#allocation4 + $0x78] sm:$0xff] 0.0
    %72 = vst [vmem:[#allocation4 + $0x80] sm:$0xff] 0.0
    %73 = vst [vmem:[#allocation4 + $0x88] sm:$0xff] 0.0
    %74 = vst [vmem:[#allocation4 + $0x90] sm:$0xff] 0.0
    %75 = vst [vmem:[#allocation4 + $0x98] sm:$0xff] 0.0
    %76 = vst [vmem:[#allocation4 + $0xa0] sm:$0xff] 0.0
    %77 = vst [vmem:[#allocation4 + $0xa8] sm:$0xff] 0.0
    %78 = vst [vmem:[#allocation4 + $0xb0] sm:$0xff] 0.0
    %79 = vst [vmem:[#allocation4 + $0xb8] sm:$0xff] 0.0
    %80 = vst [vmem:[#allocation4 + $0xc0] sm:$0xff] 0.0
    %81 = vst [vmem:[#allocation4 + $0xc8] sm:$0xff] 0.0
    %82 = vst [vmem:[#allocation4 + $0xd0] sm:$0xff] 0.0
    %83 = vst [vmem:[#allocation4 + $0xd8] sm:$0xff] 0.0
    %84 = vst [vmem:[#allocation4 + $0xe0] sm:$0xff] 0.0
    %85 = vst [vmem:[#allocation4 + $0xe8] sm:$0xff] 0.0
    %86 = vst [vmem:[#allocation4 + $0xf0] sm:$0xff] 0.0
    %87 = vst [vmem:[#allocation4 + $0xf8] sm:$0xff] 0.0
  $region25: #{discriminator_forward.4} parent=0 // pred_fallthru
    _
  %v88 = vld [vmem:[%s1] sm:$0xf]
  %v89 = vld [vmem:[%s1 + $0x4] sm:$0xf]
  %v90 = vld [vmem:[%s0] sm:$0xff]
  %v91 = vld [vmem:[%s0 + $0x8] sm:$0xff]
  %v92 = vld [vmem:[%s0 + $0x10] sm:$0xff]
  %v93 = vld [vmem:[%s0 + $0x18] sm:$0xff]
  %v94 = vld [vmem:[%s0 + $0x20] sm:$0xff]
  %v95 = vld [vmem:[%s0 + $0x28] sm:$0xff]
  %v96 = vld [vmem:[%s0 + $0x30] sm:$0xff]
  %v97 = vld [vmem:[%s0 + $0x38] sm:$0xff]
  %v98 = vld [vmem:[%s0 + $0x40] sm:$0xff]
  %v99 = vld [vmem:[%s0 + $0x48] sm:$0xff]
  %v100 = vld [vmem:[%s0 + $0x50] sm:$0xff]
  %v101 = vld [vmem:[%s0 + $0x58] sm:$0xff]
  %v102 = vld [vmem:[%s0 + $0x60] sm:$0xff]
  %v103 = vld [vmem:[%s0 + $0x68] sm:$0xff]
  %v104 = vld [vmem:[%s0 + $0x70] sm:$0xff]
  %v105 = vld [vmem:[%s0 + $0x78] sm:$0xff]
  %v106 = vld [vmem:[%s0 + $0x80] sm:$0xff]
  %v107 = vld [vmem:[%s0 + $0x88] sm:$0xff]
  %v108 = vld [vmem:[%s0 + $0x90] sm:$0xff]
  %v109 = vld [vmem:[%s0 + $0x98] sm:$0xff]
  %v110 = vld [vmem:[%s0 + $0xa0] sm:$0xff]
  %v111 = vld [vmem:[%s0 + $0xa8] sm:$0xff]
  %v112 = vld [vmem:[%s0 + $0xb0] sm:$0xff]
  %v113 = vld [vmem:[%s0 + $0xb8] sm:$0xff]
  %v114 = vld [vmem:[%s0 + $0xc0] sm:$0xff]
  %v115 = vld [vmem:[%s0 + $0xc8] sm:$0xff]
  %v116 = vld [vmem:[%s0 + $0xd0] sm:$0xff]
  %v117 = vld [vmem:[%s0 + $0xd8] sm:$0xff]
  %v118 = vld [vmem:[%s0 + $0xe0] sm:$0xff]
  %v119 = vld [vmem:[%s0 + $0xe8] sm:$0xff]
  %v120 = vld [vmem:[%s0 + $0xf0] sm:$0xff]
  %v121 = vld [vmem:[%s0 + $0xf8] sm:$0xff]
  %v122 = vld [vmem:[%s0 + $0x100] sm:$0xff]
  %v123 = vld [vmem:[%s0 + $0x108] sm:$0xff]
  %v124 = vld [vmem:[%s0 + $0x110] sm:$0xff]
  %v125 = vld [vmem:[%s0 + $0x118] sm:$0xff]
  %v126 = vld [vmem:[%s0 + $0x120] sm:$0xff]
  %v127 = vld [vmem:[%s0 + $0x128] sm:$0xff]
  %v128 = vld [vmem:[%s0 + $0x130] sm:$0xff]
  %v129 = vld [vmem:[%s0 + $0x138] sm:$0xff]
  %v130 = vld [vmem:[%s0 + $0x140] sm:$0xff]
  %v131 = vld [vmem:[%s0 + $0x148] sm:$0xff]
  %v132 = vld [vmem:[%s0 + $0x150] sm:$0xff]
  %v133 = vld [vmem:[%s0 + $0x158] sm:$0xff]
  %v134 = vld [vmem:[%s0 + $0x160] sm:$0xff]
  %v135 = vld [vmem:[%s0 + $0x168] sm:$0xff]
  %v136 = vld [vmem:[%s0 + $0x170] sm:$0xff]
  %v137 = vld [vmem:[%s0 + $0x178] sm:$0xff]
  %v138 = vld [vmem:[%s0 + $0x180] sm:$0xff]
  %v139 = vld [vmem:[%s0 + $0x188] sm:$0xff]
  %v140 = vld [vmem:[%s0 + $0x190] sm:$0xff]
  %v141 = vld [vmem:[%s0 + $0x198] sm:$0xff]
  %v142 = vld [vmem:[%s0 + $0x1a0] sm:$0xff]
  %v143 = vld [vmem:[%s0 + $0x1a8] sm:$0xff]
  %v144 = vld [vmem:[%s0 + $0x1b0] sm:$0xff]
  %v145 = vld [vmem:[%s0 + $0x1b8] sm:$0xff]
  %v146 = vld [vmem:[%s0 + $0x1c0] sm:$0xff]
  %v147 = vld [vmem:[%s0 + $0x1c8] sm:$0xff]
  %v148 = vld [vmem:[%s0 + $0x1d0] sm:$0xff]
  %v149 = vld [vmem:[%s0 + $0x1d8] sm:$0xff]
  %v150 = vld [vmem:[%s0 + $0x1e0] sm:$0xff]
  %v151 = vld [vmem:[%s0 + $0x1e8] sm:$0xff]
  %v152 = vld [vmem:[%s0 + $0x1f0] sm:$0xff]
  %v153 = vld [vmem:[%s0 + $0x1f8] sm:$0xff]
  %v154 = vld [vmem:[%s0 + $0x200] sm:$0xff]
  %v155 = vld [vmem:[%s0 + $0x208] sm:$0xff]
  %v156 = vld [vmem:[%s0 + $0x210] sm:$0xff]
  %v157 = vld [vmem:[%s0 + $0x218] sm:$0xff]
  %v158 = vld [vmem:[%s0 + $0x220] sm:$0xff]
  %v159 = vld [vmem:[%s0 + $0x228] sm:$0xff]
  %v160 = vld [vmem:[%s0 + $0x230] sm:$0xff]
  %v161 = vld [vmem:[%s0 + $0x238] sm:$0xff]
  %v162 = vld [vmem:[%s0 + $0x240] sm:$0xff]
  %v163 = vld [vmem:[%s0 + $0x248] sm:$0xff]
  %v164 = vld [vmem:[%s0 + $0x250] sm:$0xff]
  %v165 = vld [vmem:[%s0 + $0x258] sm:$0xff]
  %v166 = vld [vmem:[%s0 + $0x260] sm:$0xff]
  %v167 = vld [vmem:[%s0 + $0x268] sm:$0xff]
  %v168 = vld [vmem:[%s0 + $0x270] sm:$0xff]
  %v169 = vld [vmem:[%s0 + $0x278] sm:$0xff]
  %v170 = vld [vmem:[%s0 + $0x280] sm:$0xff]
  %v171 = vld [vmem:[%s0 + $0x288] sm:$0xff]
  %v172 = vld [vmem:[%s0 + $0x290] sm:$0xff]
  %v173 = vld [vmem:[%s0 + $0x298] sm:$0xff]
  %v174 = vld [vmem:[%s0 + $0x2a0] sm:$0xff]
  %v175 = vld [vmem:[%s0 + $0x2a8] sm:$0xff]
  %v176 = vld [vmem:[%s0 + $0x2b0] sm:$0xff]
  %v177 = vld [vmem:[%s0 + $0x2b8] sm:$0xff]
  %v178 = vld [vmem:[%s0 + $0x2c0] sm:$0xff]
  %v179 = vld [vmem:[%s0 + $0x2c8] sm:$0xff]
  %v180 = vld [vmem:[%s0 + $0x2d0] sm:$0xff]
  %v181 = vld [vmem:[%s0 + $0x2d8] sm:$0xff]
  %v182 = vld [vmem:[%s0 + $0x2e0] sm:$0xff]
  %v183 = vld [vmem:[%s0 + $0x2e8] sm:$0xff]
  %v184 = vld [vmem:[%s0 + $0x2f0] sm:$0xff]
  %v185 = vld [vmem:[%s0 + $0x2f8] sm:$0xff]
  %v186 = vld [vmem:[%s0 + $0x300] sm:$0xff]
  %v187 = vld [vmem:[%s0 + $0x308] sm:$0xff]
  %v188 = vld [vmem:[%s0 + $0x310] sm:$0xff]
  %v189 = vld [vmem:[%s0 + $0x318] sm:$0xff]
  %v190 = vld [vmem:[%s0 + $0x320] sm:$0xff]
  %v191 = vld [vmem:[%s0 + $0x328] sm:$0xff]
  %v192 = vld [vmem:[%s0 + $0x330] sm:$0xff]
  %v193 = vld [vmem:[%s0 + $0x338] sm:$0xff]
  %v194 = vld [vmem:[%s0 + $0x340] sm:$0xff]
  %v195 = vld [vmem:[%s0 + $0x348] sm:$0xff]
  %v196 = vld [vmem:[%s0 + $0x350] sm:$0xff]
  %v197 = vld [vmem:[%s0 + $0x358] sm:$0xff]
  %v198 = vld [vmem:[%s0 + $0x360] sm:$0xff]
  %v199 = vld [vmem:[%s0 + $0x368] sm:$0xff]
  %v200 = vld [vmem:[%s0 + $0x370] sm:$0xff]
  %v201 = vld [vmem:[%s0 + $0x378] sm:$0xff]
  %v202 = vld [vmem:[%s0 + $0x380] sm:$0xff]
  %v203 = vld [vmem:[%s0 + $0x388] sm:$0xff]
  %v204 = vld [vmem:[%s0 + $0x390] sm:$0xff]
  %v205 = vld [vmem:[%s0 + $0x398] sm:$0xff]
  %v206 = vld [vmem:[%s0 + $0x3a0] sm:$0xff]
  %v207 = vld [vmem:[%s0 + $0x3a8] sm:$0xff]
  %v208 = vld [vmem:[%s0 + $0x3b0] sm:$0xff]
  %v209 = vld [vmem:[%s0 + $0x3b8] sm:$0xff]
  %v210 = vld [vmem:[%s0 + $0x3c0] sm:$0xff]
  %v211 = vld [vmem:[%s0 + $0x3c8] sm:$0xff]
  %v212 = vld [vmem:[%s0 + $0x3d0] sm:$0xff]
  %v213 = vld [vmem:[%s0 + $0x3d8] sm:$0xff]
  %v214 = vld [vmem:[%s0 + $0x3e0] sm:$0xff]
  %v215 = vld [vmem:[%s0 + $0x3e8] sm:$0xff]
  %v216 = vld [vmem:[%s0 + $0x3f0] sm:$0xff]
  %v217 = vld [vmem:[%s0 + $0x3f8] sm:$0xff]
  %v218 = vld [vmem:[%s2] sm:$0xff]
  %v219 = vld [vmem:[%s2 + $0x8] sm:$0xff]
  %221 = vset.pattern.permute.xlu0 0
  %222 = vperm.xlu0 %221, %v218
  %v223 = vpop.permute.xlu0 %222
  %226 = vset.pattern.permute.xlu0 0
  %227 = vperm.xlu0 %226, %v219
  %v228 = vpop.permute.xlu0 %227
  %v232 = vunpack.c.l.b16 %v88
  %v233 = vunpack.c.l.b16 %v89
  %v234 = vpack.c.b16 %v233, %v232
  %v364 = vunpack.c.l.b16 %v90
  %v365 = vunpack.c.h.b16 %v90
  %v366 = vunpack.c.l.b16 %v91
  %v367 = vunpack.c.h.b16 %v91
  %v368 = vunpack.c.l.b16 %v92
  %v369 = vunpack.c.h.b16 %v92
  %v370 = vunpack.c.l.b16 %v93
  %v371 = vunpack.c.h.b16 %v93
  %v372 = vunpack.c.l.b16 %v94
  %v373 = vunpack.c.h.b16 %v94
  %v374 = vunpack.c.l.b16 %v95
  %v375 = vunpack.c.h.b16 %v95
  %v376 = vunpack.c.l.b16 %v96
  %v377 = vunpack.c.h.b16 %v96
  %v378 = vunpack.c.l.b16 %v97
  %v379 = vunpack.c.h.b16 %v97
  %v380 = vunpack.c.l.b16 %v98
  %v381 = vunpack.c.h.b16 %v98
  %v382 = vunpack.c.l.b16 %v99
  %v383 = vunpack.c.h.b16 %v99
  %v384 = vunpack.c.l.b16 %v100
  %v385 = vunpack.c.h.b16 %v100
  %v386 = vunpack.c.l.b16 %v101
  %v387 = vunpack.c.h.b16 %v101
  %v388 = vunpack.c.l.b16 %v102
  %v389 = vunpack.c.h.b16 %v102
  %v390 = vunpack.c.l.b16 %v103
  %v391 = vunpack.c.h.b16 %v103
  %v392 = vunpack.c.l.b16 %v104
  %v393 = vunpack.c.h.b16 %v104
  %v394 = vunpack.c.l.b16 %v105
  %v395 = vunpack.c.h.b16 %v105
  %v396 = vunpack.c.l.b16 %v106
  %v397 = vunpack.c.h.b16 %v106
  %v398 = vunpack.c.l.b16 %v107
  %v399 = vunpack.c.h.b16 %v107
  %v400 = vunpack.c.l.b16 %v108
  %v401 = vunpack.c.h.b16 %v108
  %v402 = vunpack.c.l.b16 %v109
  %v403 = vunpack.c.h.b16 %v109
  %v404 = vunpack.c.l.b16 %v110
  %v405 = vunpack.c.h.b16 %v110
  %v406 = vunpack.c.l.b16 %v111
  %v407 = vunpack.c.h.b16 %v111
  %v408 = vunpack.c.l.b16 %v112
  %v409 = vunpack.c.h.b16 %v112
  %v410 = vunpack.c.l.b16 %v113
  %v411 = vunpack.c.h.b16 %v113
  %v412 = vunpack.c.l.b16 %v114
  %v413 = vunpack.c.h.b16 %v114
  %v414 = vunpack.c.l.b16 %v115
  %v415 = vunpack.c.h.b16 %v115
  %v416 = vunpack.c.l.b16 %v116
  %v417 = vunpack.c.h.b16 %v116
  %v418 = vunpack.c.l.b16 %v117
  %v419 = vunpack.c.h.b16 %v117
  %v420 = vunpack.c.l.b16 %v118
  %v421 = vunpack.c.h.b16 %v118
  %v422 = vunpack.c.l.b16 %v119
  %v423 = vunpack.c.h.b16 %v119
  %v424 = vunpack.c.l.b16 %v120
  %v425 = vunpack.c.h.b16 %v120
  %v426 = vunpack.c.l.b16 %v121
  %v427 = vunpack.c.h.b16 %v121
  %v428 = vunpack.c.l.b16 %v122
  %v429 = vunpack.c.h.b16 %v122
  %v430 = vunpack.c.l.b16 %v123
  %v431 = vunpack.c.h.b16 %v123
  %v432 = vunpack.c.l.b16 %v124
  %v433 = vunpack.c.h.b16 %v124
  %v434 = vunpack.c.l.b16 %v125
  %v435 = vunpack.c.h.b16 %v125
  %v436 = vunpack.c.l.b16 %v126
  %v437 = vunpack.c.h.b16 %v126
  %v438 = vunpack.c.l.b16 %v127
  %v439 = vunpack.c.h.b16 %v127
  %v440 = vunpack.c.l.b16 %v128
  %v441 = vunpack.c.h.b16 %v128
  %v442 = vunpack.c.l.b16 %v129
  %v443 = vunpack.c.h.b16 %v129
  %v444 = vunpack.c.l.b16 %v130
  %v445 = vunpack.c.h.b16 %v130
  %v446 = vunpack.c.l.b16 %v131
  %v447 = vunpack.c.h.b16 %v131
  %v448 = vunpack.c.l.b16 %v132
  %v449 = vunpack.c.h.b16 %v132
  %v450 = vunpack.c.l.b16 %v133
  %v451 = vunpack.c.h.b16 %v133
  %v452 = vunpack.c.l.b16 %v134
  %v453 = vunpack.c.h.b16 %v134
  %v454 = vunpack.c.l.b16 %v135
  %v455 = vunpack.c.h.b16 %v135
  %v456 = vunpack.c.l.b16 %v136
  %v457 = vunpack.c.h.b16 %v136
  %v458 = vunpack.c.l.b16 %v137
  %v459 = vunpack.c.h.b16 %v137
  %v460 = vunpack.c.l.b16 %v138
  %v461 = vunpack.c.h.b16 %v138
  %v462 = vunpack.c.l.b16 %v139
  %v463 = vunpack.c.h.b16 %v139
  %v464 = vunpack.c.l.b16 %v140
  %v465 = vunpack.c.h.b16 %v140
  %v466 = vunpack.c.l.b16 %v141
  %v467 = vunpack.c.h.b16 %v141
  %v468 = vunpack.c.l.b16 %v142
  %v469 = vunpack.c.h.b16 %v142
  %v470 = vunpack.c.l.b16 %v143
  %v471 = vunpack.c.h.b16 %v143
  %v472 = vunpack.c.l.b16 %v144
  %v473 = vunpack.c.h.b16 %v144
  %v474 = vunpack.c.l.b16 %v145
  %v475 = vunpack.c.h.b16 %v145
  %v476 = vunpack.c.l.b16 %v146
  %v477 = vunpack.c.h.b16 %v146
  %v478 = vunpack.c.l.b16 %v147
  %v479 = vunpack.c.h.b16 %v147
  %v480 = vunpack.c.l.b16 %v148
  %v481 = vunpack.c.h.b16 %v148
  %v482 = vunpack.c.l.b16 %v149
  %v483 = vunpack.c.h.b16 %v149
  %v484 = vunpack.c.l.b16 %v150
  %v485 = vunpack.c.h.b16 %v150
  %v486 = vunpack.c.l.b16 %v151
  %v487 = vunpack.c.h.b16 %v151
  %v488 = vunpack.c.l.b16 %v152
  %v489 = vunpack.c.h.b16 %v152
  %v490 = vunpack.c.l.b16 %v153
  %v491 = vunpack.c.h.b16 %v153
  %v492 = vunpack.c.l.b16 %v154
  %v493 = vunpack.c.h.b16 %v154
  %v494 = vunpack.c.l.b16 %v155
  %v495 = vunpack.c.h.b16 %v155
  %v496 = vunpack.c.l.b16 %v156
  %v497 = vunpack.c.h.b16 %v156
  %v498 = vunpack.c.l.b16 %v157
  %v499 = vunpack.c.h.b16 %v157
  %v500 = vunpack.c.l.b16 %v158
  %v501 = vunpack.c.h.b16 %v158
  %v502 = vunpack.c.l.b16 %v159
  %v503 = vunpack.c.h.b16 %v159
  %v504 = vunpack.c.l.b16 %v160
  %v505 = vunpack.c.h.b16 %v160
  %v506 = vunpack.c.l.b16 %v161
  %v507 = vunpack.c.h.b16 %v161
  %v508 = vunpack.c.l.b16 %v162
  %v509 = vunpack.c.h.b16 %v162
  %v510 = vunpack.c.l.b16 %v163
  %v511 = vunpack.c.h.b16 %v163
  %v512 = vunpack.c.l.b16 %v164
  %v513 = vunpack.c.h.b16 %v164
  %v514 = vunpack.c.l.b16 %v165
  %v515 = vunpack.c.h.b16 %v165
  %v516 = vunpack.c.l.b16 %v166
  %v517 = vunpack.c.h.b16 %v166
  %v518 = vunpack.c.l.b16 %v167
  %v519 = vunpack.c.h.b16 %v167
  %v520 = vunpack.c.l.b16 %v168
  %v521 = vunpack.c.h.b16 %v168
  %v522 = vunpack.c.l.b16 %v169
  %v523 = vunpack.c.h.b16 %v169
  %v524 = vunpack.c.l.b16 %v170
  %v525 = vunpack.c.h.b16 %v170
  %v526 = vunpack.c.l.b16 %v171
  %v527 = vunpack.c.h.b16 %v171
  %v528 = vunpack.c.l.b16 %v172
  %v529 = vunpack.c.h.b16 %v172
  %v530 = vunpack.c.l.b16 %v173
  %v531 = vunpack.c.h.b16 %v173
  %v532 = vunpack.c.l.b16 %v174
  %v533 = vunpack.c.h.b16 %v174
  %v534 = vunpack.c.l.b16 %v175
  %v535 = vunpack.c.h.b16 %v175
  %v536 = vunpack.c.l.b16 %v176
  %v537 = vunpack.c.h.b16 %v176
  %v538 = vunpack.c.l.b16 %v177
  %v539 = vunpack.c.h.b16 %v177
  %v540 = vunpack.c.l.b16 %v178
  %v541 = vunpack.c.h.b16 %v178
  %v542 = vunpack.c.l.b16 %v179
  %v543 = vunpack.c.h.b16 %v179
  %v544 = vunpack.c.l.b16 %v180
  %v545 = vunpack.c.h.b16 %v180
  %v546 = vunpack.c.l.b16 %v181
  %v547 = vunpack.c.h.b16 %v181
  %v548 = vunpack.c.l.b16 %v182
  %v549 = vunpack.c.h.b16 %v182
  %v550 = vunpack.c.l.b16 %v183
  %v551 = vunpack.c.h.b16 %v183
  %v552 = vunpack.c.l.b16 %v184
  %v553 = vunpack.c.h.b16 %v184
  %v554 = vunpack.c.l.b16 %v185
  %v555 = vunpack.c.h.b16 %v185
  %v556 = vunpack.c.l.b16 %v186
  %v557 = vunpack.c.h.b16 %v186
  %v558 = vunpack.c.l.b16 %v187
  %v559 = vunpack.c.h.b16 %v187
  %v560 = vunpack.c.l.b16 %v188
  %v561 = vunpack.c.h.b16 %v188
  %v562 = vunpack.c.l.b16 %v189
  %v563 = vunpack.c.h.b16 %v189
  %v564 = vunpack.c.l.b16 %v190
  %v565 = vunpack.c.h.b16 %v190
  %v566 = vunpack.c.l.b16 %v191
  %v567 = vunpack.c.h.b16 %v191
  %v568 = vunpack.c.l.b16 %v192
  %v569 = vunpack.c.h.b16 %v192
  %v570 = vunpack.c.l.b16 %v193
  %v571 = vunpack.c.h.b16 %v193
  %v572 = vunpack.c.l.b16 %v194
  %v573 = vunpack.c.h.b16 %v194
  %v574 = vunpack.c.l.b16 %v195
  %v575 = vunpack.c.h.b16 %v195
  %v576 = vunpack.c.l.b16 %v196
  %v577 = vunpack.c.h.b16 %v196
  %v578 = vunpack.c.l.b16 %v197
  %v579 = vunpack.c.h.b16 %v197
  %v580 = vunpack.c.l.b16 %v198
  %v581 = vunpack.c.h.b16 %v198
  %v582 = vunpack.c.l.b16 %v199
  %v583 = vunpack.c.h.b16 %v199
  %v584 = vunpack.c.l.b16 %v200
  %v585 = vunpack.c.h.b16 %v200
  %v586 = vunpack.c.l.b16 %v201
  %v587 = vunpack.c.h.b16 %v201
  %v588 = vunpack.c.l.b16 %v202
  %v589 = vunpack.c.h.b16 %v202
  %v590 = vunpack.c.l.b16 %v203
  %v591 = vunpack.c.h.b16 %v203
  %v592 = vunpack.c.l.b16 %v204
  %v593 = vunpack.c.h.b16 %v204
  %v594 = vunpack.c.l.b16 %v205
  %v595 = vunpack.c.h.b16 %v205
  %v596 = vunpack.c.l.b16 %v206
  %v597 = vunpack.c.h.b16 %v206
  %v598 = vunpack.c.l.b16 %v207
  %v599 = vunpack.c.h.b16 %v207
  %v600 = vunpack.c.l.b16 %v208
  %v601 = vunpack.c.h.b16 %v208
  %v602 = vunpack.c.l.b16 %v209
  %v603 = vunpack.c.h.b16 %v209
  %v604 = vunpack.c.l.b16 %v210
  %v605 = vunpack.c.h.b16 %v210
  %v606 = vunpack.c.l.b16 %v211
  %v607 = vunpack.c.h.b16 %v211
  %v608 = vunpack.c.l.b16 %v212
  %v609 = vunpack.c.h.b16 %v212
  %v610 = vunpack.c.l.b16 %v213
  %v611 = vunpack.c.h.b16 %v213
  %v612 = vunpack.c.l.b16 %v214
  %v613 = vunpack.c.h.b16 %v214
  %v614 = vunpack.c.l.b16 %v215
  %v615 = vunpack.c.h.b16 %v215
  %v616 = vunpack.c.l.b16 %v216
  %v617 = vunpack.c.h.b16 %v216
  %v618 = vunpack.c.l.b16 %v217
  %v619 = vunpack.c.h.b16 %v217
  %v620 = vpack.c.b16 %v380, %v364
  %v621 = vpack.c.b16 %v381, %v365
  %v622 = vpack.c.b16 %v382, %v366
  %v623 = vpack.c.b16 %v383, %v367
  %v624 = vpack.c.b16 %v384, %v368
  %v625 = vpack.c.b16 %v385, %v369
  %v626 = vpack.c.b16 %v386, %v370
  %v627 = vpack.c.b16 %v387, %v371
  %v628 = vpack.c.b16 %v388, %v372
  %v629 = vpack.c.b16 %v389, %v373
  %v630 = vpack.c.b16 %v390, %v374
  %v631 = vpack.c.b16 %v391, %v375
  %v632 = vpack.c.b16 %v392, %v376
  %v633 = vpack.c.b16 %v393, %v377
  %v634 = vpack.c.b16 %v394, %v378
  %v635 = vpack.c.b16 %v395, %v379
  %v636 = vpack.c.b16 %v412, %v396
  %v637 = vpack.c.b16 %v413, %v397
  %v638 = vpack.c.b16 %v414, %v398
  %v639 = vpack.c.b16 %v415, %v399
  %v640 = vpack.c.b16 %v416, %v400
  %v641 = vpack.c.b16 %v417, %v401
  %v642 = vpack.c.b16 %v418, %v402
  %v643 = vpack.c.b16 %v419, %v403
  %v644 = vpack.c.b16 %v420, %v404
  %v645 = vpack.c.b16 %v421, %v405
  %v646 = vpack.c.b16 %v422, %v406
  %v647 = vpack.c.b16 %v423, %v407
  %v648 = vpack.c.b16 %v424, %v408
  %v649 = vpack.c.b16 %v425, %v409
  %v650 = vpack.c.b16 %v426, %v410
  %v651 = vpack.c.b16 %v427, %v411
  %v652 = vpack.c.b16 %v444, %v428
  %v653 = vpack.c.b16 %v445, %v429
  %v654 = vpack.c.b16 %v446, %v430
  %v655 = vpack.c.b16 %v447, %v431
  %v656 = vpack.c.b16 %v448, %v432
  %v657 = vpack.c.b16 %v449, %v433
  %v658 = vpack.c.b16 %v450, %v434
  %v659 = vpack.c.b16 %v451, %v435
  %v660 = vpack.c.b16 %v452, %v436
  %v661 = vpack.c.b16 %v453, %v437
  %v662 = vpack.c.b16 %v454, %v438
  %v663 = vpack.c.b16 %v455, %v439
  %v664 = vpack.c.b16 %v456, %v440
  %v665 = vpack.c.b16 %v457, %v441
  %v666 = vpack.c.b16 %v458, %v442
  %v667 = vpack.c.b16 %v459, %v443
  %v668 = vpack.c.b16 %v476, %v460
  %v669 = vpack.c.b16 %v477, %v461
  %v670 = vpack.c.b16 %v478, %v462
  %v671 = vpack.c.b16 %v479, %v463
  %v672 = vpack.c.b16 %v480, %v464
  %v673 = vpack.c.b16 %v481, %v465
  %v674 = vpack.c.b16 %v482, %v466
  %v675 = vpack.c.b16 %v483, %v467
  %v676 = vpack.c.b16 %v484, %v468
  %v677 = vpack.c.b16 %v485, %v469
  %v678 = vpack.c.b16 %v486, %v470
  %v679 = vpack.c.b16 %v487, %v471
  %v680 = vpack.c.b16 %v488, %v472
  %v681 = vpack.c.b16 %v489, %v473
  %v682 = vpack.c.b16 %v490, %v474
  %v683 = vpack.c.b16 %v491, %v475
  %v684 = vpack.c.b16 %v508, %v492
  %v685 = vpack.c.b16 %v509, %v493
  %v686 = vpack.c.b16 %v510, %v494
  %v687 = vpack.c.b16 %v511, %v495
  %v688 = vpack.c.b16 %v512, %v496
  %v689 = vpack.c.b16 %v513, %v497
  %v690 = vpack.c.b16 %v514, %v498
  %v691 = vpack.c.b16 %v515, %v499
  %v692 = vpack.c.b16 %v516, %v500
  %v693 = vpack.c.b16 %v517, %v501
  %v694 = vpack.c.b16 %v518, %v502
  %v695 = vpack.c.b16 %v519, %v503
  %v696 = vpack.c.b16 %v520, %v504
  %v697 = vpack.c.b16 %v521, %v505
  %v698 = vpack.c.b16 %v522, %v506
  %v699 = vpack.c.b16 %v523, %v507
  %v700 = vpack.c.b16 %v540, %v524
  %v701 = vpack.c.b16 %v541, %v525
  %v702 = vpack.c.b16 %v542, %v526
  %v703 = vpack.c.b16 %v543, %v527
  %v704 = vpack.c.b16 %v544, %v528
  %v705 = vpack.c.b16 %v545, %v529
  %v706 = vpack.c.b16 %v546, %v530
  %v707 = vpack.c.b16 %v547, %v531
  %v708 = vpack.c.b16 %v548, %v532
  %v709 = vpack.c.b16 %v549, %v533
  %v710 = vpack.c.b16 %v550, %v534
  %v711 = vpack.c.b16 %v551, %v535
  %v712 = vpack.c.b16 %v552, %v536
  %v713 = vpack.c.b16 %v553, %v537
  %v714 = vpack.c.b16 %v554, %v538
  %v715 = vpack.c.b16 %v555, %v539
  %v716 = vpack.c.b16 %v572, %v556
  %v717 = vpack.c.b16 %v573, %v557
  %v718 = vpack.c.b16 %v574, %v558
  %v719 = vpack.c.b16 %v575, %v559
  %v720 = vpack.c.b16 %v576, %v560
  %v721 = vpack.c.b16 %v577, %v561
  %v722 = vpack.c.b16 %v578, %v562
  %v723 = vpack.c.b16 %v579, %v563
  %v724 = vpack.c.b16 %v580, %v564
  %v725 = vpack.c.b16 %v581, %v565
  %v726 = vpack.c.b16 %v582, %v566
  %v727 = vpack.c.b16 %v583, %v567
  %v728 = vpack.c.b16 %v584, %v568
  %v729 = vpack.c.b16 %v585, %v569
  %v730 = vpack.c.b16 %v586, %v570
  %v731 = vpack.c.b16 %v587, %v571
  %v732 = vpack.c.b16 %v604, %v588
  %v733 = vpack.c.b16 %v605, %v589
  %v734 = vpack.c.b16 %v606, %v590
  %v735 = vpack.c.b16 %v607, %v591
  %v736 = vpack.c.b16 %v608, %v592
  %v737 = vpack.c.b16 %v609, %v593
  %v738 = vpack.c.b16 %v610, %v594
  %v739 = vpack.c.b16 %v611, %v595
  %v740 = vpack.c.b16 %v612, %v596
  %v741 = vpack.c.b16 %v613, %v597
  %v742 = vpack.c.b16 %v614, %v598
  %v743 = vpack.c.b16 %v615, %v599
  %v744 = vpack.c.b16 %v616, %v600
  %v745 = vpack.c.b16 %v617, %v601
  %v746 = vpack.c.b16 %v618, %v602
  %v747 = vpack.c.b16 %v619, %v603
  %876 = vmatpush.bf16.msra.mxu0 %v732
  %877 = vmatpush.bf16.msra.mxu0 %v716
  %878 = vmatpush.bf16.msra.mxu0 %v700
  %879 = vmatpush.bf16.msra.mxu0 %v684
  %880 = vmatpush.bf16.msra.mxu0 %v668
  %881 = vmatpush.bf16.msra.mxu0 %v652
  %882 = vmatpush.bf16.msra.mxu0 %v636
  %883 = vmatpush.bf16.msra.mxu0 %v620
  %884 = vmatmul.bf16.gmra.mxu0 %v234
  %v885 = vpop.f32.mrf.mxu0
  %v886 = vadd.f32 %v223, %v885
  %v887 = vpop.f32.mrf.mxu0
  %v888 = vadd.f32 %v228, %v887
  %889 = vdwg.mxu0
  %890 = vmatpush.bf16.msra.mxu0 %v733
  %891 = vmatpush.bf16.msra.mxu0 %v717
  %892 = vmatpush.bf16.msra.mxu0 %v701
  %893 = vmatpush.bf16.msra.mxu0 %v685
  %894 = vmatpush.bf16.msra.mxu0 %v669
  %895 = vmatpush.bf16.msra.mxu0 %v653
  %896 = vmatpush.bf16.msra.mxu0 %v637
  %897 = vmatpush.bf16.msra.mxu0 %v621
  %898 = vmatmul.bf16.gmra.mxu0 %v234
  %v899 = vpop.f32.mrf.mxu0
  %v900 = vadd.f32 %v223, %v899
  %v901 = vpop.f32.mrf.mxu0
  %v902 = vadd.f32 %v228, %v901
  %903 = vdwg.mxu0
  %904 = vmatpush.bf16.msra.mxu0 %v734
  %905 = vmatpush.bf16.msra.mxu0 %v718
  %906 = vmatpush.bf16.msra.mxu0 %v702
  %907 = vmatpush.bf16.msra.mxu0 %v686
  %908 = vmatpush.bf16.msra.mxu0 %v670
  %909 = vmatpush.bf16.msra.mxu0 %v654
  %910 = vmatpush.bf16.msra.mxu0 %v638
  %911 = vmatpush.bf16.msra.mxu0 %v622
  %912 = vmatmul.bf16.gmra.mxu0 %v234
  %v913 = vpop.f32.mrf.mxu0
  %v914 = vadd.f32 %v223, %v913
  %v915 = vpop.f32.mrf.mxu0
  %v916 = vadd.f32 %v228, %v915
  %917 = vdwg.mxu0
  %918 = vmatpush.bf16.msra.mxu0 %v735
  %919 = vmatpush.bf16.msra.mxu0 %v719
  %920 = vmatpush.bf16.msra.mxu0 %v703
  %921 = vmatpush.bf16.msra.mxu0 %v687
  %922 = vmatpush.bf16.msra.mxu0 %v671
  %923 = vmatpush.bf16.msra.mxu0 %v655
  %924 = vmatpush.bf16.msra.mxu0 %v639
  %925 = vmatpush.bf16.msra.mxu0 %v623
  %926 = vmatmul.bf16.gmra.mxu0 %v234
  %v927 = vpop.f32.mrf.mxu0
  %v928 = vadd.f32 %v223, %v927
  %v929 = vpop.f32.mrf.mxu0
  %v930 = vadd.f32 %v228, %v929
  %931 = vdwg.mxu0
  %932 = vmatpush.bf16.msra.mxu0 %v736
  %933 = vmatpush.bf16.msra.mxu0 %v720
  %934 = vmatpush.bf16.msra.mxu0 %v704
  %935 = vmatpush.bf16.msra.mxu0 %v688
  %936 = vmatpush.bf16.msra.mxu0 %v672
  %937 = vmatpush.bf16.msra.mxu0 %v656
  %938 = vmatpush.bf16.msra.mxu0 %v640
  %939 = vmatpush.bf16.msra.mxu0 %v624
  %940 = vmatmul.bf16.gmra.mxu0 %v234
  %v941 = vpop.f32.mrf.mxu0
  %v942 = vadd.f32 %v223, %v941
  %v943 = vpop.f32.mrf.mxu0
  %v944 = vadd.f32 %v228, %v943
  %945 = vdwg.mxu0
  %946 = vmatpush.bf16.msra.mxu0 %v737
  %947 = vmatpush.bf16.msra.mxu0 %v721
  %948 = vmatpush.bf16.msra.mxu0 %v705
  %949 = vmatpush.bf16.msra.mxu0 %v689
  %950 = vmatpush.bf16.msra.mxu0 %v673
  %951 = vmatpush.bf16.msra.mxu0 %v657
  %952 = vmatpush.bf16.msra.mxu0 %v641
  %953 = vmatpush.bf16.msra.mxu0 %v625
  %954 = vmatmul.bf16.gmra.mxu0 %v234
  %v955 = vpop.f32.mrf.mxu0
  %v956 = vadd.f32 %v223, %v955
  %v957 = vpop.f32.mrf.mxu0
  %v958 = vadd.f32 %v228, %v957
  %959 = vdwg.mxu0
  %960 = vmatpush.bf16.msra.mxu0 %v738
  %961 = vmatpush.bf16.msra.mxu0 %v722
  %962 = vmatpush.bf16.msra.mxu0 %v706
  %963 = vmatpush.bf16.msra.mxu0 %v690
  %964 = vmatpush.bf16.msra.mxu0 %v674
  %965 = vmatpush.bf16.msra.mxu0 %v658
  %966 = vmatpush.bf16.msra.mxu0 %v642
  %967 = vmatpush.bf16.msra.mxu0 %v626
  %968 = vmatmul.bf16.gmra.mxu0 %v234
  %v969 = vpop.f32.mrf.mxu0
  %v970 = vadd.f32 %v223, %v969
  %v971 = vpop.f32.mrf.mxu0
  %v972 = vadd.f32 %v228, %v971
  %973 = vdwg.mxu0
  %974 = vmatpush.bf16.msra.mxu0 %v739
  %975 = vmatpush.bf16.msra.mxu0 %v723
  %976 = vmatpush.bf16.msra.mxu0 %v707
  %977 = vmatpush.bf16.msra.mxu0 %v691
  %978 = vmatpush.bf16.msra.mxu0 %v675
  %979 = vmatpush.bf16.msra.mxu0 %v659
  %980 = vmatpush.bf16.msra.mxu0 %v643
  %981 = vmatpush.bf16.msra.mxu0 %v627
  %982 = vmatmul.bf16.gmra.mxu0 %v234
  %v983 = vpop.f32.mrf.mxu0
  %v984 = vadd.f32 %v223, %v983
  %v985 = vpop.f32.mrf.mxu0
  %v986 = vadd.f32 %v228, %v985
  %987 = vdwg.mxu0
  %988 = vmatpush.bf16.msra.mxu0 %v740
  %989 = vmatpush.bf16.msra.mxu0 %v724
  %990 = vmatpush.bf16.msra.mxu0 %v708
  %991 = vmatpush.bf16.msra.mxu0 %v692
  %992 = vmatpush.bf16.msra.mxu0 %v676
  %993 = vmatpush.bf16.msra.mxu0 %v660
  %994 = vmatpush.bf16.msra.mxu0 %v644
  %995 = vmatpush.bf16.msra.mxu0 %v628
  %996 = vmatmul.bf16.gmra.mxu0 %v234
  %v997 = vpop.f32.mrf.mxu0
  %v998 = vadd.f32 %v223, %v997
  %v999 = vpop.f32.mrf.mxu0
  %v1000 = vadd.f32 %v228, %v999
  %1001 = vdwg.mxu0
  %1002 = vmatpush.bf16.msra.mxu0 %v741
  %1003 = vmatpush.bf16.msra.mxu0 %v725
  %1004 = vmatpush.bf16.msra.mxu0 %v709
  %1005 = vmatpush.bf16.msra.mxu0 %v693
  %1006 = vmatpush.bf16.msra.mxu0 %v677
  %1007 = vmatpush.bf16.msra.mxu0 %v661
  %1008 = vmatpush.bf16.msra.mxu0 %v645
  %1009 = vmatpush.bf16.msra.mxu0 %v629
  %1010 = vmatmul.bf16.gmra.mxu0 %v234
  %v1011 = vpop.f32.mrf.mxu0
  %v1012 = vadd.f32 %v223, %v1011
  %v1013 = vpop.f32.mrf.mxu0
  %v1014 = vadd.f32 %v228, %v1013
  %1015 = vdwg.mxu0
  %1016 = vmatpush.bf16.msra.mxu0 %v742
  %1017 = vmatpush.bf16.msra.mxu0 %v726
  %1018 = vmatpush.bf16.msra.mxu0 %v710
  %1019 = vmatpush.bf16.msra.mxu0 %v694
  %1020 = vmatpush.bf16.msra.mxu0 %v678
  %1021 = vmatpush.bf16.msra.mxu0 %v662
  %1022 = vmatpush.bf16.msra.mxu0 %v646
  %1023 = vmatpush.bf16.msra.mxu0 %v630
  %1024 = vmatmul.bf16.gmra.mxu0 %v234
  %v1025 = vpop.f32.mrf.mxu0
  %v1026 = vadd.f32 %v223, %v1025
  %v1027 = vpop.f32.mrf.mxu0
  %v1028 = vadd.f32 %v228, %v1027
  %1029 = vdwg.mxu0
  %1030 = vmatpush.bf16.msra.mxu0 %v743
  %1031 = vmatpush.bf16.msra.mxu0 %v727
  %1032 = vmatpush.bf16.msra.mxu0 %v711
  %1033 = vmatpush.bf16.msra.mxu0 %v695
  %1034 = vmatpush.bf16.msra.mxu0 %v679
  %1035 = vmatpush.bf16.msra.mxu0 %v663
  %1036 = vmatpush.bf16.msra.mxu0 %v647
  %1037 = vmatpush.bf16.msra.mxu0 %v631
  %1038 = vmatmul.bf16.gmra.mxu0 %v234
  %v1039 = vpop.f32.mrf.mxu0
  %v1040 = vadd.f32 %v223, %v1039
  %v1041 = vpop.f32.mrf.mxu0
  %v1042 = vadd.f32 %v228, %v1041
  %1043 = vdwg.mxu0
  %1044 = vmatpush.bf16.msra.mxu0 %v744
  %1045 = vmatpush.bf16.msra.mxu0 %v728
  %1046 = vmatpush.bf16.msra.mxu0 %v712
  %1047 = vmatpush.bf16.msra.mxu0 %v696
  %1048 = vmatpush.bf16.msra.mxu0 %v680
  %1049 = vmatpush.bf16.msra.mxu0 %v664
  %1050 = vmatpush.bf16.msra.mxu0 %v648
  %1051 = vmatpush.bf16.msra.mxu0 %v632
  %1052 = vmatmul.bf16.gmra.mxu0 %v234
  %v1053 = vpop.f32.mrf.mxu0
  %v1054 = vadd.f32 %v223, %v1053
  %v1055 = vpop.f32.mrf.mxu0
  %v1056 = vadd.f32 %v228, %v1055
  %1057 = vdwg.mxu0
  %1058 = vmatpush.bf16.msra.mxu0 %v745
  %1059 = vmatpush.bf16.msra.mxu0 %v729
  %1060 = vmatpush.bf16.msra.mxu0 %v713
  %1061 = vmatpush.bf16.msra.mxu0 %v697
  %1062 = vmatpush.bf16.msra.mxu0 %v681
  %1063 = vmatpush.bf16.msra.mxu0 %v665
  %1064 = vmatpush.bf16.msra.mxu0 %v649
  %1065 = vmatpush.bf16.msra.mxu0 %v633
  %1066 = vmatmul.bf16.gmra.mxu0 %v234
  %v1067 = vpop.f32.mrf.mxu0
  %v1068 = vadd.f32 %v223, %v1067
  %v1069 = vpop.f32.mrf.mxu0
  %v1070 = vadd.f32 %v228, %v1069
  %1071 = vdwg.mxu0
  %1072 = vmatpush.bf16.msra.mxu0 %v746
  %1073 = vmatpush.bf16.msra.mxu0 %v730
  %1074 = vmatpush.bf16.msra.mxu0 %v714
  %1075 = vmatpush.bf16.msra.mxu0 %v698
  %1076 = vmatpush.bf16.msra.mxu0 %v682
  %1077 = vmatpush.bf16.msra.mxu0 %v666
  %1078 = vmatpush.bf16.msra.mxu0 %v650
  %1079 = vmatpush.bf16.msra.mxu0 %v634
  %1080 = vmatmul.bf16.gmra.mxu0 %v234
  %v1081 = vpop.f32.mrf.mxu0
  %v1082 = vadd.f32 %v223, %v1081
  %v1083 = vpop.f32.mrf.mxu0
  %v1084 = vadd.f32 %v228, %v1083
  %1085 = vdwg.mxu0
  %1086 = vmatpush.bf16.msra.mxu0 %v747
  %1087 = vmatpush.bf16.msra.mxu0 %v731
  %1088 = vmatpush.bf16.msra.mxu0 %v715
  %1089 = vmatpush.bf16.msra.mxu0 %v699
  %1090 = vmatpush.bf16.msra.mxu0 %v683
  %1091 = vmatpush.bf16.msra.mxu0 %v667
  %1092 = vmatpush.bf16.msra.mxu0 %v651
  %1093 = vmatpush.bf16.msra.mxu0 %v635
  %1094 = vmatmul.bf16.gmra.mxu0 %v234
  %v1095 = vpop.f32.mrf.mxu0
  %v1096 = vadd.f32 %v223, %v1095
  %v1097 = vpop.f32.mrf.mxu0
  %v1098 = vadd.f32 %v228, %v1097
  %1099 = vdwg.mxu0
  %s1100 = smul.u32 0, 32
  %s1101 = smul.addr %s1100, 8
  %s1102 = scalar_lea.vmem [#allocation2], %s1101
  %1103 = vst [vmem:[%s1102] sm:$0xff] %v886
  %1104 = vst [vmem:[%s1102 + $0x8] sm:$0xff] %v900
  %1105 = vst [vmem:[%s1102 + $0x10] sm:$0xff] %v914
  %1106 = vst [vmem:[%s1102 + $0x18] sm:$0xff] %v928
  %1107 = vst [vmem:[%s1102 + $0x20] sm:$0xff] %v942
  %1108 = vst [vmem:[%s1102 + $0x28] sm:$0xff] %v956
  %1109 = vst [vmem:[%s1102 + $0x30] sm:$0xff] %v970
  %1110 = vst [vmem:[%s1102 + $0x38] sm:$0xff] %v984
  %1111 = vst [vmem:[%s1102 + $0x40] sm:$0xff] %v998
  %1112 = vst [vmem:[%s1102 + $0x48] sm:$0xff] %v1012
  %1113 = vst [vmem:[%s1102 + $0x50] sm:$0xff] %v1026
  %1114 = vst [vmem:[%s1102 + $0x58] sm:$0xff] %v1040
  %1115 = vst [vmem:[%s1102 + $0x60] sm:$0xff] %v1054
  %1116 = vst [vmem:[%s1102 + $0x68] sm:$0xff] %v1068
  %1117 = vst [vmem:[%s1102 + $0x70] sm:$0xff] %v1082
  %1118 = vst [vmem:[%s1102 + $0x78] sm:$0xff] %v1096
  %1119 = vst [vmem:[%s1102 + $0x80] sm:$0xff] %v888
  %1120 = vst [vmem:[%s1102 + $0x88] sm:$0xff] %v902
  %1121 = vst [vmem:[%s1102 + $0x90] sm:$0xff] %v916
  %1122 = vst [vmem:[%s1102 + $0x98] sm:$0xff] %v930
  %1123 = vst [vmem:[%s1102 + $0xa0] sm:$0xff] %v944
  %1124 = vst [vmem:[%s1102 + $0xa8] sm:$0xff] %v958
  %1125 = vst [vmem:[%s1102 + $0xb0] sm:$0xff] %v972
  %1126 = vst [vmem:[%s1102 + $0xb8] sm:$0xff] %v986
  %1127 = vst [vmem:[%s1102 + $0xc0] sm:$0xff] %v1000
  %1128 = vst [vmem:[%s1102 + $0xc8] sm:$0xff] %v1014
  %1129 = vst [vmem:[%s1102 + $0xd0] sm:$0xff] %v1028
  %1130 = vst [vmem:[%s1102 + $0xd8] sm:$0xff] %v1042
  %1131 = vst [vmem:[%s1102 + $0xe0] sm:$0xff] %v1056
  %1132 = vst [vmem:[%s1102 + $0xe8] sm:$0xff] %v1070
  %1133 = vst [vmem:[%s1102 + $0xf0] sm:$0xff] %v1084
  %1134 = vst [vmem:[%s1102 + $0xf8] sm:$0xff] %v1098
  %v1135 = vld [vmem:[%s1102] sm:$0xff]
  %v1136 = vld [vmem:[%s1102 + $0x8] sm:$0xff]
  %v1137 = vld [vmem:[%s1102 + $0x10] sm:$0xff]
  %v1138 = vld [vmem:[%s1102 + $0x18] sm:$0xff]
  %v1139 = vld [vmem:[%s1102 + $0x20] sm:$0xff]
  %v1140 = vld [vmem:[%s1102 + $0x28] sm:$0xff]
  %v1141 = vld [vmem:[%s1102 + $0x30] sm:$0xff]
  %v1142 = vld [vmem:[%s1102 + $0x38] sm:$0xff]
  %v1143 = vld [vmem:[%s1102 + $0x40] sm:$0xff]
  %v1144 = vld [vmem:[%s1102 + $0x48] sm:$0xff]
  %v1145 = vld [vmem:[%s1102 + $0x50] sm:$0xff]
  %v1146 = vld [vmem:[%s1102 + $0x58] sm:$0xff]
  %v1147 = vld [vmem:[%s1102 + $0x60] sm:$0xff]
  %v1148 = vld [vmem:[%s1102 + $0x68] sm:$0xff]
  %v1149 = vld [vmem:[%s1102 + $0x70] sm:$0xff]
  %v1150 = vld [vmem:[%s1102 + $0x78] sm:$0xff]
  %v1151 = vld [vmem:[%s1102 + $0x80] sm:$0xff]
  %v1152 = vld [vmem:[%s1102 + $0x88] sm:$0xff]
  %v1153 = vld [vmem:[%s1102 + $0x90] sm:$0xff]
  %v1154 = vld [vmem:[%s1102 + $0x98] sm:$0xff]
  %v1155 = vld [vmem:[%s1102 + $0xa0] sm:$0xff]
  %v1156 = vld [vmem:[%s1102 + $0xa8] sm:$0xff]
  %v1157 = vld [vmem:[%s1102 + $0xb0] sm:$0xff]
  %v1158 = vld [vmem:[%s1102 + $0xb8] sm:$0xff]
  %v1159 = vld [vmem:[%s1102 + $0xc0] sm:$0xff]
  %v1160 = vld [vmem:[%s1102 + $0xc8] sm:$0xff]
  %v1161 = vld [vmem:[%s1102 + $0xd0] sm:$0xff]
  %v1162 = vld [vmem:[%s1102 + $0xd8] sm:$0xff]
  %v1163 = vld [vmem:[%s1102 + $0xe0] sm:$0xff]
  %v1164 = vld [vmem:[%s1102 + $0xe8] sm:$0xff]
  %v1165 = vld [vmem:[%s1102 + $0xf0] sm:$0xff]
  %v1166 = vld [vmem:[%s1102 + $0xf8] sm:$0xff]
  %v1167 = vld [vmem:[#allocation3] sm:$0xff]
  %v1168 = vld [vmem:[#allocation3 + $0x8] sm:$0xff]
  %v1169 = vld [vmem:[#allocation3 + $0x10] sm:$0xff]
  %v1170 = vld [vmem:[#allocation3 + $0x18] sm:$0xff]
  %v1171 = vld [vmem:[#allocation3 + $0x20] sm:$0xff]
  %v1172 = vld [vmem:[#allocation3 + $0x28] sm:$0xff]
  %v1173 = vld [vmem:[#allocation3 + $0x30] sm:$0xff]
  %v1174 = vld [vmem:[#allocation3 + $0x38] sm:$0xff]
  %v1175 = vld [vmem:[#allocation3 + $0x40] sm:$0xff]
  %v1176 = vld [vmem:[#allocation3 + $0x48] sm:$0xff]
  %v1177 = vld [vmem:[#allocation3 + $0x50] sm:$0xff]
  %v1178 = vld [vmem:[#allocation3 + $0x58] sm:$0xff]
  %v1179 = vld [vmem:[#allocation3 + $0x60] sm:$0xff]
  %v1180 = vld [vmem:[#allocation3 + $0x68] sm:$0xff]
  %v1181 = vld [vmem:[#allocation3 + $0x70] sm:$0xff]
  %v1182 = vld [vmem:[#allocation3 + $0x78] sm:$0xff]
  %v1183 = vld [vmem:[#allocation3 + $0x80] sm:$0xff]
  %v1184 = vld [vmem:[#allocation3 + $0x88] sm:$0xff]
  %v1185 = vld [vmem:[#allocation3 + $0x90] sm:$0xff]
  %v1186 = vld [vmem:[#allocation3 + $0x98] sm:$0xff]
  %v1187 = vld [vmem:[#allocation3 + $0xa0] sm:$0xff]
  %v1188 = vld [vmem:[#allocation3 + $0xa8] sm:$0xff]
  %v1189 = vld [vmem:[#allocation3 + $0xb0] sm:$0xff]
  %v1190 = vld [vmem:[#allocation3 + $0xb8] sm:$0xff]
  %v1191 = vld [vmem:[#allocation3 + $0xc0] sm:$0xff]
  %v1192 = vld [vmem:[#allocation3 + $0xc8] sm:$0xff]
  %v1193 = vld [vmem:[#allocation3 + $0xd0] sm:$0xff]
  %v1194 = vld [vmem:[#allocation3 + $0xd8] sm:$0xff]
  %v1195 = vld [vmem:[#allocation3 + $0xe0] sm:$0xff]
  %v1196 = vld [vmem:[#allocation3 + $0xe8] sm:$0xff]
  %v1197 = vld [vmem:[#allocation3 + $0xf0] sm:$0xff]
  %v1198 = vld [vmem:[#allocation3 + $0xf8] sm:$0xff]
  %v1199 = vadd.f32 %v1167, %v1135
  %v1200 = vadd.f32 %v1168, %v1136
  %v1201 = vadd.f32 %v1169, %v1137
  %v1202 = vadd.f32 %v1170, %v1138
  %v1203 = vadd.f32 %v1171, %v1139
  %v1204 = vadd.f32 %v1172, %v1140
  %v1205 = vadd.f32 %v1173, %v1141
  %v1206 = vadd.f32 %v1174, %v1142
  %v1207 = vadd.f32 %v1175, %v1143
  %v1208 = vadd.f32 %v1176, %v1144
  %v1209 = vadd.f32 %v1177, %v1145
  %v1210 = vadd.f32 %v1178, %v1146
  %v1211 = vadd.f32 %v1179, %v1147
  %v1212 = vadd.f32 %v1180, %v1148
  %v1213 = vadd.f32 %v1181, %v1149
  %v1214 = vadd.f32 %v1182, %v1150
  %v1215 = vadd.f32 %v1183, %v1151
  %v1216 = vadd.f32 %v1184, %v1152
  %v1217 = vadd.f32 %v1185, %v1153
  %v1218 = vadd.f32 %v1186, %v1154
  %v1219 = vadd.f32 %v1187, %v1155
  %v1220 = vadd.f32 %v1188, %v1156
  %v1221 = vadd.f32 %v1189, %v1157
  %v1222 = vadd.f32 %v1190, %v1158
  %v1223 = vadd.f32 %v1191, %v1159
  %v1224 = vadd.f32 %v1192, %v1160
  %v1225 = vadd.f32 %v1193, %v1161
  %v1226 = vadd.f32 %v1194, %v1162
  %v1227 = vadd.f32 %v1195, %v1163
  %v1228 = vadd.f32 %v1196, %v1164
  %v1229 = vadd.f32 %v1197, %v1165
  %v1230 = vadd.f32 %v1198, %v1166
  %1231 = vst [vmem:[#allocation3] sm:$0xff] %v1199
  %1232 = vst [vmem:[#allocation3 + $0x8] sm:$0xff] %v1200
  %1233 = vst [vmem:[#allocation3 + $0x10] sm:$0xff] %v1201
  %1234 = vst [vmem:[#allocation3 + $0x18] sm:$0xff] %v1202
  %1235 = vst [vmem:[#allocation3 + $0x20] sm:$0xff] %v1203
  %1236 = vst [vmem:[#allocation3 + $0x28] sm:$0xff] %v1204
  %1237 = vst [vmem:[#allocation3 + $0x30] sm:$0xff] %v1205
  %1238 = vst [vmem:[#allocation3 + $0x38] sm:$0xff] %v1206
  %1239 = vst [vmem:[#allocation3 + $0x40] sm:$0xff] %v1207
  %1240 = vst [vmem:[#allocation3 + $0x48] sm:$0xff] %v1208
  %1241 = vst [vmem:[#allocation3 + $0x50] sm:$0xff] %v1209
  %1242 = vst [vmem:[#allocation3 + $0x58] sm:$0xff] %v1210
  %1243 = vst [vmem:[#allocation3 + $0x60] sm:$0xff] %v1211
  %1244 = vst [vmem:[#allocation3 + $0x68] sm:$0xff] %v1212
  %1245 = vst [vmem:[#allocation3 + $0x70] sm:$0xff] %v1213
  %1246 = vst [vmem:[#allocation3 + $0x78] sm:$0xff] %v1214
  %1247 = vst [vmem:[#allocation3 + $0x80] sm:$0xff] %v1215
  %1248 = vst [vmem:[#allocation3 + $0x88] sm:$0xff] %v1216
  %1249 = vst [vmem:[#allocation3 + $0x90] sm:$0xff] %v1217
  %1250 = vst [vmem:[#allocation3 + $0x98] sm:$0xff] %v1218
  %1251 = vst [vmem:[#allocation3 + $0xa0] sm:$0xff] %v1219
  %1252 = vst [vmem:[#allocation3 + $0xa8] sm:$0xff] %v1220
  %1253 = vst [vmem:[#allocation3 + $0xb0] sm:$0xff] %v1221
  %1254 = vst [vmem:[#allocation3 + $0xb8] sm:$0xff] %v1222
  %1255 = vst [vmem:[#allocation3 + $0xc0] sm:$0xff] %v1223
  %1256 = vst [vmem:[#allocation3 + $0xc8] sm:$0xff] %v1224
  %1257 = vst [vmem:[#allocation3 + $0xd0] sm:$0xff] %v1225
  %1258 = vst [vmem:[#allocation3 + $0xd8] sm:$0xff] %v1226
  %1259 = vst [vmem:[#allocation3 + $0xe0] sm:$0xff] %v1227
  %1260 = vst [vmem:[#allocation3 + $0xe8] sm:$0xff] %v1228
  %1261 = vst [vmem:[#allocation3 + $0xf0] sm:$0xff] %v1229
  %1262 = vst [vmem:[#allocation3 + $0xf8] sm:$0xff] %v1230
  %v1263 = vld [vmem:[#allocation4] sm:$0xff]
  %v1264 = vld [vmem:[#allocation4 + $0x8] sm:$0xff]
  %v1265 = vld [vmem:[#allocation4 + $0x10] sm:$0xff]
  %v1266 = vld [vmem:[#allocation4 + $0x18] sm:$0xff]
  %v1267 = vld [vmem:[#allocation4 + $0x20] sm:$0xff]
  %v1268 = vld [vmem:[#allocation4 + $0x28] sm:$0xff]
  %v1269 = vld [vmem:[#allocation4 + $0x30] sm:$0xff]
  %v1270 = vld [vmem:[#allocation4 + $0x38] sm:$0xff]
  %v1271 = vld [vmem:[#allocation4 + $0x40] sm:$0xff]
  %v1272 = vld [vmem:[#allocation4 + $0x48] sm:$0xff]
  %v1273 = vld [vmem:[#allocation4 + $0x50] sm:$0xff]
  %v1274 = vld [vmem:[#allocation4 + $0x58] sm:$0xff]
  %v1275 = vld [vmem:[#allocation4 + $0x60] sm:$0xff]
  %v1276 = vld [vmem:[#allocation4 + $0x68] sm:$0xff]
  %v1277 = vld [vmem:[#allocation4 + $0x70] sm:$0xff]
  %v1278 = vld [vmem:[#allocation4 + $0x78] sm:$0xff]
  %v1279 = vld [vmem:[#allocation4 + $0x80] sm:$0xff]
  %v1280 = vld [vmem:[#allocation4 + $0x88] sm:$0xff]
  %v1281 = vld [vmem:[#allocation4 + $0x90] sm:$0xff]
  %v1282 = vld [vmem:[#allocation4 + $0x98] sm:$0xff]
  %v1283 = vld [vmem:[#allocation4 + $0xa0] sm:$0xff]
  %v1284 = vld [vmem:[#allocation4 + $0xa8] sm:$0xff]
  %v1285 = vld [vmem:[#allocation4 + $0xb0] sm:$0xff]
  %v1286 = vld [vmem:[#allocation4 + $0xb8] sm:$0xff]
  %v1287 = vld [vmem:[#allocation4 + $0xc0] sm:$0xff]
  %v1288 = vld [vmem:[#allocation4 + $0xc8] sm:$0xff]
  %v1289 = vld [vmem:[#allocation4 + $0xd0] sm:$0xff]
  %v1290 = vld [vmem:[#allocation4 + $0xd8] sm:$0xff]
  %v1291 = vld [vmem:[#allocation4 + $0xe0] sm:$0xff]
  %v1292 = vld [vmem:[#allocation4 + $0xe8] sm:$0xff]
  %v1293 = vld [vmem:[#allocation4 + $0xf0] sm:$0xff]
  %v1294 = vld [vmem:[#allocation4 + $0xf8] sm:$0xff]
  %v1295 = vmul.f32 %v1135, %v1135
  %v1296 = vmul.f32 %v1136, %v1136
  %v1297 = vmul.f32 %v1137, %v1137
  %v1298 = vmul.f32 %v1138, %v1138
  %v1299 = vmul.f32 %v1139, %v1139
  %v1300 = vmul.f32 %v1140, %v1140
  %v1301 = vmul.f32 %v1141, %v1141
  %v1302 = vmul.f32 %v1142, %v1142
  %v1303 = vmul.f32 %v1143, %v1143
  %v1304 = vmul.f32 %v1144, %v1144
  %v1305 = vmul.f32 %v1145, %v1145
  %v1306 = vmul.f32 %v1146, %v1146
  %v1307 = vmul.f32 %v1147, %v1147
  %v1308 = vmul.f32 %v1148, %v1148
  %v1309 = vmul.f32 %v1149, %v1149
  %v1310 = vmul.f32 %v1150, %v1150
  %v1311 = vmul.f32 %v1151, %v1151
  %v1312 = vmul.f32 %v1152, %v1152
  %v1313 = vmul.f32 %v1153, %v1153
  %v1314 = vmul.f32 %v1154, %v1154
  %v1315 = vmul.f32 %v1155, %v1155
  %v1316 = vmul.f32 %v1156, %v1156
  %v1317 = vmul.f32 %v1157, %v1157
  %v1318 = vmul.f32 %v1158, %v1158
  %v1319 = vmul.f32 %v1159, %v1159
  %v1320 = vmul.f32 %v1160, %v1160
  %v1321 = vmul.f32 %v1161, %v1161
  %v1322 = vmul.f32 %v1162, %v1162
  %v1323 = vmul.f32 %v1163, %v1163
  %v1324 = vmul.f32 %v1164, %v1164
  %v1325 = vmul.f32 %v1165, %v1165
  %v1326 = vmul.f32 %v1166, %v1166
  %v1327 = vadd.f32 %v1263, %v1295
  %v1328 = vadd.f32 %v1264, %v1296
  %v1329 = vadd.f32 %v1265, %v1297
  %v1330 = vadd.f32 %v1266, %v1298
  %v1331 = vadd.f32 %v1267, %v1299
  %v1332 = vadd.f32 %v1268, %v1300
  %v1333 = vadd.f32 %v1269, %v1301
  %v1334 = vadd.f32 %v1270, %v1302
  %v1335 = vadd.f32 %v1271, %v1303
  %v1336 = vadd.f32 %v1272, %v1304
  %v1337 = vadd.f32 %v1273, %v1305
  %v1338 = vadd.f32 %v1274, %v1306
  %v1339 = vadd.f32 %v1275, %v1307
  %v1340 = vadd.f32 %v1276, %v1308
  %v1341 = vadd.f32 %v1277, %v1309
  %v1342 = vadd.f32 %v1278, %v1310
  %v1343 = vadd.f32 %v1279, %v1311
  %v1344 = vadd.f32 %v1280, %v1312
  %v1345 = vadd.f32 %v1281, %v1313
  %v1346 = vadd.f32 %v1282, %v1314
  %v1347 = vadd.f32 %v1283, %v1315
  %v1348 = vadd.f32 %v1284, %v1316
  %v1349 = vadd.f32 %v1285, %v1317
  %v1350 = vadd.f32 %v1286, %v1318
  %v1351 = vadd.f32 %v1287, %v1319
  %v1352 = vadd.f32 %v1288, %v1320
  %v1353 = vadd.f32 %v1289, %v1321
  %v1354 = vadd.f32 %v1290, %v1322
  %v1355 = vadd.f32 %v1291, %v1323
  %v1356 = vadd.f32 %v1292, %v1324
  %v1357 = vadd.f32 %v1293, %v1325
  %v1358 = vadd.f32 %v1294, %v1326
  %1359 = vst [vmem:[#allocation4] sm:$0xff] %v1327
  %1360 = vst [vmem:[#allocation4 + $0x8] sm:$0xff] %v1328
  %1361 = vst [vmem:[#allocation4 + $0x10] sm:$0xff] %v1329
  %1362 = vst [vmem:[#allocation4 + $0x18] sm:$0xff] %v1330
  %1363 = vst [vmem:[#allocation4 + $0x20] sm:$0xff] %v1331
  %1364 = vst [vmem:[#allocation4 + $0x28] sm:$0xff] %v1332
  %1365 = vst [vmem:[#allocation4 + $0x30] sm:$0xff] %v1333
  %1366 = vst [vmem:[#allocation4 + $0x38] sm:$0xff] %v1334
  %1367 = vst [vmem:[#allocation4 + $0x40] sm:$0xff] %v1335
  %1368 = vst [vmem:[#allocation4 + $0x48] sm:$0xff] %v1336
  %1369 = vst [vmem:[#allocation4 + $0x50] sm:$0xff] %v1337
  %1370 = vst [vmem:[#allocation4 + $0x58] sm:$0xff] %v1338
  %1371 = vst [vmem:[#allocation4 + $0x60] sm:$0xff] %v1339
  %1372 = vst [vmem:[#allocation4 + $0x68] sm:$0xff] %v1340
  %1373 = vst [vmem:[#allocation4 + $0x70] sm:$0xff] %v1341
  %1374 = vst [vmem:[#allocation4 + $0x78] sm:$0xff] %v1342
  %1375 = vst [vmem:[#allocation4 + $0x80] sm:$0xff] %v1343
  %1376 = vst [vmem:[#allocation4 + $0x88] sm:$0xff] %v1344
  %1377 = vst [vmem:[#allocation4 + $0x90] sm:$0xff] %v1345
  %1378 = vst [vmem:[#allocation4 + $0x98] sm:$0xff] %v1346
  %1379 = vst [vmem:[#allocation4 + $0xa0] sm:$0xff] %v1347
  %1380 = vst [vmem:[#allocation4 + $0xa8] sm:$0xff] %v1348
  %1381 = vst [vmem:[#allocation4 + $0xb0] sm:$0xff] %v1349
  %1382 = vst [vmem:[#allocation4 + $0xb8] sm:$0xff] %v1350
  %1383 = vst [vmem:[#allocation4 + $0xc0] sm:$0xff] %v1351
  %1384 = vst [vmem:[#allocation4 + $0xc8] sm:$0xff] %v1352
  %1385 = vst [vmem:[#allocation4 + $0xd0] sm:$0xff] %v1353
  %1386 = vst [vmem:[#allocation4 + $0xd8] sm:$0xff] %v1354
  %1387 = vst [vmem:[#allocation4 + $0xe0] sm:$0xff] %v1355
  %1388 = vst [vmem:[#allocation4 + $0xe8] sm:$0xff] %v1356
  %1389 = vst [vmem:[#allocation4 + $0xf0] sm:$0xff] %v1357
  %1390 = vst [vmem:[#allocation4 + $0xf8] sm:$0xff] %v1358
  // Predicated region
  $region26: #{discriminator_forward.4} parent=0 // pred_check
    %p1391 = pneg %p20
  $region27: #{discriminator_forward.4} parent=0 // pred_check_branch
    %1393 = sbr.rel (%p1391) target = $region29
  $region28: #{discriminator_forward.4} parent=0 // pred_region
    %v1394 = vld [vmem:[#allocation3] sm:$0xff]
    %v1395 = vld [vmem:[#allocation3 + $0x8] sm:$0xff]
    %v1396 = vld [vmem:[#allocation3 + $0x10] sm:$0xff]
    %v1397 = vld [vmem:[#allocation3 + $0x18] sm:$0xff]
    %v1398 = vld [vmem:[#allocation3 + $0x20] sm:$0xff]
    %v1399 = vld [vmem:[#allocation3 + $0x28] sm:$0xff]
    %v1400 = vld [vmem:[#allocation3 + $0x30] sm:$0xff]
    %v1401 = vld [vmem:[#allocation3 + $0x38] sm:$0xff]
    %v1402 = vld [vmem:[#allocation3 + $0x40] sm:$0xff]
    %v1403 = vld [vmem:[#allocation3 + $0x48] sm:$0xff]
    %v1404 = vld [vmem:[#allocation3 + $0x50] sm:$0xff]
    %v1405 = vld [vmem:[#allocation3 + $0x58] sm:$0xff]
    %v1406 = vld [vmem:[#allocation3 + $0x60] sm:$0xff]
    %v1407 = vld [vmem:[#allocation3 + $0x68] sm:$0xff]
    %v1408 = vld [vmem:[#allocation3 + $0x70] sm:$0xff]
    %v1409 = vld [vmem:[#allocation3 + $0x78] sm:$0xff]
    %v1410 = vld [vmem:[#allocation3 + $0x80] sm:$0xff]
    %v1411 = vld [vmem:[#allocation3 + $0x88] sm:$0xff]
    %v1412 = vld [vmem:[#allocation3 + $0x90] sm:$0xff]
    %v1413 = vld [vmem:[#allocation3 + $0x98] sm:$0xff]
    %v1414 = vld [vmem:[#allocation3 + $0xa0] sm:$0xff]
    %v1415 = vld [vmem:[#allocation3 + $0xa8] sm:$0xff]
    %v1416 = vld [vmem:[#allocation3 + $0xb0] sm:$0xff]
    %v1417 = vld [vmem:[#allocation3 + $0xb8] sm:$0xff]
    %v1418 = vld [vmem:[#allocation3 + $0xc0] sm:$0xff]
    %v1419 = vld [vmem:[#allocation3 + $0xc8] sm:$0xff]
    %v1420 = vld [vmem:[#allocation3 + $0xd0] sm:$0xff]
    %v1421 = vld [vmem:[#allocation3 + $0xd8] sm:$0xff]
    %v1422 = vld [vmem:[#allocation3 + $0xe0] sm:$0xff]
    %v1423 = vld [vmem:[#allocation3 + $0xe8] sm:$0xff]
    %v1424 = vld [vmem:[#allocation3 + $0xf0] sm:$0xff]
    %v1425 = vld [vmem:[#allocation3 + $0xf8] sm:$0xff]
    %v1426 = vadd.f32 %v1394, %v1395
    %v1427 = vadd.f32 %v1426, %v1396
    %v1428 = vadd.f32 %v1427, %v1397
    %v1429 = vadd.f32 %v1428, %v1398
    %v1430 = vadd.f32 %v1429, %v1399
    %v1431 = vadd.f32 %v1430, %v1400
    %v1432 = vadd.f32 %v1431, %v1401
    %v1433 = vadd.f32 %v1432, %v1402
    %v1434 = vadd.f32 %v1433, %v1403
    %v1435 = vadd.f32 %v1434, %v1404
    %v1436 = vadd.f32 %v1435, %v1405
    %v1437 = vadd.f32 %v1436, %v1406
    %v1438 = vadd.f32 %v1437, %v1407
    %v1439 = vadd.f32 %v1438, %v1408
    %v1440 = vadd.f32 %v1439, %v1409
    %1441 = vadd.xlane.f32.xlu0 %v1440
    %v1442 = vpop.xlane.xlu0 %1441
    %v1443 = vadd.f32 %v1410, %v1411
    %v1444 = vadd.f32 %v1443, %v1412
    %v1445 = vadd.f32 %v1444, %v1413
    %v1446 = vadd.f32 %v1445, %v1414
    %v1447 = vadd.f32 %v1446, %v1415
    %v1448 = vadd.f32 %v1447, %v1416
    %v1449 = vadd.f32 %v1448, %v1417
    %v1450 = vadd.f32 %v1449, %v1418
    %v1451 = vadd.f32 %v1450, %v1419
    %v1452 = vadd.f32 %v1451, %v1420
    %v1453 = vadd.f32 %v1452, %v1421
    %v1454 = vadd.f32 %v1453, %v1422
    %v1455 = vadd.f32 %v1454, %v1423
    %v1456 = vadd.f32 %v1455, %v1424
    %v1457 = vadd.f32 %v1456, %v1425
    %1458 = vadd.xlane.f32.xlu0 %v1457
    %v1459 = vpop.xlane.xlu0 %1458
    %v1460 = vld [vmem:[#allocation4] sm:$0xff]
    %v1461 = vld [vmem:[#allocation4 + $0x8] sm:$0xff]
    %v1462 = vld [vmem:[#allocation4 + $0x10] sm:$0xff]
    %v1463 = vld [vmem:[#allocation4 + $0x18] sm:$0xff]
    %v1464 = vld [vmem:[#allocation4 + $0x20] sm:$0xff]
    %v1465 = vld [vmem:[#allocation4 + $0x28] sm:$0xff]
    %v1466 = vld [vmem:[#allocation4 + $0x30] sm:$0xff]
    %v1467 = vld [vmem:[#allocation4 + $0x38] sm:$0xff]
    %v1468 = vld [vmem:[#allocation4 + $0x40] sm:$0xff]
    %v1469 = vld [vmem:[#allocation4 + $0x48] sm:$0xff]
    %v1470 = vld [vmem:[#allocation4 + $0x50] sm:$0xff]
    %v1471 = vld [vmem:[#allocation4 + $0x58] sm:$0xff]
    %v1472 = vld [vmem:[#allocation4 + $0x60] sm:$0xff]
    %v1473 = vld [vmem:[#allocation4 + $0x68] sm:$0xff]
    %v1474 = vld [vmem:[#allocation4 + $0x70] sm:$0xff]
    %v1475 = vld [vmem:[#allocation4 + $0x78] sm:$0xff]
    %v1476 = vld [vmem:[#allocation4 + $0x80] sm:$0xff]
    %v1477 = vld [vmem:[#allocation4 + $0x88] sm:$0xff]
    %v1478 = vld [vmem:[#allocation4 + $0x90] sm:$0xff]
    %v1479 = vld [vmem:[#allocation4 + $0x98] sm:$0xff]
    %v1480 = vld [vmem:[#allocation4 + $0xa0] sm:$0xff]
    %v1481 = vld [vmem:[#allocation4 + $0xa8] sm:$0xff]
    %v1482 = vld [vmem:[#allocation4 + $0xb0] sm:$0xff]
    %v1483 = vld [vmem:[#allocation4 + $0xb8] sm:$0xff]
    %v1484 = vld [vmem:[#allocation4 + $0xc0] sm:$0xff]
    %v1485 = vld [vmem:[#allocation4 + $0xc8] sm:$0xff]
    %v1486 = vld [vmem:[#allocation4 + $0xd0] sm:$0xff]
    %v1487 = vld [vmem:[#allocation4 + $0xd8] sm:$0xff]
    %v1488 = vld [vmem:[#allocation4 + $0xe0] sm:$0xff]
    %v1489 = vld [vmem:[#allocation4 + $0xe8] sm:$0xff]
    %v1490 = vld [vmem:[#allocation4 + $0xf0] sm:$0xff]
    %v1491 = vld [vmem:[#allocation4 + $0xf8] sm:$0xff]
    %v1492 = vadd.f32 %v1460, %v1461
    %v1493 = vadd.f32 %v1492, %v1462
    %v1494 = vadd.f32 %v1493, %v1463
    %v1495 = vadd.f32 %v1494, %v1464
    %v1496 = vadd.f32 %v1495, %v1465
    %v1497 = vadd.f32 %v1496, %v1466
    %v1498 = vadd.f32 %v1497, %v1467
    %v1499 = vadd.f32 %v1498, %v1468
    %v1500 = vadd.f32 %v1499, %v1469
    %v1501 = vadd.f32 %v1500, %v1470
    %v1502 = vadd.f32 %v1501, %v1471
    %v1503 = vadd.f32 %v1502, %v1472
    %v1504 = vadd.f32 %v1503, %v1473
    %v1505 = vadd.f32 %v1504, %v1474
    %v1506 = vadd.f32 %v1505, %v1475
    %1507 = vadd.xlane.f32.xlu0 %v1506
    %v1508 = vpop.xlane.xlu0 %1507
    %v1509 = vadd.f32 %v1476, %v1477
    %v1510 = vadd.f32 %v1509, %v1478
    %v1511 = vadd.f32 %v1510, %v1479
    %v1512 = vadd.f32 %v1511, %v1480
    %v1513 = vadd.f32 %v1512, %v1481
    %v1514 = vadd.f32 %v1513, %v1482
    %v1515 = vadd.f32 %v1514, %v1483
    %v1516 = vadd.f32 %v1515, %v1484
    %v1517 = vadd.f32 %v1516, %v1485
    %v1518 = vadd.f32 %v1517, %v1486
    %v1519 = vadd.f32 %v1518, %v1487
    %v1520 = vadd.f32 %v1519, %v1488
    %v1521 = vadd.f32 %v1520, %v1489
    %v1522 = vadd.f32 %v1521, %v1490
    %v1523 = vadd.f32 %v1522, %v1491
    %1524 = vadd.xlane.f32.xlu0 %v1523
    %v1525 = vpop.xlane.xlu0 %1524
    %v1526 = vmul.f32 %v1442, 0.00048828125
    %v1527 = vmul.f32 %v1459, 0.00048828125
    %v1528 = vmul.f32 %v1508, 0.00048828125
    %v1529 = vmul.f32 %v1525, 0.00048828125
    %v1530 = vmul.f32 %v1526, %v1526
    %v1531 = vmul.f32 %v1527, %v1527
    %v1532 = vsub.f32 %v1528, %v1530
    %v1533 = vsub.f32 %v1529, %v1531
    %v1534 = vld [vmem:[%s3] sm:$0xff]
    %v1535 = vld [vmem:[%s3 + $0x8] sm:$0xff]
    %v1536 = vadd.f32 %v1532, 1e-05
    %v1537 = vadd.f32 %v1533, 1e-05
    %v1538 = vrsqrt.pop %v1536
    %v1539 = vmul.f32 %v1538, %v1536
    %v1540 = vmul.f32 %v1539, %v1538
    %v1541 = vmul.f32 0.5, %v1540
    %v1542 = vsub.f32 1.5, %v1541
    %v1543 = vmul.f32 %v1538, %v1542
    %vm1544 = vweird.f32 %v1536
    %vm1545 = vweird.f32 %v1538
    %vm1546 = vmor %vm1544, %vm1545
    %v1547 = vsel %vm1546, %v1538, %v1543
    %v1548 = vrsqrt.pop %v1537
    %v1549 = vmul.f32 %v1548, %v1537
    %v1550 = vmul.f32 %v1549, %v1548
    %v1551 = vmul.f32 0.5, %v1550
    %v1552 = vsub.f32 1.5, %v1551
    %v1553 = vmul.f32 %v1548, %v1552
    %vm1554 = vweird.f32 %v1537
    %vm1555 = vweird.f32 %v1548
    %vm1556 = vmor %vm1554, %vm1555
    %v1557 = vsel %vm1556, %v1548, %v1553
    %v1558 = vmul.f32 %v1534, %v1547
    %v1559 = vmul.f32 %v1535, %v1557
    %v1560 = vld [vmem:[%s4] sm:$0xff]
    %v1561 = vld [vmem:[%s4 + $0x8] sm:$0xff]
    %v1562 = vmul.f32 %v1526, %v1558
    %v1563 = vmul.f32 %v1527, %v1559
    %v1564 = vsub.f32 %v1560, %v1562
    %v1565 = vsub.f32 %v1561, %v1563
    %v1566 = vld [vmem:[#allocation2] sm:$0xff]
    %v1567 = vld [vmem:[#allocation2 + $0x8] sm:$0xff]
    %v1568 = vld [vmem:[#allocation2 + $0x10] sm:$0xff]
    %v1569 = vld [vmem:[#allocation2 + $0x18] sm:$0xff]
    %v1570 = vld [vmem:[#allocation2 + $0x80] sm:$0xff]
    %v1571 = vld [vmem:[#allocation2 + $0x88] sm:$0xff]
    %v1572 = vld [vmem:[#allocation2 + $0x90] sm:$0xff]
    %v1573 = vld [vmem:[#allocation2 + $0x98] sm:$0xff]
    %1575 = vset.pattern.permute.xlu0 0
    %1576 = vperm.xlu0 %1575, %v1558
    %v1577 = vpop.permute.xlu0 %1576
    %1580 = vset.pattern.permute.xlu0 0
    %1581 = vperm.xlu0 %1580, %v1559
    %v1582 = vpop.permute.xlu0 %1581
    %v1584 = vmul.f32 %v1566, %v1577
    %v1585 = vmul.f32 %v1567, %v1577
    %v1586 = vmul.f32 %v1568, %v1577
    %v1587 = vmul.f32 %v1569, %v1577
    %v1588 = vmul.f32 %v1570, %v1582
    %v1589 = vmul.f32 %v1571, %v1582
    %v1590 = vmul.f32 %v1572, %v1582
    %v1591 = vmul.f32 %v1573, %v1582
    %1593 = vset.pattern.permute.xlu0 0
    %1594 = vperm.xlu0 %1593, %v1564
    %v1595 = vpop.permute.xlu0 %1594
    %1598 = vset.pattern.permute.xlu0 0
    %1599 = vperm.xlu0 %1598, %v1565
    %v1600 = vpop.permute.xlu0 %1599
    %v1602 = vadd.f32 %v1584, %v1595
    %v1603 = vadd.f32 %v1585, %v1595
    %v1604 = vadd.f32 %v1586, %v1595
    %v1605 = vadd.f32 %v1587, %v1595
    %v1606 = vadd.f32 %v1588, %v1600
    %v1607 = vadd.f32 %v1589, %v1600
    %v1608 = vadd.f32 %v1590, %v1600
    %v1609 = vadd.f32 %v1591, %v1600
    %v1610 = vmax.f32 %v1602, 0.0
    %v1611 = vmax.f32 %v1603, 0.0
    %v1612 = vmax.f32 %v1604, 0.0
    %v1613 = vmax.f32 %v1605, 0.0
    %v1614 = vmax.f32 %v1606, 0.0
    %v1615 = vmax.f32 %v1607, 0.0
    %v1616 = vmax.f32 %v1608, 0.0
    %v1617 = vmax.f32 %v1609, 0.0
    %v1618 = vld [vmem:[#allocation2 + $0x20] sm:$0xff]
    %v1619 = vld [vmem:[#allocation2 + $0x28] sm:$0xff]
    %v1620 = vld [vmem:[#allocation2 + $0x30] sm:$0xff]
    %v1621 = vld [vmem:[#allocation2 + $0x38] sm:$0xff]
    %v1622 = vld [vmem:[#allocation2 + $0xa0] sm:$0xff]
    %v1623 = vld [vmem:[#allocation2 + $0xa8] sm:$0xff]
    %v1624 = vld [vmem:[#allocation2 + $0xb0] sm:$0xff]
    %v1625 = vld [vmem:[#allocation2 + $0xb8] sm:$0xff]
    %v1626 = vmul.f32 %v1618, %v1577
    %v1627 = vmul.f32 %v1619, %v1577
    %v1628 = vmul.f32 %v1620, %v1577
    %v1629 = vmul.f32 %v1621, %v1577
    %v1630 = vmul.f32 %v1622, %v1582
    %v1631 = vmul.f32 %v1623, %v1582
    %v1632 = vmul.f32 %v1624, %v1582
    %v1633 = vmul.f32 %v1625, %v1582
    %v1634 = vadd.f32 %v1626, %v1595
    %v1635 = vadd.f32 %v1627, %v1595
    %v1636 = vadd.f32 %v1628, %v1595
    %v1637 = vadd.f32 %v1629, %v1595
    %v1638 = vadd.f32 %v1630, %v1600
    %v1639 = vadd.f32 %v1631, %v1600
    %v1640 = vadd.f32 %v1632, %v1600
    %v1641 = vadd.f32 %v1633, %v1600
    %v1642 = vmax.f32 %v1634, 0.0
    %v1643 = vmax.f32 %v1635, 0.0
    %v1644 = vmax.f32 %v1636, 0.0
    %v1645 = vmax.f32 %v1637, 0.0
    %v1646 = vmax.f32 %v1638, 0.0
    %v1647 = vmax.f32 %v1639, 0.0
    %v1648 = vmax.f32 %v1640, 0.0
    %v1649 = vmax.f32 %v1641, 0.0
    %v1650 = vmax.f32 %v1610, %v1642
    %v1651 = vmax.f32 %v1611, %v1643
    %v1652 = vmax.f32 %v1612, %v1644
    %v1653 = vmax.f32 %v1613, %v1645
    %v1654 = vmax.f32 %v1614, %v1646
    %v1655 = vmax.f32 %v1615, %v1647
    %v1656 = vmax.f32 %v1616, %v1648
    %v1657 = vmax.f32 %v1617, %v1649
    %v1658 = vld [vmem:[#allocation2 + $0x40] sm:$0xff]
    %v1659 = vld [vmem:[#allocation2 + $0x48] sm:$0xff]
    %v1660 = vld [vmem:[#allocation2 + $0x50] sm:$0xff]
    %v1661 = vld [vmem:[#allocation2 + $0x58] sm:$0xff]
    %v1662 = vld [vmem:[#allocation2 + $0xc0] sm:$0xff]
    %v1663 = vld [vmem:[#allocation2 + $0xc8] sm:$0xff]
    %v1664 = vld [vmem:[#allocation2 + $0xd0] sm:$0xff]
    %v1665 = vld [vmem:[#allocation2 + $0xd8] sm:$0xff]
    %v1666 = vmul.f32 %v1658, %v1577
    %v1667 = vmul.f32 %v1659, %v1577
    %v1668 = vmul.f32 %v1660, %v1577
    %v1669 = vmul.f32 %v1661, %v1577
    %v1670 = vmul.f32 %v1662, %v1582
    %v1671 = vmul.f32 %v1663, %v1582
    %v1672 = vmul.f32 %v1664, %v1582
    %v1673 = vmul.f32 %v1665, %v1582
    %v1674 = vadd.f32 %v1666, %v1595
    %v1675 = vadd.f32 %v1667, %v1595
    %v1676 = vadd.f32 %v1668, %v1595
    %v1677 = vadd.f32 %v1669, %v1595
    %v1678 = vadd.f32 %v1670, %v1600
    %v1679 = vadd.f32 %v1671, %v1600
    %v1680 = vadd.f32 %v1672, %v1600
    %v1681 = vadd.f32 %v1673, %v1600
    %v1682 = vmax.f32 %v1674, 0.0
    %v1683 = vmax.f32 %v1675, 0.0
    %v1684 = vmax.f32 %v1676, 0.0
    %v1685 = vmax.f32 %v1677, 0.0
    %v1686 = vmax.f32 %v1678, 0.0
    %v1687 = vmax.f32 %v1679, 0.0
    %v1688 = vmax.f32 %v1680, 0.0
    %v1689 = vmax.f32 %v1681, 0.0
    %v1690 = vmax.f32 %v1650, %v1682
    %v1691 = vmax.f32 %v1651, %v1683
    %v1692 = vmax.f32 %v1652, %v1684
    %v1693 = vmax.f32 %v1653, %v1685
    %v1694 = vmax.f32 %v1654, %v1686
    %v1695 = vmax.f32 %v1655, %v1687
    %v1696 = vmax.f32 %v1656, %v1688
    %v1697 = vmax.f32 %v1657, %v1689
    %v1698 = vld [vmem:[#allocation2 + $0x60] sm:$0xff]
    %v1699 = vld [vmem:[#allocation2 + $0x68] sm:$0xff]
    %v1700 = vld [vmem:[#allocation2 + $0x70] sm:$0xff]
    %v1701 = vld [vmem:[#allocation2 + $0x78] sm:$0xff]
    %v1702 = vld [vmem:[#allocation2 + $0xe0] sm:$0xff]
    %v1703 = vld [vmem:[#allocation2 + $0xe8] sm:$0xff]
    %v1704 = vld [vmem:[#allocation2 + $0xf0] sm:$0xff]
    %v1705 = vld [vmem:[#allocation2 + $0xf8] sm:$0xff]
    %v1706 = vmul.f32 %v1698, %v1577
    %v1707 = vmul.f32 %v1699, %v1577
    %v1708 = vmul.f32 %v1700, %v1577
    %v1709 = vmul.f32 %v1701, %v1577
    %v1710 = vmul.f32 %v1702, %v1582
    %v1711 = vmul.f32 %v1703, %v1582
    %v1712 = vmul.f32 %v1704, %v1582
    %v1713 = vmul.f32 %v1705, %v1582
    %v1714 = vadd.f32 %v1706, %v1595
    %v1715 = vadd.f32 %v1707, %v1595
    %v1716 = vadd.f32 %v1708, %v1595
    %v1717 = vadd.f32 %v1709, %v1595
    %v1718 = vadd.f32 %v1710, %v1600
    %v1719 = vadd.f32 %v1711, %v1600
    %v1720 = vadd.f32 %v1712, %v1600
    %v1721 = vadd.f32 %v1713, %v1600
    %v1722 = vmax.f32 %v1714, 0.0
    %v1723 = vmax.f32 %v1715, 0.0
    %v1724 = vmax.f32 %v1716, 0.0
    %v1725 = vmax.f32 %v1717, 0.0
    %v1726 = vmax.f32 %v1718, 0.0
    %v1727 = vmax.f32 %v1719, 0.0
    %v1728 = vmax.f32 %v1720, 0.0
    %v1729 = vmax.f32 %v1721, 0.0
    %v1730 = vmax.f32 %v1690, %v1722
    %v1731 = vmax.f32 %v1691, %v1723
    %v1732 = vmax.f32 %v1692, %v1724
    %v1733 = vmax.f32 %v1693, %v1725
    %v1734 = vmax.f32 %v1694, %v1726
    %v1735 = vmax.f32 %v1695, %v1727
    %v1736 = vmax.f32 %v1696, %v1728
    %v1737 = vmax.f32 %v1697, %v1729
    %1738 = vst [vmem:[%s5] sm:$0xff] %v1730
    %1739 = vst [vmem:[%s5 + $0x8] sm:$0xff] %v1731
    %1740 = vst [vmem:[%s5 + $0x10] sm:$0xff] %v1732
    %1741 = vst [vmem:[%s5 + $0x18] sm:$0xff] %v1733
    %1742 = vst [vmem:[%s5 + $0x20] sm:$0xff] %v1734
    %1743 = vst [vmem:[%s5 + $0x28] sm:$0xff] %v1735
    %1744 = vst [vmem:[%s5 + $0x30] sm:$0xff] %v1736
    %1745 = vst [vmem:[%s5 + $0x38] sm:$0xff] %v1737
  $region29: #{discriminator_forward.4} parent=0 // pred_fallthru
    _
  // Predicated region
  $region30: #{discriminator_forward.4} parent=0 // pred_check
    _
  $region31: #{discriminator_forward.4} parent=0 // pred_check_branch
    %1747 = sbr.rel (0) target = $region33
  $region32: #{discriminator_forward.4} parent=0 // pred_region
    _
  $region33: #{discriminator_forward.4} parent=0 // pred_fallthru
    _
  // Predicated region
  $region34: #{discriminator_forward.4} parent=0 // pred_check
    _
  $region35: #{discriminator_forward.4} parent=0 // pred_check_branch
    %1749 = sbr.rel (0) target = $region37
  $region36: #{discriminator_forward.4} parent=0 // pred_region
    _
  $region37: #{discriminator_forward.4} parent=0 // pred_fallthru
    _

// kernel: discriminator_forward.5
$region0: #{discriminator_forward.5}
  #allocation0 [shape = 'u32[]', space=smem, size = 0x4, offset = 0x4, fixed_abs, tag = 'smem constant byte address 0x4 - core index']
  #allocation1 [shape = 'u32[72,128]{1,0:T(1,128)}', space=vmem, size = 0x9000, scoped, tag = 'internal scratch']
  #allocation2 [shape = 'f32[1,32,128]{2,1,0:T(8,128)}', space=vmem, size = 0x4000, scoped, tag = 'scratch operand']
  #allocation3 [shape = 'f32[32,128]{1,0:T(8,128)}', space=vmem, size = 0x4000, scoped, tag = 'scratch operand']
  #allocation4 [shape = 'f32[32,128]{1,0:T(8,128)}', space=vmem, size = 0x4000, scoped, tag = 'scratch operand']
  #allocation5 [shape = 'f32[1,1]{1,0:T(1,128)S(1)}', space=vmem, size = 0x200, scoped, tag = 'scoped memory for discriminator_forward.5']
  %s0 = inlined_call_operand.vmem [shape: bf16[256,128], index: 0, kind: input, shape index: {}]
  %s1 = inlined_call_operand.vmem [shape: bf16[32,256], index: 1, kind: input, shape index: {}]
  %s2 = inlined_call_operand.vmem [shape: f32[32,1], index: 2, kind: input, shape index: {}]
  %s3 = inlined_call_operand.vmem [shape: f32[32,1], index: 3, kind: input, shape index: {}]
  %s4 = inlined_call_operand.vmem [shape: f32[32,1], index: 4, kind: input, shape index: {}]
  %s5 = inlined_call_operand.vmem [shape: f32[32,16], index: 5, kind: input, shape index: {}]
  %s6 = inlined_call_operand.<no memory space> [shape: f32[1,1], index: 6, kind: input, shape index: {}]
  %s7 = inlined_call_operand.vmem [shape: f32[2,1], index: 7, kind: output, shape index: {}]
  %s8 = sld [smem:[#allocation0]]
  $region46: #{discriminator_forward.5} parent=0
    _
  %s10 = ssub.s32 1, %s8
  %s11 = scalar_select 0, %s10, %s8
  %v12 = vstv %s6
  %13 = vst [vmem:[#allocation5] sm:$0x1] %v12
  // Predicated region
  $region2: #{discriminator_forward.5} parent=0 // pred_check
    _
  $region3: #{discriminator_forward.5} parent=0 // pred_check_branch
    %15 = sbr.rel (0) target = $region5
  $region4: #{discriminator_forward.5} parent=0 // pred_region
    _
  $region5: #{discriminator_forward.5} parent=0 // pred_fallthru
    _
  // Predicated region
  $region6: #{discriminator_forward.5} parent=0 // pred_check
    _
  $region7: #{discriminator_forward.5} parent=0 // pred_check_branch
    %17 = sbr.rel (0) target = $region9
  $region8: #{discriminator_forward.5} parent=0 // pred_region
    _
  $region9: #{discriminator_forward.5} parent=0 // pred_fallthru
    _
  // Predicated region
  $region10: #{discriminator_forward.5} parent=0 // pred_check
    _
  $region11: #{discriminator_forward.5} parent=0 // pred_check_branch
    %19 = sbr.rel (0) target = $region13
  $region12: #{discriminator_forward.5} parent=0 // pred_region
    _
  $region13: #{discriminator_forward.5} parent=0 // pred_fallthru
    _
  // Predicated region
  $region14: #{discriminator_forward.5} parent=0 // pred_check
    _
  $region15: #{discriminator_forward.5} parent=0 // pred_check_branch
    %21 = sbr.rel (0) target = $region17
  $region16: #{discriminator_forward.5} parent=0 // pred_region
    _
  $region17: #{discriminator_forward.5} parent=0 // pred_fallthru
    _
  // Predicated region
  $region18: #{discriminator_forward.5} parent=0 // pred_check
    _
  $region19: #{discriminator_forward.5} parent=0 // pred_check_branch
    %23 = sbr.rel (0) target = $region21
  $region20: #{discriminator_forward.5} parent=0 // pred_region
    _
  $region21: #{discriminator_forward.5} parent=0 // pred_fallthru
    _
  // Predicated region
  $region22: #{discriminator_forward.5} parent=0 // pred_check
    _
  $region23: #{discriminator_forward.5} parent=0 // pred_check_branch
    %25 = sbr.rel (0) target = $region25
  $region24: #{discriminator_forward.5} parent=0 // pred_region
    _
  $region25: #{discriminator_forward.5} parent=0 // pred_fallthru
    _
  // Predicated region
  $region26: #{discriminator_forward.5} parent=0 // pred_check
    _
  $region27: #{discriminator_forward.5} parent=0 // pred_check_branch
    %27 = sbr.rel (0) target = $region29
  $region28: #{discriminator_forward.5} parent=0 // pred_region
    _
  $region29: #{discriminator_forward.5} parent=0 // pred_fallthru
    _
  %p28 = scmp.eq.s32.totalorder 0, 0
  // Predicated region
  $region30: #{discriminator_forward.5} parent=0 // pred_check
    %p29 = pneg %p28
  $region31: #{discriminator_forward.5} parent=0 // pred_check_branch
    %31 = sbr.rel (%p29) target = $region33
  $region32: #{discriminator_forward.5} parent=0 // pred_region
    %32 = vst [vmem:[#allocation3] sm:$0xff] 0.0
    %33 = vst [vmem:[#allocation3 + $0x8] sm:$0xff] 0.0
    %34 = vst [vmem:[#allocation3 + $0x10] sm:$0xff] 0.0
    %35 = vst [vmem:[#allocation3 + $0x18] sm:$0xff] 0.0
    %36 = vst [vmem:[#allocation4] sm:$0xff] 0.0
    %37 = vst [vmem:[#allocation4 + $0x8] sm:$0xff] 0.0
    %38 = vst [vmem:[#allocation4 + $0x10] sm:$0xff] 0.0
    %39 = vst [vmem:[#allocation4 + $0x18] sm:$0xff] 0.0
  $region33: #{discriminator_forward.5} parent=0 // pred_fallthru
    _
  %v40 = vld [vmem:[%s1] sm:$0xff]
  %v41 = vld [vmem:[%s1 + $0x8] sm:$0xff]
  %v42 = vld [vmem:[%s1 + $0x10] sm:$0xff]
  %v43 = vld [vmem:[%s1 + $0x18] sm:$0xff]
  %v44 = vld [vmem:[%s0] sm:$0xf]
  %v45 = vld [vmem:[%s0 + $0x4] sm:$0xf]
  %v46 = vld [vmem:[%s0 + $0x8] sm:$0xf]
  %v47 = vld [vmem:[%s0 + $0xc] sm:$0xf]
  %v48 = vld [vmem:[%s0 + $0x10] sm:$0xf]
  %v49 = vld [vmem:[%s0 + $0x14] sm:$0xf]
  %v50 = vld [vmem:[%s0 + $0x18] sm:$0xf]
  %v51 = vld [vmem:[%s0 + $0x1c] sm:$0xf]
  %v52 = vld [vmem:[%s0 + $0x20] sm:$0xf]
  %v53 = vld [vmem:[%s0 + $0x24] sm:$0xf]
  %v54 = vld [vmem:[%s0 + $0x28] sm:$0xf]
  %v55 = vld [vmem:[%s0 + $0x2c] sm:$0xf]
  %v56 = vld [vmem:[%s0 + $0x30] sm:$0xf]
  %v57 = vld [vmem:[%s0 + $0x34] sm:$0xf]
  %v58 = vld [vmem:[%s0 + $0x38] sm:$0xf]
  %v59 = vld [vmem:[%s0 + $0x3c] sm:$0xf]
  %v60 = vld [vmem:[%s0 + $0x40] sm:$0xf]
  %v61 = vld [vmem:[%s0 + $0x44] sm:$0xf]
  %v62 = vld [vmem:[%s0 + $0x48] sm:$0xf]
  %v63 = vld [vmem:[%s0 + $0x4c] sm:$0xf]
  %v64 = vld [vmem:[%s0 + $0x50] sm:$0xf]
  %v65 = vld [vmem:[%s0 + $0x54] sm:$0xf]
  %v66 = vld [vmem:[%s0 + $0x58] sm:$0xf]
  %v67 = vld [vmem:[%s0 + $0x5c] sm:$0xf]
  %v68 = vld [vmem:[%s0 + $0x60] sm:$0xf]
  %v69 = vld [vmem:[%s0 + $0x64] sm:$0xf]
  %v70 = vld [vmem:[%s0 + $0x68] sm:$0xf]
  %v71 = vld [vmem:[%s0 + $0x6c] sm:$0xf]
  %v72 = vld [vmem:[%s0 + $0x70] sm:$0xf]
  %v73 = vld [vmem:[%s0 + $0x74] sm:$0xf]
  %v74 = vld [vmem:[%s0 + $0x78] sm:$0xf]
  %v75 = vld [vmem:[%s0 + $0x7c] sm:$0xf]
  %v76 = vld [vmem:[%s2] sm:$0xff]
  %v77 = vld [vmem:[%s2 + $0x8] sm:$0xff]
  %v78 = vld [vmem:[%s2 + $0x10] sm:$0xff]
  %v79 = vld [vmem:[%s2 + $0x18] sm:$0xff]
  %81 = vset.pattern.permute.xlu0 0
  %82 = vperm.xlu0 %81, %v76
  %v83 = vpop.permute.xlu0 %82
  %86 = vset.pattern.permute.xlu0 0
  %87 = vperm.xlu0 %86, %v77
  %v88 = vpop.permute.xlu0 %87
  %91 = vset.pattern.permute.xlu0 0
  %92 = vperm.xlu0 %91, %v78
  %v93 = vpop.permute.xlu0 %92
  %96 = vset.pattern.permute.xlu0 0
  %97 = vperm.xlu0 %96, %v79
  %v98 = vpop.permute.xlu0 %97
  %v104 = vunpack.c.l.b16 %v40
  %v105 = vunpack.c.h.b16 %v40
  %v106 = vunpack.c.l.b16 %v41
  %v107 = vunpack.c.h.b16 %v41
  %v108 = vunpack.c.l.b16 %v42
  %v109 = vunpack.c.h.b16 %v42
  %v110 = vunpack.c.l.b16 %v43
  %v111 = vunpack.c.h.b16 %v43
  %v112 = vpack.c.b16 %v106, %v104
  %v113 = vpack.c.b16 %v107, %v105
  %v114 = vpack.c.b16 %v110, %v108
  %v115 = vpack.c.b16 %v111, %v109
  %v152 = vunpack.c.l.b16 %v44
  %v153 = vunpack.c.l.b16 %v45
  %v154 = vunpack.c.l.b16 %v46
  %v155 = vunpack.c.l.b16 %v47
  %v156 = vunpack.c.l.b16 %v48
  %v157 = vunpack.c.l.b16 %v49
  %v158 = vunpack.c.l.b16 %v50
  %v159 = vunpack.c.l.b16 %v51
  %v160 = vunpack.c.l.b16 %v52
  %v161 = vunpack.c.l.b16 %v53
  %v162 = vunpack.c.l.b16 %v54
  %v163 = vunpack.c.l.b16 %v55
  %v164 = vunpack.c.l.b16 %v56
  %v165 = vunpack.c.l.b16 %v57
  %v166 = vunpack.c.l.b16 %v58
  %v167 = vunpack.c.l.b16 %v59
  %v168 = vunpack.c.l.b16 %v60
  %v169 = vunpack.c.l.b16 %v61
  %v170 = vunpack.c.l.b16 %v62
  %v171 = vunpack.c.l.b16 %v63
  %v172 = vunpack.c.l.b16 %v64
  %v173 = vunpack.c.l.b16 %v65
  %v174 = vunpack.c.l.b16 %v66
  %v175 = vunpack.c.l.b16 %v67
  %v176 = vunpack.c.l.b16 %v68
  %v177 = vunpack.c.l.b16 %v69
  %v178 = vunpack.c.l.b16 %v70
  %v179 = vunpack.c.l.b16 %v71
  %v180 = vunpack.c.l.b16 %v72
  %v181 = vunpack.c.l.b16 %v73
  %v182 = vunpack.c.l.b16 %v74
  %v183 = vunpack.c.l.b16 %v75
  %v184 = vpack.c.b16 %v153, %v152
  %v185 = vpack.c.b16 %v155, %v154
  %v186 = vpack.c.b16 %v157, %v156
  %v187 = vpack.c.b16 %v159, %v158
  %v188 = vpack.c.b16 %v161, %v160
  %v189 = vpack.c.b16 %v163, %v162
  %v190 = vpack.c.b16 %v165, %v164
  %v191 = vpack.c.b16 %v167, %v166
  %v192 = vpack.c.b16 %v169, %v168
  %v193 = vpack.c.b16 %v171, %v170
  %v194 = vpack.c.b16 %v173, %v172
  %v195 = vpack.c.b16 %v175, %v174
  %v196 = vpack.c.b16 %v177, %v176
  %v197 = vpack.c.b16 %v179, %v178
  %v198 = vpack.c.b16 %v181, %v180
  %v199 = vpack.c.b16 %v183, %v182
  %216 = vmatpush.bf16.msra.mxu0 %v191
  %217 = vmatpush.bf16.msra.mxu0 %v190
  %218 = vmatpush.bf16.msra.mxu0 %v189
  %219 = vmatpush.bf16.msra.mxu0 %v188
  %220 = vmatpush.bf16.msra.mxu0 %v187
  %221 = vmatpush.bf16.msra.mxu0 %v186
  %222 = vmatpush.bf16.msra.mxu0 %v185
  %223 = vmatpush.bf16.msra.mxu0 %v184
  %224 = vmatmul.bf16.gmra.mxu0 %v112
  %v225 = vpop.f32.mrf.mxu0
  %v226 = vadd.f32 %v83, %v225
  %v227 = vpop.f32.mrf.mxu0
  %v228 = vadd.f32 %v88, %v227
  %229 = vmatmul.bf16.gmra.mxu0 %v114
  %v230 = vpop.f32.mrf.mxu0
  %v231 = vadd.f32 %v93, %v230
  %v232 = vpop.f32.mrf.mxu0
  %v233 = vadd.f32 %v98, %v232
  %234 = vdwg.mxu0
  %235 = vmatpush.bf16.msra.mxu0 %v199
  %236 = vmatpush.bf16.msra.mxu0 %v198
  %237 = vmatpush.bf16.msra.mxu0 %v197
  %238 = vmatpush.bf16.msra.mxu0 %v196
  %239 = vmatpush.bf16.msra.mxu0 %v195
  %240 = vmatpush.bf16.msra.mxu0 %v194
  %241 = vmatpush.bf16.msra.mxu0 %v193
  %242 = vmatpush.bf16.msra.mxu0 %v192
  %243 = vmatmul.bf16.gmra.mxu0 %v113
  %v244 = vpop.f32.mrf.mxu0
  %v245 = vadd.f32 %v226, %v244
  %v246 = vpop.f32.mrf.mxu0
  %v247 = vadd.f32 %v228, %v246
  %248 = vmatmul.bf16.gmra.mxu0 %v115
  %v249 = vpop.f32.mrf.mxu0
  %v250 = vadd.f32 %v231, %v249
  %v251 = vpop.f32.mrf.mxu0
  %v252 = vadd.f32 %v233, %v251
  %253 = vdwg.mxu0
  %s254 = smul.u32 0, 32
  %s255 = scalar_lea.vmem [#allocation2], %s254
  %256 = vst [vmem:[%s255] sm:$0xff] %v245
  %257 = vst [vmem:[%s255 + $0x8] sm:$0xff] %v247
  %258 = vst [vmem:[%s255 + $0x10] sm:$0xff] %v250
  %259 = vst [vmem:[%s255 + $0x18] sm:$0xff] %v252
  %v260 = vld [vmem:[%s255] sm:$0xff]
  %v261 = vld [vmem:[%s255 + $0x8] sm:$0xff]
  %v262 = vld [vmem:[%s255 + $0x10] sm:$0xff]
  %v263 = vld [vmem:[%s255 + $0x18] sm:$0xff]
  %v264 = vld [vmem:[#allocation3] sm:$0xff]
  %v265 = vld [vmem:[#allocation3 + $0x8] sm:$0xff]
  %v266 = vld [vmem:[#allocation3 + $0x10] sm:$0xff]
  %v267 = vld [vmem:[#allocation3 + $0x18] sm:$0xff]
  %v268 = vadd.f32 %v264, %v260
  %v269 = vadd.f32 %v265, %v261
  %v270 = vadd.f32 %v266, %v262
  %v271 = vadd.f32 %v267, %v263
  %272 = vst [vmem:[#allocation3] sm:$0xff] %v268
  %273 = vst [vmem:[#allocation3 + $0x8] sm:$0xff] %v269
  %274 = vst [vmem:[#allocation3 + $0x10] sm:$0xff] %v270
  %275 = vst [vmem:[#allocation3 + $0x18] sm:$0xff] %v271
  %v276 = vld [vmem:[#allocation4] sm:$0xff]
  %v277 = vld [vmem:[#allocation4 + $0x8] sm:$0xff]
  %v278 = vld [vmem:[#allocation4 + $0x10] sm:$0xff]
  %v279 = vld [vmem:[#allocation4 + $0x18] sm:$0xff]
  %v280 = vmul.f32 %v260, %v260
  %v281 = vmul.f32 %v261, %v261
  %v282 = vmul.f32 %v262, %v262
  %v283 = vmul.f32 %v263, %v263
  %v284 = vadd.f32 %v276, %v280
  %v285 = vadd.f32 %v277, %v281
  %v286 = vadd.f32 %v278, %v282
  %v287 = vadd.f32 %v279, %v283
  %288 = vst [vmem:[#allocation4] sm:$0xff] %v284
  %289 = vst [vmem:[#allocation4 + $0x8] sm:$0xff] %v285
  %290 = vst [vmem:[#allocation4 + $0x10] sm:$0xff] %v286
  %291 = vst [vmem:[#allocation4 + $0x18] sm:$0xff] %v287
  // Predicated region
  $region34: #{discriminator_forward.5} parent=0 // pred_check
    %p292 = pneg %p28
  $region35: #{discriminator_forward.5} parent=0 // pred_check_branch
    %294 = sbr.rel (%p292) target = $region37
  $region36: #{discriminator_forward.5} parent=0 // pred_region
    %v295 = vld [vmem:[#allocation3] sm:$0xff]
    %v296 = vld [vmem:[#allocation3 + $0x8] sm:$0xff]
    %v297 = vld [vmem:[#allocation3 + $0x10] sm:$0xff]
    %v298 = vld [vmem:[#allocation3 + $0x18] sm:$0xff]
    %299 = vadd.xlane.f32.xlu0 %v295
    %v300 = vpop.xlane.xlu0 %299
    %301 = vadd.xlane.f32.xlu0 %v296
    %v302 = vpop.xlane.xlu0 %301
    %303 = vadd.xlane.f32.xlu0 %v297
    %v304 = vpop.xlane.xlu0 %303
    %305 = vadd.xlane.f32.xlu0 %v298
    %v306 = vpop.xlane.xlu0 %305
    %v307 = vld [vmem:[#allocation4] sm:$0xff]
    %v308 = vld [vmem:[#allocation4 + $0x8] sm:$0xff]
    %v309 = vld [vmem:[#allocation4 + $0x10] sm:$0xff]
    %v310 = vld [vmem:[#allocation4 + $0x18] sm:$0xff]
    %311 = vadd.xlane.f32.xlu0 %v307
    %v312 = vpop.xlane.xlu0 %311
    %313 = vadd.xlane.f32.xlu0 %v308
    %v314 = vpop.xlane.xlu0 %313
    %315 = vadd.xlane.f32.xlu0 %v309
    %v316 = vpop.xlane.xlu0 %315
    %317 = vadd.xlane.f32.xlu0 %v310
    %v318 = vpop.xlane.xlu0 %317
    %v319 = vmul.f32 %v300, 0.0078125
    %v320 = vmul.f32 %v302, 0.0078125
    %v321 = vmul.f32 %v304, 0.0078125
    %v322 = vmul.f32 %v306, 0.0078125
    %v323 = vmul.f32 %v312, 0.0078125
    %v324 = vmul.f32 %v314, 0.0078125
    %v325 = vmul.f32 %v316, 0.0078125
    %v326 = vmul.f32 %v318, 0.0078125
    %v327 = vmul.f32 %v319, %v319
    %v328 = vmul.f32 %v320, %v320
    %v329 = vmul.f32 %v321, %v321
    %v330 = vmul.f32 %v322, %v322
    %v331 = vsub.f32 %v323, %v327
    %v332 = vsub.f32 %v324, %v328
    %v333 = vsub.f32 %v325, %v329
    %v334 = vsub.f32 %v326, %v330
    %v335 = vld [vmem:[%s3] sm:$0xff]
    %v336 = vld [vmem:[%s3 + $0x8] sm:$0xff]
    %v337 = vld [vmem:[%s3 + $0x10] sm:$0xff]
    %v338 = vld [vmem:[%s3 + $0x18] sm:$0xff]
    %v339 = vadd.f32 %v331, 1e-05
    %v340 = vadd.f32 %v332, 1e-05
    %v341 = vadd.f32 %v333, 1e-05
    %v342 = vadd.f32 %v334, 1e-05
    %v343 = vrsqrt.pop %v339
    %v344 = vmul.f32 %v343, %v339
    %v345 = vmul.f32 %v344, %v343
    %v346 = vmul.f32 0.5, %v345
    %v347 = vsub.f32 1.5, %v346
    %v348 = vmul.f32 %v343, %v347
    %vm349 = vweird.f32 %v339
    %vm350 = vweird.f32 %v343
    %vm351 = vmor %vm349, %vm350
    %v352 = vsel %vm351, %v343, %v348
    %v353 = vrsqrt.pop %v340
    %v354 = vmul.f32 %v353, %v340
    %v355 = vmul.f32 %v354, %v353
    %v356 = vmul.f32 0.5, %v355
    %v357 = vsub.f32 1.5, %v356
    %v358 = vmul.f32 %v353, %v357
    %vm359 = vweird.f32 %v340
    %vm360 = vweird.f32 %v353
    %vm361 = vmor %vm359, %vm360
    %v362 = vsel %vm361, %v353, %v358
    %v363 = vrsqrt.pop %v341
    %v364 = vmul.f32 %v363, %v341
    %v365 = vmul.f32 %v364, %v363
    %v366 = vmul.f32 0.5, %v365
    %v367 = vsub.f32 1.5, %v366
    %v368 = vmul.f32 %v363, %v367
    %vm369 = vweird.f32 %v341
    %vm370 = vweird.f32 %v363
    %vm371 = vmor %vm369, %vm370
    %v372 = vsel %vm371, %v363, %v368
    %v373 = vrsqrt.pop %v342
    %v374 = vmul.f32 %v373, %v342
    %v375 = vmul.f32 %v374, %v373
    %v376 = vmul.f32 0.5, %v375
    %v377 = vsub.f32 1.5, %v376
    %v378 = vmul.f32 %v373, %v377
    %vm379 = vweird.f32 %v342
    %vm380 = vweird.f32 %v373
    %vm381 = vmor %vm379, %vm380
    %v382 = vsel %vm381, %v373, %v378
    %v383 = vmul.f32 %v335, %v352
    %v384 = vmul.f32 %v336, %v362
    %v385 = vmul.f32 %v337, %v372
    %v386 = vmul.f32 %v338, %v382
    %v387 = vld [vmem:[%s4] sm:$0xff]
    %v388 = vld [vmem:[%s4 + $0x8] sm:$0xff]
    %v389 = vld [vmem:[%s4 + $0x10] sm:$0xff]
    %v390 = vld [vmem:[%s4 + $0x18] sm:$0xff]
    %v391 = vmul.f32 %v319, %v383
    %v392 = vmul.f32 %v320, %v384
    %v393 = vmul.f32 %v321, %v385
    %v394 = vmul.f32 %v322, %v386
    %v395 = vsub.f32 %v387, %v391
    %v396 = vsub.f32 %v388, %v392
    %v397 = vsub.f32 %v389, %v393
    %v398 = vsub.f32 %v390, %v394
    %v399 = vld [vmem:[#allocation2] sm:$0xff]
    %v400 = vld [vmem:[#allocation2 + $0x8] sm:$0xff]
    %v401 = vld [vmem:[#allocation2 + $0x10] sm:$0xff]
    %v402 = vld [vmem:[#allocation2 + $0x18] sm:$0xff]
    %404 = vset.pattern.permute.xlu0 0
    %405 = vperm.xlu0 %404, %v383
    %v406 = vpop.permute.xlu0 %405
    %409 = vset.pattern.permute.xlu0 0
    %410 = vperm.xlu0 %409, %v384
    %v411 = vpop.permute.xlu0 %410
    %414 = vset.pattern.permute.xlu0 0
    %415 = vperm.xlu0 %414, %v385
    %v416 = vpop.permute.xlu0 %415
    %419 = vset.pattern.permute.xlu0 0
    %420 = vperm.xlu0 %419, %v386
    %v421 = vpop.permute.xlu0 %420
    %v423 = vmul.f32 %v399, %v406
    %v424 = vmul.f32 %v400, %v411
    %v425 = vmul.f32 %v401, %v416
    %v426 = vmul.f32 %v402, %v421
    %428 = vset.pattern.permute.xlu0 0
    %429 = vperm.xlu0 %428, %v395
    %v430 = vpop.permute.xlu0 %429
    %433 = vset.pattern.permute.xlu0 0
    %434 = vperm.xlu0 %433, %v396
    %v435 = vpop.permute.xlu0 %434
    %438 = vset.pattern.permute.xlu0 0
    %439 = vperm.xlu0 %438, %v397
    %v440 = vpop.permute.xlu0 %439
    %443 = vset.pattern.permute.xlu0 0
    %444 = vperm.xlu0 %443, %v398
    %v445 = vpop.permute.xlu0 %444
    %v447 = vadd.f32 %v423, %v430
    %v448 = vadd.f32 %v424, %v435
    %v449 = vadd.f32 %v425, %v440
    %v450 = vadd.f32 %v426, %v445
    %v451 = vmax.f32 %v447, 0.0
    %v452 = vmax.f32 %v448, 0.0
    %v453 = vmax.f32 %v449, 0.0
    %v454 = vmax.f32 %v450, 0.0
    %459 = vrot.lane.b32.xlu0 %v451, 96
    %v460 = vpop.permute.xlu0 %459
    %461 = vrot.lane.b32.xlu0 %v452, 96
    %v462 = vpop.permute.xlu0 %461
    %463 = vrot.lane.b32.xlu0 %v453, 96
    %v464 = vpop.permute.xlu0 %463
    %465 = vrot.lane.b32.xlu0 %v454, 96
    %v466 = vpop.permute.xlu0 %465
    %v471 = vmax.f32 %v451, %v460
    %v472 = vmax.f32 %v452, %v462
    %v473 = vmax.f32 %v453, %v464
    %v474 = vmax.f32 %v454, %v466
    %475 = vrot.lane.b32.xlu0 %v451, 64
    %v476 = vpop.permute.xlu0 %475
    %477 = vrot.lane.b32.xlu0 %v452, 64
    %v478 = vpop.permute.xlu0 %477
    %479 = vrot.lane.b32.xlu0 %v453, 64
    %v480 = vpop.permute.xlu0 %479
    %481 = vrot.lane.b32.xlu0 %v454, 64
    %v482 = vpop.permute.xlu0 %481
    %v487 = vmax.f32 %v471, %v476
    %v488 = vmax.f32 %v472, %v478
    %v489 = vmax.f32 %v473, %v480
    %v490 = vmax.f32 %v474, %v482
    %491 = vrot.lane.b32.xlu0 %v451, 32
    %v492 = vpop.permute.xlu0 %491
    %493 = vrot.lane.b32.xlu0 %v452, 32
    %v494 = vpop.permute.xlu0 %493
    %495 = vrot.lane.b32.xlu0 %v453, 32
    %v496 = vpop.permute.xlu0 %495
    %497 = vrot.lane.b32.xlu0 %v454, 32
    %v498 = vpop.permute.xlu0 %497
    %v503 = vmax.f32 %v487, %v492
    %v504 = vmax.f32 %v488, %v494
    %v505 = vmax.f32 %v489, %v496
    %v506 = vmax.f32 %v490, %v498
    %v507 = vld [vmem:[%s5] sm:$0xff]
    %v508 = vld [vmem:[%s5 + $0x8] sm:$0xff]
    %v509 = vld [vmem:[%s5 + $0x10] sm:$0xff]
    %v510 = vld [vmem:[%s5 + $0x18] sm:$0xff]
    %v511 = vmul.f32 %v503, %v507
    %v512 = vmul.f32 %v504, %v508
    %v513 = vmul.f32 %v505, %v509
    %v514 = vmul.f32 %v506, %v510
    %vm515 = vcmask 130048
    %v516 = vsel %vm515, %v511, 0.0
    %517 = vadd.xlane.f32.xlu0 %v516
    %v518 = vpop.xlane.xlu0 %517
    %v519 = vsel %vm515, %v512, 0.0
    %520 = vadd.xlane.f32.xlu0 %v519
    %v521 = vpop.xlane.xlu0 %520
    %v522 = vsel %vm515, %v513, 0.0
    %523 = vadd.xlane.f32.xlu0 %v522
    %v524 = vpop.xlane.xlu0 %523
    %v525 = vsel %vm515, %v514, 0.0
    %526 = vadd.xlane.f32.xlu0 %v525
    %v527 = vpop.xlane.xlu0 %526
    %v528 = vadd.f32 %v518, %v521
    %v529 = vadd.f32 %v528, %v524
    %v530 = vadd.f32 %v529, %v527
    %v531 = vrot.slane %v530, 4
    %v532 = vadd.f32 %v530, %v531
    %v533 = vrot.slane %v532, 2
    %v534 = vadd.f32 %v532, %v533
    %v535 = vrot.slane %v534, 1
    %v536 = vadd.f32 %v534, %v535
    %541 = vrot.lane.b32.xlu0 %v507, 16
    %v542 = vpop.permute.xlu0 %541
    %543 = vrot.lane.b32.xlu0 %v508, 16
    %v544 = vpop.permute.xlu0 %543
    %545 = vrot.lane.b32.xlu0 %v509, 16
    %v546 = vpop.permute.xlu0 %545
    %547 = vrot.lane.b32.xlu0 %v510, 16
    %v548 = vpop.permute.xlu0 %547
    %v553 = vmul.f32 %v503, %v542
    %v554 = vmul.f32 %v504, %v544
    %v555 = vmul.f32 %v505, %v546
    %v556 = vmul.f32 %v506, %v548
    %561 = vrot.lane.b32.xlu0 %v553, 112
    %v562 = vpop.permute.xlu0 %561
    %563 = vrot.lane.b32.xlu0 %v554, 112
    %v564 = vpop.permute.xlu0 %563
    %565 = vrot.lane.b32.xlu0 %v555, 112
    %v566 = vpop.permute.xlu0 %565
    %567 = vrot.lane.b32.xlu0 %v556, 112
    %v568 = vpop.permute.xlu0 %567
    %v573 = vsel %vm515, %v562, 0.0
    %574 = vadd.xlane.f32.xlu0 %v573
    %v575 = vpop.xlane.xlu0 %574
    %v576 = vsel %vm515, %v564, 0.0
    %577 = vadd.xlane.f32.xlu0 %v576
    %v578 = vpop.xlane.xlu0 %577
    %v579 = vsel %vm515, %v566, 0.0
    %580 = vadd.xlane.f32.xlu0 %v579
    %v581 = vpop.xlane.xlu0 %580
    %v582 = vsel %vm515, %v568, 0.0
    %583 = vadd.xlane.f32.xlu0 %v582
    %v584 = vpop.xlane.xlu0 %583
    %v585 = vadd.f32 %v575, %v578
    %v586 = vadd.f32 %v585, %v581
    %v587 = vadd.f32 %v586, %v584
    %v588 = vrot.slane %v587, 4
    %v589 = vadd.f32 %v587, %v588
    %v590 = vrot.slane %v589, 2
    %v591 = vadd.f32 %v589, %v590
    %v592 = vrot.slane %v591, 1
    %v593 = vadd.f32 %v591, %v592
    %vm594 = vcmask 1040384
    %v595 = vsel %vm594, %v536, %v593
    %v596 = vld [vmem:[#allocation5] sm:$0x1]
    %v598 = vperm.slane %v596, 0
    %v600 = vadd.f32 %v595, %v598
    %v601 = vsub.f32 0.0, %v600
    %v602 = vmul.f32 %v601, 1.442695
    %v603 = vpow.pop %v602
    %v604 = vadd.f32 %v603, 1.0
    %v605 = vrcp.pop %v604
    %v606 = vmul.f32 %v604, %v605
    %v607 = vsub.f32 1.0, %v606
    %v608 = vmul.f32 %v605, %v607
    %v609 = vadd.f32 %v605, %v608
    %vm610 = vweird.f32 %v604
    %vm611 = vweird.f32 %v605
    %vm612 = vmor %vm610, %vm611
    %v613 = vsel %vm612, %v605, %v609
    %v614 = vand.u32 2147483647, %v604
    %vm615 = vcmp.eq.f32.partialorder %v614, 8.507059e+37
    %v616 = vand.u32 %v604, 2147483648
    %v617 = vor.u32 1.1754944e-38, %v616
    %v618 = vsel %vm615, %v617, %v613
    %v619 = vmul.f32 1.0, %v618
    %vm620 = vcmask 1024
    %621 = vst.msk [vmem:[%s7] sm:$0x3] %vm620, %v619
  $region37: #{discriminator_forward.5} parent=0 // pred_fallthru
    _
  // Predicated region
  $region38: #{discriminator_forward.5} parent=0 // pred_check
    _
  $region39: #{discriminator_forward.5} parent=0 // pred_check_branch
    %623 = sbr.rel (0) target = $region41
  $region40: #{discriminator_forward.5} parent=0 // pred_region
    _
  $region41: #{discriminator_forward.5} parent=0 // pred_fallthru
    _
  // Predicated region
  $region42: #{discriminator_forward.5} parent=0 // pred_check
    _
  $region43: #{discriminator_forward.5} parent=0 // pred_check_branch
    %625 = sbr.rel (0) target = $region45
  $region44: #{discriminator_forward.5} parent=0 // pred_region
    _
  $region45: #{discriminator_forward.5} parent=0 // pred_fallthru
    _

</llo_original>
